<compile_context>
chip_gen: v6e
topology: v6e:2x2x1
jax: 0.10.0
libtpu: 0.0.40
codegen_flags: <defaults>
</compile_context>

<pallas_src>
import jax
import jax.numpy as jnp
import numpy as np
from jax import lax
from jax.experimental import pallas as pl
from jax.experimental.pallas import tpu as pltpu

NEG_SLOPE = 0.01   # nn.LeakyReLU default negative_slope
BN_EPS = 1e-5      # nn.BatchNorm2d default eps


# ------------------------------ fused kernel --------------------------------

def _dec_block_kernel(xp_ref, ws1_ref, wres_ref,
                      g1_ref, b1_ref, g2_ref, b2_ref, g3_ref, b3_ref,
                      o_ref):
    """Entire dec_block in one invocation; all operands / intermediates in VMEM.

    xp_ref  : (N, H+2, W+2, Cin)   input, zero-padded by 1 on every side
    ws1_ref : (9*Cin, Cin+4*Cout)  fused weights: [3x3 conv | identity ConvT]
    wres_ref: (4*Cin, 4*Cout)      parity-grouped ConvT weights (res branch)
    g1/b1   : (1, Cin)             BN after the 3x3 conv
    g2/b2   : (1, Cout)            BN after the res-branch ConvT
    g3/b3   : (1, Cout)            BN after the identity-branch ConvT
    o_ref   : (NHW/fold, fold*4*Cout)  lane-dense output (row blocks folded
                                        into lanes; wrapper unfolds)
    """
    N, Hp, Wp, Cin = xp_ref.shape
    H, W = Hp - 2, Wp - 2
    NHW = N * H * W
    Cout = g2_ref.shape[1]
    C4 = 4 * Cout

    def lrelu(y):
        return jnp.where(y >= 0, y, NEG_SLOPE * y)

    # ---- stage 1: im2col (9 taps on the lane dim) + ONE matmul producing both
    #      the 3x3 conv (first Cin cols) and the identity-branch ConvT parity
    #      planes (last 4*Cout cols).  Biases folded into the following BNs.
    taps = [xp_ref[:, kh:kh + H, kw:kw + W, :].reshape(NHW, Cin)
            for kh in range(3) for kw in range(3)]
    im = jnp.concatenate(taps, axis=-1)                          # (NHW, 9*Cin)
    s1 = jnp.dot(im, ws1_ref[...], preferred_element_type=jnp.float32)
    c1 = s1[:, :Cin]                                             # (NHW, Cin)
    c3 = s1[:, Cin:]                                             # (NHW, 4*Cout)

    # ---- BN1 (+LReLU): training-mode batch stats, single pass (E[x^2]-m^2).
    inv_n = 1.0 / float(NHW)
    m1 = jnp.sum(c1, axis=0, keepdims=True) * inv_n
    v1 = jnp.sum(c1 * c1, axis=0, keepdims=True) * inv_n - m1 * m1
    sc1 = g1_ref[...] * lax.rsqrt(v1 + BN_EPS)
    sh1 = b1_ref[...] - m1 * sc1
    h1 = lrelu(c1 * sc1 + sh1)                                   # (NHW, Cin)

    # ---- res-branch ConvT (k=3, s=2, p=1, op=1) via output-parity
    #      decomposition: concat the 4 shifted h1 taps (zero halo bottom/right,
    #      built with 2 small concats -- no scratch, no full zero-fill) and
    #      contract once against the parity-grouped weight.
    h4 = h1.reshape(N, H, W, Cin)
    zc = jnp.zeros((N, H, 1, Cin), h1.dtype)
    zr = jnp.zeros((N, 1, W + 1, Cin), h1.dtype)
    hp = jnp.concatenate([jnp.concatenate([h4, zc], axis=2), zr], axis=1)
    res_in = jnp.concatenate(
        [hp[:, :H, :W, :].reshape(NHW, Cin),
         hp[:, :H, 1:, :].reshape(NHW, Cin),
         hp[:, 1:, :W, :].reshape(NHW, Cin),
         hp[:, 1:, 1:, :].reshape(NHW, Cin)], axis=-1)           # (NHW, 4*Cin)
    c2 = jnp.dot(res_in, wres_ref[...],
                 preferred_element_type=jnp.float32)             # (NHW, 4*Cout)

    # ---- merged BN (+LReLU) for BOTH ConvT branches in one pass.
    #      Per-channel stats pool the 4 parity planes (each holds NHW of the
    #      N*2H*2W output pixels); pooling / re-broadcast are lane slices/concats.
    cc = jnp.concatenate([c2, c3], axis=-1)                      # (NHW, 8*Cout)
    s = jnp.sum(cc, axis=0, keepdims=True)                       # (1, 8*Cout)
    s2 = jnp.sum(cc * cc, axis=0, keepdims=True)
    inv_cnt = 1.0 / (4.0 * NHW)

    def pool4(t, base):                                          # (1,4C) -> (1,C)
        return (t[:, base:base + Cout]
                + t[:, base + Cout:base + 2 * Cout]
                + t[:, base + 2 * Cout:base + 3 * Cout]
                + t[:, base + 3 * Cout:base + 4 * Cout])

    m_r = pool4(s, 0) * inv_cnt                                  # res branch (c2)
    m_i = pool4(s, C4) * inv_cnt                                 # identity branch (c3)
    v_r = pool4(s2, 0) * inv_cnt - m_r * m_r
    v_i = pool4(s2, C4) * inv_cnt - m_i * m_i
    sc_r = g2_ref[...] * lax.rsqrt(v_r + BN_EPS)
    sc_i = g3_ref[...] * lax.rsqrt(v_i + BN_EPS)
    sh_r = b2_ref[...] - m_r * sc_r
    sh_i = b3_ref[...] - m_i * sc_i
    sc_b = jnp.concatenate([sc_r] * 4 + [sc_i] * 4, axis=1)      # (1, 8*Cout)
    sh_b = jnp.concatenate([sh_r] * 4 + [sh_i] * 4, axis=1)
    y = lrelu(cc * sc_b + sh_b)                                  # (NHW, 8*Cout)

    out = y[:, :C4] + y[:, C4:]                                  # (NHW, 4*Cout)

    # ---- lane-dense store: fold `Fold` contiguous row blocks into the lane dim
    #      so the output block is >=128 lanes wide (unmasked stores).
    rows = o_ref.shape[0]
    fold = o_ref.shape[1] // C4
    o_ref[...] = jnp.concatenate(
        [out[j * rows:(j + 1) * rows, :] for j in range(fold)], axis=1)


# ----------------------------- weight plumbing ------------------------------

def _convT_parity_weights(w_iohw):
    """ConvTranspose2d weight (I, O, 3, 3) -> (4, I, 4*O) parity-grouped taps.

    Output column blocks are the four parity planes [ee | eo | oe | oo] of the
    stride-2 transposed conv; the leading axis selects which shifted input pixel
    (y[a,b], y[a,b+1], y[a+1,b], y[a+1,b+1]) the taps multiply.
    """
    wf = jnp.transpose(jnp.flip(w_iohw, (2, 3)), (2, 3, 0, 1))   # (kh, kw, I, O)
    i_dim, o_dim = wf.shape[2], wf.shape[3]
    z = jnp.zeros((i_dim, o_dim), wf.dtype)
    w00 = jnp.concatenate([wf[1, 1], wf[1, 0], wf[0, 1], wf[0, 0]], axis=1)
    w01 = jnp.concatenate([z,        wf[1, 2], z,        wf[0, 2]], axis=1)
    w10 = jnp.concatenate([z,        z,        wf[2, 1], wf[2, 0]], axis=1)
    w11 = jnp.concatenate([z,        z,        z,        wf[2, 2]], axis=1)
    return jnp.stack([w00, w01, w10, w11], axis=0)               # (4, I, 4*O)


def _stage1_weight(w_res_conv, w_id_tconv):
    """Fused stage-1 weight (9*Cin, Cin + 4*Cout): [3x3 conv | identity ConvT].

    Row block k = kh*3+kw matches the im2col tap order; the identity ConvT only
    uses taps 4, 5, 7, 8 (center / right / down / down-right pixels).
    """
    cin = w_res_conv.shape[1]
    cout = w_id_tconv.shape[1]
    w1 = jnp.transpose(w_res_conv, (2, 3, 1, 0)).reshape(9 * cin, cin)
    wid = _convT_parity_weights(w_id_tconv)                      # (4, Cin, 4*Cout)
    z = jnp.zeros((cin, 4 * cout), w1.dtype)
    wid_rows = jnp.concatenate(
        [z, z, z, z, wid[0], wid[1], z, wid[2], wid[3]], axis=0)  # (9*Cin, 4*Cout)
    return jnp.concatenate([w1, wid_rows], axis=1)               # (9*Cin, Cin+4*Cout)


def _full_spec(shape):
    zeros = (0,) * len(shape)
    return pl.BlockSpec(shape, lambda i: zeros)


# --------------------------------- wrapper ----------------------------------

@jax.jit
def dec_block_forward(x_nchw, p):
    """PyTorch dec_block forward (training-mode BN), NCHW in / NCHW out."""
    N, Cin, H, W = x_nchw.shape
    Cout = p["w_id_tconv"].shape[1]
    C4 = 4 * Cout
    NHW = N * H * W

    # NCHW -> NHWC + 1-pixel zero halo (one tiny fused XLA op; layout plumbing).
    x = jnp.transpose(x_nchw, (0, 2, 3, 1)).astype(jnp.float32)
    xp = jnp.pad(x, ((0, 0), (1, 1), (1, 1), (0, 0)))            # (N,H+2,W+2,Cin)

    ws1 = _stage1_weight(p["w_res_conv"].astype(jnp.float32),
                         p["w_id_tconv"].astype(jnp.float32))
    wres = _convT_parity_weights(
        p["w_res_tconv"].astype(jnp.float32)).reshape(4 * Cin, C4)

    # fold factor so the output block is >=128 lanes wide (unmasked stores)
    fold = 1
    while fold * C4 < 128 and NHW % (2 * fold) == 0:
        fold *= 2
    rows = NHW // fold

    # NOTE: conv / convT biases are intentionally NOT passed: training-mode BN
    # follows each conv and its batch-mean subtraction cancels them exactly.
    args = (xp, ws1, wres,
            p["g_bn_res1"][None, :].astype(jnp.float32),
            p["b_bn_res1"][None, :].astype(jnp.float32),
            p["g_bn_res2"][None, :].astype(jnp.float32),
            p["b_bn_res2"][None, :].astype(jnp.float32),
            p["g_bn_id"][None, :].astype(jnp.float32),
            p["b_bn_id"][None, :].astype(jnp.float32))

    o = pl.pallas_call(
        _dec_block_kernel,
        out_shape=jax.ShapeDtypeStruct((rows, fold * C4), jnp.float32),
        grid=(1,),
        in_specs=[_full_spec(a.shape) for a in args],
        out_specs=_full_spec((rows, fold * C4)),
        compiler_params=pltpu.CompilerParams(
            dimension_semantics=("arbitrary",),
            vmem_limit_bytes=32 * 1024 * 1024),
    )(*args)

    # undo the in-kernel row->lane fold, then parity interleave -> NCHW
    out_tok = o.reshape(rows, fold, C4).transpose(1, 0, 2).reshape(NHW, C4)
    out6 = out_tok.reshape(N, H, W, 2, 2, Cout)        # (n, a, b, rp, cp, c)
    out = jnp.transpose(out6, (0, 5, 1, 3, 2, 4))      # (n, c, a, rp, b, cp)
    return out.reshape(N, Cout, 2 * H, 2 * W)


# -------------------------- pure-JAX reference -------------------------------

def _ref_conv(x, w_oihw, b, pad, lhs_dil):
    y = lax.conv_general_dilated(
        x, w_oihw, window_strides=(1, 1), padding=(pad, pad),
        lhs_dilation=(lhs_dil, lhs_dil),
        dimension_numbers=("NCHW", "OIHW", "NCHW"))
    return y + b[None, :, None, None]


def _ref_bn_lrelu(y, g, b):
    m = y.mean((0, 2, 3), keepdims=True)
    v = y.var((0, 2, 3), keepdims=True)
    z = (y - m) / jnp.sqrt(v + BN_EPS) * g[None, :, None, None] + b[None, :, None, None]
    return jnp.where(z >= 0, z, NEG_SLOPE * z)


def ref_forward(x, p):
    r = _ref_conv(x, p["w_res_conv"], p["b_res_conv"], (1, 1), 1)
    r = _ref_bn_lrelu(r, p["g_bn_res1"], p["b_bn_res1"])
    wt = jnp.transpose(jnp.flip(p["w_res_tconv"], (2, 3)), (1, 0, 2, 3))
    r = _ref_conv(r, wt, p["b_res_tconv"], (1, 2), 2)
    r = _ref_bn_lrelu(r, p["g_bn_res2"], p["b_bn_res2"])

    wt2 = jnp.transpose(jnp.flip(p["w_id_tconv"], (2, 3)), (1, 0, 2, 3))
    i = _ref_conv(x, wt2, p["b_id_tconv"], (1, 2), 2)
    i = _ref_bn_lrelu(i, p["g_bn_id"], p["b_bn_id"])
    return i + r


# ------------------------------- params --------------------------------------

def init_params(key, cin, cout):
    ks = jax.random.split(key, 12)
    n = lambda k, s, sc=0.1: sc * jax.random.normal(k, s, jnp.float32)
    return {
        # res: Conv2d(cin, cin, 3) -> BN -> LReLU -> ConvT(cin, cout) -> BN -> LReLU
        "w_res_conv": n(ks[0], (cin, cin, 3, 3)),
        "b_res_conv": n(ks[1], (cin,)),
        "g_bn_res1": 1.0 + n(ks[2], (cin,)),
        "b_bn_res1": n(ks[3], (cin,)),
        "w_res_tconv": n(ks[4], (cin, cout, 3, 3)),
        "b_res_tconv": n(ks[5], (cout,)),
        "g_bn_res2": 1.0 + n(ks[6], (cout,)),
        "b_bn_res2": n(ks[7], (cout,)),
        # identity: ConvT(cin, cout) -> BN -> LReLU
        "w_id_tconv": n(ks[8], (cin, cout, 3, 3)),
        "b_id_tconv": n(ks[9], (cout,)),
        "g_bn_id": 1.0 + n(ks[10], (cin if False else cout,)),
        "b_bn_id": n(ks[11], (cout,)),
    }


if __name__ == "__main__":
    key = jax.random.PRNGKey(0)
    kx, kp = jax.random.split(key)

    N, Cin, Cout, H, W = 2, 4, 8, 16, 16
    x = jax.random.uniform(kx, (N, Cin, H, W), jnp.float32)
    params = init_params(kp, Cin, Cout)

    out = jax.block_until_ready(dec_block_forward(x, params))
    assert out.shape == (N, Cout, 2 * H, 2 * W), out.shape

    ref = jax.block_until_ready(ref_forward(x, params))
    np.testing.assert_allclose(np.asarray(out), np.asarray(ref),
                               rtol=2e-3, atol=1e-3)

    print("KERNEL_OK")
</pallas_src>

<mosaic_0001>
module attributes {stable_mosaic.version = 11 : i64} {
  func.func @_dec_block_kernel(%arg0: i32, %arg1: memref<2x18x18x4xf32, #tpu.memory_space<vmem>>, %arg2: memref<36x36xf32, #tpu.memory_space<vmem>>, %arg3: memref<16x32xf32, #tpu.memory_space<vmem>>, %arg4: memref<1x4xf32, #tpu.memory_space<vmem>>, %arg5: memref<1x4xf32, #tpu.memory_space<vmem>>, %arg6: memref<1x8xf32, #tpu.memory_space<vmem>>, %arg7: memref<1x8xf32, #tpu.memory_space<vmem>>, %arg8: memref<1x8xf32, #tpu.memory_space<vmem>>, %arg9: memref<1x8xf32, #tpu.memory_space<vmem>>, %arg10: memref<128x128xf32, #tpu.memory_space<vmem>>) attributes {dimension_semantics = [#tpu.dimension_semantics<arbitrary>], iteration_bounds = array<i64: 1>, scalar_prefetch = 0 : i64, scratch_operands = 0 : i64, tpu.core_type = #tpu.core_type<tc>, window_params = [{pipeline_mode = #tpu.pipeline_mode<synchronous>, transform_indices = @transform_0, window_bounds = array<i64: 2, 18, 18, 4>}, {pipeline_mode = #tpu.pipeline_mode<synchronous>, transform_indices = @transform_1, window_bounds = array<i64: 36, 36>}, {pipeline_mode = #tpu.pipeline_mode<synchronous>, transform_indices = @transform_2, window_bounds = array<i64: 16, 32>}, {pipeline_mode = #tpu.pipeline_mode<synchronous>, transform_indices = @transform_3, window_bounds = array<i64: 1, 4>}, {pipeline_mode = #tpu.pipeline_mode<synchronous>, transform_indices = @transform_4, window_bounds = array<i64: 1, 4>}, {pipeline_mode = #tpu.pipeline_mode<synchronous>, transform_indices = @transform_5, window_bounds = array<i64: 1, 8>}, {pipeline_mode = #tpu.pipeline_mode<synchronous>, transform_indices = @transform_6, window_bounds = array<i64: 1, 8>}, {pipeline_mode = #tpu.pipeline_mode<synchronous>, transform_indices = @transform_7, window_bounds = array<i64: 1, 8>}, {pipeline_mode = #tpu.pipeline_mode<synchronous>, transform_indices = @transform_8, window_bounds = array<i64: 1, 8>}, {pipeline_mode = #tpu.pipeline_mode<synchronous>, transform_indices = @transform_9, window_bounds = array<i64: 128, 128>}]} {
    %c0 = arith.constant 0 : index
    %c0_0 = arith.constant 0 : index
    %c0_1 = arith.constant 0 : index
    %c0_2 = arith.constant 0 : index
    %0 = vector.load %arg1[%c0, %c0_0, %c0_1, %c0_2] : memref<2x18x18x4xf32, #tpu.memory_space<vmem>>, vector<2x16x16x4xf32>
    %1 = vector.shape_cast %0 : vector<2x16x16x4xf32> to vector<512x4xf32>
    %c0_3 = arith.constant 0 : index
    %c0_4 = arith.constant 0 : index
    %c1 = arith.constant 1 : index
    %c0_5 = arith.constant 0 : index
    %2 = vector.load %arg1[%c0_3, %c0_4, %c1, %c0_5] : memref<2x18x18x4xf32, #tpu.memory_space<vmem>>, vector<2x16x16x4xf32>
    %3 = vector.shape_cast %2 : vector<2x16x16x4xf32> to vector<512x4xf32>
    %c0_6 = arith.constant 0 : index
    %c0_7 = arith.constant 0 : index
    %c2 = arith.constant 2 : index
    %c0_8 = arith.constant 0 : index
    %4 = vector.load %arg1[%c0_6, %c0_7, %c2, %c0_8] : memref<2x18x18x4xf32, #tpu.memory_space<vmem>>, vector<2x16x16x4xf32>
    %5 = vector.shape_cast %4 : vector<2x16x16x4xf32> to vector<512x4xf32>
    %c0_9 = arith.constant 0 : index
    %c1_10 = arith.constant 1 : index
    %c0_11 = arith.constant 0 : index
    %c0_12 = arith.constant 0 : index
    %6 = vector.load %arg1[%c0_9, %c1_10, %c0_11, %c0_12] : memref<2x18x18x4xf32, #tpu.memory_space<vmem>>, vector<2x16x16x4xf32>
    %7 = vector.shape_cast %6 : vector<2x16x16x4xf32> to vector<512x4xf32>
    %c0_13 = arith.constant 0 : index
    %c1_14 = arith.constant 1 : index
    %c1_15 = arith.constant 1 : index
    %c0_16 = arith.constant 0 : index
    %8 = vector.load %arg1[%c0_13, %c1_14, %c1_15, %c0_16] : memref<2x18x18x4xf32, #tpu.memory_space<vmem>>, vector<2x16x16x4xf32>
    %9 = vector.shape_cast %8 : vector<2x16x16x4xf32> to vector<512x4xf32>
    %c0_17 = arith.constant 0 : index
    %c1_18 = arith.constant 1 : index
    %c2_19 = arith.constant 2 : index
    %c0_20 = arith.constant 0 : index
    %10 = vector.load %arg1[%c0_17, %c1_18, %c2_19, %c0_20] : memref<2x18x18x4xf32, #tpu.memory_space<vmem>>, vector<2x16x16x4xf32>
    %11 = vector.shape_cast %10 : vector<2x16x16x4xf32> to vector<512x4xf32>
    %c0_21 = arith.constant 0 : index
    %c2_22 = arith.constant 2 : index
    %c0_23 = arith.constant 0 : index
    %c0_24 = arith.constant 0 : index
    %12 = vector.load %arg1[%c0_21, %c2_22, %c0_23, %c0_24] : memref<2x18x18x4xf32, #tpu.memory_space<vmem>>, vector<2x16x16x4xf32>
    %13 = vector.shape_cast %12 : vector<2x16x16x4xf32> to vector<512x4xf32>
    %c0_25 = arith.constant 0 : index
    %c2_26 = arith.constant 2 : index
    %c1_27 = arith.constant 1 : index
    %c0_28 = arith.constant 0 : index
    %14 = vector.load %arg1[%c0_25, %c2_26, %c1_27, %c0_28] : memref<2x18x18x4xf32, #tpu.memory_space<vmem>>, vector<2x16x16x4xf32>
    %15 = vector.shape_cast %14 : vector<2x16x16x4xf32> to vector<512x4xf32>
    %c0_29 = arith.constant 0 : index
    %c2_30 = arith.constant 2 : index
    %c2_31 = arith.constant 2 : index
    %c0_32 = arith.constant 0 : index
    %16 = vector.load %arg1[%c0_29, %c2_30, %c2_31, %c0_32] : memref<2x18x18x4xf32, #tpu.memory_space<vmem>>, vector<2x16x16x4xf32>
    %17 = vector.shape_cast %16 : vector<2x16x16x4xf32> to vector<512x4xf32>
    %18 = tpu.concatenate %1, %3, %5, %7, %9, %11, %13, %15, %17 in 1 : vector<512x4xf32>, vector<512x4xf32>, vector<512x4xf32>, vector<512x4xf32>, vector<512x4xf32>, vector<512x4xf32>, vector<512x4xf32>, vector<512x4xf32>, vector<512x4xf32> -> vector<512x36xf32>
    %c0_33 = arith.constant 0 : index
    %c0_34 = arith.constant 0 : index
    %19 = vector.load %arg2[%c0_33, %c0_34] : memref<36x36xf32, #tpu.memory_space<vmem>>, vector<36x36xf32>
    %cst = arith.constant dense<0.000000e+00> : vector<512x36xf32>
    %20 = tpu.matmul %18, %19, %cst {dimension_numbers = #tpu.dot_dimension_numbers<[1], [0], [0], [1], [0, 0, 1, 1], [], []>} : vector<512x36xf32>, vector<36x36xf32>, vector<512x36xf32> -> vector<512x36xf32>
    %21 = vector.extract_strided_slice %20 {offsets = [0, 0], sizes = [512, 4], strides = [1, 1]} : vector<512x36xf32> to vector<512x4xf32>
    %22 = vector.extract_strided_slice %20 {offsets = [0, 4], sizes = [512, 32], strides = [1, 1]} : vector<512x36xf32> to vector<512x32xf32>
    %cst_35 = arith.constant dense<0.000000e+00> : vector<4xf32>
    %23 = vector.multi_reduction <add>, %21, %cst_35 [0] : vector<512x4xf32> to vector<4xf32>
    %24 = vector.shape_cast %23 : vector<4xf32> to vector<1x4xf32>
    %cst_36 = arith.constant 0.001953125 : f32
    %25 = vector.broadcast %cst_36 : f32 to vector<1x4xf32>
    %26 = arith.mulf %24, %25 : vector<1x4xf32>
    %27 = arith.mulf %21, %21 : vector<512x4xf32>
    %cst_37 = arith.constant dense<0.000000e+00> : vector<4xf32>
    %28 = vector.multi_reduction <add>, %27, %cst_37 [0] : vector<512x4xf32> to vector<4xf32>
    %29 = vector.shape_cast %28 : vector<4xf32> to vector<1x4xf32>
    %cst_38 = arith.constant 0.001953125 : f32
    %30 = vector.broadcast %cst_38 : f32 to vector<1x4xf32>
    %31 = arith.mulf %29, %30 : vector<1x4xf32>
    %32 = arith.mulf %26, %26 : vector<1x4xf32>
    %33 = arith.subf %31, %32 : vector<1x4xf32>
    %c0_39 = arith.constant 0 : index
    %c0_40 = arith.constant 0 : index
    %34 = vector.load %arg4[%c0_39, %c0_40] : memref<1x4xf32, #tpu.memory_space<vmem>>, vector<1x4xf32>
    %cst_41 = arith.constant 9.99999974E-6 : f32
    %35 = vector.broadcast %cst_41 : f32 to vector<1x4xf32>
    %36 = arith.addf %33, %35 : vector<1x4xf32>
    %37 = math.rsqrt %36 : vector<1x4xf32>
    %38 = arith.mulf %34, %37 : vector<1x4xf32>
    %c0_42 = arith.constant 0 : index
    %c0_43 = arith.constant 0 : index
    %39 = vector.load %arg5[%c0_42, %c0_43] : memref<1x4xf32, #tpu.memory_space<vmem>>, vector<1x4xf32>
    %40 = arith.mulf %26, %38 : vector<1x4xf32>
    %41 = arith.subf %39, %40 : vector<1x4xf32>
    %42 = vector.broadcast %38 : vector<1x4xf32> to vector<512x4xf32>
    %43 = arith.mulf %21, %42 : vector<512x4xf32>
    %44 = vector.broadcast %41 : vector<1x4xf32> to vector<512x4xf32>
    %45 = arith.addf %43, %44 : vector<512x4xf32>
    %cst_44 = arith.constant 0.000000e+00 : f32
    %46 = vector.broadcast %cst_44 : f32 to vector<512x4xf32>
    %47 = arith.cmpf oge, %45, %46 : vector<512x4xf32>
    %cst_45 = arith.constant 0.00999999977 : f32
    %48 = vector.broadcast %cst_45 : f32 to vector<512x4xf32>
    %49 = arith.mulf %48, %45 : vector<512x4xf32>
    %50 = arith.select %47, %45, %49 : vector<512x4xi1>, vector<512x4xf32>
    %51 = vector.shape_cast %50 : vector<512x4xf32> to vector<2x16x16x4xf32>
    %cst_46 = arith.constant 0.000000e+00 : f32
    %52 = vector.broadcast %cst_46 : f32 to vector<2x16x1x4xf32>
    %cst_47 = arith.constant 0.000000e+00 : f32
    %53 = vector.broadcast %cst_47 : f32 to vector<2x1x17x4xf32>
    %54 = tpu.concatenate %51, %52 in 2 : vector<2x16x16x4xf32>, vector<2x16x1x4xf32> -> vector<2x16x17x4xf32>
    %55 = tpu.concatenate %54, %53 in 1 : vector<2x16x17x4xf32>, vector<2x1x17x4xf32> -> vector<2x17x17x4xf32>
    %56 = vector.extract_strided_slice %55 {offsets = [0, 0, 0, 0], sizes = [2, 16, 16, 4], strides = [1, 1, 1, 1]} : vector<2x17x17x4xf32> to vector<2x16x16x4xf32>
    %57 = vector.shape_cast %56 : vector<2x16x16x4xf32> to vector<512x4xf32>
    %58 = vector.extract_strided_slice %55 {offsets = [0, 0, 1, 0], sizes = [2, 16, 16, 4], strides = [1, 1, 1, 1]} : vector<2x17x17x4xf32> to vector<2x16x16x4xf32>
    %59 = vector.shape_cast %58 : vector<2x16x16x4xf32> to vector<512x4xf32>
    %60 = vector.extract_strided_slice %55 {offsets = [0, 1, 0, 0], sizes = [2, 16, 16, 4], strides = [1, 1, 1, 1]} : vector<2x17x17x4xf32> to vector<2x16x16x4xf32>
    %61 = vector.shape_cast %60 : vector<2x16x16x4xf32> to vector<512x4xf32>
    %62 = vector.extract_strided_slice %55 {offsets = [0, 1, 1, 0], sizes = [2, 16, 16, 4], strides = [1, 1, 1, 1]} : vector<2x17x17x4xf32> to vector<2x16x16x4xf32>
    %63 = vector.shape_cast %62 : vector<2x16x16x4xf32> to vector<512x4xf32>
    %64 = tpu.concatenate %57, %59, %61, %63 in 1 : vector<512x4xf32>, vector<512x4xf32>, vector<512x4xf32>, vector<512x4xf32> -> vector<512x16xf32>
    %c0_48 = arith.constant 0 : index
    %c0_49 = arith.constant 0 : index
    %65 = vector.load %arg3[%c0_48, %c0_49] : memref<16x32xf32, #tpu.memory_space<vmem>>, vector<16x32xf32>
    %cst_50 = arith.constant dense<0.000000e+00> : vector<512x32xf32>
    %66 = tpu.matmul %64, %65, %cst_50 {dimension_numbers = #tpu.dot_dimension_numbers<[1], [0], [0], [1], [0, 0, 1, 1], [], []>} : vector<512x16xf32>, vector<16x32xf32>, vector<512x32xf32> -> vector<512x32xf32>
    %67 = tpu.concatenate %66, %22 in 1 : vector<512x32xf32>, vector<512x32xf32> -> vector<512x64xf32>
    %cst_51 = arith.constant dense<0.000000e+00> : vector<64xf32>
    %68 = vector.multi_reduction <add>, %67, %cst_51 [0] : vector<512x64xf32> to vector<64xf32>
    %69 = vector.shape_cast %68 : vector<64xf32> to vector<1x64xf32>
    %70 = arith.mulf %67, %67 : vector<512x64xf32>
    %cst_52 = arith.constant dense<0.000000e+00> : vector<64xf32>
    %71 = vector.multi_reduction <add>, %70, %cst_52 [0] : vector<512x64xf32> to vector<64xf32>
    %72 = vector.shape_cast %71 : vector<64xf32> to vector<1x64xf32>
    %73 = vector.extract_strided_slice %69 {offsets = [0, 0], sizes = [1, 8], strides = [1, 1]} : vector<1x64xf32> to vector<1x8xf32>
    %74 = vector.extract_strided_slice %69 {offsets = [0, 8], sizes = [1, 8], strides = [1, 1]} : vector<1x64xf32> to vector<1x8xf32>
    %75 = arith.addf %73, %74 : vector<1x8xf32>
    %76 = vector.extract_strided_slice %69 {offsets = [0, 16], sizes = [1, 8], strides = [1, 1]} : vector<1x64xf32> to vector<1x8xf32>
    %77 = arith.addf %75, %76 : vector<1x8xf32>
    %78 = vector.extract_strided_slice %69 {offsets = [0, 24], sizes = [1, 8], strides = [1, 1]} : vector<1x64xf32> to vector<1x8xf32>
    %79 = arith.addf %77, %78 : vector<1x8xf32>
    %cst_53 = arith.constant 4.8828125E-4 : f32
    %80 = vector.broadcast %cst_53 : f32 to vector<1x8xf32>
    %81 = arith.mulf %79, %80 : vector<1x8xf32>
    %82 = vector.extract_strided_slice %69 {offsets = [0, 32], sizes = [1, 8], strides = [1, 1]} : vector<1x64xf32> to vector<1x8xf32>
    %83 = vector.extract_strided_slice %69 {offsets = [0, 40], sizes = [1, 8], strides = [1, 1]} : vector<1x64xf32> to vector<1x8xf32>
    %84 = arith.addf %82, %83 : vector<1x8xf32>
    %85 = vector.extract_strided_slice %69 {offsets = [0, 48], sizes = [1, 8], strides = [1, 1]} : vector<1x64xf32> to vector<1x8xf32>
    %86 = arith.addf %84, %85 : vector<1x8xf32>
    %87 = vector.extract_strided_slice %69 {offsets = [0, 56], sizes = [1, 8], strides = [1, 1]} : vector<1x64xf32> to vector<1x8xf32>
    %88 = arith.addf %86, %87 : vector<1x8xf32>
    %cst_54 = arith.constant 4.8828125E-4 : f32
    %89 = vector.broadcast %cst_54 : f32 to vector<1x8xf32>
    %90 = arith.mulf %88, %89 : vector<1x8xf32>
    %91 = vector.extract_strided_slice %72 {offsets = [0, 0], sizes = [1, 8], strides = [1, 1]} : vector<1x64xf32> to vector<1x8xf32>
    %92 = vector.extract_strided_slice %72 {offsets = [0, 8], sizes = [1, 8], strides = [1, 1]} : vector<1x64xf32> to vector<1x8xf32>
    %93 = arith.addf %91, %92 : vector<1x8xf32>
    %94 = vector.extract_strided_slice %72 {offsets = [0, 16], sizes = [1, 8], strides = [1, 1]} : vector<1x64xf32> to vector<1x8xf32>
    %95 = arith.addf %93, %94 : vector<1x8xf32>
    %96 = vector.extract_strided_slice %72 {offsets = [0, 24], sizes = [1, 8], strides = [1, 1]} : vector<1x64xf32> to vector<1x8xf32>
    %97 = arith.addf %95, %96 : vector<1x8xf32>
    %cst_55 = arith.constant 4.8828125E-4 : f32
    %98 = vector.broadcast %cst_55 : f32 to vector<1x8xf32>
    %99 = arith.mulf %97, %98 : vector<1x8xf32>
    %100 = arith.mulf %81, %81 : vector<1x8xf32>
    %101 = arith.subf %99, %100 : vector<1x8xf32>
    %102 = vector.extract_strided_slice %72 {offsets = [0, 32], sizes = [1, 8], strides = [1, 1]} : vector<1x64xf32> to vector<1x8xf32>
    %103 = vector.extract_strided_slice %72 {offsets = [0, 40], sizes = [1, 8], strides = [1, 1]} : vector<1x64xf32> to vector<1x8xf32>
    %104 = arith.addf %102, %103 : vector<1x8xf32>
    %105 = vector.extract_strided_slice %72 {offsets = [0, 48], sizes = [1, 8], strides = [1, 1]} : vector<1x64xf32> to vector<1x8xf32>
    %106 = arith.addf %104, %105 : vector<1x8xf32>
    %107 = vector.extract_strided_slice %72 {offsets = [0, 56], sizes = [1, 8], strides = [1, 1]} : vector<1x64xf32> to vector<1x8xf32>
    %108 = arith.addf %106, %107 : vector<1x8xf32>
    %cst_56 = arith.constant 4.8828125E-4 : f32
    %109 = vector.broadcast %cst_56 : f32 to vector<1x8xf32>
    %110 = arith.mulf %108, %109 : vector<1x8xf32>
    %111 = arith.mulf %90, %90 : vector<1x8xf32>
    %112 = arith.subf %110, %111 : vector<1x8xf32>
    %c0_57 = arith.constant 0 : index
    %c0_58 = arith.constant 0 : index
    %113 = vector.load %arg6[%c0_57, %c0_58] : memref<1x8xf32, #tpu.memory_space<vmem>>, vector<1x8xf32>
    %cst_59 = arith.constant 9.99999974E-6 : f32
    %114 = vector.broadcast %cst_59 : f32 to vector<1x8xf32>
    %115 = arith.addf %101, %114 : vector<1x8xf32>
    %116 = math.rsqrt %115 : vector<1x8xf32>
    %117 = arith.mulf %113, %116 : vector<1x8xf32>
    %c0_60 = arith.constant 0 : index
    %c0_61 = arith.constant 0 : index
    %118 = vector.load %arg8[%c0_60, %c0_61] : memref<1x8xf32, #tpu.memory_space<vmem>>, vector<1x8xf32>
    %cst_62 = arith.constant 9.99999974E-6 : f32
    %119 = vector.broadcast %cst_62 : f32 to vector<1x8xf32>
    %120 = arith.addf %112, %119 : vector<1x8xf32>
    %121 = math.rsqrt %120 : vector<1x8xf32>
    %122 = arith.mulf %118, %121 : vector<1x8xf32>
    %c0_63 = arith.constant 0 : index
    %c0_64 = arith.constant 0 : index
    %123 = vector.load %arg7[%c0_63, %c0_64] : memref<1x8xf32, #tpu.memory_space<vmem>>, vector<1x8xf32>
    %124 = arith.mulf %81, %117 : vector<1x8xf32>
    %125 = arith.subf %123, %124 : vector<1x8xf32>
    %c0_65 = arith.constant 0 : index
    %c0_66 = arith.constant 0 : index
    %126 = vector.load %arg9[%c0_65, %c0_66] : memref<1x8xf32, #tpu.memory_space<vmem>>, vector<1x8xf32>
    %127 = arith.mulf %90, %122 : vector<1x8xf32>
    %128 = arith.subf %126, %127 : vector<1x8xf32>
    %129 = tpu.concatenate %117, %117, %117, %117, %122, %122, %122, %122 in 1 : vector<1x8xf32>, vector<1x8xf32>, vector<1x8xf32>, vector<1x8xf32>, vector<1x8xf32>, vector<1x8xf32>, vector<1x8xf32>, vector<1x8xf32> -> vector<1x64xf32>
    %130 = tpu.concatenate %125, %125, %125, %125, %128, %128, %128, %128 in 1 : vector<1x8xf32>, vector<1x8xf32>, vector<1x8xf32>, vector<1x8xf32>, vector<1x8xf32>, vector<1x8xf32>, vector<1x8xf32>, vector<1x8xf32> -> vector<1x64xf32>
    %131 = vector.broadcast %129 : vector<1x64xf32> to vector<512x64xf32>
    %132 = arith.mulf %67, %131 : vector<512x64xf32>
    %133 = vector.broadcast %130 : vector<1x64xf32> to vector<512x64xf32>
    %134 = arith.addf %132, %133 : vector<512x64xf32>
    %cst_67 = arith.constant 0.000000e+00 : f32
    %135 = vector.broadcast %cst_67 : f32 to vector<512x64xf32>
    %136 = arith.cmpf oge, %134, %135 : vector<512x64xf32>
    %cst_68 = arith.constant 0.00999999977 : f32
    %137 = vector.broadcast %cst_68 : f32 to vector<512x64xf32>
    %138 = arith.mulf %137, %134 : vector<512x64xf32>
    %139 = arith.select %136, %134, %138 : vector<512x64xi1>, vector<512x64xf32>
    %140 = vector.extract_strided_slice %139 {offsets = [0, 0], sizes = [512, 32], strides = [1, 1]} : vector<512x64xf32> to vector<512x32xf32>
    %141 = vector.extract_strided_slice %139 {offsets = [0, 32], sizes = [512, 32], strides = [1, 1]} : vector<512x64xf32> to vector<512x32xf32>
    %142 = arith.addf %140, %141 : vector<512x32xf32>
    %143 = vector.extract_strided_slice %142 {offsets = [0, 0], sizes = [128, 32], strides = [1, 1]} : vector<512x32xf32> to vector<128x32xf32>
    %144 = vector.extract_strided_slice %142 {offsets = [128, 0], sizes = [128, 32], strides = [1, 1]} : vector<512x32xf32> to vector<128x32xf32>
    %145 = vector.extract_strided_slice %142 {offsets = [256, 0], sizes = [128, 32], strides = [1, 1]} : vector<512x32xf32> to vector<128x32xf32>
    %146 = vector.extract_strided_slice %142 {offsets = [384, 0], sizes = [128, 32], strides = [1, 1]} : vector<512x32xf32> to vector<128x32xf32>
    %147 = tpu.concatenate %143, %144, %145, %146 in 1 : vector<128x32xf32>, vector<128x32xf32>, vector<128x32xf32>, vector<128x32xf32> -> vector<128x128xf32>
    %c0_69 = arith.constant 0 : index
    %c0_70 = arith.constant 0 : index
    %148 = vector.load %arg10[%c0_69, %c0_70] : memref<128x128xf32, #tpu.memory_space<vmem>>, vector<128x128xf32>
    tpu.vector_store %arg10[%c0_69, %c0_70], %147 {strides = array<i32>} : memref<128x128xf32, #tpu.memory_space<vmem>>, vector<128x128xf32>,
    return
  }
  func.func @transform_0(%arg0: i32) -> (i32, i32, i32, i32) {
    %c0_i32 = arith.constant 0 : i32
    %c0_i32_0 = arith.constant 0 : i32
    %c0_i32_1 = arith.constant 0 : i32
    %c0_i32_2 = arith.constant 0 : i32
    %c0_i32_3 = arith.constant 0 : i32
    return %c0_i32, %c0_i32_0, %c0_i32_1, %c0_i32_2 : i32, i32, i32, i32
  }
  func.func @transform_1(%arg0: i32) -> (i32, i32) {
    %c0_i32 = arith.constant 0 : i32
    %c0_i32_0 = arith.constant 0 : i32
    %c0_i32_1 = arith.constant 0 : i32
    return %c0_i32, %c0_i32_0 : i32, i32
  }
  func.func @transform_2(%arg0: i32) -> (i32, i32) {
    %c0_i32 = arith.constant 0 : i32
    %c0_i32_0 = arith.constant 0 : i32
    %c0_i32_1 = arith.constant 0 : i32
    return %c0_i32, %c0_i32_0 : i32, i32
  }
  func.func @transform_3(%arg0: i32) -> (i32, i32) {
    %c0_i32 = arith.constant 0 : i32
    %c0_i32_0 = arith.constant 0 : i32
    %c0_i32_1 = arith.constant 0 : i32
    return %c0_i32, %c0_i32_0 : i32, i32
  }
  func.func @transform_4(%arg0: i32) -> (i32, i32) {
    %c0_i32 = arith.constant 0 : i32
    %c0_i32_0 = arith.constant 0 : i32
    %c0_i32_1 = arith.constant 0 : i32
    return %c0_i32, %c0_i32_0 : i32, i32
  }
  func.func @transform_5(%arg0: i32) -> (i32, i32) {
    %c0_i32 = arith.constant 0 : i32
    %c0_i32_0 = arith.constant 0 : i32
    %c0_i32_1 = arith.constant 0 : i32
    return %c0_i32, %c0_i32_0 : i32, i32
  }
  func.func @transform_6(%arg0: i32) -> (i32, i32) {
    %c0_i32 = arith.constant 0 : i32
    %c0_i32_0 = arith.constant 0 : i32
    %c0_i32_1 = arith.constant 0 : i32
    return %c0_i32, %c0_i32_0 : i32, i32
  }
  func.func @transform_7(%arg0: i32) -> (i32, i32) {
    %c0_i32 = arith.constant 0 : i32
    %c0_i32_0 = arith.constant 0 : i32
    %c0_i32_1 = arith.constant 0 : i32
    return %c0_i32, %c0_i32_0 : i32, i32
  }
  func.func @transform_8(%arg0: i32) -> (i32, i32) {
    %c0_i32 = arith.constant 0 : i32
    %c0_i32_0 = arith.constant 0 : i32
    %c0_i32_1 = arith.constant 0 : i32
    return %c0_i32, %c0_i32_0 : i32, i32
  }
  func.func @transform_9(%arg0: i32) -> (i32, i32) {
    %c0_i32 = arith.constant 0 : i32
    %c0_i32_0 = arith.constant 0 : i32
    %c0_i32_1 = arith.constant 0 : i32
    return %c0_i32, %c0_i32_0 : i32, i32
  }
}

</mosaic_0001>

<llo_original>
// kernel: dec_block_forward.1
$region0: #{dec_block_forward.1}
  #allocation0 [shape = 'u32[]', space=smem, size = 0x4, offset = 0x4, fixed_abs, tag = 'smem constant byte address 0x4 - core index']
  #allocation1 [shape = 'u32[144,128]{1,0:T(1,128)}', space=vmem, size = 0x12000, scoped, tag = 'internal scratch']
  %s0 = inlined_call_operand.vmem [shape: f32[2,18,18,4], index: 0, kind: input, shape index: {}]
  %s1 = inlined_call_operand.vmem [shape: f32[36,36], index: 1, kind: input, shape index: {}]
  %s2 = inlined_call_operand.vmem [shape: f32[16,32], index: 2, kind: input, shape index: {}]
  %s3 = inlined_call_operand.vmem [shape: f32[1,4], index: 3, kind: input, shape index: {}]
  %s4 = inlined_call_operand.vmem [shape: f32[1,4], index: 4, kind: input, shape index: {}]
  %s5 = inlined_call_operand.vmem [shape: f32[1,8], index: 5, kind: input, shape index: {}]
  %s6 = inlined_call_operand.vmem [shape: f32[1,8], index: 6, kind: input, shape index: {}]
  %s7 = inlined_call_operand.vmem [shape: f32[1,8], index: 7, kind: input, shape index: {}]
  %s8 = inlined_call_operand.vmem [shape: f32[1,8], index: 8, kind: input, shape index: {}]
  %s9 = inlined_call_operand.vmem [shape: f32[128,128], index: 9, kind: output, shape index: {}]
  %s10 = sld [smem:[#allocation0]]
  $region46: #{dec_block_forward.1} parent=0
    _
  %s12 = ssub.s32 1, %s10
  %s13 = scalar_select 0, %s12, %s10
  // Predicated region
  $region2: #{dec_block_forward.1} parent=0 // pred_check
    _
  $region3: #{dec_block_forward.1} parent=0 // pred_check_branch
    %15 = sbr.rel (0) target = $region5
  $region4: #{dec_block_forward.1} parent=0 // pred_region
    _
  $region5: #{dec_block_forward.1} parent=0 // pred_fallthru
    _
  // Predicated region
  $region6: #{dec_block_forward.1} parent=0 // pred_check
    _
  $region7: #{dec_block_forward.1} parent=0 // pred_check_branch
    %17 = sbr.rel (0) target = $region9
  $region8: #{dec_block_forward.1} parent=0 // pred_region
    _
  $region9: #{dec_block_forward.1} parent=0 // pred_fallthru
    _
  // Predicated region
  $region10: #{dec_block_forward.1} parent=0 // pred_check
    _
  $region11: #{dec_block_forward.1} parent=0 // pred_check_branch
    %19 = sbr.rel (0) target = $region13
  $region12: #{dec_block_forward.1} parent=0 // pred_region
    _
  $region13: #{dec_block_forward.1} parent=0 // pred_fallthru
    _
  // Predicated region
  $region14: #{dec_block_forward.1} parent=0 // pred_check
    _
  $region15: #{dec_block_forward.1} parent=0 // pred_check_branch
    %21 = sbr.rel (0) target = $region17
  $region16: #{dec_block_forward.1} parent=0 // pred_region
    _
  $region17: #{dec_block_forward.1} parent=0 // pred_fallthru
    _
  // Predicated region
  $region18: #{dec_block_forward.1} parent=0 // pred_check
    _
  $region19: #{dec_block_forward.1} parent=0 // pred_check_branch
    %23 = sbr.rel (0) target = $region21
  $region20: #{dec_block_forward.1} parent=0 // pred_region
    _
  $region21: #{dec_block_forward.1} parent=0 // pred_fallthru
    _
  // Predicated region
  $region22: #{dec_block_forward.1} parent=0 // pred_check
    _
  $region23: #{dec_block_forward.1} parent=0 // pred_check_branch
    %25 = sbr.rel (0) target = $region25
  $region24: #{dec_block_forward.1} parent=0 // pred_region
    _
  $region25: #{dec_block_forward.1} parent=0 // pred_fallthru
    _
  // Predicated region
  $region26: #{dec_block_forward.1} parent=0 // pred_check
    _
  $region27: #{dec_block_forward.1} parent=0 // pred_check_branch
    %27 = sbr.rel (0) target = $region29
  $region28: #{dec_block_forward.1} parent=0 // pred_region
    _
  $region29: #{dec_block_forward.1} parent=0 // pred_fallthru
    _
  // Predicated region
  $region30: #{dec_block_forward.1} parent=0 // pred_check
    _
  $region31: #{dec_block_forward.1} parent=0 // pred_check_branch
    %29 = sbr.rel (0) target = $region33
  $region32: #{dec_block_forward.1} parent=0 // pred_region
    _
  $region33: #{dec_block_forward.1} parent=0 // pred_fallthru
    _
  // Predicated region
  $region34: #{dec_block_forward.1} parent=0 // pred_check
    _
  $region35: #{dec_block_forward.1} parent=0 // pred_check_branch
    %31 = sbr.rel (0) target = $region37
  $region36: #{dec_block_forward.1} parent=0 // pred_region
    _
  $region37: #{dec_block_forward.1} parent=0 // pred_fallthru
    _
  %v32 = vld [vmem:[%s0] sm:$0xff]
  %v33 = vld [vmem:[%s0 + $0x8] sm:$0xff]
  %v34 = vld [vmem:[%s0 + $0x18] sm:$0xff]
  %v35 = vld [vmem:[%s0 + $0x20] sm:$0xff]
  %v36 = vld [vmem:[%s0 + $0x30] sm:$0xff]
  %v37 = vld [vmem:[%s0 + $0x38] sm:$0xff]
  %v38 = vld [vmem:[%s0 + $0x48] sm:$0xff]
  %v39 = vld [vmem:[%s0 + $0x50] sm:$0xff]
  %v40 = vld [vmem:[%s0 + $0x60] sm:$0xff]
  %v41 = vld [vmem:[%s0 + $0x68] sm:$0xff]
  %v42 = vld [vmem:[%s0 + $0x78] sm:$0xff]
  %v43 = vld [vmem:[%s0 + $0x80] sm:$0xff]
  %v44 = vld [vmem:[%s0 + $0x90] sm:$0xff]
  %v45 = vld [vmem:[%s0 + $0x98] sm:$0xff]
  %v46 = vld [vmem:[%s0 + $0xa8] sm:$0xff]
  %v47 = vld [vmem:[%s0 + $0xb0] sm:$0xff]
  %v48 = vld [vmem:[%s0 + $0xc0] sm:$0xff]
  %v49 = vld [vmem:[%s0 + $0xc8] sm:$0xff]
  %v50 = vld [vmem:[%s0 + $0xd8] sm:$0xff]
  %v51 = vld [vmem:[%s0 + $0xe0] sm:$0xff]
  %v52 = vld [vmem:[%s0 + $0xf0] sm:$0xff]
  %v53 = vld [vmem:[%s0 + $0xf8] sm:$0xff]
  %v54 = vld [vmem:[%s0 + $0x108] sm:$0xff]
  %v55 = vld [vmem:[%s0 + $0x110] sm:$0xff]
  %v56 = vld [vmem:[%s0 + $0x120] sm:$0xff]
  %v57 = vld [vmem:[%s0 + $0x128] sm:$0xff]
  %v58 = vld [vmem:[%s0 + $0x138] sm:$0xff]
  %v59 = vld [vmem:[%s0 + $0x140] sm:$0xff]
  %v60 = vld [vmem:[%s0 + $0x150] sm:$0xff]
  %v61 = vld [vmem:[%s0 + $0x158] sm:$0xff]
  %v62 = vld [vmem:[%s0 + $0x168] sm:$0xff]
  %v63 = vld [vmem:[%s0 + $0x170] sm:$0xff]
  %v64 = vld [vmem:[%s0 + $0x1b0] sm:$0xff]
  %v65 = vld [vmem:[%s0 + $0x1b8] sm:$0xff]
  %v66 = vld [vmem:[%s0 + $0x1c8] sm:$0xff]
  %v67 = vld [vmem:[%s0 + $0x1d0] sm:$0xff]
  %v68 = vld [vmem:[%s0 + $0x1e0] sm:$0xff]
  %v69 = vld [vmem:[%s0 + $0x1e8] sm:$0xff]
  %v70 = vld [vmem:[%s0 + $0x1f8] sm:$0xff]
  %v71 = vld [vmem:[%s0 + $0x200] sm:$0xff]
  %v72 = vld [vmem:[%s0 + $0x210] sm:$0xff]
  %v73 = vld [vmem:[%s0 + $0x218] sm:$0xff]
  %v74 = vld [vmem:[%s0 + $0x228] sm:$0xff]
  %v75 = vld [vmem:[%s0 + $0x230] sm:$0xff]
  %v76 = vld [vmem:[%s0 + $0x240] sm:$0xff]
  %v77 = vld [vmem:[%s0 + $0x248] sm:$0xff]
  %v78 = vld [vmem:[%s0 + $0x258] sm:$0xff]
  %v79 = vld [vmem:[%s0 + $0x260] sm:$0xff]
  %v80 = vld [vmem:[%s0 + $0x270] sm:$0xff]
  %v81 = vld [vmem:[%s0 + $0x278] sm:$0xff]
  %v82 = vld [vmem:[%s0 + $0x288] sm:$0xff]
  %v83 = vld [vmem:[%s0 + $0x290] sm:$0xff]
  %v84 = vld [vmem:[%s0 + $0x2a0] sm:$0xff]
  %v85 = vld [vmem:[%s0 + $0x2a8] sm:$0xff]
  %v86 = vld [vmem:[%s0 + $0x2b8] sm:$0xff]
  %v87 = vld [vmem:[%s0 + $0x2c0] sm:$0xff]
  %v88 = vld [vmem:[%s0 + $0x2d0] sm:$0xff]
  %v89 = vld [vmem:[%s0 + $0x2d8] sm:$0xff]
  %v90 = vld [vmem:[%s0 + $0x2e8] sm:$0xff]
  %v91 = vld [vmem:[%s0 + $0x2f0] sm:$0xff]
  %v92 = vld [vmem:[%s0 + $0x300] sm:$0xff]
  %v93 = vld [vmem:[%s0 + $0x308] sm:$0xff]
  %v94 = vld [vmem:[%s0 + $0x318] sm:$0xff]
  %v95 = vld [vmem:[%s0 + $0x320] sm:$0xff]
  %v96 = vld [vmem:[%s0 + $0x1] sm:$0xff]
  %v97 = vld [vmem:[%s0 + $0x9] sm:$0xff]
  %v98 = vld [vmem:[%s0 + $0x19] sm:$0xff]
  %v99 = vld [vmem:[%s0 + $0x21] sm:$0xff]
  %v100 = vld [vmem:[%s0 + $0x31] sm:$0xff]
  %v101 = vld [vmem:[%s0 + $0x39] sm:$0xff]
  %v102 = vld [vmem:[%s0 + $0x49] sm:$0xff]
  %v103 = vld [vmem:[%s0 + $0x51] sm:$0xff]
  %v104 = vld [vmem:[%s0 + $0x61] sm:$0xff]
  %v105 = vld [vmem:[%s0 + $0x69] sm:$0xff]
  %v106 = vld [vmem:[%s0 + $0x79] sm:$0xff]
  %v107 = vld [vmem:[%s0 + $0x81] sm:$0xff]
  %v108 = vld [vmem:[%s0 + $0x91] sm:$0xff]
  %v109 = vld [vmem:[%s0 + $0x99] sm:$0xff]
  %v110 = vld [vmem:[%s0 + $0xa9] sm:$0xff]
  %v111 = vld [vmem:[%s0 + $0xb1] sm:$0xff]
  %v112 = vld [vmem:[%s0 + $0xc1] sm:$0xff]
  %v113 = vld [vmem:[%s0 + $0xc9] sm:$0xff]
  %v114 = vld [vmem:[%s0 + $0xd9] sm:$0xff]
  %v115 = vld [vmem:[%s0 + $0xe1] sm:$0xff]
  %v116 = vld [vmem:[%s0 + $0xf1] sm:$0xff]
  %v117 = vld [vmem:[%s0 + $0xf9] sm:$0xff]
  %v118 = vld [vmem:[%s0 + $0x109] sm:$0xff]
  %v119 = vld [vmem:[%s0 + $0x111] sm:$0xff]
  %v120 = vld [vmem:[%s0 + $0x121] sm:$0xff]
  %v121 = vld [vmem:[%s0 + $0x129] sm:$0xff]
  %v122 = vld [vmem:[%s0 + $0x139] sm:$0xff]
  %v123 = vld [vmem:[%s0 + $0x141] sm:$0xff]
  %v124 = vld [vmem:[%s0 + $0x151] sm:$0xff]
  %v125 = vld [vmem:[%s0 + $0x159] sm:$0xff]
  %v126 = vld [vmem:[%s0 + $0x169] sm:$0xff]
  %v127 = vld [vmem:[%s0 + $0x171] sm:$0xff]
  %v128 = vld [vmem:[%s0 + $0x1b1] sm:$0xff]
  %v129 = vld [vmem:[%s0 + $0x1b9] sm:$0xff]
  %v130 = vld [vmem:[%s0 + $0x1c9] sm:$0xff]
  %v131 = vld [vmem:[%s0 + $0x1d1] sm:$0xff]
  %v132 = vld [vmem:[%s0 + $0x1e1] sm:$0xff]
  %v133 = vld [vmem:[%s0 + $0x1e9] sm:$0xff]
  %v134 = vld [vmem:[%s0 + $0x1f9] sm:$0xff]
  %v135 = vld [vmem:[%s0 + $0x201] sm:$0xff]
  %v136 = vld [vmem:[%s0 + $0x211] sm:$0xff]
  %v137 = vld [vmem:[%s0 + $0x219] sm:$0xff]
  %v138 = vld [vmem:[%s0 + $0x229] sm:$0xff]
  %v139 = vld [vmem:[%s0 + $0x231] sm:$0xff]
  %v140 = vld [vmem:[%s0 + $0x241] sm:$0xff]
  %v141 = vld [vmem:[%s0 + $0x249] sm:$0xff]
  %v142 = vld [vmem:[%s0 + $0x259] sm:$0xff]
  %v143 = vld [vmem:[%s0 + $0x261] sm:$0xff]
  %v144 = vld [vmem:[%s0 + $0x271] sm:$0xff]
  %v145 = vld [vmem:[%s0 + $0x279] sm:$0xff]
  %v146 = vld [vmem:[%s0 + $0x289] sm:$0xff]
  %v147 = vld [vmem:[%s0 + $0x291] sm:$0xff]
  %v148 = vld [vmem:[%s0 + $0x2a1] sm:$0xff]
  %v149 = vld [vmem:[%s0 + $0x2a9] sm:$0xff]
  %v150 = vld [vmem:[%s0 + $0x2b9] sm:$0xff]
  %v151 = vld [vmem:[%s0 + $0x2c1] sm:$0xff]
  %v152 = vld [vmem:[%s0 + $0x2d1] sm:$0xff]
  %v153 = vld [vmem:[%s0 + $0x2d9] sm:$0xff]
  %v154 = vld [vmem:[%s0 + $0x2e9] sm:$0xff]
  %v155 = vld [vmem:[%s0 + $0x2f1] sm:$0xff]
  %v156 = vld [vmem:[%s0 + $0x301] sm:$0xff]
  %v157 = vld [vmem:[%s0 + $0x309] sm:$0xff]
  %v158 = vld [vmem:[%s0 + $0x319] sm:$0xff]
  %v159 = vld [vmem:[%s0 + $0x321] sm:$0xff]
  %v160 = vld [vmem:[%s0 + $0x2] sm:$0xff]
  %v161 = vld [vmem:[%s0 + $0xa] sm:$0xff]
  %v162 = vld [vmem:[%s0 + $0x1a] sm:$0xff]
  %v163 = vld [vmem:[%s0 + $0x22] sm:$0xff]
  %v164 = vld [vmem:[%s0 + $0x32] sm:$0xff]
  %v165 = vld [vmem:[%s0 + $0x3a] sm:$0xff]
  %v166 = vld [vmem:[%s0 + $0x4a] sm:$0xff]
  %v167 = vld [vmem:[%s0 + $0x52] sm:$0xff]
  %v168 = vld [vmem:[%s0 + $0x62] sm:$0xff]
  %v169 = vld [vmem:[%s0 + $0x6a] sm:$0xff]
  %v170 = vld [vmem:[%s0 + $0x7a] sm:$0xff]
  %v171 = vld [vmem:[%s0 + $0x82] sm:$0xff]
  %v172 = vld [vmem:[%s0 + $0x92] sm:$0xff]
  %v173 = vld [vmem:[%s0 + $0x9a] sm:$0xff]
  %v174 = vld [vmem:[%s0 + $0xaa] sm:$0xff]
  %v175 = vld [vmem:[%s0 + $0xb2] sm:$0xff]
  %v176 = vld [vmem:[%s0 + $0xc2] sm:$0xff]
  %v177 = vld [vmem:[%s0 + $0xca] sm:$0xff]
  %v178 = vld [vmem:[%s0 + $0xda] sm:$0xff]
  %v179 = vld [vmem:[%s0 + $0xe2] sm:$0xff]
  %v180 = vld [vmem:[%s0 + $0xf2] sm:$0xff]
  %v181 = vld [vmem:[%s0 + $0xfa] sm:$0xff]
  %v182 = vld [vmem:[%s0 + $0x10a] sm:$0xff]
  %v183 = vld [vmem:[%s0 + $0x112] sm:$0xff]
  %v184 = vld [vmem:[%s0 + $0x122] sm:$0xff]
  %v185 = vld [vmem:[%s0 + $0x12a] sm:$0xff]
  %v186 = vld [vmem:[%s0 + $0x13a] sm:$0xff]
  %v187 = vld [vmem:[%s0 + $0x142] sm:$0xff]
  %v188 = vld [vmem:[%s0 + $0x152] sm:$0xff]
  %v189 = vld [vmem:[%s0 + $0x15a] sm:$0xff]
  %v190 = vld [vmem:[%s0 + $0x16a] sm:$0xff]
  %v191 = vld [vmem:[%s0 + $0x172] sm:$0xff]
  %v192 = vld [vmem:[%s0 + $0x1b2] sm:$0xff]
  %v193 = vld [vmem:[%s0 + $0x1ba] sm:$0xff]
  %v194 = vld [vmem:[%s0 + $0x1ca] sm:$0xff]
  %v195 = vld [vmem:[%s0 + $0x1d2] sm:$0xff]
  %v196 = vld [vmem:[%s0 + $0x1e2] sm:$0xff]
  %v197 = vld [vmem:[%s0 + $0x1ea] sm:$0xff]
  %v198 = vld [vmem:[%s0 + $0x1fa] sm:$0xff]
  %v199 = vld [vmem:[%s0 + $0x202] sm:$0xff]
  %v200 = vld [vmem:[%s0 + $0x212] sm:$0xff]
  %v201 = vld [vmem:[%s0 + $0x21a] sm:$0xff]
  %v202 = vld [vmem:[%s0 + $0x22a] sm:$0xff]
  %v203 = vld [vmem:[%s0 + $0x232] sm:$0xff]
  %v204 = vld [vmem:[%s0 + $0x242] sm:$0xff]
  %v205 = vld [vmem:[%s0 + $0x24a] sm:$0xff]
  %v206 = vld [vmem:[%s0 + $0x25a] sm:$0xff]
  %v207 = vld [vmem:[%s0 + $0x262] sm:$0xff]
  %v208 = vld [vmem:[%s0 + $0x272] sm:$0xff]
  %v209 = vld [vmem:[%s0 + $0x27a] sm:$0xff]
  %v210 = vld [vmem:[%s0 + $0x28a] sm:$0xff]
  %v211 = vld [vmem:[%s0 + $0x292] sm:$0xff]
  %v212 = vld [vmem:[%s0 + $0x2a2] sm:$0xff]
  %v213 = vld [vmem:[%s0 + $0x2aa] sm:$0xff]
  %v214 = vld [vmem:[%s0 + $0x2ba] sm:$0xff]
  %v215 = vld [vmem:[%s0 + $0x2c2] sm:$0xff]
  %v216 = vld [vmem:[%s0 + $0x2d2] sm:$0xff]
  %v217 = vld [vmem:[%s0 + $0x2da] sm:$0xff]
  %v218 = vld [vmem:[%s0 + $0x2ea] sm:$0xff]
  %v219 = vld [vmem:[%s0 + $0x2f2] sm:$0xff]
  %v220 = vld [vmem:[%s0 + $0x302] sm:$0xff]
  %v221 = vld [vmem:[%s0 + $0x30a] sm:$0xff]
  %v222 = vld [vmem:[%s0 + $0x31a] sm:$0xff]
  %v223 = vld [vmem:[%s0 + $0x322] sm:$0xff]
  %s224 = scalar_lea.vmem %s0, 24
  %v225 = vld [vmem:[%s224] sm:$0xff]
  %v226 = vld [vmem:[%s224 + $0x8] sm:$0xff]
  %v227 = vld [vmem:[%s224 + $0x18] sm:$0xff]
  %v228 = vld [vmem:[%s224 + $0x20] sm:$0xff]
  %v229 = vld [vmem:[%s224 + $0x30] sm:$0xff]
  %v230 = vld [vmem:[%s224 + $0x38] sm:$0xff]
  %v231 = vld [vmem:[%s224 + $0x48] sm:$0xff]
  %v232 = vld [vmem:[%s224 + $0x50] sm:$0xff]
  %v233 = vld [vmem:[%s224 + $0x60] sm:$0xff]
  %v234 = vld [vmem:[%s224 + $0x68] sm:$0xff]
  %v235 = vld [vmem:[%s224 + $0x78] sm:$0xff]
  %v236 = vld [vmem:[%s224 + $0x80] sm:$0xff]
  %v237 = vld [vmem:[%s224 + $0x90] sm:$0xff]
  %v238 = vld [vmem:[%s224 + $0x98] sm:$0xff]
  %v239 = vld [vmem:[%s224 + $0xa8] sm:$0xff]
  %v240 = vld [vmem:[%s224 + $0xb0] sm:$0xff]
  %v241 = vld [vmem:[%s224 + $0xc0] sm:$0xff]
  %v242 = vld [vmem:[%s224 + $0xc8] sm:$0xff]
  %v243 = vld [vmem:[%s224 + $0xd8] sm:$0xff]
  %v244 = vld [vmem:[%s224 + $0xe0] sm:$0xff]
  %v245 = vld [vmem:[%s224 + $0xf0] sm:$0xff]
  %v246 = vld [vmem:[%s224 + $0xf8] sm:$0xff]
  %v247 = vld [vmem:[%s224 + $0x108] sm:$0xff]
  %v248 = vld [vmem:[%s224 + $0x110] sm:$0xff]
  %v249 = vld [vmem:[%s224 + $0x120] sm:$0xff]
  %v250 = vld [vmem:[%s224 + $0x128] sm:$0xff]
  %v251 = vld [vmem:[%s224 + $0x138] sm:$0xff]
  %v252 = vld [vmem:[%s224 + $0x140] sm:$0xff]
  %v253 = vld [vmem:[%s224 + $0x150] sm:$0xff]
  %v254 = vld [vmem:[%s224 + $0x158] sm:$0xff]
  %v255 = vld [vmem:[%s224 + $0x168] sm:$0xff]
  %v256 = vld [vmem:[%s224 + $0x170] sm:$0xff]
  %v257 = vld [vmem:[%s224 + $0x1b0] sm:$0xff]
  %v258 = vld [vmem:[%s224 + $0x1b8] sm:$0xff]
  %v259 = vld [vmem:[%s224 + $0x1c8] sm:$0xff]
  %v260 = vld [vmem:[%s224 + $0x1d0] sm:$0xff]
  %v261 = vld [vmem:[%s224 + $0x1e0] sm:$0xff]
  %v262 = vld [vmem:[%s224 + $0x1e8] sm:$0xff]
  %v263 = vld [vmem:[%s224 + $0x1f8] sm:$0xff]
  %v264 = vld [vmem:[%s224 + $0x200] sm:$0xff]
  %v265 = vld [vmem:[%s224 + $0x210] sm:$0xff]
  %v266 = vld [vmem:[%s224 + $0x218] sm:$0xff]
  %v267 = vld [vmem:[%s224 + $0x228] sm:$0xff]
  %v268 = vld [vmem:[%s224 + $0x230] sm:$0xff]
  %v269 = vld [vmem:[%s224 + $0x240] sm:$0xff]
  %v270 = vld [vmem:[%s224 + $0x248] sm:$0xff]
  %v271 = vld [vmem:[%s224 + $0x258] sm:$0xff]
  %v272 = vld [vmem:[%s224 + $0x260] sm:$0xff]
  %v273 = vld [vmem:[%s224 + $0x270] sm:$0xff]
  %v274 = vld [vmem:[%s224 + $0x278] sm:$0xff]
  %v275 = vld [vmem:[%s224 + $0x288] sm:$0xff]
  %v276 = vld [vmem:[%s224 + $0x290] sm:$0xff]
  %v277 = vld [vmem:[%s224 + $0x2a0] sm:$0xff]
  %v278 = vld [vmem:[%s224 + $0x2a8] sm:$0xff]
  %v279 = vld [vmem:[%s224 + $0x2b8] sm:$0xff]
  %v280 = vld [vmem:[%s224 + $0x2c0] sm:$0xff]
  %v281 = vld [vmem:[%s224 + $0x2d0] sm:$0xff]
  %v282 = vld [vmem:[%s224 + $0x2d8] sm:$0xff]
  %v283 = vld [vmem:[%s224 + $0x2e8] sm:$0xff]
  %v284 = vld [vmem:[%s224 + $0x2f0] sm:$0xff]
  %v285 = vld [vmem:[%s224 + $0x300] sm:$0xff]
  %v286 = vld [vmem:[%s224 + $0x308] sm:$0xff]
  %v287 = vld [vmem:[%s224 + $0x318] sm:$0xff]
  %v288 = vld [vmem:[%s224 + $0x320] sm:$0xff]
  %v289 = vld [vmem:[%s224 + $0x1] sm:$0xff]
  %v290 = vld [vmem:[%s224 + $0x9] sm:$0xff]
  %v291 = vld [vmem:[%s224 + $0x19] sm:$0xff]
  %v292 = vld [vmem:[%s224 + $0x21] sm:$0xff]
  %v293 = vld [vmem:[%s224 + $0x31] sm:$0xff]
  %v294 = vld [vmem:[%s224 + $0x39] sm:$0xff]
  %v295 = vld [vmem:[%s224 + $0x49] sm:$0xff]
  %v296 = vld [vmem:[%s224 + $0x51] sm:$0xff]
  %v297 = vld [vmem:[%s224 + $0x61] sm:$0xff]
  %v298 = vld [vmem:[%s224 + $0x69] sm:$0xff]
  %v299 = vld [vmem:[%s224 + $0x79] sm:$0xff]
  %v300 = vld [vmem:[%s224 + $0x81] sm:$0xff]
  %v301 = vld [vmem:[%s224 + $0x91] sm:$0xff]
  %v302 = vld [vmem:[%s224 + $0x99] sm:$0xff]
  %v303 = vld [vmem:[%s224 + $0xa9] sm:$0xff]
  %v304 = vld [vmem:[%s224 + $0xb1] sm:$0xff]
  %v305 = vld [vmem:[%s224 + $0xc1] sm:$0xff]
  %v306 = vld [vmem:[%s224 + $0xc9] sm:$0xff]
  %v307 = vld [vmem:[%s224 + $0xd9] sm:$0xff]
  %v308 = vld [vmem:[%s224 + $0xe1] sm:$0xff]
  %v309 = vld [vmem:[%s224 + $0xf1] sm:$0xff]
  %v310 = vld [vmem:[%s224 + $0xf9] sm:$0xff]
  %v311 = vld [vmem:[%s224 + $0x109] sm:$0xff]
  %v312 = vld [vmem:[%s224 + $0x111] sm:$0xff]
  %v313 = vld [vmem:[%s224 + $0x121] sm:$0xff]
  %v314 = vld [vmem:[%s224 + $0x129] sm:$0xff]
  %v315 = vld [vmem:[%s224 + $0x139] sm:$0xff]
  %v316 = vld [vmem:[%s224 + $0x141] sm:$0xff]
  %v317 = vld [vmem:[%s224 + $0x151] sm:$0xff]
  %v318 = vld [vmem:[%s224 + $0x159] sm:$0xff]
  %v319 = vld [vmem:[%s224 + $0x169] sm:$0xff]
  %v320 = vld [vmem:[%s224 + $0x171] sm:$0xff]
  %v321 = vld [vmem:[%s224 + $0x1b1] sm:$0xff]
  %v322 = vld [vmem:[%s224 + $0x1b9] sm:$0xff]
  %v323 = vld [vmem:[%s224 + $0x1c9] sm:$0xff]
  %v324 = vld [vmem:[%s224 + $0x1d1] sm:$0xff]
  %v325 = vld [vmem:[%s224 + $0x1e1] sm:$0xff]
  %v326 = vld [vmem:[%s224 + $0x1e9] sm:$0xff]
  %v327 = vld [vmem:[%s224 + $0x1f9] sm:$0xff]
  %v328 = vld [vmem:[%s224 + $0x201] sm:$0xff]
  %v329 = vld [vmem:[%s224 + $0x211] sm:$0xff]
  %v330 = vld [vmem:[%s224 + $0x219] sm:$0xff]
  %v331 = vld [vmem:[%s224 + $0x229] sm:$0xff]
  %v332 = vld [vmem:[%s224 + $0x231] sm:$0xff]
  %v333 = vld [vmem:[%s224 + $0x241] sm:$0xff]
  %v334 = vld [vmem:[%s224 + $0x249] sm:$0xff]
  %v335 = vld [vmem:[%s224 + $0x259] sm:$0xff]
  %v336 = vld [vmem:[%s224 + $0x261] sm:$0xff]
  %v337 = vld [vmem:[%s224 + $0x271] sm:$0xff]
  %v338 = vld [vmem:[%s224 + $0x279] sm:$0xff]
  %v339 = vld [vmem:[%s224 + $0x289] sm:$0xff]
  %v340 = vld [vmem:[%s224 + $0x291] sm:$0xff]
  %v341 = vld [vmem:[%s224 + $0x2a1] sm:$0xff]
  %v342 = vld [vmem:[%s224 + $0x2a9] sm:$0xff]
  %v343 = vld [vmem:[%s224 + $0x2b9] sm:$0xff]
  %v344 = vld [vmem:[%s224 + $0x2c1] sm:$0xff]
  %v345 = vld [vmem:[%s224 + $0x2d1] sm:$0xff]
  %v346 = vld [vmem:[%s224 + $0x2d9] sm:$0xff]
  %v347 = vld [vmem:[%s224 + $0x2e9] sm:$0xff]
  %v348 = vld [vmem:[%s224 + $0x2f1] sm:$0xff]
  %v349 = vld [vmem:[%s224 + $0x301] sm:$0xff]
  %v350 = vld [vmem:[%s224 + $0x309] sm:$0xff]
  %v351 = vld [vmem:[%s224 + $0x319] sm:$0xff]
  %v352 = vld [vmem:[%s224 + $0x321] sm:$0xff]
  %v353 = vld [vmem:[%s224 + $0x2] sm:$0xff]
  %v354 = vld [vmem:[%s224 + $0xa] sm:$0xff]
  %v355 = vld [vmem:[%s224 + $0x1a] sm:$0xff]
  %v356 = vld [vmem:[%s224 + $0x22] sm:$0xff]
  %v357 = vld [vmem:[%s224 + $0x32] sm:$0xff]
  %v358 = vld [vmem:[%s224 + $0x3a] sm:$0xff]
  %v359 = vld [vmem:[%s224 + $0x4a] sm:$0xff]
  %v360 = vld [vmem:[%s224 + $0x52] sm:$0xff]
  %v361 = vld [vmem:[%s224 + $0x62] sm:$0xff]
  %v362 = vld [vmem:[%s224 + $0x6a] sm:$0xff]
  %v363 = vld [vmem:[%s224 + $0x7a] sm:$0xff]
  %v364 = vld [vmem:[%s224 + $0x82] sm:$0xff]
  %v365 = vld [vmem:[%s224 + $0x92] sm:$0xff]
  %v366 = vld [vmem:[%s224 + $0x9a] sm:$0xff]
  %v367 = vld [vmem:[%s224 + $0xaa] sm:$0xff]
  %v368 = vld [vmem:[%s224 + $0xb2] sm:$0xff]
  %v369 = vld [vmem:[%s224 + $0xc2] sm:$0xff]
  %v370 = vld [vmem:[%s224 + $0xca] sm:$0xff]
  %v371 = vld [vmem:[%s224 + $0xda] sm:$0xff]
  %v372 = vld [vmem:[%s224 + $0xe2] sm:$0xff]
  %v373 = vld [vmem:[%s224 + $0xf2] sm:$0xff]
  %v374 = vld [vmem:[%s224 + $0xfa] sm:$0xff]
  %v375 = vld [vmem:[%s224 + $0x10a] sm:$0xff]
  %v376 = vld [vmem:[%s224 + $0x112] sm:$0xff]
  %v377 = vld [vmem:[%s224 + $0x122] sm:$0xff]
  %v378 = vld [vmem:[%s224 + $0x12a] sm:$0xff]
  %v379 = vld [vmem:[%s224 + $0x13a] sm:$0xff]
  %v380 = vld [vmem:[%s224 + $0x142] sm:$0xff]
  %v381 = vld [vmem:[%s224 + $0x152] sm:$0xff]
  %v382 = vld [vmem:[%s224 + $0x15a] sm:$0xff]
  %v383 = vld [vmem:[%s224 + $0x16a] sm:$0xff]
  %v384 = vld [vmem:[%s224 + $0x172] sm:$0xff]
  %v385 = vld [vmem:[%s224 + $0x1b2] sm:$0xff]
  %v386 = vld [vmem:[%s224 + $0x1ba] sm:$0xff]
  %v387 = vld [vmem:[%s224 + $0x1ca] sm:$0xff]
  %v388 = vld [vmem:[%s224 + $0x1d2] sm:$0xff]
  %v389 = vld [vmem:[%s224 + $0x1e2] sm:$0xff]
  %v390 = vld [vmem:[%s224 + $0x1ea] sm:$0xff]
  %v391 = vld [vmem:[%s224 + $0x1fa] sm:$0xff]
  %v392 = vld [vmem:[%s224 + $0x202] sm:$0xff]
  %v393 = vld [vmem:[%s224 + $0x212] sm:$0xff]
  %v394 = vld [vmem:[%s224 + $0x21a] sm:$0xff]
  %v395 = vld [vmem:[%s224 + $0x22a] sm:$0xff]
  %v396 = vld [vmem:[%s224 + $0x232] sm:$0xff]
  %v397 = vld [vmem:[%s224 + $0x242] sm:$0xff]
  %v398 = vld [vmem:[%s224 + $0x24a] sm:$0xff]
  %v399 = vld [vmem:[%s224 + $0x25a] sm:$0xff]
  %v400 = vld [vmem:[%s224 + $0x262] sm:$0xff]
  %v401 = vld [vmem:[%s224 + $0x272] sm:$0xff]
  %v402 = vld [vmem:[%s224 + $0x27a] sm:$0xff]
  %v403 = vld [vmem:[%s224 + $0x28a] sm:$0xff]
  %v404 = vld [vmem:[%s224 + $0x292] sm:$0xff]
  %v405 = vld [vmem:[%s224 + $0x2a2] sm:$0xff]
  %v406 = vld [vmem:[%s224 + $0x2aa] sm:$0xff]
  %v407 = vld [vmem:[%s224 + $0x2ba] sm:$0xff]
  %v408 = vld [vmem:[%s224 + $0x2c2] sm:$0xff]
  %v409 = vld [vmem:[%s224 + $0x2d2] sm:$0xff]
  %v410 = vld [vmem:[%s224 + $0x2da] sm:$0xff]
  %v411 = vld [vmem:[%s224 + $0x2ea] sm:$0xff]
  %v412 = vld [vmem:[%s224 + $0x2f2] sm:$0xff]
  %v413 = vld [vmem:[%s224 + $0x302] sm:$0xff]
  %v414 = vld [vmem:[%s224 + $0x30a] sm:$0xff]
  %v415 = vld [vmem:[%s224 + $0x31a] sm:$0xff]
  %v416 = vld [vmem:[%s224 + $0x322] sm:$0xff]
  %s417 = scalar_lea.vmem %s0, 48
  %v418 = vld [vmem:[%s417] sm:$0xff]
  %v419 = vld [vmem:[%s417 + $0x8] sm:$0xff]
  %v420 = vld [vmem:[%s417 + $0x18] sm:$0xff]
  %v421 = vld [vmem:[%s417 + $0x20] sm:$0xff]
  %v422 = vld [vmem:[%s417 + $0x30] sm:$0xff]
  %v423 = vld [vmem:[%s417 + $0x38] sm:$0xff]
  %v424 = vld [vmem:[%s417 + $0x48] sm:$0xff]
  %v425 = vld [vmem:[%s417 + $0x50] sm:$0xff]
  %v426 = vld [vmem:[%s417 + $0x60] sm:$0xff]
  %v427 = vld [vmem:[%s417 + $0x68] sm:$0xff]
  %v428 = vld [vmem:[%s417 + $0x78] sm:$0xff]
  %v429 = vld [vmem:[%s417 + $0x80] sm:$0xff]
  %v430 = vld [vmem:[%s417 + $0x90] sm:$0xff]
  %v431 = vld [vmem:[%s417 + $0x98] sm:$0xff]
  %v432 = vld [vmem:[%s417 + $0xa8] sm:$0xff]
  %v433 = vld [vmem:[%s417 + $0xb0] sm:$0xff]
  %v434 = vld [vmem:[%s417 + $0xc0] sm:$0xff]
  %v435 = vld [vmem:[%s417 + $0xc8] sm:$0xff]
  %v436 = vld [vmem:[%s417 + $0xd8] sm:$0xff]
  %v437 = vld [vmem:[%s417 + $0xe0] sm:$0xff]
  %v438 = vld [vmem:[%s417 + $0xf0] sm:$0xff]
  %v439 = vld [vmem:[%s417 + $0xf8] sm:$0xff]
  %v440 = vld [vmem:[%s417 + $0x108] sm:$0xff]
  %v441 = vld [vmem:[%s417 + $0x110] sm:$0xff]
  %v442 = vld [vmem:[%s417 + $0x120] sm:$0xff]
  %v443 = vld [vmem:[%s417 + $0x128] sm:$0xff]
  %v444 = vld [vmem:[%s417 + $0x138] sm:$0xff]
  %v445 = vld [vmem:[%s417 + $0x140] sm:$0xff]
  %v446 = vld [vmem:[%s417 + $0x150] sm:$0xff]
  %v447 = vld [vmem:[%s417 + $0x158] sm:$0xff]
  %v448 = vld [vmem:[%s417 + $0x168] sm:$0xff]
  %v449 = vld [vmem:[%s417 + $0x170] sm:$0xff]
  %v450 = vld [vmem:[%s417 + $0x1b0] sm:$0xff]
  %v451 = vld [vmem:[%s417 + $0x1b8] sm:$0xff]
  %v452 = vld [vmem:[%s417 + $0x1c8] sm:$0xff]
  %v453 = vld [vmem:[%s417 + $0x1d0] sm:$0xff]
  %v454 = vld [vmem:[%s417 + $0x1e0] sm:$0xff]
  %v455 = vld [vmem:[%s417 + $0x1e8] sm:$0xff]
  %v456 = vld [vmem:[%s417 + $0x1f8] sm:$0xff]
  %v457 = vld [vmem:[%s417 + $0x200] sm:$0xff]
  %v458 = vld [vmem:[%s417 + $0x210] sm:$0xff]
  %v459 = vld [vmem:[%s417 + $0x218] sm:$0xff]
  %v460 = vld [vmem:[%s417 + $0x228] sm:$0xff]
  %v461 = vld [vmem:[%s417 + $0x230] sm:$0xff]
  %v462 = vld [vmem:[%s417 + $0x240] sm:$0xff]
  %v463 = vld [vmem:[%s417 + $0x248] sm:$0xff]
  %v464 = vld [vmem:[%s417 + $0x258] sm:$0xff]
  %v465 = vld [vmem:[%s417 + $0x260] sm:$0xff]
  %v466 = vld [vmem:[%s417 + $0x270] sm:$0xff]
  %v467 = vld [vmem:[%s417 + $0x278] sm:$0xff]
  %v468 = vld [vmem:[%s417 + $0x288] sm:$0xff]
  %v469 = vld [vmem:[%s417 + $0x290] sm:$0xff]
  %v470 = vld [vmem:[%s417 + $0x2a0] sm:$0xff]
  %v471 = vld [vmem:[%s417 + $0x2a8] sm:$0xff]
  %v472 = vld [vmem:[%s417 + $0x2b8] sm:$0xff]
  %v473 = vld [vmem:[%s417 + $0x2c0] sm:$0xff]
  %v474 = vld [vmem:[%s417 + $0x2d0] sm:$0xff]
  %v475 = vld [vmem:[%s417 + $0x2d8] sm:$0xff]
  %v476 = vld [vmem:[%s417 + $0x2e8] sm:$0xff]
  %v477 = vld [vmem:[%s417 + $0x2f0] sm:$0xff]
  %v478 = vld [vmem:[%s417 + $0x300] sm:$0xff]
  %v479 = vld [vmem:[%s417 + $0x308] sm:$0xff]
  %v480 = vld [vmem:[%s417 + $0x318] sm:$0xff]
  %v481 = vld [vmem:[%s417 + $0x320] sm:$0xff]
  %v482 = vld [vmem:[%s417 + $0x1] sm:$0xff]
  %v483 = vld [vmem:[%s417 + $0x9] sm:$0xff]
  %v484 = vld [vmem:[%s417 + $0x19] sm:$0xff]
  %v485 = vld [vmem:[%s417 + $0x21] sm:$0xff]
  %v486 = vld [vmem:[%s417 + $0x31] sm:$0xff]
  %v487 = vld [vmem:[%s417 + $0x39] sm:$0xff]
  %v488 = vld [vmem:[%s417 + $0x49] sm:$0xff]
  %v489 = vld [vmem:[%s417 + $0x51] sm:$0xff]
  %v490 = vld [vmem:[%s417 + $0x61] sm:$0xff]
  %v491 = vld [vmem:[%s417 + $0x69] sm:$0xff]
  %v492 = vld [vmem:[%s417 + $0x79] sm:$0xff]
  %v493 = vld [vmem:[%s417 + $0x81] sm:$0xff]
  %v494 = vld [vmem:[%s417 + $0x91] sm:$0xff]
  %v495 = vld [vmem:[%s417 + $0x99] sm:$0xff]
  %v496 = vld [vmem:[%s417 + $0xa9] sm:$0xff]
  %v497 = vld [vmem:[%s417 + $0xb1] sm:$0xff]
  %v498 = vld [vmem:[%s417 + $0xc1] sm:$0xff]
  %v499 = vld [vmem:[%s417 + $0xc9] sm:$0xff]
  %v500 = vld [vmem:[%s417 + $0xd9] sm:$0xff]
  %v501 = vld [vmem:[%s417 + $0xe1] sm:$0xff]
  %v502 = vld [vmem:[%s417 + $0xf1] sm:$0xff]
  %v503 = vld [vmem:[%s417 + $0xf9] sm:$0xff]
  %v504 = vld [vmem:[%s417 + $0x109] sm:$0xff]
  %v505 = vld [vmem:[%s417 + $0x111] sm:$0xff]
  %v506 = vld [vmem:[%s417 + $0x121] sm:$0xff]
  %v507 = vld [vmem:[%s417 + $0x129] sm:$0xff]
  %v508 = vld [vmem:[%s417 + $0x139] sm:$0xff]
  %v509 = vld [vmem:[%s417 + $0x141] sm:$0xff]
  %v510 = vld [vmem:[%s417 + $0x151] sm:$0xff]
  %v511 = vld [vmem:[%s417 + $0x159] sm:$0xff]
  %v512 = vld [vmem:[%s417 + $0x169] sm:$0xff]
  %v513 = vld [vmem:[%s417 + $0x171] sm:$0xff]
  %v514 = vld [vmem:[%s417 + $0x1b1] sm:$0xff]
  %v515 = vld [vmem:[%s417 + $0x1b9] sm:$0xff]
  %v516 = vld [vmem:[%s417 + $0x1c9] sm:$0xff]
  %v517 = vld [vmem:[%s417 + $0x1d1] sm:$0xff]
  %v518 = vld [vmem:[%s417 + $0x1e1] sm:$0xff]
  %v519 = vld [vmem:[%s417 + $0x1e9] sm:$0xff]
  %v520 = vld [vmem:[%s417 + $0x1f9] sm:$0xff]
  %v521 = vld [vmem:[%s417 + $0x201] sm:$0xff]
  %v522 = vld [vmem:[%s417 + $0x211] sm:$0xff]
  %v523 = vld [vmem:[%s417 + $0x219] sm:$0xff]
  %v524 = vld [vmem:[%s417 + $0x229] sm:$0xff]
  %v525 = vld [vmem:[%s417 + $0x231] sm:$0xff]
  %v526 = vld [vmem:[%s417 + $0x241] sm:$0xff]
  %v527 = vld [vmem:[%s417 + $0x249] sm:$0xff]
  %v528 = vld [vmem:[%s417 + $0x259] sm:$0xff]
  %v529 = vld [vmem:[%s417 + $0x261] sm:$0xff]
  %v530 = vld [vmem:[%s417 + $0x271] sm:$0xff]
  %v531 = vld [vmem:[%s417 + $0x279] sm:$0xff]
  %v532 = vld [vmem:[%s417 + $0x289] sm:$0xff]
  %v533 = vld [vmem:[%s417 + $0x291] sm:$0xff]
  %v534 = vld [vmem:[%s417 + $0x2a1] sm:$0xff]
  %v535 = vld [vmem:[%s417 + $0x2a9] sm:$0xff]
  %v536 = vld [vmem:[%s417 + $0x2b9] sm:$0xff]
  %v537 = vld [vmem:[%s417 + $0x2c1] sm:$0xff]
  %v538 = vld [vmem:[%s417 + $0x2d1] sm:$0xff]
  %v539 = vld [vmem:[%s417 + $0x2d9] sm:$0xff]
  %v540 = vld [vmem:[%s417 + $0x2e9] sm:$0xff]
  %v541 = vld [vmem:[%s417 + $0x2f1] sm:$0xff]
  %v542 = vld [vmem:[%s417 + $0x301] sm:$0xff]
  %v543 = vld [vmem:[%s417 + $0x309] sm:$0xff]
  %v544 = vld [vmem:[%s417 + $0x319] sm:$0xff]
  %v545 = vld [vmem:[%s417 + $0x321] sm:$0xff]
  %v546 = vld [vmem:[%s417 + $0x2] sm:$0xff]
  %v547 = vld [vmem:[%s417 + $0xa] sm:$0xff]
  %v548 = vld [vmem:[%s417 + $0x1a] sm:$0xff]
  %v549 = vld [vmem:[%s417 + $0x22] sm:$0xff]
  %v550 = vld [vmem:[%s417 + $0x32] sm:$0xff]
  %v551 = vld [vmem:[%s417 + $0x3a] sm:$0xff]
  %v552 = vld [vmem:[%s417 + $0x4a] sm:$0xff]
  %v553 = vld [vmem:[%s417 + $0x52] sm:$0xff]
  %v554 = vld [vmem:[%s417 + $0x62] sm:$0xff]
  %v555 = vld [vmem:[%s417 + $0x6a] sm:$0xff]
  %v556 = vld [vmem:[%s417 + $0x7a] sm:$0xff]
  %v557 = vld [vmem:[%s417 + $0x82] sm:$0xff]
  %v558 = vld [vmem:[%s417 + $0x92] sm:$0xff]
  %v559 = vld [vmem:[%s417 + $0x9a] sm:$0xff]
  %v560 = vld [vmem:[%s417 + $0xaa] sm:$0xff]
  %v561 = vld [vmem:[%s417 + $0xb2] sm:$0xff]
  %v562 = vld [vmem:[%s417 + $0xc2] sm:$0xff]
  %v563 = vld [vmem:[%s417 + $0xca] sm:$0xff]
  %v564 = vld [vmem:[%s417 + $0xda] sm:$0xff]
  %v565 = vld [vmem:[%s417 + $0xe2] sm:$0xff]
  %v566 = vld [vmem:[%s417 + $0xf2] sm:$0xff]
  %v567 = vld [vmem:[%s417 + $0xfa] sm:$0xff]
  %v568 = vld [vmem:[%s417 + $0x10a] sm:$0xff]
  %v569 = vld [vmem:[%s417 + $0x112] sm:$0xff]
  %v570 = vld [vmem:[%s417 + $0x122] sm:$0xff]
  %v571 = vld [vmem:[%s417 + $0x12a] sm:$0xff]
  %v572 = vld [vmem:[%s417 + $0x13a] sm:$0xff]
  %v573 = vld [vmem:[%s417 + $0x142] sm:$0xff]
  %v574 = vld [vmem:[%s417 + $0x152] sm:$0xff]
  %v575 = vld [vmem:[%s417 + $0x15a] sm:$0xff]
  %v576 = vld [vmem:[%s417 + $0x16a] sm:$0xff]
  %v577 = vld [vmem:[%s417 + $0x172] sm:$0xff]
  %v578 = vld [vmem:[%s417 + $0x1b2] sm:$0xff]
  %v579 = vld [vmem:[%s417 + $0x1ba] sm:$0xff]
  %v580 = vld [vmem:[%s417 + $0x1ca] sm:$0xff]
  %v581 = vld [vmem:[%s417 + $0x1d2] sm:$0xff]
  %v582 = vld [vmem:[%s417 + $0x1e2] sm:$0xff]
  %v583 = vld [vmem:[%s417 + $0x1ea] sm:$0xff]
  %v584 = vld [vmem:[%s417 + $0x1fa] sm:$0xff]
  %v585 = vld [vmem:[%s417 + $0x202] sm:$0xff]
  %v586 = vld [vmem:[%s417 + $0x212] sm:$0xff]
  %v587 = vld [vmem:[%s417 + $0x21a] sm:$0xff]
  %v588 = vld [vmem:[%s417 + $0x22a] sm:$0xff]
  %v589 = vld [vmem:[%s417 + $0x232] sm:$0xff]
  %v590 = vld [vmem:[%s417 + $0x242] sm:$0xff]
  %v591 = vld [vmem:[%s417 + $0x24a] sm:$0xff]
  %v592 = vld [vmem:[%s417 + $0x25a] sm:$0xff]
  %v593 = vld [vmem:[%s417 + $0x262] sm:$0xff]
  %v594 = vld [vmem:[%s417 + $0x272] sm:$0xff]
  %v595 = vld [vmem:[%s417 + $0x27a] sm:$0xff]
  %v596 = vld [vmem:[%s417 + $0x28a] sm:$0xff]
  %v597 = vld [vmem:[%s417 + $0x292] sm:$0xff]
  %v598 = vld [vmem:[%s417 + $0x2a2] sm:$0xff]
  %v599 = vld [vmem:[%s417 + $0x2aa] sm:$0xff]
  %v600 = vld [vmem:[%s417 + $0x2ba] sm:$0xff]
  %v601 = vld [vmem:[%s417 + $0x2c2] sm:$0xff]
  %v602 = vld [vmem:[%s417 + $0x2d2] sm:$0xff]
  %v603 = vld [vmem:[%s417 + $0x2da] sm:$0xff]
  %v604 = vld [vmem:[%s417 + $0x2ea] sm:$0xff]
  %v605 = vld [vmem:[%s417 + $0x2f2] sm:$0xff]
  %v606 = vld [vmem:[%s417 + $0x302] sm:$0xff]
  %v607 = vld [vmem:[%s417 + $0x30a] sm:$0xff]
  %v608 = vld [vmem:[%s417 + $0x31a] sm:$0xff]
  %v609 = vld [vmem:[%s417 + $0x322] sm:$0xff]
  %674 = vrot.lane.b32.xlu0 %v96, 4
  %v675 = vpop.permute.xlu0 %674
  %676 = vrot.lane.b32.xlu0 %v97, 4
  %v677 = vpop.permute.xlu0 %676
  %678 = vrot.lane.b32.xlu0 %v98, 4
  %v679 = vpop.permute.xlu0 %678
  %680 = vrot.lane.b32.xlu0 %v99, 4
  %v681 = vpop.permute.xlu0 %680
  %682 = vrot.lane.b32.xlu0 %v100, 4
  %v683 = vpop.permute.xlu0 %682
  %684 = vrot.lane.b32.xlu0 %v101, 4
  %v685 = vpop.permute.xlu0 %684
  %686 = vrot.lane.b32.xlu0 %v102, 4
  %v687 = vpop.permute.xlu0 %686
  %688 = vrot.lane.b32.xlu0 %v103, 4
  %v689 = vpop.permute.xlu0 %688
  %690 = vrot.lane.b32.xlu0 %v104, 4
  %v691 = vpop.permute.xlu0 %690
  %692 = vrot.lane.b32.xlu0 %v105, 4
  %v693 = vpop.permute.xlu0 %692
  %694 = vrot.lane.b32.xlu0 %v106, 4
  %v695 = vpop.permute.xlu0 %694
  %696 = vrot.lane.b32.xlu0 %v107, 4
  %v697 = vpop.permute.xlu0 %696
  %698 = vrot.lane.b32.xlu0 %v108, 4
  %v699 = vpop.permute.xlu0 %698
  %700 = vrot.lane.b32.xlu0 %v109, 4
  %v701 = vpop.permute.xlu0 %700
  %702 = vrot.lane.b32.xlu0 %v110, 4
  %v703 = vpop.permute.xlu0 %702
  %704 = vrot.lane.b32.xlu0 %v111, 4
  %v705 = vpop.permute.xlu0 %704
  %706 = vrot.lane.b32.xlu0 %v112, 4
  %v707 = vpop.permute.xlu0 %706
  %708 = vrot.lane.b32.xlu0 %v113, 4
  %v709 = vpop.permute.xlu0 %708
  %710 = vrot.lane.b32.xlu0 %v114, 4
  %v711 = vpop.permute.xlu0 %710
  %712 = vrot.lane.b32.xlu0 %v115, 4
  %v713 = vpop.permute.xlu0 %712
  %714 = vrot.lane.b32.xlu0 %v116, 4
  %v715 = vpop.permute.xlu0 %714
  %716 = vrot.lane.b32.xlu0 %v117, 4
  %v717 = vpop.permute.xlu0 %716
  %718 = vrot.lane.b32.xlu0 %v118, 4
  %v719 = vpop.permute.xlu0 %718
  %720 = vrot.lane.b32.xlu0 %v119, 4
  %v721 = vpop.permute.xlu0 %720
  %722 = vrot.lane.b32.xlu0 %v120, 4
  %v723 = vpop.permute.xlu0 %722
  %724 = vrot.lane.b32.xlu0 %v121, 4
  %v725 = vpop.permute.xlu0 %724
  %726 = vrot.lane.b32.xlu0 %v122, 4
  %v727 = vpop.permute.xlu0 %726
  %728 = vrot.lane.b32.xlu0 %v123, 4
  %v729 = vpop.permute.xlu0 %728
  %730 = vrot.lane.b32.xlu0 %v124, 4
  %v731 = vpop.permute.xlu0 %730
  %732 = vrot.lane.b32.xlu0 %v125, 4
  %v733 = vpop.permute.xlu0 %732
  %734 = vrot.lane.b32.xlu0 %v126, 4
  %v735 = vpop.permute.xlu0 %734
  %736 = vrot.lane.b32.xlu0 %v127, 4
  %v737 = vpop.permute.xlu0 %736
  %738 = vrot.lane.b32.xlu0 %v128, 4
  %v739 = vpop.permute.xlu0 %738
  %740 = vrot.lane.b32.xlu0 %v129, 4
  %v741 = vpop.permute.xlu0 %740
  %742 = vrot.lane.b32.xlu0 %v130, 4
  %v743 = vpop.permute.xlu0 %742
  %744 = vrot.lane.b32.xlu0 %v131, 4
  %v745 = vpop.permute.xlu0 %744
  %746 = vrot.lane.b32.xlu0 %v132, 4
  %v747 = vpop.permute.xlu0 %746
  %748 = vrot.lane.b32.xlu0 %v133, 4
  %v749 = vpop.permute.xlu0 %748
  %750 = vrot.lane.b32.xlu0 %v134, 4
  %v751 = vpop.permute.xlu0 %750
  %752 = vrot.lane.b32.xlu0 %v135, 4
  %v753 = vpop.permute.xlu0 %752
  %754 = vrot.lane.b32.xlu0 %v136, 4
  %v755 = vpop.permute.xlu0 %754
  %756 = vrot.lane.b32.xlu0 %v137, 4
  %v757 = vpop.permute.xlu0 %756
  %758 = vrot.lane.b32.xlu0 %v138, 4
  %v759 = vpop.permute.xlu0 %758
  %760 = vrot.lane.b32.xlu0 %v139, 4
  %v761 = vpop.permute.xlu0 %760
  %762 = vrot.lane.b32.xlu0 %v140, 4
  %v763 = vpop.permute.xlu0 %762
  %764 = vrot.lane.b32.xlu0 %v141, 4
  %v765 = vpop.permute.xlu0 %764
  %766 = vrot.lane.b32.xlu0 %v142, 4
  %v767 = vpop.permute.xlu0 %766
  %768 = vrot.lane.b32.xlu0 %v143, 4
  %v769 = vpop.permute.xlu0 %768
  %770 = vrot.lane.b32.xlu0 %v144, 4
  %v771 = vpop.permute.xlu0 %770
  %772 = vrot.lane.b32.xlu0 %v145, 4
  %v773 = vpop.permute.xlu0 %772
  %774 = vrot.lane.b32.xlu0 %v146, 4
  %v775 = vpop.permute.xlu0 %774
  %776 = vrot.lane.b32.xlu0 %v147, 4
  %v777 = vpop.permute.xlu0 %776
  %778 = vrot.lane.b32.xlu0 %v148, 4
  %v779 = vpop.permute.xlu0 %778
  %780 = vrot.lane.b32.xlu0 %v149, 4
  %v781 = vpop.permute.xlu0 %780
  %782 = vrot.lane.b32.xlu0 %v150, 4
  %v783 = vpop.permute.xlu0 %782
  %784 = vrot.lane.b32.xlu0 %v151, 4
  %v785 = vpop.permute.xlu0 %784
  %786 = vrot.lane.b32.xlu0 %v152, 4
  %v787 = vpop.permute.xlu0 %786
  %788 = vrot.lane.b32.xlu0 %v153, 4
  %v789 = vpop.permute.xlu0 %788
  %790 = vrot.lane.b32.xlu0 %v154, 4
  %v791 = vpop.permute.xlu0 %790
  %792 = vrot.lane.b32.xlu0 %v155, 4
  %v793 = vpop.permute.xlu0 %792
  %794 = vrot.lane.b32.xlu0 %v156, 4
  %v795 = vpop.permute.xlu0 %794
  %796 = vrot.lane.b32.xlu0 %v157, 4
  %v797 = vpop.permute.xlu0 %796
  %798 = vrot.lane.b32.xlu0 %v158, 4
  %v799 = vpop.permute.xlu0 %798
  %800 = vrot.lane.b32.xlu0 %v159, 4
  %v801 = vpop.permute.xlu0 %800
  %930 = vrot.lane.b32.xlu0 %v160, 8
  %v931 = vpop.permute.xlu0 %930
  %932 = vrot.lane.b32.xlu0 %v161, 8
  %v933 = vpop.permute.xlu0 %932
  %934 = vrot.lane.b32.xlu0 %v162, 8
  %v935 = vpop.permute.xlu0 %934
  %936 = vrot.lane.b32.xlu0 %v163, 8
  %v937 = vpop.permute.xlu0 %936
  %938 = vrot.lane.b32.xlu0 %v164, 8
  %v939 = vpop.permute.xlu0 %938
  %940 = vrot.lane.b32.xlu0 %v165, 8
  %v941 = vpop.permute.xlu0 %940
  %942 = vrot.lane.b32.xlu0 %v166, 8
  %v943 = vpop.permute.xlu0 %942
  %944 = vrot.lane.b32.xlu0 %v167, 8
  %v945 = vpop.permute.xlu0 %944
  %946 = vrot.lane.b32.xlu0 %v168, 8
  %v947 = vpop.permute.xlu0 %946
  %948 = vrot.lane.b32.xlu0 %v169, 8
  %v949 = vpop.permute.xlu0 %948
  %950 = vrot.lane.b32.xlu0 %v170, 8
  %v951 = vpop.permute.xlu0 %950
  %952 = vrot.lane.b32.xlu0 %v171, 8
  %v953 = vpop.permute.xlu0 %952
  %954 = vrot.lane.b32.xlu0 %v172, 8
  %v955 = vpop.permute.xlu0 %954
  %956 = vrot.lane.b32.xlu0 %v173, 8
  %v957 = vpop.permute.xlu0 %956
  %958 = vrot.lane.b32.xlu0 %v174, 8
  %v959 = vpop.permute.xlu0 %958
  %960 = vrot.lane.b32.xlu0 %v175, 8
  %v961 = vpop.permute.xlu0 %960
  %962 = vrot.lane.b32.xlu0 %v176, 8
  %v963 = vpop.permute.xlu0 %962
  %964 = vrot.lane.b32.xlu0 %v177, 8
  %v965 = vpop.permute.xlu0 %964
  %966 = vrot.lane.b32.xlu0 %v178, 8
  %v967 = vpop.permute.xlu0 %966
  %968 = vrot.lane.b32.xlu0 %v179, 8
  %v969 = vpop.permute.xlu0 %968
  %970 = vrot.lane.b32.xlu0 %v180, 8
  %v971 = vpop.permute.xlu0 %970
  %972 = vrot.lane.b32.xlu0 %v181, 8
  %v973 = vpop.permute.xlu0 %972
  %974 = vrot.lane.b32.xlu0 %v182, 8
  %v975 = vpop.permute.xlu0 %974
  %976 = vrot.lane.b32.xlu0 %v183, 8
  %v977 = vpop.permute.xlu0 %976
  %978 = vrot.lane.b32.xlu0 %v184, 8
  %v979 = vpop.permute.xlu0 %978
  %980 = vrot.lane.b32.xlu0 %v185, 8
  %v981 = vpop.permute.xlu0 %980
  %982 = vrot.lane.b32.xlu0 %v186, 8
  %v983 = vpop.permute.xlu0 %982
  %984 = vrot.lane.b32.xlu0 %v187, 8
  %v985 = vpop.permute.xlu0 %984
  %986 = vrot.lane.b32.xlu0 %v188, 8
  %v987 = vpop.permute.xlu0 %986
  %988 = vrot.lane.b32.xlu0 %v189, 8
  %v989 = vpop.permute.xlu0 %988
  %990 = vrot.lane.b32.xlu0 %v190, 8
  %v991 = vpop.permute.xlu0 %990
  %992 = vrot.lane.b32.xlu0 %v191, 8
  %v993 = vpop.permute.xlu0 %992
  %994 = vrot.lane.b32.xlu0 %v192, 8
  %v995 = vpop.permute.xlu0 %994
  %996 = vrot.lane.b32.xlu0 %v193, 8
  %v997 = vpop.permute.xlu0 %996
  %998 = vrot.lane.b32.xlu0 %v194, 8
  %v999 = vpop.permute.xlu0 %998
  %1000 = vrot.lane.b32.xlu0 %v195, 8
  %v1001 = vpop.permute.xlu0 %1000
  %1002 = vrot.lane.b32.xlu0 %v196, 8
  %v1003 = vpop.permute.xlu0 %1002
  %1004 = vrot.lane.b32.xlu0 %v197, 8
  %v1005 = vpop.permute.xlu0 %1004
  %1006 = vrot.lane.b32.xlu0 %v198, 8
  %v1007 = vpop.permute.xlu0 %1006
  %1008 = vrot.lane.b32.xlu0 %v199, 8
  %v1009 = vpop.permute.xlu0 %1008
  %1010 = vrot.lane.b32.xlu0 %v200, 8
  %v1011 = vpop.permute.xlu0 %1010
  %1012 = vrot.lane.b32.xlu0 %v201, 8
  %v1013 = vpop.permute.xlu0 %1012
  %1014 = vrot.lane.b32.xlu0 %v202, 8
  %v1015 = vpop.permute.xlu0 %1014
  %1016 = vrot.lane.b32.xlu0 %v203, 8
  %v1017 = vpop.permute.xlu0 %1016
  %1018 = vrot.lane.b32.xlu0 %v204, 8
  %v1019 = vpop.permute.xlu0 %1018
  %1020 = vrot.lane.b32.xlu0 %v205, 8
  %v1021 = vpop.permute.xlu0 %1020
  %1022 = vrot.lane.b32.xlu0 %v206, 8
  %v1023 = vpop.permute.xlu0 %1022
  %1024 = vrot.lane.b32.xlu0 %v207, 8
  %v1025 = vpop.permute.xlu0 %1024
  %1026 = vrot.lane.b32.xlu0 %v208, 8
  %v1027 = vpop.permute.xlu0 %1026
  %1028 = vrot.lane.b32.xlu0 %v209, 8
  %v1029 = vpop.permute.xlu0 %1028
  %1030 = vrot.lane.b32.xlu0 %v210, 8
  %v1031 = vpop.permute.xlu0 %1030
  %1032 = vrot.lane.b32.xlu0 %v211, 8
  %v1033 = vpop.permute.xlu0 %1032
  %1034 = vrot.lane.b32.xlu0 %v212, 8
  %v1035 = vpop.permute.xlu0 %1034
  %1036 = vrot.lane.b32.xlu0 %v213, 8
  %v1037 = vpop.permute.xlu0 %1036
  %1038 = vrot.lane.b32.xlu0 %v214, 8
  %v1039 = vpop.permute.xlu0 %1038
  %1040 = vrot.lane.b32.xlu0 %v215, 8
  %v1041 = vpop.permute.xlu0 %1040
  %1042 = vrot.lane.b32.xlu0 %v216, 8
  %v1043 = vpop.permute.xlu0 %1042
  %1044 = vrot.lane.b32.xlu0 %v217, 8
  %v1045 = vpop.permute.xlu0 %1044
  %1046 = vrot.lane.b32.xlu0 %v218, 8
  %v1047 = vpop.permute.xlu0 %1046
  %1048 = vrot.lane.b32.xlu0 %v219, 8
  %v1049 = vpop.permute.xlu0 %1048
  %1050 = vrot.lane.b32.xlu0 %v220, 8
  %v1051 = vpop.permute.xlu0 %1050
  %1052 = vrot.lane.b32.xlu0 %v221, 8
  %v1053 = vpop.permute.xlu0 %1052
  %1054 = vrot.lane.b32.xlu0 %v222, 8
  %v1055 = vpop.permute.xlu0 %1054
  %1056 = vrot.lane.b32.xlu0 %v223, 8
  %v1057 = vpop.permute.xlu0 %1056
  %1186 = vrot.lane.b32.xlu0 %v225, 12
  %v1187 = vpop.permute.xlu0 %1186
  %1188 = vrot.lane.b32.xlu0 %v226, 12
  %v1189 = vpop.permute.xlu0 %1188
  %1190 = vrot.lane.b32.xlu0 %v227, 12
  %v1191 = vpop.permute.xlu0 %1190
  %1192 = vrot.lane.b32.xlu0 %v228, 12
  %v1193 = vpop.permute.xlu0 %1192
  %1194 = vrot.lane.b32.xlu0 %v229, 12
  %v1195 = vpop.permute.xlu0 %1194
  %1196 = vrot.lane.b32.xlu0 %v230, 12
  %v1197 = vpop.permute.xlu0 %1196
  %1198 = vrot.lane.b32.xlu0 %v231, 12
  %v1199 = vpop.permute.xlu0 %1198
  %1200 = vrot.lane.b32.xlu0 %v232, 12
  %v1201 = vpop.permute.xlu0 %1200
  %1202 = vrot.lane.b32.xlu0 %v233, 12
  %v1203 = vpop.permute.xlu0 %1202
  %1204 = vrot.lane.b32.xlu0 %v234, 12
  %v1205 = vpop.permute.xlu0 %1204
  %1206 = vrot.lane.b32.xlu0 %v235, 12
  %v1207 = vpop.permute.xlu0 %1206
  %1208 = vrot.lane.b32.xlu0 %v236, 12
  %v1209 = vpop.permute.xlu0 %1208
  %1210 = vrot.lane.b32.xlu0 %v237, 12
  %v1211 = vpop.permute.xlu0 %1210
  %1212 = vrot.lane.b32.xlu0 %v238, 12
  %v1213 = vpop.permute.xlu0 %1212
  %1214 = vrot.lane.b32.xlu0 %v239, 12
  %v1215 = vpop.permute.xlu0 %1214
  %1216 = vrot.lane.b32.xlu0 %v240, 12
  %v1217 = vpop.permute.xlu0 %1216
  %1218 = vrot.lane.b32.xlu0 %v241, 12
  %v1219 = vpop.permute.xlu0 %1218
  %1220 = vrot.lane.b32.xlu0 %v242, 12
  %v1221 = vpop.permute.xlu0 %1220
  %1222 = vrot.lane.b32.xlu0 %v243, 12
  %v1223 = vpop.permute.xlu0 %1222
  %1224 = vrot.lane.b32.xlu0 %v244, 12
  %v1225 = vpop.permute.xlu0 %1224
  %1226 = vrot.lane.b32.xlu0 %v245, 12
  %v1227 = vpop.permute.xlu0 %1226
  %1228 = vrot.lane.b32.xlu0 %v246, 12
  %v1229 = vpop.permute.xlu0 %1228
  %1230 = vrot.lane.b32.xlu0 %v247, 12
  %v1231 = vpop.permute.xlu0 %1230
  %1232 = vrot.lane.b32.xlu0 %v248, 12
  %v1233 = vpop.permute.xlu0 %1232
  %1234 = vrot.lane.b32.xlu0 %v249, 12
  %v1235 = vpop.permute.xlu0 %1234
  %1236 = vrot.lane.b32.xlu0 %v250, 12
  %v1237 = vpop.permute.xlu0 %1236
  %1238 = vrot.lane.b32.xlu0 %v251, 12
  %v1239 = vpop.permute.xlu0 %1238
  %1240 = vrot.lane.b32.xlu0 %v252, 12
  %v1241 = vpop.permute.xlu0 %1240
  %1242 = vrot.lane.b32.xlu0 %v253, 12
  %v1243 = vpop.permute.xlu0 %1242
  %1244 = vrot.lane.b32.xlu0 %v254, 12
  %v1245 = vpop.permute.xlu0 %1244
  %1246 = vrot.lane.b32.xlu0 %v255, 12
  %v1247 = vpop.permute.xlu0 %1246
  %1248 = vrot.lane.b32.xlu0 %v256, 12
  %v1249 = vpop.permute.xlu0 %1248
  %1250 = vrot.lane.b32.xlu0 %v257, 12
  %v1251 = vpop.permute.xlu0 %1250
  %1252 = vrot.lane.b32.xlu0 %v258, 12
  %v1253 = vpop.permute.xlu0 %1252
  %1254 = vrot.lane.b32.xlu0 %v259, 12
  %v1255 = vpop.permute.xlu0 %1254
  %1256 = vrot.lane.b32.xlu0 %v260, 12
  %v1257 = vpop.permute.xlu0 %1256
  %1258 = vrot.lane.b32.xlu0 %v261, 12
  %v1259 = vpop.permute.xlu0 %1258
  %1260 = vrot.lane.b32.xlu0 %v262, 12
  %v1261 = vpop.permute.xlu0 %1260
  %1262 = vrot.lane.b32.xlu0 %v263, 12
  %v1263 = vpop.permute.xlu0 %1262
  %1264 = vrot.lane.b32.xlu0 %v264, 12
  %v1265 = vpop.permute.xlu0 %1264
  %1266 = vrot.lane.b32.xlu0 %v265, 12
  %v1267 = vpop.permute.xlu0 %1266
  %1268 = vrot.lane.b32.xlu0 %v266, 12
  %v1269 = vpop.permute.xlu0 %1268
  %1270 = vrot.lane.b32.xlu0 %v267, 12
  %v1271 = vpop.permute.xlu0 %1270
  %1272 = vrot.lane.b32.xlu0 %v268, 12
  %v1273 = vpop.permute.xlu0 %1272
  %1274 = vrot.lane.b32.xlu0 %v269, 12
  %v1275 = vpop.permute.xlu0 %1274
  %1276 = vrot.lane.b32.xlu0 %v270, 12
  %v1277 = vpop.permute.xlu0 %1276
  %1278 = vrot.lane.b32.xlu0 %v271, 12
  %v1279 = vpop.permute.xlu0 %1278
  %1280 = vrot.lane.b32.xlu0 %v272, 12
  %v1281 = vpop.permute.xlu0 %1280
  %1282 = vrot.lane.b32.xlu0 %v273, 12
  %v1283 = vpop.permute.xlu0 %1282
  %1284 = vrot.lane.b32.xlu0 %v274, 12
  %v1285 = vpop.permute.xlu0 %1284
  %1286 = vrot.lane.b32.xlu0 %v275, 12
  %v1287 = vpop.permute.xlu0 %1286
  %1288 = vrot.lane.b32.xlu0 %v276, 12
  %v1289 = vpop.permute.xlu0 %1288
  %1290 = vrot.lane.b32.xlu0 %v277, 12
  %v1291 = vpop.permute.xlu0 %1290
  %1292 = vrot.lane.b32.xlu0 %v278, 12
  %v1293 = vpop.permute.xlu0 %1292
  %1294 = vrot.lane.b32.xlu0 %v279, 12
  %v1295 = vpop.permute.xlu0 %1294
  %1296 = vrot.lane.b32.xlu0 %v280, 12
  %v1297 = vpop.permute.xlu0 %1296
  %1298 = vrot.lane.b32.xlu0 %v281, 12
  %v1299 = vpop.permute.xlu0 %1298
  %1300 = vrot.lane.b32.xlu0 %v282, 12
  %v1301 = vpop.permute.xlu0 %1300
  %1302 = vrot.lane.b32.xlu0 %v283, 12
  %v1303 = vpop.permute.xlu0 %1302
  %1304 = vrot.lane.b32.xlu0 %v284, 12
  %v1305 = vpop.permute.xlu0 %1304
  %1306 = vrot.lane.b32.xlu0 %v285, 12
  %v1307 = vpop.permute.xlu0 %1306
  %1308 = vrot.lane.b32.xlu0 %v286, 12
  %v1309 = vpop.permute.xlu0 %1308
  %1310 = vrot.lane.b32.xlu0 %v287, 12
  %v1311 = vpop.permute.xlu0 %1310
  %1312 = vrot.lane.b32.xlu0 %v288, 12
  %v1313 = vpop.permute.xlu0 %1312
  %1442 = vrot.lane.b32.xlu0 %v289, 16
  %v1443 = vpop.permute.xlu0 %1442
  %1444 = vrot.lane.b32.xlu0 %v290, 16
  %v1445 = vpop.permute.xlu0 %1444
  %1446 = vrot.lane.b32.xlu0 %v291, 16
  %v1447 = vpop.permute.xlu0 %1446
  %1448 = vrot.lane.b32.xlu0 %v292, 16
  %v1449 = vpop.permute.xlu0 %1448
  %1450 = vrot.lane.b32.xlu0 %v293, 16
  %v1451 = vpop.permute.xlu0 %1450
  %1452 = vrot.lane.b32.xlu0 %v294, 16
  %v1453 = vpop.permute.xlu0 %1452
  %1454 = vrot.lane.b32.xlu0 %v295, 16
  %v1455 = vpop.permute.xlu0 %1454
  %1456 = vrot.lane.b32.xlu0 %v296, 16
  %v1457 = vpop.permute.xlu0 %1456
  %1458 = vrot.lane.b32.xlu0 %v297, 16
  %v1459 = vpop.permute.xlu0 %1458
  %1460 = vrot.lane.b32.xlu0 %v298, 16
  %v1461 = vpop.permute.xlu0 %1460
  %1462 = vrot.lane.b32.xlu0 %v299, 16
  %v1463 = vpop.permute.xlu0 %1462
  %1464 = vrot.lane.b32.xlu0 %v300, 16
  %v1465 = vpop.permute.xlu0 %1464
  %1466 = vrot.lane.b32.xlu0 %v301, 16
  %v1467 = vpop.permute.xlu0 %1466
  %1468 = vrot.lane.b32.xlu0 %v302, 16
  %v1469 = vpop.permute.xlu0 %1468
  %1470 = vrot.lane.b32.xlu0 %v303, 16
  %v1471 = vpop.permute.xlu0 %1470
  %1472 = vrot.lane.b32.xlu0 %v304, 16
  %v1473 = vpop.permute.xlu0 %1472
  %1474 = vrot.lane.b32.xlu0 %v305, 16
  %v1475 = vpop.permute.xlu0 %1474
  %1476 = vrot.lane.b32.xlu0 %v306, 16
  %v1477 = vpop.permute.xlu0 %1476
  %1478 = vrot.lane.b32.xlu0 %v307, 16
  %v1479 = vpop.permute.xlu0 %1478
  %1480 = vrot.lane.b32.xlu0 %v308, 16
  %v1481 = vpop.permute.xlu0 %1480
  %1482 = vrot.lane.b32.xlu0 %v309, 16
  %v1483 = vpop.permute.xlu0 %1482
  %1484 = vrot.lane.b32.xlu0 %v310, 16
  %v1485 = vpop.permute.xlu0 %1484
  %1486 = vrot.lane.b32.xlu0 %v311, 16
  %v1487 = vpop.permute.xlu0 %1486
  %1488 = vrot.lane.b32.xlu0 %v312, 16
  %v1489 = vpop.permute.xlu0 %1488
  %1490 = vrot.lane.b32.xlu0 %v313, 16
  %v1491 = vpop.permute.xlu0 %1490
  %1492 = vrot.lane.b32.xlu0 %v314, 16
  %v1493 = vpop.permute.xlu0 %1492
  %1494 = vrot.lane.b32.xlu0 %v315, 16
  %v1495 = vpop.permute.xlu0 %1494
  %1496 = vrot.lane.b32.xlu0 %v316, 16
  %v1497 = vpop.permute.xlu0 %1496
  %1498 = vrot.lane.b32.xlu0 %v317, 16
  %v1499 = vpop.permute.xlu0 %1498
  %1500 = vrot.lane.b32.xlu0 %v318, 16
  %v1501 = vpop.permute.xlu0 %1500
  %1502 = vrot.lane.b32.xlu0 %v319, 16
  %v1503 = vpop.permute.xlu0 %1502
  %1504 = vrot.lane.b32.xlu0 %v320, 16
  %v1505 = vpop.permute.xlu0 %1504
  %1506 = vrot.lane.b32.xlu0 %v321, 16
  %v1507 = vpop.permute.xlu0 %1506
  %1508 = vrot.lane.b32.xlu0 %v322, 16
  %v1509 = vpop.permute.xlu0 %1508
  %1510 = vrot.lane.b32.xlu0 %v323, 16
  %v1511 = vpop.permute.xlu0 %1510
  %1512 = vrot.lane.b32.xlu0 %v324, 16
  %v1513 = vpop.permute.xlu0 %1512
  %1514 = vrot.lane.b32.xlu0 %v325, 16
  %v1515 = vpop.permute.xlu0 %1514
  %1516 = vrot.lane.b32.xlu0 %v326, 16
  %v1517 = vpop.permute.xlu0 %1516
  %1518 = vrot.lane.b32.xlu0 %v327, 16
  %v1519 = vpop.permute.xlu0 %1518
  %1520 = vrot.lane.b32.xlu0 %v328, 16
  %v1521 = vpop.permute.xlu0 %1520
  %1522 = vrot.lane.b32.xlu0 %v329, 16
  %v1523 = vpop.permute.xlu0 %1522
  %1524 = vrot.lane.b32.xlu0 %v330, 16
  %v1525 = vpop.permute.xlu0 %1524
  %1526 = vrot.lane.b32.xlu0 %v331, 16
  %v1527 = vpop.permute.xlu0 %1526
  %1528 = vrot.lane.b32.xlu0 %v332, 16
  %v1529 = vpop.permute.xlu0 %1528
  %1530 = vrot.lane.b32.xlu0 %v333, 16
  %v1531 = vpop.permute.xlu0 %1530
  %1532 = vrot.lane.b32.xlu0 %v334, 16
  %v1533 = vpop.permute.xlu0 %1532
  %1534 = vrot.lane.b32.xlu0 %v335, 16
  %v1535 = vpop.permute.xlu0 %1534
  %1536 = vrot.lane.b32.xlu0 %v336, 16
  %v1537 = vpop.permute.xlu0 %1536
  %1538 = vrot.lane.b32.xlu0 %v337, 16
  %v1539 = vpop.permute.xlu0 %1538
  %1540 = vrot.lane.b32.xlu0 %v338, 16
  %v1541 = vpop.permute.xlu0 %1540
  %1542 = vrot.lane.b32.xlu0 %v339, 16
  %v1543 = vpop.permute.xlu0 %1542
  %1544 = vrot.lane.b32.xlu0 %v340, 16
  %v1545 = vpop.permute.xlu0 %1544
  %1546 = vrot.lane.b32.xlu0 %v341, 16
  %v1547 = vpop.permute.xlu0 %1546
  %1548 = vrot.lane.b32.xlu0 %v342, 16
  %v1549 = vpop.permute.xlu0 %1548
  %1550 = vrot.lane.b32.xlu0 %v343, 16
  %v1551 = vpop.permute.xlu0 %1550
  %1552 = vrot.lane.b32.xlu0 %v344, 16
  %v1553 = vpop.permute.xlu0 %1552
  %1554 = vrot.lane.b32.xlu0 %v345, 16
  %v1555 = vpop.permute.xlu0 %1554
  %1556 = vrot.lane.b32.xlu0 %v346, 16
  %v1557 = vpop.permute.xlu0 %1556
  %1558 = vrot.lane.b32.xlu0 %v347, 16
  %v1559 = vpop.permute.xlu0 %1558
  %1560 = vrot.lane.b32.xlu0 %v348, 16
  %v1561 = vpop.permute.xlu0 %1560
  %1562 = vrot.lane.b32.xlu0 %v349, 16
  %v1563 = vpop.permute.xlu0 %1562
  %1564 = vrot.lane.b32.xlu0 %v350, 16
  %v1565 = vpop.permute.xlu0 %1564
  %1566 = vrot.lane.b32.xlu0 %v351, 16
  %v1567 = vpop.permute.xlu0 %1566
  %1568 = vrot.lane.b32.xlu0 %v352, 16
  %v1569 = vpop.permute.xlu0 %1568
  %1698 = vrot.lane.b32.xlu0 %v353, 20
  %v1699 = vpop.permute.xlu0 %1698
  %1700 = vrot.lane.b32.xlu0 %v354, 20
  %v1701 = vpop.permute.xlu0 %1700
  %1702 = vrot.lane.b32.xlu0 %v355, 20
  %v1703 = vpop.permute.xlu0 %1702
  %1704 = vrot.lane.b32.xlu0 %v356, 20
  %v1705 = vpop.permute.xlu0 %1704
  %1706 = vrot.lane.b32.xlu0 %v357, 20
  %v1707 = vpop.permute.xlu0 %1706
  %1708 = vrot.lane.b32.xlu0 %v358, 20
  %v1709 = vpop.permute.xlu0 %1708
  %1710 = vrot.lane.b32.xlu0 %v359, 20
  %v1711 = vpop.permute.xlu0 %1710
  %1712 = vrot.lane.b32.xlu0 %v360, 20
  %v1713 = vpop.permute.xlu0 %1712
  %1714 = vrot.lane.b32.xlu0 %v361, 20
  %v1715 = vpop.permute.xlu0 %1714
  %1716 = vrot.lane.b32.xlu0 %v362, 20
  %v1717 = vpop.permute.xlu0 %1716
  %1718 = vrot.lane.b32.xlu0 %v363, 20
  %v1719 = vpop.permute.xlu0 %1718
  %1720 = vrot.lane.b32.xlu0 %v364, 20
  %v1721 = vpop.permute.xlu0 %1720
  %1722 = vrot.lane.b32.xlu0 %v365, 20
  %v1723 = vpop.permute.xlu0 %1722
  %1724 = vrot.lane.b32.xlu0 %v366, 20
  %v1725 = vpop.permute.xlu0 %1724
  %1726 = vrot.lane.b32.xlu0 %v367, 20
  %v1727 = vpop.permute.xlu0 %1726
  %1728 = vrot.lane.b32.xlu0 %v368, 20
  %v1729 = vpop.permute.xlu0 %1728
  %1730 = vrot.lane.b32.xlu0 %v369, 20
  %v1731 = vpop.permute.xlu0 %1730
  %1732 = vrot.lane.b32.xlu0 %v370, 20
  %v1733 = vpop.permute.xlu0 %1732
  %1734 = vrot.lane.b32.xlu0 %v371, 20
  %v1735 = vpop.permute.xlu0 %1734
  %1736 = vrot.lane.b32.xlu0 %v372, 20
  %v1737 = vpop.permute.xlu0 %1736
  %1738 = vrot.lane.b32.xlu0 %v373, 20
  %v1739 = vpop.permute.xlu0 %1738
  %1740 = vrot.lane.b32.xlu0 %v374, 20
  %v1741 = vpop.permute.xlu0 %1740
  %1742 = vrot.lane.b32.xlu0 %v375, 20
  %v1743 = vpop.permute.xlu0 %1742
  %1744 = vrot.lane.b32.xlu0 %v376, 20
  %v1745 = vpop.permute.xlu0 %1744
  %1746 = vrot.lane.b32.xlu0 %v377, 20
  %v1747 = vpop.permute.xlu0 %1746
  %1748 = vrot.lane.b32.xlu0 %v378, 20
  %v1749 = vpop.permute.xlu0 %1748
  %1750 = vrot.lane.b32.xlu0 %v379, 20
  %v1751 = vpop.permute.xlu0 %1750
  %1752 = vrot.lane.b32.xlu0 %v380, 20
  %v1753 = vpop.permute.xlu0 %1752
  %1754 = vrot.lane.b32.xlu0 %v381, 20
  %v1755 = vpop.permute.xlu0 %1754
  %1756 = vrot.lane.b32.xlu0 %v382, 20
  %v1757 = vpop.permute.xlu0 %1756
  %1758 = vrot.lane.b32.xlu0 %v383, 20
  %v1759 = vpop.permute.xlu0 %1758
  %1760 = vrot.lane.b32.xlu0 %v384, 20
  %v1761 = vpop.permute.xlu0 %1760
  %1762 = vrot.lane.b32.xlu0 %v385, 20
  %v1763 = vpop.permute.xlu0 %1762
  %1764 = vrot.lane.b32.xlu0 %v386, 20
  %v1765 = vpop.permute.xlu0 %1764
  %1766 = vrot.lane.b32.xlu0 %v387, 20
  %v1767 = vpop.permute.xlu0 %1766
  %1768 = vrot.lane.b32.xlu0 %v388, 20
  %v1769 = vpop.permute.xlu0 %1768
  %1770 = vrot.lane.b32.xlu0 %v389, 20
  %v1771 = vpop.permute.xlu0 %1770
  %1772 = vrot.lane.b32.xlu0 %v390, 20
  %v1773 = vpop.permute.xlu0 %1772
  %1774 = vrot.lane.b32.xlu0 %v391, 20
  %v1775 = vpop.permute.xlu0 %1774
  %1776 = vrot.lane.b32.xlu0 %v392, 20
  %v1777 = vpop.permute.xlu0 %1776
  %1778 = vrot.lane.b32.xlu0 %v393, 20
  %v1779 = vpop.permute.xlu0 %1778
  %1780 = vrot.lane.b32.xlu0 %v394, 20
  %v1781 = vpop.permute.xlu0 %1780
  %1782 = vrot.lane.b32.xlu0 %v395, 20
  %v1783 = vpop.permute.xlu0 %1782
  %1784 = vrot.lane.b32.xlu0 %v396, 20
  %v1785 = vpop.permute.xlu0 %1784
  %1786 = vrot.lane.b32.xlu0 %v397, 20
  %v1787 = vpop.permute.xlu0 %1786
  %1788 = vrot.lane.b32.xlu0 %v398, 20
  %v1789 = vpop.permute.xlu0 %1788
  %1790 = vrot.lane.b32.xlu0 %v399, 20
  %v1791 = vpop.permute.xlu0 %1790
  %1792 = vrot.lane.b32.xlu0 %v400, 20
  %v1793 = vpop.permute.xlu0 %1792
  %1794 = vrot.lane.b32.xlu0 %v401, 20
  %v1795 = vpop.permute.xlu0 %1794
  %1796 = vrot.lane.b32.xlu0 %v402, 20
  %v1797 = vpop.permute.xlu0 %1796
  %1798 = vrot.lane.b32.xlu0 %v403, 20
  %v1799 = vpop.permute.xlu0 %1798
  %1800 = vrot.lane.b32.xlu0 %v404, 20
  %v1801 = vpop.permute.xlu0 %1800
  %1802 = vrot.lane.b32.xlu0 %v405, 20
  %v1803 = vpop.permute.xlu0 %1802
  %1804 = vrot.lane.b32.xlu0 %v406, 20
  %v1805 = vpop.permute.xlu0 %1804
  %1806 = vrot.lane.b32.xlu0 %v407, 20
  %v1807 = vpop.permute.xlu0 %1806
  %1808 = vrot.lane.b32.xlu0 %v408, 20
  %v1809 = vpop.permute.xlu0 %1808
  %1810 = vrot.lane.b32.xlu0 %v409, 20
  %v1811 = vpop.permute.xlu0 %1810
  %1812 = vrot.lane.b32.xlu0 %v410, 20
  %v1813 = vpop.permute.xlu0 %1812
  %1814 = vrot.lane.b32.xlu0 %v411, 20
  %v1815 = vpop.permute.xlu0 %1814
  %1816 = vrot.lane.b32.xlu0 %v412, 20
  %v1817 = vpop.permute.xlu0 %1816
  %1818 = vrot.lane.b32.xlu0 %v413, 20
  %v1819 = vpop.permute.xlu0 %1818
  %1820 = vrot.lane.b32.xlu0 %v414, 20
  %v1821 = vpop.permute.xlu0 %1820
  %1822 = vrot.lane.b32.xlu0 %v415, 20
  %v1823 = vpop.permute.xlu0 %1822
  %1824 = vrot.lane.b32.xlu0 %v416, 20
  %v1825 = vpop.permute.xlu0 %1824
  %1954 = vrot.lane.b32.xlu0 %v418, 24
  %v1955 = vpop.permute.xlu0 %1954
  %1956 = vrot.lane.b32.xlu0 %v419, 24
  %v1957 = vpop.permute.xlu0 %1956
  %1958 = vrot.lane.b32.xlu0 %v420, 24
  %v1959 = vpop.permute.xlu0 %1958
  %1960 = vrot.lane.b32.xlu0 %v421, 24
  %v1961 = vpop.permute.xlu0 %1960
  %1962 = vrot.lane.b32.xlu0 %v422, 24
  %v1963 = vpop.permute.xlu0 %1962
  %1964 = vrot.lane.b32.xlu0 %v423, 24
  %v1965 = vpop.permute.xlu0 %1964
  %1966 = vrot.lane.b32.xlu0 %v424, 24
  %v1967 = vpop.permute.xlu0 %1966
  %1968 = vrot.lane.b32.xlu0 %v425, 24
  %v1969 = vpop.permute.xlu0 %1968
  %1970 = vrot.lane.b32.xlu0 %v426, 24
  %v1971 = vpop.permute.xlu0 %1970
  %1972 = vrot.lane.b32.xlu0 %v427, 24
  %v1973 = vpop.permute.xlu0 %1972
  %1974 = vrot.lane.b32.xlu0 %v428, 24
  %v1975 = vpop.permute.xlu0 %1974
  %1976 = vrot.lane.b32.xlu0 %v429, 24
  %v1977 = vpop.permute.xlu0 %1976
  %1978 = vrot.lane.b32.xlu0 %v430, 24
  %v1979 = vpop.permute.xlu0 %1978
  %1980 = vrot.lane.b32.xlu0 %v431, 24
  %v1981 = vpop.permute.xlu0 %1980
  %1982 = vrot.lane.b32.xlu0 %v432, 24
  %v1983 = vpop.permute.xlu0 %1982
  %1984 = vrot.lane.b32.xlu0 %v433, 24
  %v1985 = vpop.permute.xlu0 %1984
  %1986 = vrot.lane.b32.xlu0 %v434, 24
  %v1987 = vpop.permute.xlu0 %1986
  %1988 = vrot.lane.b32.xlu0 %v435, 24
  %v1989 = vpop.permute.xlu0 %1988
  %1990 = vrot.lane.b32.xlu0 %v436, 24
  %v1991 = vpop.permute.xlu0 %1990
  %1992 = vrot.lane.b32.xlu0 %v437, 24
  %v1993 = vpop.permute.xlu0 %1992
  %1994 = vrot.lane.b32.xlu0 %v438, 24
  %v1995 = vpop.permute.xlu0 %1994
  %1996 = vrot.lane.b32.xlu0 %v439, 24
  %v1997 = vpop.permute.xlu0 %1996
  %1998 = vrot.lane.b32.xlu0 %v440, 24
  %v1999 = vpop.permute.xlu0 %1998
  %2000 = vrot.lane.b32.xlu0 %v441, 24
  %v2001 = vpop.permute.xlu0 %2000
  %2002 = vrot.lane.b32.xlu0 %v442, 24
  %v2003 = vpop.permute.xlu0 %2002
  %2004 = vrot.lane.b32.xlu0 %v443, 24
  %v2005 = vpop.permute.xlu0 %2004
  %2006 = vrot.lane.b32.xlu0 %v444, 24
  %v2007 = vpop.permute.xlu0 %2006
  %2008 = vrot.lane.b32.xlu0 %v445, 24
  %v2009 = vpop.permute.xlu0 %2008
  %2010 = vrot.lane.b32.xlu0 %v446, 24
  %v2011 = vpop.permute.xlu0 %2010
  %2012 = vrot.lane.b32.xlu0 %v447, 24
  %v2013 = vpop.permute.xlu0 %2012
  %2014 = vrot.lane.b32.xlu0 %v448, 24
  %v2015 = vpop.permute.xlu0 %2014
  %2016 = vrot.lane.b32.xlu0 %v449, 24
  %v2017 = vpop.permute.xlu0 %2016
  %2018 = vrot.lane.b32.xlu0 %v450, 24
  %v2019 = vpop.permute.xlu0 %2018
  %2020 = vrot.lane.b32.xlu0 %v451, 24
  %v2021 = vpop.permute.xlu0 %2020
  %2022 = vrot.lane.b32.xlu0 %v452, 24
  %v2023 = vpop.permute.xlu0 %2022
  %2024 = vrot.lane.b32.xlu0 %v453, 24
  %v2025 = vpop.permute.xlu0 %2024
  %2026 = vrot.lane.b32.xlu0 %v454, 24
  %v2027 = vpop.permute.xlu0 %2026
  %2028 = vrot.lane.b32.xlu0 %v455, 24
  %v2029 = vpop.permute.xlu0 %2028
  %2030 = vrot.lane.b32.xlu0 %v456, 24
  %v2031 = vpop.permute.xlu0 %2030
  %2032 = vrot.lane.b32.xlu0 %v457, 24
  %v2033 = vpop.permute.xlu0 %2032
  %2034 = vrot.lane.b32.xlu0 %v458, 24
  %v2035 = vpop.permute.xlu0 %2034
  %2036 = vrot.lane.b32.xlu0 %v459, 24
  %v2037 = vpop.permute.xlu0 %2036
  %2038 = vrot.lane.b32.xlu0 %v460, 24
  %v2039 = vpop.permute.xlu0 %2038
  %2040 = vrot.lane.b32.xlu0 %v461, 24
  %v2041 = vpop.permute.xlu0 %2040
  %2042 = vrot.lane.b32.xlu0 %v462, 24
  %v2043 = vpop.permute.xlu0 %2042
  %2044 = vrot.lane.b32.xlu0 %v463, 24
  %v2045 = vpop.permute.xlu0 %2044
  %2046 = vrot.lane.b32.xlu0 %v464, 24
  %v2047 = vpop.permute.xlu0 %2046
  %2048 = vrot.lane.b32.xlu0 %v465, 24
  %v2049 = vpop.permute.xlu0 %2048
  %2050 = vrot.lane.b32.xlu0 %v466, 24
  %v2051 = vpop.permute.xlu0 %2050
  %2052 = vrot.lane.b32.xlu0 %v467, 24
  %v2053 = vpop.permute.xlu0 %2052
  %2054 = vrot.lane.b32.xlu0 %v468, 24
  %v2055 = vpop.permute.xlu0 %2054
  %2056 = vrot.lane.b32.xlu0 %v469, 24
  %v2057 = vpop.permute.xlu0 %2056
  %2058 = vrot.lane.b32.xlu0 %v470, 24
  %v2059 = vpop.permute.xlu0 %2058
  %2060 = vrot.lane.b32.xlu0 %v471, 24
  %v2061 = vpop.permute.xlu0 %2060
  %2062 = vrot.lane.b32.xlu0 %v472, 24
  %v2063 = vpop.permute.xlu0 %2062
  %2064 = vrot.lane.b32.xlu0 %v473, 24
  %v2065 = vpop.permute.xlu0 %2064
  %2066 = vrot.lane.b32.xlu0 %v474, 24
  %v2067 = vpop.permute.xlu0 %2066
  %2068 = vrot.lane.b32.xlu0 %v475, 24
  %v2069 = vpop.permute.xlu0 %2068
  %2070 = vrot.lane.b32.xlu0 %v476, 24
  %v2071 = vpop.permute.xlu0 %2070
  %2072 = vrot.lane.b32.xlu0 %v477, 24
  %v2073 = vpop.permute.xlu0 %2072
  %2074 = vrot.lane.b32.xlu0 %v478, 24
  %v2075 = vpop.permute.xlu0 %2074
  %2076 = vrot.lane.b32.xlu0 %v479, 24
  %v2077 = vpop.permute.xlu0 %2076
  %2078 = vrot.lane.b32.xlu0 %v480, 24
  %v2079 = vpop.permute.xlu0 %2078
  %2080 = vrot.lane.b32.xlu0 %v481, 24
  %v2081 = vpop.permute.xlu0 %2080
  %2210 = vrot.lane.b32.xlu0 %v482, 28
  %v2211 = vpop.permute.xlu0 %2210
  %2212 = vrot.lane.b32.xlu0 %v483, 28
  %v2213 = vpop.permute.xlu0 %2212
  %2214 = vrot.lane.b32.xlu0 %v484, 28
  %v2215 = vpop.permute.xlu0 %2214
  %2216 = vrot.lane.b32.xlu0 %v485, 28
  %v2217 = vpop.permute.xlu0 %2216
  %2218 = vrot.lane.b32.xlu0 %v486, 28
  %v2219 = vpop.permute.xlu0 %2218
  %2220 = vrot.lane.b32.xlu0 %v487, 28
  %v2221 = vpop.permute.xlu0 %2220
  %2222 = vrot.lane.b32.xlu0 %v488, 28
  %v2223 = vpop.permute.xlu0 %2222
  %2224 = vrot.lane.b32.xlu0 %v489, 28
  %v2225 = vpop.permute.xlu0 %2224
  %2226 = vrot.lane.b32.xlu0 %v490, 28
  %v2227 = vpop.permute.xlu0 %2226
  %2228 = vrot.lane.b32.xlu0 %v491, 28
  %v2229 = vpop.permute.xlu0 %2228
  %2230 = vrot.lane.b32.xlu0 %v492, 28
  %v2231 = vpop.permute.xlu0 %2230
  %2232 = vrot.lane.b32.xlu0 %v493, 28
  %v2233 = vpop.permute.xlu0 %2232
  %2234 = vrot.lane.b32.xlu0 %v494, 28
  %v2235 = vpop.permute.xlu0 %2234
  %2236 = vrot.lane.b32.xlu0 %v495, 28
  %v2237 = vpop.permute.xlu0 %2236
  %2238 = vrot.lane.b32.xlu0 %v496, 28
  %v2239 = vpop.permute.xlu0 %2238
  %2240 = vrot.lane.b32.xlu0 %v497, 28
  %v2241 = vpop.permute.xlu0 %2240
  %2242 = vrot.lane.b32.xlu0 %v498, 28
  %v2243 = vpop.permute.xlu0 %2242
  %2244 = vrot.lane.b32.xlu0 %v499, 28
  %v2245 = vpop.permute.xlu0 %2244
  %2246 = vrot.lane.b32.xlu0 %v500, 28
  %v2247 = vpop.permute.xlu0 %2246
  %2248 = vrot.lane.b32.xlu0 %v501, 28
  %v2249 = vpop.permute.xlu0 %2248
  %2250 = vrot.lane.b32.xlu0 %v502, 28
  %v2251 = vpop.permute.xlu0 %2250
  %2252 = vrot.lane.b32.xlu0 %v503, 28
  %v2253 = vpop.permute.xlu0 %2252
  %2254 = vrot.lane.b32.xlu0 %v504, 28
  %v2255 = vpop.permute.xlu0 %2254
  %2256 = vrot.lane.b32.xlu0 %v505, 28
  %v2257 = vpop.permute.xlu0 %2256
  %2258 = vrot.lane.b32.xlu0 %v506, 28
  %v2259 = vpop.permute.xlu0 %2258
  %2260 = vrot.lane.b32.xlu0 %v507, 28
  %v2261 = vpop.permute.xlu0 %2260
  %2262 = vrot.lane.b32.xlu0 %v508, 28
  %v2263 = vpop.permute.xlu0 %2262
  %2264 = vrot.lane.b32.xlu0 %v509, 28
  %v2265 = vpop.permute.xlu0 %2264
  %2266 = vrot.lane.b32.xlu0 %v510, 28
  %v2267 = vpop.permute.xlu0 %2266
  %2268 = vrot.lane.b32.xlu0 %v511, 28
  %v2269 = vpop.permute.xlu0 %2268
  %2270 = vrot.lane.b32.xlu0 %v512, 28
  %v2271 = vpop.permute.xlu0 %2270
  %2272 = vrot.lane.b32.xlu0 %v513, 28
  %v2273 = vpop.permute.xlu0 %2272
  %2274 = vrot.lane.b32.xlu0 %v514, 28
  %v2275 = vpop.permute.xlu0 %2274
  %2276 = vrot.lane.b32.xlu0 %v515, 28
  %v2277 = vpop.permute.xlu0 %2276
  %2278 = vrot.lane.b32.xlu0 %v516, 28
  %v2279 = vpop.permute.xlu0 %2278
  %2280 = vrot.lane.b32.xlu0 %v517, 28
  %v2281 = vpop.permute.xlu0 %2280
  %2282 = vrot.lane.b32.xlu0 %v518, 28
  %v2283 = vpop.permute.xlu0 %2282
  %2284 = vrot.lane.b32.xlu0 %v519, 28
  %v2285 = vpop.permute.xlu0 %2284
  %2286 = vrot.lane.b32.xlu0 %v520, 28
  %v2287 = vpop.permute.xlu0 %2286
  %2288 = vrot.lane.b32.xlu0 %v521, 28
  %v2289 = vpop.permute.xlu0 %2288
  %2290 = vrot.lane.b32.xlu0 %v522, 28
  %v2291 = vpop.permute.xlu0 %2290
  %2292 = vrot.lane.b32.xlu0 %v523, 28
  %v2293 = vpop.permute.xlu0 %2292
  %2294 = vrot.lane.b32.xlu0 %v524, 28
  %v2295 = vpop.permute.xlu0 %2294
  %2296 = vrot.lane.b32.xlu0 %v525, 28
  %v2297 = vpop.permute.xlu0 %2296
  %2298 = vrot.lane.b32.xlu0 %v526, 28
  %v2299 = vpop.permute.xlu0 %2298
  %2300 = vrot.lane.b32.xlu0 %v527, 28
  %v2301 = vpop.permute.xlu0 %2300
  %2302 = vrot.lane.b32.xlu0 %v528, 28
  %v2303 = vpop.permute.xlu0 %2302
  %2304 = vrot.lane.b32.xlu0 %v529, 28
  %v2305 = vpop.permute.xlu0 %2304
  %2306 = vrot.lane.b32.xlu0 %v530, 28
  %v2307 = vpop.permute.xlu0 %2306
  %2308 = vrot.lane.b32.xlu0 %v531, 28
  %v2309 = vpop.permute.xlu0 %2308
  %2310 = vrot.lane.b32.xlu0 %v532, 28
  %v2311 = vpop.permute.xlu0 %2310
  %2312 = vrot.lane.b32.xlu0 %v533, 28
  %v2313 = vpop.permute.xlu0 %2312
  %2314 = vrot.lane.b32.xlu0 %v534, 28
  %v2315 = vpop.permute.xlu0 %2314
  %2316 = vrot.lane.b32.xlu0 %v535, 28
  %v2317 = vpop.permute.xlu0 %2316
  %2318 = vrot.lane.b32.xlu0 %v536, 28
  %v2319 = vpop.permute.xlu0 %2318
  %2320 = vrot.lane.b32.xlu0 %v537, 28
  %v2321 = vpop.permute.xlu0 %2320
  %2322 = vrot.lane.b32.xlu0 %v538, 28
  %v2323 = vpop.permute.xlu0 %2322
  %2324 = vrot.lane.b32.xlu0 %v539, 28
  %v2325 = vpop.permute.xlu0 %2324
  %2326 = vrot.lane.b32.xlu0 %v540, 28
  %v2327 = vpop.permute.xlu0 %2326
  %2328 = vrot.lane.b32.xlu0 %v541, 28
  %v2329 = vpop.permute.xlu0 %2328
  %2330 = vrot.lane.b32.xlu0 %v542, 28
  %v2331 = vpop.permute.xlu0 %2330
  %2332 = vrot.lane.b32.xlu0 %v543, 28
  %v2333 = vpop.permute.xlu0 %2332
  %2334 = vrot.lane.b32.xlu0 %v544, 28
  %v2335 = vpop.permute.xlu0 %2334
  %2336 = vrot.lane.b32.xlu0 %v545, 28
  %v2337 = vpop.permute.xlu0 %2336
  %2466 = vrot.lane.b32.xlu0 %v546, 32
  %v2467 = vpop.permute.xlu0 %2466
  %2468 = vrot.lane.b32.xlu0 %v547, 32
  %v2469 = vpop.permute.xlu0 %2468
  %2470 = vrot.lane.b32.xlu0 %v548, 32
  %v2471 = vpop.permute.xlu0 %2470
  %2472 = vrot.lane.b32.xlu0 %v549, 32
  %v2473 = vpop.permute.xlu0 %2472
  %2474 = vrot.lane.b32.xlu0 %v550, 32
  %v2475 = vpop.permute.xlu0 %2474
  %2476 = vrot.lane.b32.xlu0 %v551, 32
  %v2477 = vpop.permute.xlu0 %2476
  %2478 = vrot.lane.b32.xlu0 %v552, 32
  %v2479 = vpop.permute.xlu0 %2478
  %2480 = vrot.lane.b32.xlu0 %v553, 32
  %v2481 = vpop.permute.xlu0 %2480
  %2482 = vrot.lane.b32.xlu0 %v554, 32
  %v2483 = vpop.permute.xlu0 %2482
  %2484 = vrot.lane.b32.xlu0 %v555, 32
  %v2485 = vpop.permute.xlu0 %2484
  %2486 = vrot.lane.b32.xlu0 %v556, 32
  %v2487 = vpop.permute.xlu0 %2486
  %2488 = vrot.lane.b32.xlu0 %v557, 32
  %v2489 = vpop.permute.xlu0 %2488
  %2490 = vrot.lane.b32.xlu0 %v558, 32
  %v2491 = vpop.permute.xlu0 %2490
  %2492 = vrot.lane.b32.xlu0 %v559, 32
  %v2493 = vpop.permute.xlu0 %2492
  %2494 = vrot.lane.b32.xlu0 %v560, 32
  %v2495 = vpop.permute.xlu0 %2494
  %2496 = vrot.lane.b32.xlu0 %v561, 32
  %v2497 = vpop.permute.xlu0 %2496
  %2498 = vrot.lane.b32.xlu0 %v562, 32
  %v2499 = vpop.permute.xlu0 %2498
  %2500 = vrot.lane.b32.xlu0 %v563, 32
  %v2501 = vpop.permute.xlu0 %2500
  %2502 = vrot.lane.b32.xlu0 %v564, 32
  %v2503 = vpop.permute.xlu0 %2502
  %2504 = vrot.lane.b32.xlu0 %v565, 32
  %v2505 = vpop.permute.xlu0 %2504
  %2506 = vrot.lane.b32.xlu0 %v566, 32
  %v2507 = vpop.permute.xlu0 %2506
  %2508 = vrot.lane.b32.xlu0 %v567, 32
  %v2509 = vpop.permute.xlu0 %2508
  %2510 = vrot.lane.b32.xlu0 %v568, 32
  %v2511 = vpop.permute.xlu0 %2510
  %2512 = vrot.lane.b32.xlu0 %v569, 32
  %v2513 = vpop.permute.xlu0 %2512
  %2514 = vrot.lane.b32.xlu0 %v570, 32
  %v2515 = vpop.permute.xlu0 %2514
  %2516 = vrot.lane.b32.xlu0 %v571, 32
  %v2517 = vpop.permute.xlu0 %2516
  %2518 = vrot.lane.b32.xlu0 %v572, 32
  %v2519 = vpop.permute.xlu0 %2518
  %2520 = vrot.lane.b32.xlu0 %v573, 32
  %v2521 = vpop.permute.xlu0 %2520
  %2522 = vrot.lane.b32.xlu0 %v574, 32
  %v2523 = vpop.permute.xlu0 %2522
  %2524 = vrot.lane.b32.xlu0 %v575, 32
  %v2525 = vpop.permute.xlu0 %2524
  %2526 = vrot.lane.b32.xlu0 %v576, 32
  %v2527 = vpop.permute.xlu0 %2526
  %2528 = vrot.lane.b32.xlu0 %v577, 32
  %v2529 = vpop.permute.xlu0 %2528
  %2530 = vrot.lane.b32.xlu0 %v578, 32
  %v2531 = vpop.permute.xlu0 %2530
  %2532 = vrot.lane.b32.xlu0 %v579, 32
  %v2533 = vpop.permute.xlu0 %2532
  %2534 = vrot.lane.b32.xlu0 %v580, 32
  %v2535 = vpop.permute.xlu0 %2534
  %2536 = vrot.lane.b32.xlu0 %v581, 32
  %v2537 = vpop.permute.xlu0 %2536
  %2538 = vrot.lane.b32.xlu0 %v582, 32
  %v2539 = vpop.permute.xlu0 %2538
  %2540 = vrot.lane.b32.xlu0 %v583, 32
  %v2541 = vpop.permute.xlu0 %2540
  %2542 = vrot.lane.b32.xlu0 %v584, 32
  %v2543 = vpop.permute.xlu0 %2542
  %2544 = vrot.lane.b32.xlu0 %v585, 32
  %v2545 = vpop.permute.xlu0 %2544
  %2546 = vrot.lane.b32.xlu0 %v586, 32
  %v2547 = vpop.permute.xlu0 %2546
  %2548 = vrot.lane.b32.xlu0 %v587, 32
  %v2549 = vpop.permute.xlu0 %2548
  %2550 = vrot.lane.b32.xlu0 %v588, 32
  %v2551 = vpop.permute.xlu0 %2550
  %2552 = vrot.lane.b32.xlu0 %v589, 32
  %v2553 = vpop.permute.xlu0 %2552
  %2554 = vrot.lane.b32.xlu0 %v590, 32
  %v2555 = vpop.permute.xlu0 %2554
  %2556 = vrot.lane.b32.xlu0 %v591, 32
  %v2557 = vpop.permute.xlu0 %2556
  %2558 = vrot.lane.b32.xlu0 %v592, 32
  %v2559 = vpop.permute.xlu0 %2558
  %2560 = vrot.lane.b32.xlu0 %v593, 32
  %v2561 = vpop.permute.xlu0 %2560
  %2562 = vrot.lane.b32.xlu0 %v594, 32
  %v2563 = vpop.permute.xlu0 %2562
  %2564 = vrot.lane.b32.xlu0 %v595, 32
  %v2565 = vpop.permute.xlu0 %2564
  %2566 = vrot.lane.b32.xlu0 %v596, 32
  %v2567 = vpop.permute.xlu0 %2566
  %2568 = vrot.lane.b32.xlu0 %v597, 32
  %v2569 = vpop.permute.xlu0 %2568
  %2570 = vrot.lane.b32.xlu0 %v598, 32
  %v2571 = vpop.permute.xlu0 %2570
  %2572 = vrot.lane.b32.xlu0 %v599, 32
  %v2573 = vpop.permute.xlu0 %2572
  %2574 = vrot.lane.b32.xlu0 %v600, 32
  %v2575 = vpop.permute.xlu0 %2574
  %2576 = vrot.lane.b32.xlu0 %v601, 32
  %v2577 = vpop.permute.xlu0 %2576
  %2578 = vrot.lane.b32.xlu0 %v602, 32
  %v2579 = vpop.permute.xlu0 %2578
  %2580 = vrot.lane.b32.xlu0 %v603, 32
  %v2581 = vpop.permute.xlu0 %2580
  %2582 = vrot.lane.b32.xlu0 %v604, 32
  %v2583 = vpop.permute.xlu0 %2582
  %2584 = vrot.lane.b32.xlu0 %v605, 32
  %v2585 = vpop.permute.xlu0 %2584
  %2586 = vrot.lane.b32.xlu0 %v606, 32
  %v2587 = vpop.permute.xlu0 %2586
  %2588 = vrot.lane.b32.xlu0 %v607, 32
  %v2589 = vpop.permute.xlu0 %2588
  %2590 = vrot.lane.b32.xlu0 %v608, 32
  %v2591 = vpop.permute.xlu0 %2590
  %2592 = vrot.lane.b32.xlu0 %v609, 32
  %v2593 = vpop.permute.xlu0 %2592
  %vm2658 = vcmask 31744
  %v2659 = vsel %vm2658, %v32, %v675
  %v2660 = vsel %vm2658, %v33, %v677
  %v2661 = vsel %vm2658, %v34, %v679
  %v2662 = vsel %vm2658, %v35, %v681
  %v2663 = vsel %vm2658, %v36, %v683
  %v2664 = vsel %vm2658, %v37, %v685
  %v2665 = vsel %vm2658, %v38, %v687
  %v2666 = vsel %vm2658, %v39, %v689
  %v2667 = vsel %vm2658, %v40, %v691
  %v2668 = vsel %vm2658, %v41, %v693
  %v2669 = vsel %vm2658, %v42, %v695
  %v2670 = vsel %vm2658, %v43, %v697
  %v2671 = vsel %vm2658, %v44, %v699
  %v2672 = vsel %vm2658, %v45, %v701
  %v2673 = vsel %vm2658, %v46, %v703
  %v2674 = vsel %vm2658, %v47, %v705
  %v2675 = vsel %vm2658, %v48, %v707
  %v2676 = vsel %vm2658, %v49, %v709
  %v2677 = vsel %vm2658, %v50, %v711
  %v2678 = vsel %vm2658, %v51, %v713
  %v2679 = vsel %vm2658, %v52, %v715
  %v2680 = vsel %vm2658, %v53, %v717
  %v2681 = vsel %vm2658, %v54, %v719
  %v2682 = vsel %vm2658, %v55, %v721
  %v2683 = vsel %vm2658, %v56, %v723
  %v2684 = vsel %vm2658, %v57, %v725
  %v2685 = vsel %vm2658, %v58, %v727
  %v2686 = vsel %vm2658, %v59, %v729
  %v2687 = vsel %vm2658, %v60, %v731
  %v2688 = vsel %vm2658, %v61, %v733
  %v2689 = vsel %vm2658, %v62, %v735
  %v2690 = vsel %vm2658, %v63, %v737
  %v2691 = vsel %vm2658, %v64, %v739
  %v2692 = vsel %vm2658, %v65, %v741
  %v2693 = vsel %vm2658, %v66, %v743
  %v2694 = vsel %vm2658, %v67, %v745
  %v2695 = vsel %vm2658, %v68, %v747
  %v2696 = vsel %vm2658, %v69, %v749
  %v2697 = vsel %vm2658, %v70, %v751
  %v2698 = vsel %vm2658, %v71, %v753
  %v2699 = vsel %vm2658, %v72, %v755
  %v2700 = vsel %vm2658, %v73, %v757
  %v2701 = vsel %vm2658, %v74, %v759
  %v2702 = vsel %vm2658, %v75, %v761
  %v2703 = vsel %vm2658, %v76, %v763
  %v2704 = vsel %vm2658, %v77, %v765
  %v2705 = vsel %vm2658, %v78, %v767
  %v2706 = vsel %vm2658, %v79, %v769
  %v2707 = vsel %vm2658, %v80, %v771
  %v2708 = vsel %vm2658, %v81, %v773
  %v2709 = vsel %vm2658, %v82, %v775
  %v2710 = vsel %vm2658, %v83, %v777
  %v2711 = vsel %vm2658, %v84, %v779
  %v2712 = vsel %vm2658, %v85, %v781
  %v2713 = vsel %vm2658, %v86, %v783
  %v2714 = vsel %vm2658, %v87, %v785
  %v2715 = vsel %vm2658, %v88, %v787
  %v2716 = vsel %vm2658, %v89, %v789
  %v2717 = vsel %vm2658, %v90, %v791
  %v2718 = vsel %vm2658, %v91, %v793
  %v2719 = vsel %vm2658, %v92, %v795
  %v2720 = vsel %vm2658, %v93, %v797
  %v2721 = vsel %vm2658, %v94, %v799
  %v2722 = vsel %vm2658, %v95, %v801
  %vm2723 = vcmask 64512
  %v2724 = vsel %vm2723, %v2659, %v931
  %v2725 = vsel %vm2723, %v2660, %v933
  %v2726 = vsel %vm2723, %v2661, %v935
  %v2727 = vsel %vm2723, %v2662, %v937
  %v2728 = vsel %vm2723, %v2663, %v939
  %v2729 = vsel %vm2723, %v2664, %v941
  %v2730 = vsel %vm2723, %v2665, %v943
  %v2731 = vsel %vm2723, %v2666, %v945
  %v2732 = vsel %vm2723, %v2667, %v947
  %v2733 = vsel %vm2723, %v2668, %v949
  %v2734 = vsel %vm2723, %v2669, %v951
  %v2735 = vsel %vm2723, %v2670, %v953
  %v2736 = vsel %vm2723, %v2671, %v955
  %v2737 = vsel %vm2723, %v2672, %v957
  %v2738 = vsel %vm2723, %v2673, %v959
  %v2739 = vsel %vm2723, %v2674, %v961
  %v2740 = vsel %vm2723, %v2675, %v963
  %v2741 = vsel %vm2723, %v2676, %v965
  %v2742 = vsel %vm2723, %v2677, %v967
  %v2743 = vsel %vm2723, %v2678, %v969
  %v2744 = vsel %vm2723, %v2679, %v971
  %v2745 = vsel %vm2723, %v2680, %v973
  %v2746 = vsel %vm2723, %v2681, %v975
  %v2747 = vsel %vm2723, %v2682, %v977
  %v2748 = vsel %vm2723, %v2683, %v979
  %v2749 = vsel %vm2723, %v2684, %v981
  %v2750 = vsel %vm2723, %v2685, %v983
  %v2751 = vsel %vm2723, %v2686, %v985
  %v2752 = vsel %vm2723, %v2687, %v987
  %v2753 = vsel %vm2723, %v2688, %v989
  %v2754 = vsel %vm2723, %v2689, %v991
  %v2755 = vsel %vm2723, %v2690, %v993
  %v2756 = vsel %vm2723, %v2691, %v995
  %v2757 = vsel %vm2723, %v2692, %v997
  %v2758 = vsel %vm2723, %v2693, %v999
  %v2759 = vsel %vm2723, %v2694, %v1001
  %v2760 = vsel %vm2723, %v2695, %v1003
  %v2761 = vsel %vm2723, %v2696, %v1005
  %v2762 = vsel %vm2723, %v2697, %v1007
  %v2763 = vsel %vm2723, %v2698, %v1009
  %v2764 = vsel %vm2723, %v2699, %v1011
  %v2765 = vsel %vm2723, %v2700, %v1013
  %v2766 = vsel %vm2723, %v2701, %v1015
  %v2767 = vsel %vm2723, %v2702, %v1017
  %v2768 = vsel %vm2723, %v2703, %v1019
  %v2769 = vsel %vm2723, %v2704, %v1021
  %v2770 = vsel %vm2723, %v2705, %v1023
  %v2771 = vsel %vm2723, %v2706, %v1025
  %v2772 = vsel %vm2723, %v2707, %v1027
  %v2773 = vsel %vm2723, %v2708, %v1029
  %v2774 = vsel %vm2723, %v2709, %v1031
  %v2775 = vsel %vm2723, %v2710, %v1033
  %v2776 = vsel %vm2723, %v2711, %v1035
  %v2777 = vsel %vm2723, %v2712, %v1037
  %v2778 = vsel %vm2723, %v2713, %v1039
  %v2779 = vsel %vm2723, %v2714, %v1041
  %v2780 = vsel %vm2723, %v2715, %v1043
  %v2781 = vsel %vm2723, %v2716, %v1045
  %v2782 = vsel %vm2723, %v2717, %v1047
  %v2783 = vsel %vm2723, %v2718, %v1049
  %v2784 = vsel %vm2723, %v2719, %v1051
  %v2785 = vsel %vm2723, %v2720, %v1053
  %v2786 = vsel %vm2723, %v2721, %v1055
  %v2787 = vsel %vm2723, %v2722, %v1057
  %vm2788 = vcmask 97280
  %v2789 = vsel %vm2788, %v2724, %v1187
  %v2790 = vsel %vm2788, %v2725, %v1189
  %v2791 = vsel %vm2788, %v2726, %v1191
  %v2792 = vsel %vm2788, %v2727, %v1193
  %v2793 = vsel %vm2788, %v2728, %v1195
  %v2794 = vsel %vm2788, %v2729, %v1197
  %v2795 = vsel %vm2788, %v2730, %v1199
  %v2796 = vsel %vm2788, %v2731, %v1201
  %v2797 = vsel %vm2788, %v2732, %v1203
  %v2798 = vsel %vm2788, %v2733, %v1205
  %v2799 = vsel %vm2788, %v2734, %v1207
  %v2800 = vsel %vm2788, %v2735, %v1209
  %v2801 = vsel %vm2788, %v2736, %v1211
  %v2802 = vsel %vm2788, %v2737, %v1213
  %v2803 = vsel %vm2788, %v2738, %v1215
  %v2804 = vsel %vm2788, %v2739, %v1217
  %v2805 = vsel %vm2788, %v2740, %v1219
  %v2806 = vsel %vm2788, %v2741, %v1221
  %v2807 = vsel %vm2788, %v2742, %v1223
  %v2808 = vsel %vm2788, %v2743, %v1225
  %v2809 = vsel %vm2788, %v2744, %v1227
  %v2810 = vsel %vm2788, %v2745, %v1229
  %v2811 = vsel %vm2788, %v2746, %v1231
  %v2812 = vsel %vm2788, %v2747, %v1233
  %v2813 = vsel %vm2788, %v2748, %v1235
  %v2814 = vsel %vm2788, %v2749, %v1237
  %v2815 = vsel %vm2788, %v2750, %v1239
  %v2816 = vsel %vm2788, %v2751, %v1241
  %v2817 = vsel %vm2788, %v2752, %v1243
  %v2818 = vsel %vm2788, %v2753, %v1245
  %v2819 = vsel %vm2788, %v2754, %v1247
  %v2820 = vsel %vm2788, %v2755, %v1249
  %v2821 = vsel %vm2788, %v2756, %v1251
  %v2822 = vsel %vm2788, %v2757, %v1253
  %v2823 = vsel %vm2788, %v2758, %v1255
  %v2824 = vsel %vm2788, %v2759, %v1257
  %v2825 = vsel %vm2788, %v2760, %v1259
  %v2826 = vsel %vm2788, %v2761, %v1261
  %v2827 = vsel %vm2788, %v2762, %v1263
  %v2828 = vsel %vm2788, %v2763, %v1265
  %v2829 = vsel %vm2788, %v2764, %v1267
  %v2830 = vsel %vm2788, %v2765, %v1269
  %v2831 = vsel %vm2788, %v2766, %v1271
  %v2832 = vsel %vm2788, %v2767, %v1273
  %v2833 = vsel %vm2788, %v2768, %v1275
  %v2834 = vsel %vm2788, %v2769, %v1277
  %v2835 = vsel %vm2788, %v2770, %v1279
  %v2836 = vsel %vm2788, %v2771, %v1281
  %v2837 = vsel %vm2788, %v2772, %v1283
  %v2838 = vsel %vm2788, %v2773, %v1285
  %v2839 = vsel %vm2788, %v2774, %v1287
  %v2840 = vsel %vm2788, %v2775, %v1289
  %v2841 = vsel %vm2788, %v2776, %v1291
  %v2842 = vsel %vm2788, %v2777, %v1293
  %v2843 = vsel %vm2788, %v2778, %v1295
  %v2844 = vsel %vm2788, %v2779, %v1297
  %v2845 = vsel %vm2788, %v2780, %v1299
  %v2846 = vsel %vm2788, %v2781, %v1301
  %v2847 = vsel %vm2788, %v2782, %v1303
  %v2848 = vsel %vm2788, %v2783, %v1305
  %v2849 = vsel %vm2788, %v2784, %v1307
  %v2850 = vsel %vm2788, %v2785, %v1309
  %v2851 = vsel %vm2788, %v2786, %v1311
  %v2852 = vsel %vm2788, %v2787, %v1313
  %vm2853 = vcmask 130048
  %v2854 = vsel %vm2853, %v2789, %v1443
  %v2855 = vsel %vm2853, %v2790, %v1445
  %v2856 = vsel %vm2853, %v2791, %v1447
  %v2857 = vsel %vm2853, %v2792, %v1449
  %v2858 = vsel %vm2853, %v2793, %v1451
  %v2859 = vsel %vm2853, %v2794, %v1453
  %v2860 = vsel %vm2853, %v2795, %v1455
  %v2861 = vsel %vm2853, %v2796, %v1457
  %v2862 = vsel %vm2853, %v2797, %v1459
  %v2863 = vsel %vm2853, %v2798, %v1461
  %v2864 = vsel %vm2853, %v2799, %v1463
  %v2865 = vsel %vm2853, %v2800, %v1465
  %v2866 = vsel %vm2853, %v2801, %v1467
  %v2867 = vsel %vm2853, %v2802, %v1469
  %v2868 = vsel %vm2853, %v2803, %v1471
  %v2869 = vsel %vm2853, %v2804, %v1473
  %v2870 = vsel %vm2853, %v2805, %v1475
  %v2871 = vsel %vm2853, %v2806, %v1477
  %v2872 = vsel %vm2853, %v2807, %v1479
  %v2873 = vsel %vm2853, %v2808, %v1481
  %v2874 = vsel %vm2853, %v2809, %v1483
  %v2875 = vsel %vm2853, %v2810, %v1485
  %v2876 = vsel %vm2853, %v2811, %v1487
  %v2877 = vsel %vm2853, %v2812, %v1489
  %v2878 = vsel %vm2853, %v2813, %v1491
  %v2879 = vsel %vm2853, %v2814, %v1493
  %v2880 = vsel %vm2853, %v2815, %v1495
  %v2881 = vsel %vm2853, %v2816, %v1497
  %v2882 = vsel %vm2853, %v2817, %v1499
  %v2883 = vsel %vm2853, %v2818, %v1501
  %v2884 = vsel %vm2853, %v2819, %v1503
  %v2885 = vsel %vm2853, %v2820, %v1505
  %v2886 = vsel %vm2853, %v2821, %v1507
  %v2887 = vsel %vm2853, %v2822, %v1509
  %v2888 = vsel %vm2853, %v2823, %v1511
  %v2889 = vsel %vm2853, %v2824, %v1513
  %v2890 = vsel %vm2853, %v2825, %v1515
  %v2891 = vsel %vm2853, %v2826, %v1517
  %v2892 = vsel %vm2853, %v2827, %v1519
  %v2893 = vsel %vm2853, %v2828, %v1521
  %v2894 = vsel %vm2853, %v2829, %v1523
  %v2895 = vsel %vm2853, %v2830, %v1525
  %v2896 = vsel %vm2853, %v2831, %v1527
  %v2897 = vsel %vm2853, %v2832, %v1529
  %v2898 = vsel %vm2853, %v2833, %v1531
  %v2899 = vsel %vm2853, %v2834, %v1533
  %v2900 = vsel %vm2853, %v2835, %v1535
  %v2901 = vsel %vm2853, %v2836, %v1537
  %v2902 = vsel %vm2853, %v2837, %v1539
  %v2903 = vsel %vm2853, %v2838, %v1541
  %v2904 = vsel %vm2853, %v2839, %v1543
  %v2905 = vsel %vm2853, %v2840, %v1545
  %v2906 = vsel %vm2853, %v2841, %v1547
  %v2907 = vsel %vm2853, %v2842, %v1549
  %v2908 = vsel %vm2853, %v2843, %v1551
  %v2909 = vsel %vm2853, %v2844, %v1553
  %v2910 = vsel %vm2853, %v2845, %v1555
  %v2911 = vsel %vm2853, %v2846, %v1557
  %v2912 = vsel %vm2853, %v2847, %v1559
  %v2913 = vsel %vm2853, %v2848, %v1561
  %v2914 = vsel %vm2853, %v2849, %v1563
  %v2915 = vsel %vm2853, %v2850, %v1565
  %v2916 = vsel %vm2853, %v2851, %v1567
  %v2917 = vsel %vm2853, %v2852, %v1569
  %vm2918 = vcmask 162816
  %v2919 = vsel %vm2918, %v2854, %v1699
  %v2920 = vsel %vm2918, %v2855, %v1701
  %v2921 = vsel %vm2918, %v2856, %v1703
  %v2922 = vsel %vm2918, %v2857, %v1705
  %v2923 = vsel %vm2918, %v2858, %v1707
  %v2924 = vsel %vm2918, %v2859, %v1709
  %v2925 = vsel %vm2918, %v2860, %v1711
  %v2926 = vsel %vm2918, %v2861, %v1713
  %v2927 = vsel %vm2918, %v2862, %v1715
  %v2928 = vsel %vm2918, %v2863, %v1717
  %v2929 = vsel %vm2918, %v2864, %v1719
  %v2930 = vsel %vm2918, %v2865, %v1721
  %v2931 = vsel %vm2918, %v2866, %v1723
  %v2932 = vsel %vm2918, %v2867, %v1725
  %v2933 = vsel %vm2918, %v2868, %v1727
  %v2934 = vsel %vm2918, %v2869, %v1729
  %v2935 = vsel %vm2918, %v2870, %v1731
  %v2936 = vsel %vm2918, %v2871, %v1733
  %v2937 = vsel %vm2918, %v2872, %v1735
  %v2938 = vsel %vm2918, %v2873, %v1737
  %v2939 = vsel %vm2918, %v2874, %v1739
  %v2940 = vsel %vm2918, %v2875, %v1741
  %v2941 = vsel %vm2918, %v2876, %v1743
  %v2942 = vsel %vm2918, %v2877, %v1745
  %v2943 = vsel %vm2918, %v2878, %v1747
  %v2944 = vsel %vm2918, %v2879, %v1749
  %v2945 = vsel %vm2918, %v2880, %v1751
  %v2946 = vsel %vm2918, %v2881, %v1753
  %v2947 = vsel %vm2918, %v2882, %v1755
  %v2948 = vsel %vm2918, %v2883, %v1757
  %v2949 = vsel %vm2918, %v2884, %v1759
  %v2950 = vsel %vm2918, %v2885, %v1761
  %v2951 = vsel %vm2918, %v2886, %v1763
  %v2952 = vsel %vm2918, %v2887, %v1765
  %v2953 = vsel %vm2918, %v2888, %v1767
  %v2954 = vsel %vm2918, %v2889, %v1769
  %v2955 = vsel %vm2918, %v2890, %v1771
  %v2956 = vsel %vm2918, %v2891, %v1773
  %v2957 = vsel %vm2918, %v2892, %v1775
  %v2958 = vsel %vm2918, %v2893, %v1777
  %v2959 = vsel %vm2918, %v2894, %v1779
  %v2960 = vsel %vm2918, %v2895, %v1781
  %v2961 = vsel %vm2918, %v2896, %v1783
  %v2962 = vsel %vm2918, %v2897, %v1785
  %v2963 = vsel %vm2918, %v2898, %v1787
  %v2964 = vsel %vm2918, %v2899, %v1789
  %v2965 = vsel %vm2918, %v2900, %v1791
  %v2966 = vsel %vm2918, %v2901, %v1793
  %v2967 = vsel %vm2918, %v2902, %v1795
  %v2968 = vsel %vm2918, %v2903, %v1797
  %v2969 = vsel %vm2918, %v2904, %v1799
  %v2970 = vsel %vm2918, %v2905, %v1801
  %v2971 = vsel %vm2918, %v2906, %v1803
  %v2972 = vsel %vm2918, %v2907, %v1805
  %v2973 = vsel %vm2918, %v2908, %v1807
  %v2974 = vsel %vm2918, %v2909, %v1809
  %v2975 = vsel %vm2918, %v2910, %v1811
  %v2976 = vsel %vm2918, %v2911, %v1813
  %v2977 = vsel %vm2918, %v2912, %v1815
  %v2978 = vsel %vm2918, %v2913, %v1817
  %v2979 = vsel %vm2918, %v2914, %v1819
  %v2980 = vsel %vm2918, %v2915, %v1821
  %v2981 = vsel %vm2918, %v2916, %v1823
  %v2982 = vsel %vm2918, %v2917, %v1825
  %vm2983 = vcmask 195584
  %v2984 = vsel %vm2983, %v2919, %v1955
  %v2985 = vsel %vm2983, %v2920, %v1957
  %v2986 = vsel %vm2983, %v2921, %v1959
  %v2987 = vsel %vm2983, %v2922, %v1961
  %v2988 = vsel %vm2983, %v2923, %v1963
  %v2989 = vsel %vm2983, %v2924, %v1965
  %v2990 = vsel %vm2983, %v2925, %v1967
  %v2991 = vsel %vm2983, %v2926, %v1969
  %v2992 = vsel %vm2983, %v2927, %v1971
  %v2993 = vsel %vm2983, %v2928, %v1973
  %v2994 = vsel %vm2983, %v2929, %v1975
  %v2995 = vsel %vm2983, %v2930, %v1977
  %v2996 = vsel %vm2983, %v2931, %v1979
  %v2997 = vsel %vm2983, %v2932, %v1981
  %v2998 = vsel %vm2983, %v2933, %v1983
  %v2999 = vsel %vm2983, %v2934, %v1985
  %v3000 = vsel %vm2983, %v2935, %v1987
  %v3001 = vsel %vm2983, %v2936, %v1989
  %v3002 = vsel %vm2983, %v2937, %v1991
  %v3003 = vsel %vm2983, %v2938, %v1993
  %v3004 = vsel %vm2983, %v2939, %v1995
  %v3005 = vsel %vm2983, %v2940, %v1997
  %v3006 = vsel %vm2983, %v2941, %v1999
  %v3007 = vsel %vm2983, %v2942, %v2001
  %v3008 = vsel %vm2983, %v2943, %v2003
  %v3009 = vsel %vm2983, %v2944, %v2005
  %v3010 = vsel %vm2983, %v2945, %v2007
  %v3011 = vsel %vm2983, %v2946, %v2009
  %v3012 = vsel %vm2983, %v2947, %v2011
  %v3013 = vsel %vm2983, %v2948, %v2013
  %v3014 = vsel %vm2983, %v2949, %v2015
  %v3015 = vsel %vm2983, %v2950, %v2017
  %v3016 = vsel %vm2983, %v2951, %v2019
  %v3017 = vsel %vm2983, %v2952, %v2021
  %v3018 = vsel %vm2983, %v2953, %v2023
  %v3019 = vsel %vm2983, %v2954, %v2025
  %v3020 = vsel %vm2983, %v2955, %v2027
  %v3021 = vsel %vm2983, %v2956, %v2029
  %v3022 = vsel %vm2983, %v2957, %v2031
  %v3023 = vsel %vm2983, %v2958, %v2033
  %v3024 = vsel %vm2983, %v2959, %v2035
  %v3025 = vsel %vm2983, %v2960, %v2037
  %v3026 = vsel %vm2983, %v2961, %v2039
  %v3027 = vsel %vm2983, %v2962, %v2041
  %v3028 = vsel %vm2983, %v2963, %v2043
  %v3029 = vsel %vm2983, %v2964, %v2045
  %v3030 = vsel %vm2983, %v2965, %v2047
  %v3031 = vsel %vm2983, %v2966, %v2049
  %v3032 = vsel %vm2983, %v2967, %v2051
  %v3033 = vsel %vm2983, %v2968, %v2053
  %v3034 = vsel %vm2983, %v2969, %v2055
  %v3035 = vsel %vm2983, %v2970, %v2057
  %v3036 = vsel %vm2983, %v2971, %v2059
  %v3037 = vsel %vm2983, %v2972, %v2061
  %v3038 = vsel %vm2983, %v2973, %v2063
  %v3039 = vsel %vm2983, %v2974, %v2065
  %v3040 = vsel %vm2983, %v2975, %v2067
  %v3041 = vsel %vm2983, %v2976, %v2069
  %v3042 = vsel %vm2983, %v2977, %v2071
  %v3043 = vsel %vm2983, %v2978, %v2073
  %v3044 = vsel %vm2983, %v2979, %v2075
  %v3045 = vsel %vm2983, %v2980, %v2077
  %v3046 = vsel %vm2983, %v2981, %v2079
  %v3047 = vsel %vm2983, %v2982, %v2081
  %vm3048 = vcmask 228352
  %v3049 = vsel %vm3048, %v2984, %v2211
  %v3050 = vsel %vm3048, %v2985, %v2213
  %v3051 = vsel %vm3048, %v2986, %v2215
  %v3052 = vsel %vm3048, %v2987, %v2217
  %v3053 = vsel %vm3048, %v2988, %v2219
  %v3054 = vsel %vm3048, %v2989, %v2221
  %v3055 = vsel %vm3048, %v2990, %v2223
  %v3056 = vsel %vm3048, %v2991, %v2225
  %v3057 = vsel %vm3048, %v2992, %v2227
  %v3058 = vsel %vm3048, %v2993, %v2229
  %v3059 = vsel %vm3048, %v2994, %v2231
  %v3060 = vsel %vm3048, %v2995, %v2233
  %v3061 = vsel %vm3048, %v2996, %v2235
  %v3062 = vsel %vm3048, %v2997, %v2237
  %v3063 = vsel %vm3048, %v2998, %v2239
  %v3064 = vsel %vm3048, %v2999, %v2241
  %v3065 = vsel %vm3048, %v3000, %v2243
  %v3066 = vsel %vm3048, %v3001, %v2245
  %v3067 = vsel %vm3048, %v3002, %v2247
  %v3068 = vsel %vm3048, %v3003, %v2249
  %v3069 = vsel %vm3048, %v3004, %v2251
  %v3070 = vsel %vm3048, %v3005, %v2253
  %v3071 = vsel %vm3048, %v3006, %v2255
  %v3072 = vsel %vm3048, %v3007, %v2257
  %v3073 = vsel %vm3048, %v3008, %v2259
  %v3074 = vsel %vm3048, %v3009, %v2261
  %v3075 = vsel %vm3048, %v3010, %v2263
  %v3076 = vsel %vm3048, %v3011, %v2265
  %v3077 = vsel %vm3048, %v3012, %v2267
  %v3078 = vsel %vm3048, %v3013, %v2269
  %v3079 = vsel %vm3048, %v3014, %v2271
  %v3080 = vsel %vm3048, %v3015, %v2273
  %v3081 = vsel %vm3048, %v3016, %v2275
  %v3082 = vsel %vm3048, %v3017, %v2277
  %v3083 = vsel %vm3048, %v3018, %v2279
  %v3084 = vsel %vm3048, %v3019, %v2281
  %v3085 = vsel %vm3048, %v3020, %v2283
  %v3086 = vsel %vm3048, %v3021, %v2285
  %v3087 = vsel %vm3048, %v3022, %v2287
  %v3088 = vsel %vm3048, %v3023, %v2289
  %v3089 = vsel %vm3048, %v3024, %v2291
  %v3090 = vsel %vm3048, %v3025, %v2293
  %v3091 = vsel %vm3048, %v3026, %v2295
  %v3092 = vsel %vm3048, %v3027, %v2297
  %v3093 = vsel %vm3048, %v3028, %v2299
  %v3094 = vsel %vm3048, %v3029, %v2301
  %v3095 = vsel %vm3048, %v3030, %v2303
  %v3096 = vsel %vm3048, %v3031, %v2305
  %v3097 = vsel %vm3048, %v3032, %v2307
  %v3098 = vsel %vm3048, %v3033, %v2309
  %v3099 = vsel %vm3048, %v3034, %v2311
  %v3100 = vsel %vm3048, %v3035, %v2313
  %v3101 = vsel %vm3048, %v3036, %v2315
  %v3102 = vsel %vm3048, %v3037, %v2317
  %v3103 = vsel %vm3048, %v3038, %v2319
  %v3104 = vsel %vm3048, %v3039, %v2321
  %v3105 = vsel %vm3048, %v3040, %v2323
  %v3106 = vsel %vm3048, %v3041, %v2325
  %v3107 = vsel %vm3048, %v3042, %v2327
  %v3108 = vsel %vm3048, %v3043, %v2329
  %v3109 = vsel %vm3048, %v3044, %v2331
  %v3110 = vsel %vm3048, %v3045, %v2333
  %v3111 = vsel %vm3048, %v3046, %v2335
  %v3112 = vsel %vm3048, %v3047, %v2337
  %vm3113 = vcmask 261120
  %v3114 = vsel %vm3113, %v3049, %v2467
  %v3115 = vsel %vm3113, %v3050, %v2469
  %v3116 = vsel %vm3113, %v3051, %v2471
  %v3117 = vsel %vm3113, %v3052, %v2473
  %v3118 = vsel %vm3113, %v3053, %v2475
  %v3119 = vsel %vm3113, %v3054, %v2477
  %v3120 = vsel %vm3113, %v3055, %v2479
  %v3121 = vsel %vm3113, %v3056, %v2481
  %v3122 = vsel %vm3113, %v3057, %v2483
  %v3123 = vsel %vm3113, %v3058, %v2485
  %v3124 = vsel %vm3113, %v3059, %v2487
  %v3125 = vsel %vm3113, %v3060, %v2489
  %v3126 = vsel %vm3113, %v3061, %v2491
  %v3127 = vsel %vm3113, %v3062, %v2493
  %v3128 = vsel %vm3113, %v3063, %v2495
  %v3129 = vsel %vm3113, %v3064, %v2497
  %v3130 = vsel %vm3113, %v3065, %v2499
  %v3131 = vsel %vm3113, %v3066, %v2501
  %v3132 = vsel %vm3113, %v3067, %v2503
  %v3133 = vsel %vm3113, %v3068, %v2505
  %v3134 = vsel %vm3113, %v3069, %v2507
  %v3135 = vsel %vm3113, %v3070, %v2509
  %v3136 = vsel %vm3113, %v3071, %v2511
  %v3137 = vsel %vm3113, %v3072, %v2513
  %v3138 = vsel %vm3113, %v3073, %v2515
  %v3139 = vsel %vm3113, %v3074, %v2517
  %v3140 = vsel %vm3113, %v3075, %v2519
  %v3141 = vsel %vm3113, %v3076, %v2521
  %v3142 = vsel %vm3113, %v3077, %v2523
  %v3143 = vsel %vm3113, %v3078, %v2525
  %v3144 = vsel %vm3113, %v3079, %v2527
  %v3145 = vsel %vm3113, %v3080, %v2529
  %v3146 = vsel %vm3113, %v3081, %v2531
  %v3147 = vsel %vm3113, %v3082, %v2533
  %v3148 = vsel %vm3113, %v3083, %v2535
  %v3149 = vsel %vm3113, %v3084, %v2537
  %v3150 = vsel %vm3113, %v3085, %v2539
  %v3151 = vsel %vm3113, %v3086, %v2541
  %v3152 = vsel %vm3113, %v3087, %v2543
  %v3153 = vsel %vm3113, %v3088, %v2545
  %v3154 = vsel %vm3113, %v3089, %v2547
  %v3155 = vsel %vm3113, %v3090, %v2549
  %v3156 = vsel %vm3113, %v3091, %v2551
  %v3157 = vsel %vm3113, %v3092, %v2553
  %v3158 = vsel %vm3113, %v3093, %v2555
  %v3159 = vsel %vm3113, %v3094, %v2557
  %v3160 = vsel %vm3113, %v3095, %v2559
  %v3161 = vsel %vm3113, %v3096, %v2561
  %v3162 = vsel %vm3113, %v3097, %v2563
  %v3163 = vsel %vm3113, %v3098, %v2565
  %v3164 = vsel %vm3113, %v3099, %v2567
  %v3165 = vsel %vm3113, %v3100, %v2569
  %v3166 = vsel %vm3113, %v3101, %v2571
  %v3167 = vsel %vm3113, %v3102, %v2573
  %v3168 = vsel %vm3113, %v3103, %v2575
  %v3169 = vsel %vm3113, %v3104, %v2577
  %v3170 = vsel %vm3113, %v3105, %v2579
  %v3171 = vsel %vm3113, %v3106, %v2581
  %v3172 = vsel %vm3113, %v3107, %v2583
  %v3173 = vsel %vm3113, %v3108, %v2585
  %v3174 = vsel %vm3113, %v3109, %v2587
  %v3175 = vsel %vm3113, %v3110, %v2589
  %v3176 = vsel %vm3113, %v3111, %v2591
  %v3177 = vsel %vm3113, %v3112, %v2593
  %v3178 = vld [vmem:[%s1] sm:$0xff]
  %v3179 = vld [vmem:[%s1 + $0x8] sm:$0xff]
  %v3180 = vld [vmem:[%s1 + $0x10] sm:$0xff]
  %v3181 = vld [vmem:[%s1 + $0x18] sm:$0xff]
  %v3182 = vld [vmem:[%s1 + $0x20] sm:$0xf]
  %vm3183 = vcmask 293888
  %v3185 = vsel %vm3183, %v3114, 0
  %v3188 = vsel %vm3183, %v3115, 0
  %v3191 = vsel %vm3183, %v3116, 0
  %v3194 = vsel %vm3183, %v3117, 0
  %v3197 = vsel %vm3183, %v3118, 0
  %v3200 = vsel %vm3183, %v3119, 0
  %v3203 = vsel %vm3183, %v3120, 0
  %v3206 = vsel %vm3183, %v3121, 0
  %v3209 = vsel %vm3183, %v3122, 0
  %v3212 = vsel %vm3183, %v3123, 0
  %v3215 = vsel %vm3183, %v3124, 0
  %v3218 = vsel %vm3183, %v3125, 0
  %v3221 = vsel %vm3183, %v3126, 0
  %v3224 = vsel %vm3183, %v3127, 0
  %v3227 = vsel %vm3183, %v3128, 0
  %v3230 = vsel %vm3183, %v3129, 0
  %v3233 = vsel %vm3183, %v3130, 0
  %v3236 = vsel %vm3183, %v3131, 0
  %v3239 = vsel %vm3183, %v3132, 0
  %v3242 = vsel %vm3183, %v3133, 0
  %v3245 = vsel %vm3183, %v3134, 0
  %v3248 = vsel %vm3183, %v3135, 0
  %v3251 = vsel %vm3183, %v3136, 0
  %v3254 = vsel %vm3183, %v3137, 0
  %v3257 = vsel %vm3183, %v3138, 0
  %v3260 = vsel %vm3183, %v3139, 0
  %v3263 = vsel %vm3183, %v3140, 0
  %v3266 = vsel %vm3183, %v3141, 0
  %v3269 = vsel %vm3183, %v3142, 0
  %v3272 = vsel %vm3183, %v3143, 0
  %v3275 = vsel %vm3183, %v3144, 0
  %v3278 = vsel %vm3183, %v3145, 0
  %v3281 = vsel %vm3183, %v3146, 0
  %v3284 = vsel %vm3183, %v3147, 0
  %v3287 = vsel %vm3183, %v3148, 0
  %v3290 = vsel %vm3183, %v3149, 0
  %v3293 = vsel %vm3183, %v3150, 0
  %v3296 = vsel %vm3183, %v3151, 0
  %v3299 = vsel %vm3183, %v3152, 0
  %v3302 = vsel %vm3183, %v3153, 0
  %v3305 = vsel %vm3183, %v3154, 0
  %v3308 = vsel %vm3183, %v3155, 0
  %v3311 = vsel %vm3183, %v3156, 0
  %v3314 = vsel %vm3183, %v3157, 0
  %v3317 = vsel %vm3183, %v3158, 0
  %v3320 = vsel %vm3183, %v3159, 0
  %v3323 = vsel %vm3183, %v3160, 0
  %v3326 = vsel %vm3183, %v3161, 0
  %v3329 = vsel %vm3183, %v3162, 0
  %v3332 = vsel %vm3183, %v3163, 0
  %v3335 = vsel %vm3183, %v3164, 0
  %v3338 = vsel %vm3183, %v3165, 0
  %v3341 = vsel %vm3183, %v3166, 0
  %v3344 = vsel %vm3183, %v3167, 0
  %v3347 = vsel %vm3183, %v3168, 0
  %v3350 = vsel %vm3183, %v3169, 0
  %v3353 = vsel %vm3183, %v3170, 0
  %v3356 = vsel %vm3183, %v3171, 0
  %v3359 = vsel %vm3183, %v3172, 0
  %v3362 = vsel %vm3183, %v3173, 0
  %v3365 = vsel %vm3183, %v3174, 0
  %v3368 = vsel %vm3183, %v3175, 0
  %v3371 = vsel %vm3183, %v3176, 0
  %v3374 = vsel %vm3183, %v3177, 0
  %vm3376 = vcmask 1043456
  %v3378 = vsel %vm3376, %v3182, 0
  %3380 = vmatprep.subr.mxu0 0.0
  %3381 = vmatpush1.msra.mxu0 0.0
  %3382 = vmatprep.subr.mxu0 0.0
  %3383 = vmatpush1.msra.mxu0 0.0
  %3384 = vmatprep.subr.mxu0 0.0
  %3385 = vmatpush1.msra.mxu0 0.0
  %3386 = vmatprep.subr.mxu0 0.0
  %3387 = vmatpush1.msra.mxu0 0.0
  %3388 = vmatprep.subr.mxu0 0.0
  %3389 = vmatpush1.msra.mxu0 0.0
  %3390 = vmatprep.subr.mxu0 0.0
  %3391 = vmatpush1.msra.mxu0 0.0
  %3392 = vmatprep.subr.mxu0 0.0
  %3393 = vmatpush1.msra.mxu0 0.0
  %3394 = vmatprep.subr.mxu0 0.0
  %3395 = vmatpush1.msra.mxu0 0.0
  %3396 = vmatprep.subr.mxu0 0.0
  %3397 = vmatpush1.msra.mxu0 0.0
  %3398 = vmatprep.subr.mxu0 0.0
  %3399 = vmatpush1.msra.mxu0 0.0
  %3400 = vmatprep.subr.mxu0 0.0
  %3401 = vmatpush1.msra.mxu0 0.0
  %3402 = vmatprep.subr.mxu0 0.0
  %3403 = vmatpush1.msra.mxu0 %v3378
  %3404 = vmatprep.subr.mxu0 0.0
  %3405 = vmatpush1.msra.mxu0 %v3181
  %3406 = vmatprep.subr.mxu0 0.0
  %3407 = vmatpush1.msra.mxu0 %v3180
  %3408 = vmatprep.subr.mxu0 0.0
  %3409 = vmatpush1.msra.mxu0 %v3179
  %3410 = vmatprep.subr.mxu0 0.0
  %3411 = vmatpush1.msra.mxu0 %v3178
  %3412 = vmatprep.subr.mxu0 0.0
  %3413 = vmatpush2.msra.mxu0 0.0
  %3414 = vmatprep.subr.mxu0 0.0
  %3415 = vmatpush2.msra.mxu0 0.0
  %3416 = vmatprep.subr.mxu0 0.0
  %3417 = vmatpush2.msra.mxu0 0.0
  %3418 = vmatprep.subr.mxu0 0.0
  %3419 = vmatpush2.msra.mxu0 0.0
  %3420 = vmatprep.subr.mxu0 0.0
  %3421 = vmatpush2.msra.mxu0 0.0
  %3422 = vmatprep.subr.mxu0 0.0
  %3423 = vmatpush2.msra.mxu0 0.0
  %3424 = vmatprep.subr.mxu0 0.0
  %3425 = vmatpush2.msra.mxu0 0.0
  %3426 = vmatprep.subr.mxu0 0.0
  %3427 = vmatpush2.msra.mxu0 0.0
  %3428 = vmatprep.subr.mxu0 0.0
  %3429 = vmatpush2.msra.mxu0 0.0
  %3430 = vmatprep.subr.mxu0 0.0
  %3431 = vmatpush2.msra.mxu0 0.0
  %3432 = vmatprep.subr.mxu0 0.0
  %3433 = vmatpush2.msra.mxu0 0.0
  %3434 = vmatprep.subr.mxu0 0.0
  %3435 = vmatpush2.msra.mxu0 0.0
  %3436 = vmatprep.subr.mxu0 0.0
  %3437 = vmatpush2.msra.mxu0 0.0
  %3438 = vmatprep.subr.mxu0 0.0
  %3439 = vmatpush2.msra.mxu0 0.0
  %3440 = vmatprep.subr.mxu0 0.0
  %3441 = vmatpush2.msra.mxu0 0.0
  %3442 = vmatprep.subr.mxu0 0.0
  %3443 = vmatpush2.msra.mxu0 0.0
  %3444 = vmatprep.mubr.f32.mxu0 0.0
  %3445 = vmatmul.mubr.f32.gmra.mxu0 %v3185
  %v3446 = vpop.f32.mrf.mxu0
  %v3447 = vadd.f32 0.0, %v3446
  %v3448 = vpop.f32.mrf.mxu0
  %3449 = vmatprep.mubr.f32.mxu0 0.0
  %3450 = vmatmul.mubr.f32.gmra.mxu0 %v3188
  %v3451 = vpop.f32.mrf.mxu0
  %v3452 = vadd.f32 0.0, %v3451
  %v3453 = vpop.f32.mrf.mxu0
  %3454 = vmatprep.mubr.f32.mxu0 0.0
  %3455 = vmatmul.mubr.f32.gmra.mxu0 %v3191
  %v3456 = vpop.f32.mrf.mxu0
  %v3457 = vadd.f32 0.0, %v3456
  %v3458 = vpop.f32.mrf.mxu0
  %3459 = vmatprep.mubr.f32.mxu0 0.0
  %3460 = vmatmul.mubr.f32.gmra.mxu0 %v3194
  %v3461 = vpop.f32.mrf.mxu0
  %v3462 = vadd.f32 0.0, %v3461
  %v3463 = vpop.f32.mrf.mxu0
  %3464 = vmatprep.mubr.f32.mxu0 0.0
  %3465 = vmatmul.mubr.f32.gmra.mxu0 %v3197
  %v3466 = vpop.f32.mrf.mxu0
  %v3467 = vadd.f32 0.0, %v3466
  %v3468 = vpop.f32.mrf.mxu0
  %3469 = vmatprep.mubr.f32.mxu0 0.0
  %3470 = vmatmul.mubr.f32.gmra.mxu0 %v3200
  %v3471 = vpop.f32.mrf.mxu0
  %v3472 = vadd.f32 0.0, %v3471
  %v3473 = vpop.f32.mrf.mxu0
  %3474 = vmatprep.mubr.f32.mxu0 0.0
  %3475 = vmatmul.mubr.f32.gmra.mxu0 %v3203
  %v3476 = vpop.f32.mrf.mxu0
  %v3477 = vadd.f32 0.0, %v3476
  %v3478 = vpop.f32.mrf.mxu0
  %3479 = vmatprep.mubr.f32.mxu0 0.0
  %3480 = vmatmul.mubr.f32.gmra.mxu0 %v3206
  %v3481 = vpop.f32.mrf.mxu0
  %v3482 = vadd.f32 0.0, %v3481
  %v3483 = vpop.f32.mrf.mxu0
  %3484 = vmatprep.mubr.f32.mxu0 0.0
  %3485 = vmatmul.mubr.f32.gmra.mxu0 %v3209
  %v3486 = vpop.f32.mrf.mxu0
  %v3487 = vadd.f32 0.0, %v3486
  %v3488 = vpop.f32.mrf.mxu0
  %3489 = vmatprep.mubr.f32.mxu0 0.0
  %3490 = vmatmul.mubr.f32.gmra.mxu0 %v3212
  %v3491 = vpop.f32.mrf.mxu0
  %v3492 = vadd.f32 0.0, %v3491
  %v3493 = vpop.f32.mrf.mxu0
  %3494 = vmatprep.mubr.f32.mxu0 0.0
  %3495 = vmatmul.mubr.f32.gmra.mxu0 %v3215
  %v3496 = vpop.f32.mrf.mxu0
  %v3497 = vadd.f32 0.0, %v3496
  %v3498 = vpop.f32.mrf.mxu0
  %3499 = vmatprep.mubr.f32.mxu0 0.0
  %3500 = vmatmul.mubr.f32.gmra.mxu0 %v3218
  %v3501 = vpop.f32.mrf.mxu0
  %v3502 = vadd.f32 0.0, %v3501
  %v3503 = vpop.f32.mrf.mxu0
  %3504 = vmatprep.mubr.f32.mxu0 0.0
  %3505 = vmatmul.mubr.f32.gmra.mxu0 %v3221
  %v3506 = vpop.f32.mrf.mxu0
  %v3507 = vadd.f32 0.0, %v3506
  %v3508 = vpop.f32.mrf.mxu0
  %3509 = vmatprep.mubr.f32.mxu0 0.0
  %3510 = vmatmul.mubr.f32.gmra.mxu0 %v3224
  %v3511 = vpop.f32.mrf.mxu0
  %v3512 = vadd.f32 0.0, %v3511
  %v3513 = vpop.f32.mrf.mxu0
  %3514 = vmatprep.mubr.f32.mxu0 0.0
  %3515 = vmatmul.mubr.f32.gmra.mxu0 %v3227
  %v3516 = vpop.f32.mrf.mxu0
  %v3517 = vadd.f32 0.0, %v3516
  %v3518 = vpop.f32.mrf.mxu0
  %3519 = vmatprep.mubr.f32.mxu0 0.0
  %3520 = vmatmul.mubr.f32.gmra.mxu0 %v3230
  %v3521 = vpop.f32.mrf.mxu0
  %v3522 = vadd.f32 0.0, %v3521
  %v3523 = vpop.f32.mrf.mxu0
  %3524 = vmatprep.mubr.f32.mxu0 0.0
  %3525 = vmatmul.mubr.f32.gmra.mxu0 %v3233
  %v3526 = vpop.f32.mrf.mxu0
  %v3527 = vadd.f32 0.0, %v3526
  %v3528 = vpop.f32.mrf.mxu0
  %3529 = vmatprep.mubr.f32.mxu0 0.0
  %3530 = vmatmul.mubr.f32.gmra.mxu0 %v3236
  %v3531 = vpop.f32.mrf.mxu0
  %v3532 = vadd.f32 0.0, %v3531
  %v3533 = vpop.f32.mrf.mxu0
  %3534 = vmatprep.mubr.f32.mxu0 0.0
  %3535 = vmatmul.mubr.f32.gmra.mxu0 %v3239
  %v3536 = vpop.f32.mrf.mxu0
  %v3537 = vadd.f32 0.0, %v3536
  %v3538 = vpop.f32.mrf.mxu0
  %3539 = vmatprep.mubr.f32.mxu0 0.0
  %3540 = vmatmul.mubr.f32.gmra.mxu0 %v3242
  %v3541 = vpop.f32.mrf.mxu0
  %v3542 = vadd.f32 0.0, %v3541
  %v3543 = vpop.f32.mrf.mxu0
  %3544 = vmatprep.mubr.f32.mxu0 0.0
  %3545 = vmatmul.mubr.f32.gmra.mxu0 %v3245
  %v3546 = vpop.f32.mrf.mxu0
  %v3547 = vadd.f32 0.0, %v3546
  %v3548 = vpop.f32.mrf.mxu0
  %3549 = vmatprep.mubr.f32.mxu0 0.0
  %3550 = vmatmul.mubr.f32.gmra.mxu0 %v3248
  %v3551 = vpop.f32.mrf.mxu0
  %v3552 = vadd.f32 0.0, %v3551
  %v3553 = vpop.f32.mrf.mxu0
  %3554 = vmatprep.mubr.f32.mxu0 0.0
  %3555 = vmatmul.mubr.f32.gmra.mxu0 %v3251
  %v3556 = vpop.f32.mrf.mxu0
  %v3557 = vadd.f32 0.0, %v3556
  %v3558 = vpop.f32.mrf.mxu0
  %3559 = vmatprep.mubr.f32.mxu0 0.0
  %3560 = vmatmul.mubr.f32.gmra.mxu0 %v3254
  %v3561 = vpop.f32.mrf.mxu0
  %v3562 = vadd.f32 0.0, %v3561
  %v3563 = vpop.f32.mrf.mxu0
  %3564 = vmatprep.mubr.f32.mxu0 0.0
  %3565 = vmatmul.mubr.f32.gmra.mxu0 %v3257
  %v3566 = vpop.f32.mrf.mxu0
  %v3567 = vadd.f32 0.0, %v3566
  %v3568 = vpop.f32.mrf.mxu0
  %3569 = vmatprep.mubr.f32.mxu0 0.0
  %3570 = vmatmul.mubr.f32.gmra.mxu0 %v3260
  %v3571 = vpop.f32.mrf.mxu0
  %v3572 = vadd.f32 0.0, %v3571
  %v3573 = vpop.f32.mrf.mxu0
  %3574 = vmatprep.mubr.f32.mxu0 0.0
  %3575 = vmatmul.mubr.f32.gmra.mxu0 %v3263
  %v3576 = vpop.f32.mrf.mxu0
  %v3577 = vadd.f32 0.0, %v3576
  %v3578 = vpop.f32.mrf.mxu0
  %3579 = vmatprep.mubr.f32.mxu0 0.0
  %3580 = vmatmul.mubr.f32.gmra.mxu0 %v3266
  %v3581 = vpop.f32.mrf.mxu0
  %v3582 = vadd.f32 0.0, %v3581
  %v3583 = vpop.f32.mrf.mxu0
  %3584 = vmatprep.mubr.f32.mxu0 0.0
  %3585 = vmatmul.mubr.f32.gmra.mxu0 %v3269
  %v3586 = vpop.f32.mrf.mxu0
  %v3587 = vadd.f32 0.0, %v3586
  %v3588 = vpop.f32.mrf.mxu0
  %3589 = vmatprep.mubr.f32.mxu0 0.0
  %3590 = vmatmul.mubr.f32.gmra.mxu0 %v3272
  %v3591 = vpop.f32.mrf.mxu0
  %v3592 = vadd.f32 0.0, %v3591
  %v3593 = vpop.f32.mrf.mxu0
  %3594 = vmatprep.mubr.f32.mxu0 0.0
  %3595 = vmatmul.mubr.f32.gmra.mxu0 %v3275
  %v3596 = vpop.f32.mrf.mxu0
  %v3597 = vadd.f32 0.0, %v3596
  %v3598 = vpop.f32.mrf.mxu0
  %3599 = vmatprep.mubr.f32.mxu0 0.0
  %3600 = vmatmul.mubr.f32.gmra.mxu0 %v3278
  %v3601 = vpop.f32.mrf.mxu0
  %v3602 = vadd.f32 0.0, %v3601
  %v3603 = vpop.f32.mrf.mxu0
  %3604 = vmatprep.mubr.f32.mxu0 0.0
  %3605 = vmatmul.mubr.f32.gmra.mxu0 %v3281
  %v3606 = vpop.f32.mrf.mxu0
  %v3607 = vadd.f32 0.0, %v3606
  %v3608 = vpop.f32.mrf.mxu0
  %3609 = vmatprep.mubr.f32.mxu0 0.0
  %3610 = vmatmul.mubr.f32.gmra.mxu0 %v3284
  %v3611 = vpop.f32.mrf.mxu0
  %v3612 = vadd.f32 0.0, %v3611
  %v3613 = vpop.f32.mrf.mxu0
  %3614 = vmatprep.mubr.f32.mxu0 0.0
  %3615 = vmatmul.mubr.f32.gmra.mxu0 %v3287
  %v3616 = vpop.f32.mrf.mxu0
  %v3617 = vadd.f32 0.0, %v3616
  %v3618 = vpop.f32.mrf.mxu0
  %3619 = vmatprep.mubr.f32.mxu0 0.0
  %3620 = vmatmul.mubr.f32.gmra.mxu0 %v3290
  %v3621 = vpop.f32.mrf.mxu0
  %v3622 = vadd.f32 0.0, %v3621
  %v3623 = vpop.f32.mrf.mxu0
  %3624 = vmatprep.mubr.f32.mxu0 0.0
  %3625 = vmatmul.mubr.f32.gmra.mxu0 %v3293
  %v3626 = vpop.f32.mrf.mxu0
  %v3627 = vadd.f32 0.0, %v3626
  %v3628 = vpop.f32.mrf.mxu0
  %3629 = vmatprep.mubr.f32.mxu0 0.0
  %3630 = vmatmul.mubr.f32.gmra.mxu0 %v3296
  %v3631 = vpop.f32.mrf.mxu0
  %v3632 = vadd.f32 0.0, %v3631
  %v3633 = vpop.f32.mrf.mxu0
  %3634 = vmatprep.mubr.f32.mxu0 0.0
  %3635 = vmatmul.mubr.f32.gmra.mxu0 %v3299
  %v3636 = vpop.f32.mrf.mxu0
  %v3637 = vadd.f32 0.0, %v3636
  %v3638 = vpop.f32.mrf.mxu0
  %3639 = vmatprep.mubr.f32.mxu0 0.0
  %3640 = vmatmul.mubr.f32.gmra.mxu0 %v3302
  %v3641 = vpop.f32.mrf.mxu0
  %v3642 = vadd.f32 0.0, %v3641
  %v3643 = vpop.f32.mrf.mxu0
  %3644 = vmatprep.mubr.f32.mxu0 0.0
  %3645 = vmatmul.mubr.f32.gmra.mxu0 %v3305
  %v3646 = vpop.f32.mrf.mxu0
  %v3647 = vadd.f32 0.0, %v3646
  %v3648 = vpop.f32.mrf.mxu0
  %3649 = vmatprep.mubr.f32.mxu0 0.0
  %3650 = vmatmul.mubr.f32.gmra.mxu0 %v3308
  %v3651 = vpop.f32.mrf.mxu0
  %v3652 = vadd.f32 0.0, %v3651
  %v3653 = vpop.f32.mrf.mxu0
  %3654 = vmatprep.mubr.f32.mxu0 0.0
  %3655 = vmatmul.mubr.f32.gmra.mxu0 %v3311
  %v3656 = vpop.f32.mrf.mxu0
  %v3657 = vadd.f32 0.0, %v3656
  %v3658 = vpop.f32.mrf.mxu0
  %3659 = vmatprep.mubr.f32.mxu0 0.0
  %3660 = vmatmul.mubr.f32.gmra.mxu0 %v3314
  %v3661 = vpop.f32.mrf.mxu0
  %v3662 = vadd.f32 0.0, %v3661
  %v3663 = vpop.f32.mrf.mxu0
  %3664 = vmatprep.mubr.f32.mxu0 0.0
  %3665 = vmatmul.mubr.f32.gmra.mxu0 %v3317
  %v3666 = vpop.f32.mrf.mxu0
  %v3667 = vadd.f32 0.0, %v3666
  %v3668 = vpop.f32.mrf.mxu0
  %3669 = vmatprep.mubr.f32.mxu0 0.0
  %3670 = vmatmul.mubr.f32.gmra.mxu0 %v3320
  %v3671 = vpop.f32.mrf.mxu0
  %v3672 = vadd.f32 0.0, %v3671
  %v3673 = vpop.f32.mrf.mxu0
  %3674 = vmatprep.mubr.f32.mxu0 0.0
  %3675 = vmatmul.mubr.f32.gmra.mxu0 %v3323
  %v3676 = vpop.f32.mrf.mxu0
  %v3677 = vadd.f32 0.0, %v3676
  %v3678 = vpop.f32.mrf.mxu0
  %3679 = vmatprep.mubr.f32.mxu0 0.0
  %3680 = vmatmul.mubr.f32.gmra.mxu0 %v3326
  %v3681 = vpop.f32.mrf.mxu0
  %v3682 = vadd.f32 0.0, %v3681
  %v3683 = vpop.f32.mrf.mxu0
  %3684 = vmatprep.mubr.f32.mxu0 0.0
  %3685 = vmatmul.mubr.f32.gmra.mxu0 %v3329
  %v3686 = vpop.f32.mrf.mxu0
  %v3687 = vadd.f32 0.0, %v3686
  %v3688 = vpop.f32.mrf.mxu0
  %3689 = vmatprep.mubr.f32.mxu0 0.0
  %3690 = vmatmul.mubr.f32.gmra.mxu0 %v3332
  %v3691 = vpop.f32.mrf.mxu0
  %v3692 = vadd.f32 0.0, %v3691
  %v3693 = vpop.f32.mrf.mxu0
  %3694 = vmatprep.mubr.f32.mxu0 0.0
  %3695 = vmatmul.mubr.f32.gmra.mxu0 %v3335
  %v3696 = vpop.f32.mrf.mxu0
  %v3697 = vadd.f32 0.0, %v3696
  %v3698 = vpop.f32.mrf.mxu0
  %3699 = vmatprep.mubr.f32.mxu0 0.0
  %3700 = vmatmul.mubr.f32.gmra.mxu0 %v3338
  %v3701 = vpop.f32.mrf.mxu0
  %v3702 = vadd.f32 0.0, %v3701
  %v3703 = vpop.f32.mrf.mxu0
  %3704 = vmatprep.mubr.f32.mxu0 0.0
  %3705 = vmatmul.mubr.f32.gmra.mxu0 %v3341
  %v3706 = vpop.f32.mrf.mxu0
  %v3707 = vadd.f32 0.0, %v3706
  %v3708 = vpop.f32.mrf.mxu0
  %3709 = vmatprep.mubr.f32.mxu0 0.0
  %3710 = vmatmul.mubr.f32.gmra.mxu0 %v3344
  %v3711 = vpop.f32.mrf.mxu0
  %v3712 = vadd.f32 0.0, %v3711
  %v3713 = vpop.f32.mrf.mxu0
  %3714 = vmatprep.mubr.f32.mxu0 0.0
  %3715 = vmatmul.mubr.f32.gmra.mxu0 %v3347
  %v3716 = vpop.f32.mrf.mxu0
  %v3717 = vadd.f32 0.0, %v3716
  %v3718 = vpop.f32.mrf.mxu0
  %3719 = vmatprep.mubr.f32.mxu0 0.0
  %3720 = vmatmul.mubr.f32.gmra.mxu0 %v3350
  %v3721 = vpop.f32.mrf.mxu0
  %v3722 = vadd.f32 0.0, %v3721
  %v3723 = vpop.f32.mrf.mxu0
  %3724 = vmatprep.mubr.f32.mxu0 0.0
  %3725 = vmatmul.mubr.f32.gmra.mxu0 %v3353
  %v3726 = vpop.f32.mrf.mxu0
  %v3727 = vadd.f32 0.0, %v3726
  %v3728 = vpop.f32.mrf.mxu0
  %3729 = vmatprep.mubr.f32.mxu0 0.0
  %3730 = vmatmul.mubr.f32.gmra.mxu0 %v3356
  %v3731 = vpop.f32.mrf.mxu0
  %v3732 = vadd.f32 0.0, %v3731
  %v3733 = vpop.f32.mrf.mxu0
  %3734 = vmatprep.mubr.f32.mxu0 0.0
  %3735 = vmatmul.mubr.f32.gmra.mxu0 %v3359
  %v3736 = vpop.f32.mrf.mxu0
  %v3737 = vadd.f32 0.0, %v3736
  %v3738 = vpop.f32.mrf.mxu0
  %3739 = vmatprep.mubr.f32.mxu0 0.0
  %3740 = vmatmul.mubr.f32.gmra.mxu0 %v3362
  %v3741 = vpop.f32.mrf.mxu0
  %v3742 = vadd.f32 0.0, %v3741
  %v3743 = vpop.f32.mrf.mxu0
  %3744 = vmatprep.mubr.f32.mxu0 0.0
  %3745 = vmatmul.mubr.f32.gmra.mxu0 %v3365
  %v3746 = vpop.f32.mrf.mxu0
  %v3747 = vadd.f32 0.0, %v3746
  %v3748 = vpop.f32.mrf.mxu0
  %3749 = vmatprep.mubr.f32.mxu0 0.0
  %3750 = vmatmul.mubr.f32.gmra.mxu0 %v3368
  %v3751 = vpop.f32.mrf.mxu0
  %v3752 = vadd.f32 0.0, %v3751
  %v3753 = vpop.f32.mrf.mxu0
  %3754 = vmatprep.mubr.f32.mxu0 0.0
  %3755 = vmatmul.mubr.f32.gmra.mxu0 %v3371
  %v3756 = vpop.f32.mrf.mxu0
  %v3757 = vadd.f32 0.0, %v3756
  %v3758 = vpop.f32.mrf.mxu0
  %3759 = vmatprep.mubr.f32.mxu0 0.0
  %3760 = vmatmul.mubr.f32.gmra.mxu0 %v3374
  %v3761 = vpop.f32.mrf.mxu0
  %v3762 = vadd.f32 0.0, %v3761
  %v3763 = vpop.f32.mrf.mxu0
  %3764 = vdwg.mxu0
  %v3765 = vsel %vm2658, %v3447, 0.0
  %v3766 = vsel %vm2658, %v3452, 0.0
  %v3767 = vadd.f32 %v3765, %v3766
  %v3768 = vsel %vm2658, %v3457, 0.0
  %v3769 = vadd.f32 %v3767, %v3768
  %v3770 = vsel %vm2658, %v3462, 0.0
  %v3771 = vadd.f32 %v3769, %v3770
  %v3772 = vsel %vm2658, %v3467, 0.0
  %v3773 = vadd.f32 %v3771, %v3772
  %v3774 = vsel %vm2658, %v3472, 0.0
  %v3775 = vadd.f32 %v3773, %v3774
  %v3776 = vsel %vm2658, %v3477, 0.0
  %v3777 = vadd.f32 %v3775, %v3776
  %v3778 = vsel %vm2658, %v3482, 0.0
  %v3779 = vadd.f32 %v3777, %v3778
  %v3780 = vsel %vm2658, %v3487, 0.0
  %v3781 = vadd.f32 %v3779, %v3780
  %v3782 = vsel %vm2658, %v3492, 0.0
  %v3783 = vadd.f32 %v3781, %v3782
  %v3784 = vsel %vm2658, %v3497, 0.0
  %v3785 = vadd.f32 %v3783, %v3784
  %v3786 = vsel %vm2658, %v3502, 0.0
  %v3787 = vadd.f32 %v3785, %v3786
  %v3788 = vsel %vm2658, %v3507, 0.0
  %v3789 = vadd.f32 %v3787, %v3788
  %v3790 = vsel %vm2658, %v3512, 0.0
  %v3791 = vadd.f32 %v3789, %v3790
  %v3792 = vsel %vm2658, %v3517, 0.0
  %v3793 = vadd.f32 %v3791, %v3792
  %v3794 = vsel %vm2658, %v3522, 0.0
  %v3795 = vadd.f32 %v3793, %v3794
  %v3796 = vsel %vm2658, %v3527, 0.0
  %v3797 = vadd.f32 %v3795, %v3796
  %v3798 = vsel %vm2658, %v3532, 0.0
  %v3799 = vadd.f32 %v3797, %v3798
  %v3800 = vsel %vm2658, %v3537, 0.0
  %v3801 = vadd.f32 %v3799, %v3800
  %v3802 = vsel %vm2658, %v3542, 0.0
  %v3803 = vadd.f32 %v3801, %v3802
  %v3804 = vsel %vm2658, %v3547, 0.0
  %v3805 = vadd.f32 %v3803, %v3804
  %v3806 = vsel %vm2658, %v3552, 0.0
  %v3807 = vadd.f32 %v3805, %v3806
  %v3808 = vsel %vm2658, %v3557, 0.0
  %v3809 = vadd.f32 %v3807, %v3808
  %v3810 = vsel %vm2658, %v3562, 0.0
  %v3811 = vadd.f32 %v3809, %v3810
  %v3812 = vsel %vm2658, %v3567, 0.0
  %v3813 = vadd.f32 %v3811, %v3812
  %v3814 = vsel %vm2658, %v3572, 0.0
  %v3815 = vadd.f32 %v3813, %v3814
  %v3816 = vsel %vm2658, %v3577, 0.0
  %v3817 = vadd.f32 %v3815, %v3816
  %v3818 = vsel %vm2658, %v3582, 0.0
  %v3819 = vadd.f32 %v3817, %v3818
  %v3820 = vsel %vm2658, %v3587, 0.0
  %v3821 = vadd.f32 %v3819, %v3820
  %v3822 = vsel %vm2658, %v3592, 0.0
  %v3823 = vadd.f32 %v3821, %v3822
  %v3824 = vsel %vm2658, %v3597, 0.0
  %v3825 = vadd.f32 %v3823, %v3824
  %v3826 = vsel %vm2658, %v3602, 0.0
  %v3827 = vadd.f32 %v3825, %v3826
  %v3828 = vsel %vm2658, %v3607, 0.0
  %v3829 = vadd.f32 %v3827, %v3828
  %v3830 = vsel %vm2658, %v3612, 0.0
  %v3831 = vadd.f32 %v3829, %v3830
  %v3832 = vsel %vm2658, %v3617, 0.0
  %v3833 = vadd.f32 %v3831, %v3832
  %v3834 = vsel %vm2658, %v3622, 0.0
  %v3835 = vadd.f32 %v3833, %v3834
  %v3836 = vsel %vm2658, %v3627, 0.0
  %v3837 = vadd.f32 %v3835, %v3836
  %v3838 = vsel %vm2658, %v3632, 0.0
  %v3839 = vadd.f32 %v3837, %v3838
  %v3840 = vsel %vm2658, %v3637, 0.0
  %v3841 = vadd.f32 %v3839, %v3840
  %v3842 = vsel %vm2658, %v3642, 0.0
  %v3843 = vadd.f32 %v3841, %v3842
  %v3844 = vsel %vm2658, %v3647, 0.0
  %v3845 = vadd.f32 %v3843, %v3844
  %v3846 = vsel %vm2658, %v3652, 0.0
  %v3847 = vadd.f32 %v3845, %v3846
  %v3848 = vsel %vm2658, %v3657, 0.0
  %v3849 = vadd.f32 %v3847, %v3848
  %v3850 = vsel %vm2658, %v3662, 0.0
  %v3851 = vadd.f32 %v3849, %v3850
  %v3852 = vsel %vm2658, %v3667, 0.0
  %v3853 = vadd.f32 %v3851, %v3852
  %v3854 = vsel %vm2658, %v3672, 0.0
  %v3855 = vadd.f32 %v3853, %v3854
  %v3856 = vsel %vm2658, %v3677, 0.0
  %v3857 = vadd.f32 %v3855, %v3856
  %v3858 = vsel %vm2658, %v3682, 0.0
  %v3859 = vadd.f32 %v3857, %v3858
  %v3860 = vsel %vm2658, %v3687, 0.0
  %v3861 = vadd.f32 %v3859, %v3860
  %v3862 = vsel %vm2658, %v3692, 0.0
  %v3863 = vadd.f32 %v3861, %v3862
  %v3864 = vsel %vm2658, %v3697, 0.0
  %v3865 = vadd.f32 %v3863, %v3864
  %v3866 = vsel %vm2658, %v3702, 0.0
  %v3867 = vadd.f32 %v3865, %v3866
  %v3868 = vsel %vm2658, %v3707, 0.0
  %v3869 = vadd.f32 %v3867, %v3868
  %v3870 = vsel %vm2658, %v3712, 0.0
  %v3871 = vadd.f32 %v3869, %v3870
  %v3872 = vsel %vm2658, %v3717, 0.0
  %v3873 = vadd.f32 %v3871, %v3872
  %v3874 = vsel %vm2658, %v3722, 0.0
  %v3875 = vadd.f32 %v3873, %v3874
  %v3876 = vsel %vm2658, %v3727, 0.0
  %v3877 = vadd.f32 %v3875, %v3876
  %v3878 = vsel %vm2658, %v3732, 0.0
  %v3879 = vadd.f32 %v3877, %v3878
  %v3880 = vsel %vm2658, %v3737, 0.0
  %v3881 = vadd.f32 %v3879, %v3880
  %v3882 = vsel %vm2658, %v3742, 0.0
  %v3883 = vadd.f32 %v3881, %v3882
  %v3884 = vsel %vm2658, %v3747, 0.0
  %v3885 = vadd.f32 %v3883, %v3884
  %v3886 = vsel %vm2658, %v3752, 0.0
  %v3887 = vadd.f32 %v3885, %v3886
  %v3888 = vsel %vm2658, %v3757, 0.0
  %v3889 = vadd.f32 %v3887, %v3888
  %v3890 = vsel %vm2658, %v3762, 0.0
  %v3891 = vadd.f32 %v3889, %v3890
  %v3892 = vrot.slane %v3891, 4
  %v3893 = vadd.f32 %v3891, %v3892
  %v3894 = vrot.slane %v3893, 2
  %v3895 = vadd.f32 %v3893, %v3894
  %v3896 = vrot.slane %v3895, 1
  %v3897 = vadd.f32 %v3895, %v3896
  %v3898 = vmul.f32 %v3897, 0.001953125
  %v3899 = vmul.f32 %v3447, %v3447
  %v3900 = vmul.f32 %v3452, %v3452
  %v3901 = vmul.f32 %v3457, %v3457
  %v3902 = vmul.f32 %v3462, %v3462
  %v3903 = vmul.f32 %v3467, %v3467
  %v3904 = vmul.f32 %v3472, %v3472
  %v3905 = vmul.f32 %v3477, %v3477
  %v3906 = vmul.f32 %v3482, %v3482
  %v3907 = vmul.f32 %v3487, %v3487
  %v3908 = vmul.f32 %v3492, %v3492
  %v3909 = vmul.f32 %v3497, %v3497
  %v3910 = vmul.f32 %v3502, %v3502
  %v3911 = vmul.f32 %v3507, %v3507
  %v3912 = vmul.f32 %v3512, %v3512
  %v3913 = vmul.f32 %v3517, %v3517
  %v3914 = vmul.f32 %v3522, %v3522
  %v3915 = vmul.f32 %v3527, %v3527
  %v3916 = vmul.f32 %v3532, %v3532
  %v3917 = vmul.f32 %v3537, %v3537
  %v3918 = vmul.f32 %v3542, %v3542
  %v3919 = vmul.f32 %v3547, %v3547
  %v3920 = vmul.f32 %v3552, %v3552
  %v3921 = vmul.f32 %v3557, %v3557
  %v3922 = vmul.f32 %v3562, %v3562
  %v3923 = vmul.f32 %v3567, %v3567
  %v3924 = vmul.f32 %v3572, %v3572
  %v3925 = vmul.f32 %v3577, %v3577
  %v3926 = vmul.f32 %v3582, %v3582
  %v3927 = vmul.f32 %v3587, %v3587
  %v3928 = vmul.f32 %v3592, %v3592
  %v3929 = vmul.f32 %v3597, %v3597
  %v3930 = vmul.f32 %v3602, %v3602
  %v3931 = vmul.f32 %v3607, %v3607
  %v3932 = vmul.f32 %v3612, %v3612
  %v3933 = vmul.f32 %v3617, %v3617
  %v3934 = vmul.f32 %v3622, %v3622
  %v3935 = vmul.f32 %v3627, %v3627
  %v3936 = vmul.f32 %v3632, %v3632
  %v3937 = vmul.f32 %v3637, %v3637
  %v3938 = vmul.f32 %v3642, %v3642
  %v3939 = vmul.f32 %v3647, %v3647
  %v3940 = vmul.f32 %v3652, %v3652
  %v3941 = vmul.f32 %v3657, %v3657
  %v3942 = vmul.f32 %v3662, %v3662
  %v3943 = vmul.f32 %v3667, %v3667
  %v3944 = vmul.f32 %v3672, %v3672
  %v3945 = vmul.f32 %v3677, %v3677
  %v3946 = vmul.f32 %v3682, %v3682
  %v3947 = vmul.f32 %v3687, %v3687
  %v3948 = vmul.f32 %v3692, %v3692
  %v3949 = vmul.f32 %v3697, %v3697
  %v3950 = vmul.f32 %v3702, %v3702
  %v3951 = vmul.f32 %v3707, %v3707
  %v3952 = vmul.f32 %v3712, %v3712
  %v3953 = vmul.f32 %v3717, %v3717
  %v3954 = vmul.f32 %v3722, %v3722
  %v3955 = vmul.f32 %v3727, %v3727
  %v3956 = vmul.f32 %v3732, %v3732
  %v3957 = vmul.f32 %v3737, %v3737
  %v3958 = vmul.f32 %v3742, %v3742
  %v3959 = vmul.f32 %v3747, %v3747
  %v3960 = vmul.f32 %v3752, %v3752
  %v3961 = vmul.f32 %v3757, %v3757
  %v3962 = vmul.f32 %v3762, %v3762
  %v3963 = vsel %vm2658, %v3899, 0.0
  %v3964 = vsel %vm2658, %v3900, 0.0
  %v3965 = vadd.f32 %v3963, %v3964
  %v3966 = vsel %vm2658, %v3901, 0.0
  %v3967 = vadd.f32 %v3965, %v3966
  %v3968 = vsel %vm2658, %v3902, 0.0
  %v3969 = vadd.f32 %v3967, %v3968
  %v3970 = vsel %vm2658, %v3903, 0.0
  %v3971 = vadd.f32 %v3969, %v3970
  %v3972 = vsel %vm2658, %v3904, 0.0
  %v3973 = vadd.f32 %v3971, %v3972
  %v3974 = vsel %vm2658, %v3905, 0.0
  %v3975 = vadd.f32 %v3973, %v3974
  %v3976 = vsel %vm2658, %v3906, 0.0
  %v3977 = vadd.f32 %v3975, %v3976
  %v3978 = vsel %vm2658, %v3907, 0.0
  %v3979 = vadd.f32 %v3977, %v3978
  %v3980 = vsel %vm2658, %v3908, 0.0
  %v3981 = vadd.f32 %v3979, %v3980
  %v3982 = vsel %vm2658, %v3909, 0.0
  %v3983 = vadd.f32 %v3981, %v3982
  %v3984 = vsel %vm2658, %v3910, 0.0
  %v3985 = vadd.f32 %v3983, %v3984
  %v3986 = vsel %vm2658, %v3911, 0.0
  %v3987 = vadd.f32 %v3985, %v3986
  %v3988 = vsel %vm2658, %v3912, 0.0
  %v3989 = vadd.f32 %v3987, %v3988
  %v3990 = vsel %vm2658, %v3913, 0.0
  %v3991 = vadd.f32 %v3989, %v3990
  %v3992 = vsel %vm2658, %v3914, 0.0
  %v3993 = vadd.f32 %v3991, %v3992
  %v3994 = vsel %vm2658, %v3915, 0.0
  %v3995 = vadd.f32 %v3993, %v3994
  %v3996 = vsel %vm2658, %v3916, 0.0
  %v3997 = vadd.f32 %v3995, %v3996
  %v3998 = vsel %vm2658, %v3917, 0.0
  %v3999 = vadd.f32 %v3997, %v3998
  %v4000 = vsel %vm2658, %v3918, 0.0
  %v4001 = vadd.f32 %v3999, %v4000
  %v4002 = vsel %vm2658, %v3919, 0.0
  %v4003 = vadd.f32 %v4001, %v4002
  %v4004 = vsel %vm2658, %v3920, 0.0
  %v4005 = vadd.f32 %v4003, %v4004
  %v4006 = vsel %vm2658, %v3921, 0.0
  %v4007 = vadd.f32 %v4005, %v4006
  %v4008 = vsel %vm2658, %v3922, 0.0
  %v4009 = vadd.f32 %v4007, %v4008
  %v4010 = vsel %vm2658, %v3923, 0.0
  %v4011 = vadd.f32 %v4009, %v4010
  %v4012 = vsel %vm2658, %v3924, 0.0
  %v4013 = vadd.f32 %v4011, %v4012
  %v4014 = vsel %vm2658, %v3925, 0.0
  %v4015 = vadd.f32 %v4013, %v4014
  %v4016 = vsel %vm2658, %v3926, 0.0
  %v4017 = vadd.f32 %v4015, %v4016
  %v4018 = vsel %vm2658, %v3927, 0.0
  %v4019 = vadd.f32 %v4017, %v4018
  %v4020 = vsel %vm2658, %v3928, 0.0
  %v4021 = vadd.f32 %v4019, %v4020
  %v4022 = vsel %vm2658, %v3929, 0.0
  %v4023 = vadd.f32 %v4021, %v4022
  %v4024 = vsel %vm2658, %v3930, 0.0
  %v4025 = vadd.f32 %v4023, %v4024
  %v4026 = vsel %vm2658, %v3931, 0.0
  %v4027 = vadd.f32 %v4025, %v4026
  %v4028 = vsel %vm2658, %v3932, 0.0
  %v4029 = vadd.f32 %v4027, %v4028
  %v4030 = vsel %vm2658, %v3933, 0.0
  %v4031 = vadd.f32 %v4029, %v4030
  %v4032 = vsel %vm2658, %v3934, 0.0
  %v4033 = vadd.f32 %v4031, %v4032
  %v4034 = vsel %vm2658, %v3935, 0.0
  %v4035 = vadd.f32 %v4033, %v4034
  %v4036 = vsel %vm2658, %v3936, 0.0
  %v4037 = vadd.f32 %v4035, %v4036
  %v4038 = vsel %vm2658, %v3937, 0.0
  %v4039 = vadd.f32 %v4037, %v4038
  %v4040 = vsel %vm2658, %v3938, 0.0
  %v4041 = vadd.f32 %v4039, %v4040
  %v4042 = vsel %vm2658, %v3939, 0.0
  %v4043 = vadd.f32 %v4041, %v4042
  %v4044 = vsel %vm2658, %v3940, 0.0
  %v4045 = vadd.f32 %v4043, %v4044
  %v4046 = vsel %vm2658, %v3941, 0.0
  %v4047 = vadd.f32 %v4045, %v4046
  %v4048 = vsel %vm2658, %v3942, 0.0
  %v4049 = vadd.f32 %v4047, %v4048
  %v4050 = vsel %vm2658, %v3943, 0.0
  %v4051 = vadd.f32 %v4049, %v4050
  %v4052 = vsel %vm2658, %v3944, 0.0
  %v4053 = vadd.f32 %v4051, %v4052
  %v4054 = vsel %vm2658, %v3945, 0.0
  %v4055 = vadd.f32 %v4053, %v4054
  %v4056 = vsel %vm2658, %v3946, 0.0
  %v4057 = vadd.f32 %v4055, %v4056
  %v4058 = vsel %vm2658, %v3947, 0.0
  %v4059 = vadd.f32 %v4057, %v4058
  %v4060 = vsel %vm2658, %v3948, 0.0
  %v4061 = vadd.f32 %v4059, %v4060
  %v4062 = vsel %vm2658, %v3949, 0.0
  %v4063 = vadd.f32 %v4061, %v4062
  %v4064 = vsel %vm2658, %v3950, 0.0
  %v4065 = vadd.f32 %v4063, %v4064
  %v4066 = vsel %vm2658, %v3951, 0.0
  %v4067 = vadd.f32 %v4065, %v4066
  %v4068 = vsel %vm2658, %v3952, 0.0
  %v4069 = vadd.f32 %v4067, %v4068
  %v4070 = vsel %vm2658, %v3953, 0.0
  %v4071 = vadd.f32 %v4069, %v4070
  %v4072 = vsel %vm2658, %v3954, 0.0
  %v4073 = vadd.f32 %v4071, %v4072
  %v4074 = vsel %vm2658, %v3955, 0.0
  %v4075 = vadd.f32 %v4073, %v4074
  %v4076 = vsel %vm2658, %v3956, 0.0
  %v4077 = vadd.f32 %v4075, %v4076
  %v4078 = vsel %vm2658, %v3957, 0.0
  %v4079 = vadd.f32 %v4077, %v4078
  %v4080 = vsel %vm2658, %v3958, 0.0
  %v4081 = vadd.f32 %v4079, %v4080
  %v4082 = vsel %vm2658, %v3959, 0.0
  %v4083 = vadd.f32 %v4081, %v4082
  %v4084 = vsel %vm2658, %v3960, 0.0
  %v4085 = vadd.f32 %v4083, %v4084
  %v4086 = vsel %vm2658, %v3961, 0.0
  %v4087 = vadd.f32 %v4085, %v4086
  %v4088 = vsel %vm2658, %v3962, 0.0
  %v4089 = vadd.f32 %v4087, %v4088
  %v4090 = vrot.slane %v4089, 4
  %v4091 = vadd.f32 %v4089, %v4090
  %v4092 = vrot.slane %v4091, 2
  %v4093 = vadd.f32 %v4091, %v4092
  %v4094 = vrot.slane %v4093, 1
  %v4095 = vadd.f32 %v4093, %v4094
  %v4096 = vmul.f32 %v4095, 0.001953125
  %v4097 = vmul.f32 %v3898, %v3898
  %v4098 = vsub.f32 %v4096, %v4097
  %v4099 = vld [vmem:[%s3] sm:$0x1]
  %v4100 = vadd.f32 %v4098, 1e-05
  %v4101 = vrsqrt.pop %v4100
  %v4102 = vmul.f32 %v4099, %v4101
  %v4103 = vld [vmem:[%s4] sm:$0x1]
  %v4104 = vmul.f32 %v3898, %v4102
  %v4105 = vsub.f32 %v4103, %v4104
  %v4107 = vlaneseq
  %v4108 = vshrl.u32 %v4107, 7
  %v4109 = vsub.s32 0, %v4108
  %v4110 = vrot.slane %v4102, %v4109
  %v4112 = vmul.f32 %v3447, %v4110
  %v4113 = vmul.f32 %v3452, %v4110
  %v4114 = vmul.f32 %v3457, %v4110
  %v4115 = vmul.f32 %v3462, %v4110
  %v4116 = vmul.f32 %v3467, %v4110
  %v4117 = vmul.f32 %v3472, %v4110
  %v4118 = vmul.f32 %v3477, %v4110
  %v4119 = vmul.f32 %v3482, %v4110
  %v4120 = vmul.f32 %v3487, %v4110
  %v4121 = vmul.f32 %v3492, %v4110
  %v4122 = vmul.f32 %v3497, %v4110
  %v4123 = vmul.f32 %v3502, %v4110
  %v4124 = vmul.f32 %v3507, %v4110
  %v4125 = vmul.f32 %v3512, %v4110
  %v4126 = vmul.f32 %v3517, %v4110
  %v4127 = vmul.f32 %v3522, %v4110
  %v4128 = vmul.f32 %v3527, %v4110
  %v4129 = vmul.f32 %v3532, %v4110
  %v4130 = vmul.f32 %v3537, %v4110
  %v4131 = vmul.f32 %v3542, %v4110
  %v4132 = vmul.f32 %v3547, %v4110
  %v4133 = vmul.f32 %v3552, %v4110
  %v4134 = vmul.f32 %v3557, %v4110
  %v4135 = vmul.f32 %v3562, %v4110
  %v4136 = vmul.f32 %v3567, %v4110
  %v4137 = vmul.f32 %v3572, %v4110
  %v4138 = vmul.f32 %v3577, %v4110
  %v4139 = vmul.f32 %v3582, %v4110
  %v4140 = vmul.f32 %v3587, %v4110
  %v4141 = vmul.f32 %v3592, %v4110
  %v4142 = vmul.f32 %v3597, %v4110
  %v4143 = vmul.f32 %v3602, %v4110
  %v4144 = vmul.f32 %v3607, %v4110
  %v4145 = vmul.f32 %v3612, %v4110
  %v4146 = vmul.f32 %v3617, %v4110
  %v4147 = vmul.f32 %v3622, %v4110
  %v4148 = vmul.f32 %v3627, %v4110
  %v4149 = vmul.f32 %v3632, %v4110
  %v4150 = vmul.f32 %v3637, %v4110
  %v4151 = vmul.f32 %v3642, %v4110
  %v4152 = vmul.f32 %v3647, %v4110
  %v4153 = vmul.f32 %v3652, %v4110
  %v4154 = vmul.f32 %v3657, %v4110
  %v4155 = vmul.f32 %v3662, %v4110
  %v4156 = vmul.f32 %v3667, %v4110
  %v4157 = vmul.f32 %v3672, %v4110
  %v4158 = vmul.f32 %v3677, %v4110
  %v4159 = vmul.f32 %v3682, %v4110
  %v4160 = vmul.f32 %v3687, %v4110
  %v4161 = vmul.f32 %v3692, %v4110
  %v4162 = vmul.f32 %v3697, %v4110
  %v4163 = vmul.f32 %v3702, %v4110
  %v4164 = vmul.f32 %v3707, %v4110
  %v4165 = vmul.f32 %v3712, %v4110
  %v4166 = vmul.f32 %v3717, %v4110
  %v4167 = vmul.f32 %v3722, %v4110
  %v4168 = vmul.f32 %v3727, %v4110
  %v4169 = vmul.f32 %v3732, %v4110
  %v4170 = vmul.f32 %v3737, %v4110
  %v4171 = vmul.f32 %v3742, %v4110
  %v4172 = vmul.f32 %v3747, %v4110
  %v4173 = vmul.f32 %v3752, %v4110
  %v4174 = vmul.f32 %v3757, %v4110
  %v4175 = vmul.f32 %v3762, %v4110
  %v4177 = vlaneseq
  %v4178 = vshrl.u32 %v4177, 7
  %v4179 = vsub.s32 0, %v4178
  %v4180 = vrot.slane %v4105, %v4179
  %v4182 = vadd.f32 %v4112, %v4180
  %v4183 = vadd.f32 %v4113, %v4180
  %v4184 = vadd.f32 %v4114, %v4180
  %v4185 = vadd.f32 %v4115, %v4180
  %v4186 = vadd.f32 %v4116, %v4180
  %v4187 = vadd.f32 %v4117, %v4180
  %v4188 = vadd.f32 %v4118, %v4180
  %v4189 = vadd.f32 %v4119, %v4180
  %v4190 = vadd.f32 %v4120, %v4180
  %v4191 = vadd.f32 %v4121, %v4180
  %v4192 = vadd.f32 %v4122, %v4180
  %v4193 = vadd.f32 %v4123, %v4180
  %v4194 = vadd.f32 %v4124, %v4180
  %v4195 = vadd.f32 %v4125, %v4180
  %v4196 = vadd.f32 %v4126, %v4180
  %v4197 = vadd.f32 %v4127, %v4180
  %v4198 = vadd.f32 %v4128, %v4180
  %v4199 = vadd.f32 %v4129, %v4180
  %v4200 = vadd.f32 %v4130, %v4180
  %v4201 = vadd.f32 %v4131, %v4180
  %v4202 = vadd.f32 %v4132, %v4180
  %v4203 = vadd.f32 %v4133, %v4180
  %v4204 = vadd.f32 %v4134, %v4180
  %v4205 = vadd.f32 %v4135, %v4180
  %v4206 = vadd.f32 %v4136, %v4180
  %v4207 = vadd.f32 %v4137, %v4180
  %v4208 = vadd.f32 %v4138, %v4180
  %v4209 = vadd.f32 %v4139, %v4180
  %v4210 = vadd.f32 %v4140, %v4180
  %v4211 = vadd.f32 %v4141, %v4180
  %v4212 = vadd.f32 %v4142, %v4180
  %v4213 = vadd.f32 %v4143, %v4180
  %v4214 = vadd.f32 %v4144, %v4180
  %v4215 = vadd.f32 %v4145, %v4180
  %v4216 = vadd.f32 %v4146, %v4180
  %v4217 = vadd.f32 %v4147, %v4180
  %v4218 = vadd.f32 %v4148, %v4180
  %v4219 = vadd.f32 %v4149, %v4180
  %v4220 = vadd.f32 %v4150, %v4180
  %v4221 = vadd.f32 %v4151, %v4180
  %v4222 = vadd.f32 %v4152, %v4180
  %v4223 = vadd.f32 %v4153, %v4180
  %v4224 = vadd.f32 %v4154, %v4180
  %v4225 = vadd.f32 %v4155, %v4180
  %v4226 = vadd.f32 %v4156, %v4180
  %v4227 = vadd.f32 %v4157, %v4180
  %v4228 = vadd.f32 %v4158, %v4180
  %v4229 = vadd.f32 %v4159, %v4180
  %v4230 = vadd.f32 %v4160, %v4180
  %v4231 = vadd.f32 %v4161, %v4180
  %v4232 = vadd.f32 %v4162, %v4180
  %v4233 = vadd.f32 %v4163, %v4180
  %v4234 = vadd.f32 %v4164, %v4180
  %v4235 = vadd.f32 %v4165, %v4180
  %v4236 = vadd.f32 %v4166, %v4180
  %v4237 = vadd.f32 %v4167, %v4180
  %v4238 = vadd.f32 %v4168, %v4180
  %v4239 = vadd.f32 %v4169, %v4180
  %v4240 = vadd.f32 %v4170, %v4180
  %v4241 = vadd.f32 %v4171, %v4180
  %v4242 = vadd.f32 %v4172, %v4180
  %v4243 = vadd.f32 %v4173, %v4180
  %v4244 = vadd.f32 %v4174, %v4180
  %v4245 = vadd.f32 %v4175, %v4180
  %vm4246 = vcmp.ge.f32.partialorder %v4182, 0.0
  %vm4247 = vcmp.ge.f32.partialorder %v4183, 0.0
  %vm4248 = vcmp.ge.f32.partialorder %v4184, 0.0
  %vm4249 = vcmp.ge.f32.partialorder %v4185, 0.0
  %vm4250 = vcmp.ge.f32.partialorder %v4186, 0.0
  %vm4251 = vcmp.ge.f32.partialorder %v4187, 0.0
  %vm4252 = vcmp.ge.f32.partialorder %v4188, 0.0
  %vm4253 = vcmp.ge.f32.partialorder %v4189, 0.0
  %vm4254 = vcmp.ge.f32.partialorder %v4190, 0.0
  %vm4255 = vcmp.ge.f32.partialorder %v4191, 0.0
  %vm4256 = vcmp.ge.f32.partialorder %v4192, 0.0
  %vm4257 = vcmp.ge.f32.partialorder %v4193, 0.0
  %vm4258 = vcmp.ge.f32.partialorder %v4194, 0.0
  %vm4259 = vcmp.ge.f32.partialorder %v4195, 0.0
  %vm4260 = vcmp.ge.f32.partialorder %v4196, 0.0
  %vm4261 = vcmp.ge.f32.partialorder %v4197, 0.0
  %vm4262 = vcmp.ge.f32.partialorder %v4198, 0.0
  %vm4263 = vcmp.ge.f32.partialorder %v4199, 0.0
  %vm4264 = vcmp.ge.f32.partialorder %v4200, 0.0
  %vm4265 = vcmp.ge.f32.partialorder %v4201, 0.0
  %vm4266 = vcmp.ge.f32.partialorder %v4202, 0.0
  %vm4267 = vcmp.ge.f32.partialorder %v4203, 0.0
  %vm4268 = vcmp.ge.f32.partialorder %v4204, 0.0
  %vm4269 = vcmp.ge.f32.partialorder %v4205, 0.0
  %vm4270 = vcmp.ge.f32.partialorder %v4206, 0.0
  %vm4271 = vcmp.ge.f32.partialorder %v4207, 0.0
  %vm4272 = vcmp.ge.f32.partialorder %v4208, 0.0
  %vm4273 = vcmp.ge.f32.partialorder %v4209, 0.0
  %vm4274 = vcmp.ge.f32.partialorder %v4210, 0.0
  %vm4275 = vcmp.ge.f32.partialorder %v4211, 0.0
  %vm4276 = vcmp.ge.f32.partialorder %v4212, 0.0
  %vm4277 = vcmp.ge.f32.partialorder %v4213, 0.0
  %vm4278 = vcmp.ge.f32.partialorder %v4214, 0.0
  %vm4279 = vcmp.ge.f32.partialorder %v4215, 0.0
  %vm4280 = vcmp.ge.f32.partialorder %v4216, 0.0
  %vm4281 = vcmp.ge.f32.partialorder %v4217, 0.0
  %vm4282 = vcmp.ge.f32.partialorder %v4218, 0.0
  %vm4283 = vcmp.ge.f32.partialorder %v4219, 0.0
  %vm4284 = vcmp.ge.f32.partialorder %v4220, 0.0
  %vm4285 = vcmp.ge.f32.partialorder %v4221, 0.0
  %vm4286 = vcmp.ge.f32.partialorder %v4222, 0.0
  %vm4287 = vcmp.ge.f32.partialorder %v4223, 0.0
  %vm4288 = vcmp.ge.f32.partialorder %v4224, 0.0
  %vm4289 = vcmp.ge.f32.partialorder %v4225, 0.0
  %vm4290 = vcmp.ge.f32.partialorder %v4226, 0.0
  %vm4291 = vcmp.ge.f32.partialorder %v4227, 0.0
  %vm4292 = vcmp.ge.f32.partialorder %v4228, 0.0
  %vm4293 = vcmp.ge.f32.partialorder %v4229, 0.0
  %vm4294 = vcmp.ge.f32.partialorder %v4230, 0.0
  %vm4295 = vcmp.ge.f32.partialorder %v4231, 0.0
  %vm4296 = vcmp.ge.f32.partialorder %v4232, 0.0
  %vm4297 = vcmp.ge.f32.partialorder %v4233, 0.0
  %vm4298 = vcmp.ge.f32.partialorder %v4234, 0.0
  %vm4299 = vcmp.ge.f32.partialorder %v4235, 0.0
  %vm4300 = vcmp.ge.f32.partialorder %v4236, 0.0
  %vm4301 = vcmp.ge.f32.partialorder %v4237, 0.0
  %vm4302 = vcmp.ge.f32.partialorder %v4238, 0.0
  %vm4303 = vcmp.ge.f32.partialorder %v4239, 0.0
  %vm4304 = vcmp.ge.f32.partialorder %v4240, 0.0
  %vm4305 = vcmp.ge.f32.partialorder %v4241, 0.0
  %vm4306 = vcmp.ge.f32.partialorder %v4242, 0.0
  %vm4307 = vcmp.ge.f32.partialorder %v4243, 0.0
  %vm4308 = vcmp.ge.f32.partialorder %v4244, 0.0
  %vm4309 = vcmp.ge.f32.partialorder %v4245, 0.0
  %v4310 = vmul.f32 %v4182, 0.01
  %v4311 = vmul.f32 %v4183, 0.01
  %v4312 = vmul.f32 %v4184, 0.01
  %v4313 = vmul.f32 %v4185, 0.01
  %v4314 = vmul.f32 %v4186, 0.01
  %v4315 = vmul.f32 %v4187, 0.01
  %v4316 = vmul.f32 %v4188, 0.01
  %v4317 = vmul.f32 %v4189, 0.01
  %v4318 = vmul.f32 %v4190, 0.01
  %v4319 = vmul.f32 %v4191, 0.01
  %v4320 = vmul.f32 %v4192, 0.01
  %v4321 = vmul.f32 %v4193, 0.01
  %v4322 = vmul.f32 %v4194, 0.01
  %v4323 = vmul.f32 %v4195, 0.01
  %v4324 = vmul.f32 %v4196, 0.01
  %v4325 = vmul.f32 %v4197, 0.01
  %v4326 = vmul.f32 %v4198, 0.01
  %v4327 = vmul.f32 %v4199, 0.01
  %v4328 = vmul.f32 %v4200, 0.01
  %v4329 = vmul.f32 %v4201, 0.01
  %v4330 = vmul.f32 %v4202, 0.01
  %v4331 = vmul.f32 %v4203, 0.01
  %v4332 = vmul.f32 %v4204, 0.01
  %v4333 = vmul.f32 %v4205, 0.01
  %v4334 = vmul.f32 %v4206, 0.01
  %v4335 = vmul.f32 %v4207, 0.01
  %v4336 = vmul.f32 %v4208, 0.01
  %v4337 = vmul.f32 %v4209, 0.01
  %v4338 = vmul.f32 %v4210, 0.01
  %v4339 = vmul.f32 %v4211, 0.01
  %v4340 = vmul.f32 %v4212, 0.01
  %v4341 = vmul.f32 %v4213, 0.01
  %v4342 = vmul.f32 %v4214, 0.01
  %v4343 = vmul.f32 %v4215, 0.01
  %v4344 = vmul.f32 %v4216, 0.01
  %v4345 = vmul.f32 %v4217, 0.01
  %v4346 = vmul.f32 %v4218, 0.01
  %v4347 = vmul.f32 %v4219, 0.01
  %v4348 = vmul.f32 %v4220, 0.01
  %v4349 = vmul.f32 %v4221, 0.01
  %v4350 = vmul.f32 %v4222, 0.01
  %v4351 = vmul.f32 %v4223, 0.01
  %v4352 = vmul.f32 %v4224, 0.01
  %v4353 = vmul.f32 %v4225, 0.01
  %v4354 = vmul.f32 %v4226, 0.01
  %v4355 = vmul.f32 %v4227, 0.01
  %v4356 = vmul.f32 %v4228, 0.01
  %v4357 = vmul.f32 %v4229, 0.01
  %v4358 = vmul.f32 %v4230, 0.01
  %v4359 = vmul.f32 %v4231, 0.01
  %v4360 = vmul.f32 %v4232, 0.01
  %v4361 = vmul.f32 %v4233, 0.01
  %v4362 = vmul.f32 %v4234, 0.01
  %v4363 = vmul.f32 %v4235, 0.01
  %v4364 = vmul.f32 %v4236, 0.01
  %v4365 = vmul.f32 %v4237, 0.01
  %v4366 = vmul.f32 %v4238, 0.01
  %v4367 = vmul.f32 %v4239, 0.01
  %v4368 = vmul.f32 %v4240, 0.01
  %v4369 = vmul.f32 %v4241, 0.01
  %v4370 = vmul.f32 %v4242, 0.01
  %v4371 = vmul.f32 %v4243, 0.01
  %v4372 = vmul.f32 %v4244, 0.01
  %v4373 = vmul.f32 %v4245, 0.01
  %v4374 = vsel %vm4246, %v4182, %v4310
  %v4375 = vsel %vm4247, %v4183, %v4311
  %v4376 = vsel %vm4248, %v4184, %v4312
  %v4377 = vsel %vm4249, %v4185, %v4313
  %v4378 = vsel %vm4250, %v4186, %v4314
  %v4379 = vsel %vm4251, %v4187, %v4315
  %v4380 = vsel %vm4252, %v4188, %v4316
  %v4381 = vsel %vm4253, %v4189, %v4317
  %v4382 = vsel %vm4254, %v4190, %v4318
  %v4383 = vsel %vm4255, %v4191, %v4319
  %v4384 = vsel %vm4256, %v4192, %v4320
  %v4385 = vsel %vm4257, %v4193, %v4321
  %v4386 = vsel %vm4258, %v4194, %v4322
  %v4387 = vsel %vm4259, %v4195, %v4323
  %v4388 = vsel %vm4260, %v4196, %v4324
  %v4389 = vsel %vm4261, %v4197, %v4325
  %v4390 = vsel %vm4262, %v4198, %v4326
  %v4391 = vsel %vm4263, %v4199, %v4327
  %v4392 = vsel %vm4264, %v4200, %v4328
  %v4393 = vsel %vm4265, %v4201, %v4329
  %v4394 = vsel %vm4266, %v4202, %v4330
  %v4395 = vsel %vm4267, %v4203, %v4331
  %v4396 = vsel %vm4268, %v4204, %v4332
  %v4397 = vsel %vm4269, %v4205, %v4333
  %v4398 = vsel %vm4270, %v4206, %v4334
  %v4399 = vsel %vm4271, %v4207, %v4335
  %v4400 = vsel %vm4272, %v4208, %v4336
  %v4401 = vsel %vm4273, %v4209, %v4337
  %v4402 = vsel %vm4274, %v4210, %v4338
  %v4403 = vsel %vm4275, %v4211, %v4339
  %v4404 = vsel %vm4276, %v4212, %v4340
  %v4405 = vsel %vm4277, %v4213, %v4341
  %v4406 = vsel %vm4278, %v4214, %v4342
  %v4407 = vsel %vm4279, %v4215, %v4343
  %v4408 = vsel %vm4280, %v4216, %v4344
  %v4409 = vsel %vm4281, %v4217, %v4345
  %v4410 = vsel %vm4282, %v4218, %v4346
  %v4411 = vsel %vm4283, %v4219, %v4347
  %v4412 = vsel %vm4284, %v4220, %v4348
  %v4413 = vsel %vm4285, %v4221, %v4349
  %v4414 = vsel %vm4286, %v4222, %v4350
  %v4415 = vsel %vm4287, %v4223, %v4351
  %v4416 = vsel %vm4288, %v4224, %v4352
  %v4417 = vsel %vm4289, %v4225, %v4353
  %v4418 = vsel %vm4290, %v4226, %v4354
  %v4419 = vsel %vm4291, %v4227, %v4355
  %v4420 = vsel %vm4292, %v4228, %v4356
  %v4421 = vsel %vm4293, %v4229, %v4357
  %v4422 = vsel %vm4294, %v4230, %v4358
  %v4423 = vsel %vm4295, %v4231, %v4359
  %v4424 = vsel %vm4296, %v4232, %v4360
  %v4425 = vsel %vm4297, %v4233, %v4361
  %v4426 = vsel %vm4298, %v4234, %v4362
  %v4427 = vsel %vm4299, %v4235, %v4363
  %v4428 = vsel %vm4300, %v4236, %v4364
  %v4429 = vsel %vm4301, %v4237, %v4365
  %v4430 = vsel %vm4302, %v4238, %v4366
  %v4431 = vsel %vm4303, %v4239, %v4367
  %v4432 = vsel %vm4304, %v4240, %v4368
  %v4433 = vsel %vm4305, %v4241, %v4369
  %v4434 = vsel %vm4306, %v4242, %v4370
  %v4435 = vsel %vm4307, %v4243, %v4371
  %v4436 = vsel %vm4308, %v4244, %v4372
  %v4437 = vsel %vm4309, %v4245, %v4373
  %vm4503 = vcmask 1046528
  %v4504 = vrot.slane %v4374, 1
  %v4505 = vrot.slane %v4375, 1
  %v4506 = vsel %vm4503, %v4504, %v4505
  %v4507 = vrot.slane 0.0, 1
  %v4508 = vsel %vm4503, %v4505, %v4507
  %v4509 = vrot.slane %v4376, 1
  %v4510 = vrot.slane %v4377, 1
  %v4511 = vsel %vm4503, %v4509, %v4510
  %v4512 = vsel %vm4503, %v4510, %v4507
  %v4513 = vrot.slane %v4378, 1
  %v4514 = vrot.slane %v4379, 1
  %v4515 = vsel %vm4503, %v4513, %v4514
  %v4516 = vsel %vm4503, %v4514, %v4507
  %v4517 = vrot.slane %v4380, 1
  %v4518 = vrot.slane %v4381, 1
  %v4519 = vsel %vm4503, %v4517, %v4518
  %v4520 = vsel %vm4503, %v4518, %v4507
  %v4521 = vrot.slane %v4382, 1
  %v4522 = vrot.slane %v4383, 1
  %v4523 = vsel %vm4503, %v4521, %v4522
  %v4524 = vsel %vm4503, %v4522, %v4507
  %v4525 = vrot.slane %v4384, 1
  %v4526 = vrot.slane %v4385, 1
  %v4527 = vsel %vm4503, %v4525, %v4526
  %v4528 = vsel %vm4503, %v4526, %v4507
  %v4529 = vrot.slane %v4386, 1
  %v4530 = vrot.slane %v4387, 1
  %v4531 = vsel %vm4503, %v4529, %v4530
  %v4532 = vsel %vm4503, %v4530, %v4507
  %v4533 = vrot.slane %v4388, 1
  %v4534 = vrot.slane %v4389, 1
  %v4535 = vsel %vm4503, %v4533, %v4534
  %v4536 = vsel %vm4503, %v4534, %v4507
  %v4537 = vrot.slane %v4390, 1
  %v4538 = vrot.slane %v4391, 1
  %v4539 = vsel %vm4503, %v4537, %v4538
  %v4540 = vsel %vm4503, %v4538, %v4507
  %v4541 = vrot.slane %v4392, 1
  %v4542 = vrot.slane %v4393, 1
  %v4543 = vsel %vm4503, %v4541, %v4542
  %v4544 = vsel %vm4503, %v4542, %v4507
  %v4545 = vrot.slane %v4394, 1
  %v4546 = vrot.slane %v4395, 1
  %v4547 = vsel %vm4503, %v4545, %v4546
  %v4548 = vsel %vm4503, %v4546, %v4507
  %v4549 = vrot.slane %v4396, 1
  %v4550 = vrot.slane %v4397, 1
  %v4551 = vsel %vm4503, %v4549, %v4550
  %v4552 = vsel %vm4503, %v4550, %v4507
  %v4553 = vrot.slane %v4398, 1
  %v4554 = vrot.slane %v4399, 1
  %v4555 = vsel %vm4503, %v4553, %v4554
  %v4556 = vsel %vm4503, %v4554, %v4507
  %v4557 = vrot.slane %v4400, 1
  %v4558 = vrot.slane %v4401, 1
  %v4559 = vsel %vm4503, %v4557, %v4558
  %v4560 = vsel %vm4503, %v4558, %v4507
  %v4561 = vrot.slane %v4402, 1
  %v4562 = vrot.slane %v4403, 1
  %v4563 = vsel %vm4503, %v4561, %v4562
  %v4564 = vsel %vm4503, %v4562, %v4507
  %v4565 = vrot.slane %v4404, 1
  %v4566 = vrot.slane %v4405, 1
  %v4567 = vsel %vm4503, %v4565, %v4566
  %v4568 = vsel %vm4503, %v4566, %v4507
  %v4569 = vrot.slane %v4406, 1
  %v4570 = vrot.slane %v4407, 1
  %v4571 = vsel %vm4503, %v4569, %v4570
  %v4572 = vsel %vm4503, %v4570, %v4507
  %v4573 = vrot.slane %v4408, 1
  %v4574 = vrot.slane %v4409, 1
  %v4575 = vsel %vm4503, %v4573, %v4574
  %v4576 = vsel %vm4503, %v4574, %v4507
  %v4577 = vrot.slane %v4410, 1
  %v4578 = vrot.slane %v4411, 1
  %v4579 = vsel %vm4503, %v4577, %v4578
  %v4580 = vsel %vm4503, %v4578, %v4507
  %v4581 = vrot.slane %v4412, 1
  %v4582 = vrot.slane %v4413, 1
  %v4583 = vsel %vm4503, %v4581, %v4582
  %v4584 = vsel %vm4503, %v4582, %v4507
  %v4585 = vrot.slane %v4414, 1
  %v4586 = vrot.slane %v4415, 1
  %v4587 = vsel %vm4503, %v4585, %v4586
  %v4588 = vsel %vm4503, %v4586, %v4507
  %v4589 = vrot.slane %v4416, 1
  %v4590 = vrot.slane %v4417, 1
  %v4591 = vsel %vm4503, %v4589, %v4590
  %v4592 = vsel %vm4503, %v4590, %v4507
  %v4593 = vrot.slane %v4418, 1
  %v4594 = vrot.slane %v4419, 1
  %v4595 = vsel %vm4503, %v4593, %v4594
  %v4596 = vsel %vm4503, %v4594, %v4507
  %v4597 = vrot.slane %v4420, 1
  %v4598 = vrot.slane %v4421, 1
  %v4599 = vsel %vm4503, %v4597, %v4598
  %v4600 = vsel %vm4503, %v4598, %v4507
  %v4601 = vrot.slane %v4422, 1
  %v4602 = vrot.slane %v4423, 1
  %v4603 = vsel %vm4503, %v4601, %v4602
  %v4604 = vsel %vm4503, %v4602, %v4507
  %v4605 = vrot.slane %v4424, 1
  %v4606 = vrot.slane %v4425, 1
  %v4607 = vsel %vm4503, %v4605, %v4606
  %v4608 = vsel %vm4503, %v4606, %v4507
  %v4609 = vrot.slane %v4426, 1
  %v4610 = vrot.slane %v4427, 1
  %v4611 = vsel %vm4503, %v4609, %v4610
  %v4612 = vsel %vm4503, %v4610, %v4507
  %v4613 = vrot.slane %v4428, 1
  %v4614 = vrot.slane %v4429, 1
  %v4615 = vsel %vm4503, %v4613, %v4614
  %v4616 = vsel %vm4503, %v4614, %v4507
  %v4617 = vrot.slane %v4430, 1
  %v4618 = vrot.slane %v4431, 1
  %v4619 = vsel %vm4503, %v4617, %v4618
  %v4620 = vsel %vm4503, %v4618, %v4507
  %v4621 = vrot.slane %v4432, 1
  %v4622 = vrot.slane %v4433, 1
  %v4623 = vsel %vm4503, %v4621, %v4622
  %v4624 = vsel %vm4503, %v4622, %v4507
  %v4625 = vrot.slane %v4434, 1
  %v4626 = vrot.slane %v4435, 1
  %v4627 = vsel %vm4503, %v4625, %v4626
  %v4628 = vsel %vm4503, %v4626, %v4507
  %v4629 = vrot.slane %v4436, 1
  %v4630 = vrot.slane %v4437, 1
  %v4631 = vsel %vm4503, %v4629, %v4630
  %v4632 = vsel %vm4503, %v4630, %v4507
  %v4633 = vsel %vm4503, %v4507, %v4507
  %4634 = vrot.lane.b32.xlu0 %v4506, 4
  %v4635 = vpop.permute.xlu0 %4634
  %4636 = vrot.lane.b32.xlu0 %v4508, 4
  %v4637 = vpop.permute.xlu0 %4636
  %4638 = vrot.lane.b32.xlu0 %v4511, 4
  %v4639 = vpop.permute.xlu0 %4638
  %4640 = vrot.lane.b32.xlu0 %v4512, 4
  %v4641 = vpop.permute.xlu0 %4640
  %4642 = vrot.lane.b32.xlu0 %v4515, 4
  %v4643 = vpop.permute.xlu0 %4642
  %4644 = vrot.lane.b32.xlu0 %v4516, 4
  %v4645 = vpop.permute.xlu0 %4644
  %4646 = vrot.lane.b32.xlu0 %v4519, 4
  %v4647 = vpop.permute.xlu0 %4646
  %4648 = vrot.lane.b32.xlu0 %v4520, 4
  %v4649 = vpop.permute.xlu0 %4648
  %4650 = vrot.lane.b32.xlu0 %v4523, 4
  %v4651 = vpop.permute.xlu0 %4650
  %4652 = vrot.lane.b32.xlu0 %v4524, 4
  %v4653 = vpop.permute.xlu0 %4652
  %4654 = vrot.lane.b32.xlu0 %v4527, 4
  %v4655 = vpop.permute.xlu0 %4654
  %4656 = vrot.lane.b32.xlu0 %v4528, 4
  %v4657 = vpop.permute.xlu0 %4656
  %4658 = vrot.lane.b32.xlu0 %v4531, 4
  %v4659 = vpop.permute.xlu0 %4658
  %4660 = vrot.lane.b32.xlu0 %v4532, 4
  %v4661 = vpop.permute.xlu0 %4660
  %4662 = vrot.lane.b32.xlu0 %v4535, 4
  %v4663 = vpop.permute.xlu0 %4662
  %4664 = vrot.lane.b32.xlu0 %v4536, 4
  %v4665 = vpop.permute.xlu0 %4664
  %4666 = vrot.lane.b32.xlu0 %v4539, 4
  %v4667 = vpop.permute.xlu0 %4666
  %4668 = vrot.lane.b32.xlu0 %v4540, 4
  %v4669 = vpop.permute.xlu0 %4668
  %4670 = vrot.lane.b32.xlu0 %v4543, 4
  %v4671 = vpop.permute.xlu0 %4670
  %4672 = vrot.lane.b32.xlu0 %v4544, 4
  %v4673 = vpop.permute.xlu0 %4672
  %4674 = vrot.lane.b32.xlu0 %v4547, 4
  %v4675 = vpop.permute.xlu0 %4674
  %4676 = vrot.lane.b32.xlu0 %v4548, 4
  %v4677 = vpop.permute.xlu0 %4676
  %4678 = vrot.lane.b32.xlu0 %v4551, 4
  %v4679 = vpop.permute.xlu0 %4678
  %4680 = vrot.lane.b32.xlu0 %v4552, 4
  %v4681 = vpop.permute.xlu0 %4680
  %4682 = vrot.lane.b32.xlu0 %v4555, 4
  %v4683 = vpop.permute.xlu0 %4682
  %4684 = vrot.lane.b32.xlu0 %v4556, 4
  %v4685 = vpop.permute.xlu0 %4684
  %4686 = vrot.lane.b32.xlu0 %v4559, 4
  %v4687 = vpop.permute.xlu0 %4686
  %4688 = vrot.lane.b32.xlu0 %v4560, 4
  %v4689 = vpop.permute.xlu0 %4688
  %4690 = vrot.lane.b32.xlu0 %v4563, 4
  %v4691 = vpop.permute.xlu0 %4690
  %4692 = vrot.lane.b32.xlu0 %v4564, 4
  %v4693 = vpop.permute.xlu0 %4692
  %4694 = vrot.lane.b32.xlu0 %v4567, 4
  %v4695 = vpop.permute.xlu0 %4694
  %4696 = vrot.lane.b32.xlu0 %v4568, 4
  %v4697 = vpop.permute.xlu0 %4696
  %4698 = vrot.lane.b32.xlu0 %v4571, 4
  %v4699 = vpop.permute.xlu0 %4698
  %4700 = vrot.lane.b32.xlu0 %v4572, 4
  %v4701 = vpop.permute.xlu0 %4700
  %4702 = vrot.lane.b32.xlu0 %v4575, 4
  %v4703 = vpop.permute.xlu0 %4702
  %4704 = vrot.lane.b32.xlu0 %v4576, 4
  %v4705 = vpop.permute.xlu0 %4704
  %4706 = vrot.lane.b32.xlu0 %v4579, 4
  %v4707 = vpop.permute.xlu0 %4706
  %4708 = vrot.lane.b32.xlu0 %v4580, 4
  %v4709 = vpop.permute.xlu0 %4708
  %4710 = vrot.lane.b32.xlu0 %v4583, 4
  %v4711 = vpop.permute.xlu0 %4710
  %4712 = vrot.lane.b32.xlu0 %v4584, 4
  %v4713 = vpop.permute.xlu0 %4712
  %4714 = vrot.lane.b32.xlu0 %v4587, 4
  %v4715 = vpop.permute.xlu0 %4714
  %4716 = vrot.lane.b32.xlu0 %v4588, 4
  %v4717 = vpop.permute.xlu0 %4716
  %4718 = vrot.lane.b32.xlu0 %v4591, 4
  %v4719 = vpop.permute.xlu0 %4718
  %4720 = vrot.lane.b32.xlu0 %v4592, 4
  %v4721 = vpop.permute.xlu0 %4720
  %4722 = vrot.lane.b32.xlu0 %v4595, 4
  %v4723 = vpop.permute.xlu0 %4722
  %4724 = vrot.lane.b32.xlu0 %v4596, 4
  %v4725 = vpop.permute.xlu0 %4724
  %4726 = vrot.lane.b32.xlu0 %v4599, 4
  %v4727 = vpop.permute.xlu0 %4726
  %4728 = vrot.lane.b32.xlu0 %v4600, 4
  %v4729 = vpop.permute.xlu0 %4728
  %4730 = vrot.lane.b32.xlu0 %v4603, 4
  %v4731 = vpop.permute.xlu0 %4730
  %4732 = vrot.lane.b32.xlu0 %v4604, 4
  %v4733 = vpop.permute.xlu0 %4732
  %4734 = vrot.lane.b32.xlu0 %v4607, 4
  %v4735 = vpop.permute.xlu0 %4734
  %4736 = vrot.lane.b32.xlu0 %v4608, 4
  %v4737 = vpop.permute.xlu0 %4736
  %4738 = vrot.lane.b32.xlu0 %v4611, 4
  %v4739 = vpop.permute.xlu0 %4738
  %4740 = vrot.lane.b32.xlu0 %v4612, 4
  %v4741 = vpop.permute.xlu0 %4740
  %4742 = vrot.lane.b32.xlu0 %v4615, 4
  %v4743 = vpop.permute.xlu0 %4742
  %4744 = vrot.lane.b32.xlu0 %v4616, 4
  %v4745 = vpop.permute.xlu0 %4744
  %4746 = vrot.lane.b32.xlu0 %v4619, 4
  %v4747 = vpop.permute.xlu0 %4746
  %4748 = vrot.lane.b32.xlu0 %v4620, 4
  %v4749 = vpop.permute.xlu0 %4748
  %4750 = vrot.lane.b32.xlu0 %v4623, 4
  %v4751 = vpop.permute.xlu0 %4750
  %4752 = vrot.lane.b32.xlu0 %v4624, 4
  %v4753 = vpop.permute.xlu0 %4752
  %4754 = vrot.lane.b32.xlu0 %v4627, 4
  %v4755 = vpop.permute.xlu0 %4754
  %4756 = vrot.lane.b32.xlu0 %v4628, 4
  %v4757 = vpop.permute.xlu0 %4756
  %4758 = vrot.lane.b32.xlu0 %v4631, 4
  %v4759 = vpop.permute.xlu0 %4758
  %4760 = vrot.lane.b32.xlu0 %v4632, 4
  %v4761 = vpop.permute.xlu0 %4760
  %4826 = vrot.lane.b32.xlu0 %v4376, 8
  %v4827 = vpop.permute.xlu0 %4826
  %4828 = vrot.lane.b32.xlu0 %v4377, 8
  %v4829 = vpop.permute.xlu0 %4828
  %4830 = vrot.lane.b32.xlu0 %v4378, 8
  %v4831 = vpop.permute.xlu0 %4830
  %4832 = vrot.lane.b32.xlu0 %v4379, 8
  %v4833 = vpop.permute.xlu0 %4832
  %4834 = vrot.lane.b32.xlu0 %v4380, 8
  %v4835 = vpop.permute.xlu0 %4834
  %4836 = vrot.lane.b32.xlu0 %v4381, 8
  %v4837 = vpop.permute.xlu0 %4836
  %4838 = vrot.lane.b32.xlu0 %v4382, 8
  %v4839 = vpop.permute.xlu0 %4838
  %4840 = vrot.lane.b32.xlu0 %v4383, 8
  %v4841 = vpop.permute.xlu0 %4840
  %4842 = vrot.lane.b32.xlu0 %v4384, 8
  %v4843 = vpop.permute.xlu0 %4842
  %4844 = vrot.lane.b32.xlu0 %v4385, 8
  %v4845 = vpop.permute.xlu0 %4844
  %4846 = vrot.lane.b32.xlu0 %v4386, 8
  %v4847 = vpop.permute.xlu0 %4846
  %4848 = vrot.lane.b32.xlu0 %v4387, 8
  %v4849 = vpop.permute.xlu0 %4848
  %4850 = vrot.lane.b32.xlu0 %v4388, 8
  %v4851 = vpop.permute.xlu0 %4850
  %4852 = vrot.lane.b32.xlu0 %v4389, 8
  %v4853 = vpop.permute.xlu0 %4852
  %4854 = vrot.lane.b32.xlu0 %v4390, 8
  %v4855 = vpop.permute.xlu0 %4854
  %4856 = vrot.lane.b32.xlu0 %v4391, 8
  %v4857 = vpop.permute.xlu0 %4856
  %4858 = vrot.lane.b32.xlu0 %v4392, 8
  %v4859 = vpop.permute.xlu0 %4858
  %4860 = vrot.lane.b32.xlu0 %v4393, 8
  %v4861 = vpop.permute.xlu0 %4860
  %4862 = vrot.lane.b32.xlu0 %v4394, 8
  %v4863 = vpop.permute.xlu0 %4862
  %4864 = vrot.lane.b32.xlu0 %v4395, 8
  %v4865 = vpop.permute.xlu0 %4864
  %4866 = vrot.lane.b32.xlu0 %v4396, 8
  %v4867 = vpop.permute.xlu0 %4866
  %4868 = vrot.lane.b32.xlu0 %v4397, 8
  %v4869 = vpop.permute.xlu0 %4868
  %4870 = vrot.lane.b32.xlu0 %v4398, 8
  %v4871 = vpop.permute.xlu0 %4870
  %4872 = vrot.lane.b32.xlu0 %v4399, 8
  %v4873 = vpop.permute.xlu0 %4872
  %4874 = vrot.lane.b32.xlu0 %v4400, 8
  %v4875 = vpop.permute.xlu0 %4874
  %4876 = vrot.lane.b32.xlu0 %v4401, 8
  %v4877 = vpop.permute.xlu0 %4876
  %4878 = vrot.lane.b32.xlu0 %v4402, 8
  %v4879 = vpop.permute.xlu0 %4878
  %4880 = vrot.lane.b32.xlu0 %v4403, 8
  %v4881 = vpop.permute.xlu0 %4880
  %4882 = vrot.lane.b32.xlu0 %v4404, 8
  %v4883 = vpop.permute.xlu0 %4882
  %4884 = vrot.lane.b32.xlu0 %v4405, 8
  %v4885 = vpop.permute.xlu0 %4884
  %4886 = vrot.lane.b32.xlu0 0.0, 8
  %v4887 = vpop.permute.xlu0 %4886
  %4888 = vrot.lane.b32.xlu0 %v4408, 8
  %v4889 = vpop.permute.xlu0 %4888
  %4890 = vrot.lane.b32.xlu0 %v4409, 8
  %v4891 = vpop.permute.xlu0 %4890
  %4892 = vrot.lane.b32.xlu0 %v4410, 8
  %v4893 = vpop.permute.xlu0 %4892
  %4894 = vrot.lane.b32.xlu0 %v4411, 8
  %v4895 = vpop.permute.xlu0 %4894
  %4896 = vrot.lane.b32.xlu0 %v4412, 8
  %v4897 = vpop.permute.xlu0 %4896
  %4898 = vrot.lane.b32.xlu0 %v4413, 8
  %v4899 = vpop.permute.xlu0 %4898
  %4900 = vrot.lane.b32.xlu0 %v4414, 8
  %v4901 = vpop.permute.xlu0 %4900
  %4902 = vrot.lane.b32.xlu0 %v4415, 8
  %v4903 = vpop.permute.xlu0 %4902
  %4904 = vrot.lane.b32.xlu0 %v4416, 8
  %v4905 = vpop.permute.xlu0 %4904
  %4906 = vrot.lane.b32.xlu0 %v4417, 8
  %v4907 = vpop.permute.xlu0 %4906
  %4908 = vrot.lane.b32.xlu0 %v4418, 8
  %v4909 = vpop.permute.xlu0 %4908
  %4910 = vrot.lane.b32.xlu0 %v4419, 8
  %v4911 = vpop.permute.xlu0 %4910
  %4912 = vrot.lane.b32.xlu0 %v4420, 8
  %v4913 = vpop.permute.xlu0 %4912
  %4914 = vrot.lane.b32.xlu0 %v4421, 8
  %v4915 = vpop.permute.xlu0 %4914
  %4916 = vrot.lane.b32.xlu0 %v4422, 8
  %v4917 = vpop.permute.xlu0 %4916
  %4918 = vrot.lane.b32.xlu0 %v4423, 8
  %v4919 = vpop.permute.xlu0 %4918
  %4920 = vrot.lane.b32.xlu0 %v4424, 8
  %v4921 = vpop.permute.xlu0 %4920
  %4922 = vrot.lane.b32.xlu0 %v4425, 8
  %v4923 = vpop.permute.xlu0 %4922
  %4924 = vrot.lane.b32.xlu0 %v4426, 8
  %v4925 = vpop.permute.xlu0 %4924
  %4926 = vrot.lane.b32.xlu0 %v4427, 8
  %v4927 = vpop.permute.xlu0 %4926
  %4928 = vrot.lane.b32.xlu0 %v4428, 8
  %v4929 = vpop.permute.xlu0 %4928
  %4930 = vrot.lane.b32.xlu0 %v4429, 8
  %v4931 = vpop.permute.xlu0 %4930
  %4932 = vrot.lane.b32.xlu0 %v4430, 8
  %v4933 = vpop.permute.xlu0 %4932
  %4934 = vrot.lane.b32.xlu0 %v4431, 8
  %v4935 = vpop.permute.xlu0 %4934
  %4936 = vrot.lane.b32.xlu0 %v4432, 8
  %v4937 = vpop.permute.xlu0 %4936
  %4938 = vrot.lane.b32.xlu0 %v4433, 8
  %v4939 = vpop.permute.xlu0 %4938
  %4940 = vrot.lane.b32.xlu0 %v4434, 8
  %v4941 = vpop.permute.xlu0 %4940
  %4942 = vrot.lane.b32.xlu0 %v4435, 8
  %v4943 = vpop.permute.xlu0 %4942
  %4944 = vrot.lane.b32.xlu0 %v4436, 8
  %v4945 = vpop.permute.xlu0 %4944
  %4946 = vrot.lane.b32.xlu0 %v4437, 8
  %v4947 = vpop.permute.xlu0 %4946
  %5009 = vrot.lane.b32.xlu0 %v4511, 12
  %v5010 = vpop.permute.xlu0 %5009
  %5011 = vrot.lane.b32.xlu0 %v4512, 12
  %v5012 = vpop.permute.xlu0 %5011
  %5013 = vrot.lane.b32.xlu0 %v4515, 12
  %v5014 = vpop.permute.xlu0 %5013
  %5015 = vrot.lane.b32.xlu0 %v4516, 12
  %v5016 = vpop.permute.xlu0 %5015
  %5017 = vrot.lane.b32.xlu0 %v4519, 12
  %v5018 = vpop.permute.xlu0 %5017
  %5019 = vrot.lane.b32.xlu0 %v4520, 12
  %v5020 = vpop.permute.xlu0 %5019
  %5021 = vrot.lane.b32.xlu0 %v4523, 12
  %v5022 = vpop.permute.xlu0 %5021
  %5023 = vrot.lane.b32.xlu0 %v4524, 12
  %v5024 = vpop.permute.xlu0 %5023
  %5025 = vrot.lane.b32.xlu0 %v4527, 12
  %v5026 = vpop.permute.xlu0 %5025
  %5027 = vrot.lane.b32.xlu0 %v4528, 12
  %v5028 = vpop.permute.xlu0 %5027
  %5029 = vrot.lane.b32.xlu0 %v4531, 12
  %v5030 = vpop.permute.xlu0 %5029
  %5031 = vrot.lane.b32.xlu0 %v4532, 12
  %v5032 = vpop.permute.xlu0 %5031
  %5033 = vrot.lane.b32.xlu0 %v4535, 12
  %v5034 = vpop.permute.xlu0 %5033
  %5035 = vrot.lane.b32.xlu0 %v4536, 12
  %v5036 = vpop.permute.xlu0 %5035
  %5037 = vrot.lane.b32.xlu0 %v4539, 12
  %v5038 = vpop.permute.xlu0 %5037
  %5039 = vrot.lane.b32.xlu0 %v4540, 12
  %v5040 = vpop.permute.xlu0 %5039
  %5041 = vrot.lane.b32.xlu0 %v4543, 12
  %v5042 = vpop.permute.xlu0 %5041
  %5043 = vrot.lane.b32.xlu0 %v4544, 12
  %v5044 = vpop.permute.xlu0 %5043
  %5045 = vrot.lane.b32.xlu0 %v4547, 12
  %v5046 = vpop.permute.xlu0 %5045
  %5047 = vrot.lane.b32.xlu0 %v4548, 12
  %v5048 = vpop.permute.xlu0 %5047
  %5049 = vrot.lane.b32.xlu0 %v4551, 12
  %v5050 = vpop.permute.xlu0 %5049
  %5051 = vrot.lane.b32.xlu0 %v4552, 12
  %v5052 = vpop.permute.xlu0 %5051
  %5053 = vrot.lane.b32.xlu0 %v4555, 12
  %v5054 = vpop.permute.xlu0 %5053
  %5055 = vrot.lane.b32.xlu0 %v4556, 12
  %v5056 = vpop.permute.xlu0 %5055
  %5057 = vrot.lane.b32.xlu0 %v4559, 12
  %v5058 = vpop.permute.xlu0 %5057
  %5059 = vrot.lane.b32.xlu0 %v4560, 12
  %v5060 = vpop.permute.xlu0 %5059
  %5061 = vrot.lane.b32.xlu0 %v4563, 12
  %v5062 = vpop.permute.xlu0 %5061
  %5063 = vrot.lane.b32.xlu0 %v4564, 12
  %v5064 = vpop.permute.xlu0 %5063
  %5065 = vrot.lane.b32.xlu0 %v4567, 12
  %v5066 = vpop.permute.xlu0 %5065
  %5067 = vrot.lane.b32.xlu0 %v4568, 12
  %v5068 = vpop.permute.xlu0 %5067
  %5069 = vrot.lane.b32.xlu0 %v4633, 12
  %v5070 = vpop.permute.xlu0 %5069
  %5071 = vrot.lane.b32.xlu0 %v4575, 12
  %v5072 = vpop.permute.xlu0 %5071
  %5073 = vrot.lane.b32.xlu0 %v4576, 12
  %v5074 = vpop.permute.xlu0 %5073
  %5075 = vrot.lane.b32.xlu0 %v4579, 12
  %v5076 = vpop.permute.xlu0 %5075
  %5077 = vrot.lane.b32.xlu0 %v4580, 12
  %v5078 = vpop.permute.xlu0 %5077
  %5079 = vrot.lane.b32.xlu0 %v4583, 12
  %v5080 = vpop.permute.xlu0 %5079
  %5081 = vrot.lane.b32.xlu0 %v4584, 12
  %v5082 = vpop.permute.xlu0 %5081
  %5083 = vrot.lane.b32.xlu0 %v4587, 12
  %v5084 = vpop.permute.xlu0 %5083
  %5085 = vrot.lane.b32.xlu0 %v4588, 12
  %v5086 = vpop.permute.xlu0 %5085
  %5087 = vrot.lane.b32.xlu0 %v4591, 12
  %v5088 = vpop.permute.xlu0 %5087
  %5089 = vrot.lane.b32.xlu0 %v4592, 12
  %v5090 = vpop.permute.xlu0 %5089
  %5091 = vrot.lane.b32.xlu0 %v4595, 12
  %v5092 = vpop.permute.xlu0 %5091
  %5093 = vrot.lane.b32.xlu0 %v4596, 12
  %v5094 = vpop.permute.xlu0 %5093
  %5095 = vrot.lane.b32.xlu0 %v4599, 12
  %v5096 = vpop.permute.xlu0 %5095
  %5097 = vrot.lane.b32.xlu0 %v4600, 12
  %v5098 = vpop.permute.xlu0 %5097
  %5099 = vrot.lane.b32.xlu0 %v4603, 12
  %v5100 = vpop.permute.xlu0 %5099
  %5101 = vrot.lane.b32.xlu0 %v4604, 12
  %v5102 = vpop.permute.xlu0 %5101
  %5103 = vrot.lane.b32.xlu0 %v4607, 12
  %v5104 = vpop.permute.xlu0 %5103
  %5105 = vrot.lane.b32.xlu0 %v4608, 12
  %v5106 = vpop.permute.xlu0 %5105
  %5107 = vrot.lane.b32.xlu0 %v4611, 12
  %v5108 = vpop.permute.xlu0 %5107
  %5109 = vrot.lane.b32.xlu0 %v4612, 12
  %v5110 = vpop.permute.xlu0 %5109
  %5111 = vrot.lane.b32.xlu0 %v4615, 12
  %v5112 = vpop.permute.xlu0 %5111
  %5113 = vrot.lane.b32.xlu0 %v4616, 12
  %v5114 = vpop.permute.xlu0 %5113
  %5115 = vrot.lane.b32.xlu0 %v4619, 12
  %v5116 = vpop.permute.xlu0 %5115
  %5117 = vrot.lane.b32.xlu0 %v4620, 12
  %v5118 = vpop.permute.xlu0 %5117
  %5119 = vrot.lane.b32.xlu0 %v4623, 12
  %v5120 = vpop.permute.xlu0 %5119
  %5121 = vrot.lane.b32.xlu0 %v4624, 12
  %v5122 = vpop.permute.xlu0 %5121
  %5123 = vrot.lane.b32.xlu0 %v4627, 12
  %v5124 = vpop.permute.xlu0 %5123
  %5125 = vrot.lane.b32.xlu0 %v4628, 12
  %v5126 = vpop.permute.xlu0 %5125
  %5127 = vrot.lane.b32.xlu0 %v4631, 12
  %v5128 = vpop.permute.xlu0 %5127
  %5129 = vrot.lane.b32.xlu0 %v4632, 12
  %v5130 = vpop.permute.xlu0 %5129
  %v5192 = vsel %vm2658, %v4374, %v4635
  %v5193 = vsel %vm2658, %v4375, %v4637
  %v5194 = vsel %vm2658, %v4376, %v4639
  %v5195 = vsel %vm2658, %v4377, %v4641
  %v5196 = vsel %vm2658, %v4378, %v4643
  %v5197 = vsel %vm2658, %v4379, %v4645
  %v5198 = vsel %vm2658, %v4380, %v4647
  %v5199 = vsel %vm2658, %v4381, %v4649
  %v5200 = vsel %vm2658, %v4382, %v4651
  %v5201 = vsel %vm2658, %v4383, %v4653
  %v5202 = vsel %vm2658, %v4384, %v4655
  %v5203 = vsel %vm2658, %v4385, %v4657
  %v5204 = vsel %vm2658, %v4386, %v4659
  %v5205 = vsel %vm2658, %v4387, %v4661
  %v5206 = vsel %vm2658, %v4388, %v4663
  %v5207 = vsel %vm2658, %v4389, %v4665
  %v5208 = vsel %vm2658, %v4390, %v4667
  %v5209 = vsel %vm2658, %v4391, %v4669
  %v5210 = vsel %vm2658, %v4392, %v4671
  %v5211 = vsel %vm2658, %v4393, %v4673
  %v5212 = vsel %vm2658, %v4394, %v4675
  %v5213 = vsel %vm2658, %v4395, %v4677
  %v5214 = vsel %vm2658, %v4396, %v4679
  %v5215 = vsel %vm2658, %v4397, %v4681
  %v5216 = vsel %vm2658, %v4398, %v4683
  %v5217 = vsel %vm2658, %v4399, %v4685
  %v5218 = vsel %vm2658, %v4400, %v4687
  %v5219 = vsel %vm2658, %v4401, %v4689
  %v5220 = vsel %vm2658, %v4402, %v4691
  %v5221 = vsel %vm2658, %v4403, %v4693
  %v5222 = vsel %vm2658, %v4404, %v4695
  %v5223 = vsel %vm2658, %v4405, %v4697
  %v5224 = vsel %vm2658, %v4406, %v4699
  %v5225 = vsel %vm2658, %v4407, %v4701
  %v5226 = vsel %vm2658, %v4408, %v4703
  %v5227 = vsel %vm2658, %v4409, %v4705
  %v5228 = vsel %vm2658, %v4410, %v4707
  %v5229 = vsel %vm2658, %v4411, %v4709
  %v5230 = vsel %vm2658, %v4412, %v4711
  %v5231 = vsel %vm2658, %v4413, %v4713
  %v5232 = vsel %vm2658, %v4414, %v4715
  %v5233 = vsel %vm2658, %v4415, %v4717
  %v5234 = vsel %vm2658, %v4416, %v4719
  %v5235 = vsel %vm2658, %v4417, %v4721
  %v5236 = vsel %vm2658, %v4418, %v4723
  %v5237 = vsel %vm2658, %v4419, %v4725
  %v5238 = vsel %vm2658, %v4420, %v4727
  %v5239 = vsel %vm2658, %v4421, %v4729
  %v5240 = vsel %vm2658, %v4422, %v4731
  %v5241 = vsel %vm2658, %v4423, %v4733
  %v5242 = vsel %vm2658, %v4424, %v4735
  %v5243 = vsel %vm2658, %v4425, %v4737
  %v5244 = vsel %vm2658, %v4426, %v4739
  %v5245 = vsel %vm2658, %v4427, %v4741
  %v5246 = vsel %vm2658, %v4428, %v4743
  %v5247 = vsel %vm2658, %v4429, %v4745
  %v5248 = vsel %vm2658, %v4430, %v4747
  %v5249 = vsel %vm2658, %v4431, %v4749
  %v5250 = vsel %vm2658, %v4432, %v4751
  %v5251 = vsel %vm2658, %v4433, %v4753
  %v5252 = vsel %vm2658, %v4434, %v4755
  %v5253 = vsel %vm2658, %v4435, %v4757
  %v5254 = vsel %vm2658, %v4436, %v4759
  %v5255 = vsel %vm2658, %v4437, %v4761
  %v5256 = vsel %vm2723, %v5192, %v4827
  %v5257 = vsel %vm2723, %v5193, %v4829
  %v5258 = vsel %vm2723, %v5194, %v4831
  %v5259 = vsel %vm2723, %v5195, %v4833
  %v5260 = vsel %vm2723, %v5196, %v4835
  %v5261 = vsel %vm2723, %v5197, %v4837
  %v5262 = vsel %vm2723, %v5198, %v4839
  %v5263 = vsel %vm2723, %v5199, %v4841
  %v5264 = vsel %vm2723, %v5200, %v4843
  %v5265 = vsel %vm2723, %v5201, %v4845
  %v5266 = vsel %vm2723, %v5202, %v4847
  %v5267 = vsel %vm2723, %v5203, %v4849
  %v5268 = vsel %vm2723, %v5204, %v4851
  %v5269 = vsel %vm2723, %v5205, %v4853
  %v5270 = vsel %vm2723, %v5206, %v4855
  %v5271 = vsel %vm2723, %v5207, %v4857
  %v5272 = vsel %vm2723, %v5208, %v4859
  %v5273 = vsel %vm2723, %v5209, %v4861
  %v5274 = vsel %vm2723, %v5210, %v4863
  %v5275 = vsel %vm2723, %v5211, %v4865
  %v5276 = vsel %vm2723, %v5212, %v4867
  %v5277 = vsel %vm2723, %v5213, %v4869
  %v5278 = vsel %vm2723, %v5214, %v4871
  %v5279 = vsel %vm2723, %v5215, %v4873
  %v5280 = vsel %vm2723, %v5216, %v4875
  %v5281 = vsel %vm2723, %v5217, %v4877
  %v5282 = vsel %vm2723, %v5218, %v4879
  %v5283 = vsel %vm2723, %v5219, %v4881
  %v5284 = vsel %vm2723, %v5220, %v4883
  %v5285 = vsel %vm2723, %v5221, %v4885
  %v5286 = vsel %vm2723, %v5222, %v4887
  %v5287 = vsel %vm2723, %v5223, %v4887
  %v5288 = vsel %vm2723, %v5224, %v4889
  %v5289 = vsel %vm2723, %v5225, %v4891
  %v5290 = vsel %vm2723, %v5226, %v4893
  %v5291 = vsel %vm2723, %v5227, %v4895
  %v5292 = vsel %vm2723, %v5228, %v4897
  %v5293 = vsel %vm2723, %v5229, %v4899
  %v5294 = vsel %vm2723, %v5230, %v4901
  %v5295 = vsel %vm2723, %v5231, %v4903
  %v5296 = vsel %vm2723, %v5232, %v4905
  %v5297 = vsel %vm2723, %v5233, %v4907
  %v5298 = vsel %vm2723, %v5234, %v4909
  %v5299 = vsel %vm2723, %v5235, %v4911
  %v5300 = vsel %vm2723, %v5236, %v4913
  %v5301 = vsel %vm2723, %v5237, %v4915
  %v5302 = vsel %vm2723, %v5238, %v4917
  %v5303 = vsel %vm2723, %v5239, %v4919
  %v5304 = vsel %vm2723, %v5240, %v4921
  %v5305 = vsel %vm2723, %v5241, %v4923
  %v5306 = vsel %vm2723, %v5242, %v4925
  %v5307 = vsel %vm2723, %v5243, %v4927
  %v5308 = vsel %vm2723, %v5244, %v4929
  %v5309 = vsel %vm2723, %v5245, %v4931
  %v5310 = vsel %vm2723, %v5246, %v4933
  %v5311 = vsel %vm2723, %v5247, %v4935
  %v5312 = vsel %vm2723, %v5248, %v4937
  %v5313 = vsel %vm2723, %v5249, %v4939
  %v5314 = vsel %vm2723, %v5250, %v4941
  %v5315 = vsel %vm2723, %v5251, %v4943
  %v5316 = vsel %vm2723, %v5252, %v4945
  %v5317 = vsel %vm2723, %v5253, %v4947
  %v5318 = vsel %vm2723, %v5254, %v4887
  %v5319 = vsel %vm2723, %v5255, %v4887
  %v5320 = vsel %vm2788, %v5256, %v5010
  %v5321 = vsel %vm2788, %v5257, %v5012
  %v5322 = vsel %vm2788, %v5258, %v5014
  %v5323 = vsel %vm2788, %v5259, %v5016
  %v5324 = vsel %vm2788, %v5260, %v5018
  %v5325 = vsel %vm2788, %v5261, %v5020
  %v5326 = vsel %vm2788, %v5262, %v5022
  %v5327 = vsel %vm2788, %v5263, %v5024
  %v5328 = vsel %vm2788, %v5264, %v5026
  %v5329 = vsel %vm2788, %v5265, %v5028
  %v5330 = vsel %vm2788, %v5266, %v5030
  %v5331 = vsel %vm2788, %v5267, %v5032
  %v5332 = vsel %vm2788, %v5268, %v5034
  %v5333 = vsel %vm2788, %v5269, %v5036
  %v5334 = vsel %vm2788, %v5270, %v5038
  %v5335 = vsel %vm2788, %v5271, %v5040
  %v5336 = vsel %vm2788, %v5272, %v5042
  %v5337 = vsel %vm2788, %v5273, %v5044
  %v5338 = vsel %vm2788, %v5274, %v5046
  %v5339 = vsel %vm2788, %v5275, %v5048
  %v5340 = vsel %vm2788, %v5276, %v5050
  %v5341 = vsel %vm2788, %v5277, %v5052
  %v5342 = vsel %vm2788, %v5278, %v5054
  %v5343 = vsel %vm2788, %v5279, %v5056
  %v5344 = vsel %vm2788, %v5280, %v5058
  %v5345 = vsel %vm2788, %v5281, %v5060
  %v5346 = vsel %vm2788, %v5282, %v5062
  %v5347 = vsel %vm2788, %v5283, %v5064
  %v5348 = vsel %vm2788, %v5284, %v5066
  %v5349 = vsel %vm2788, %v5285, %v5068
  %v5350 = vsel %vm2788, %v5286, %v5070
  %v5351 = vsel %vm2788, %v5287, %v5070
  %v5352 = vsel %vm2788, %v5288, %v5072
  %v5353 = vsel %vm2788, %v5289, %v5074
  %v5354 = vsel %vm2788, %v5290, %v5076
  %v5355 = vsel %vm2788, %v5291, %v5078
  %v5356 = vsel %vm2788, %v5292, %v5080
  %v5357 = vsel %vm2788, %v5293, %v5082
  %v5358 = vsel %vm2788, %v5294, %v5084
  %v5359 = vsel %vm2788, %v5295, %v5086
  %v5360 = vsel %vm2788, %v5296, %v5088
  %v5361 = vsel %vm2788, %v5297, %v5090
  %v5362 = vsel %vm2788, %v5298, %v5092
  %v5363 = vsel %vm2788, %v5299, %v5094
  %v5364 = vsel %vm2788, %v5300, %v5096
  %v5365 = vsel %vm2788, %v5301, %v5098
  %v5366 = vsel %vm2788, %v5302, %v5100
  %v5367 = vsel %vm2788, %v5303, %v5102
  %v5368 = vsel %vm2788, %v5304, %v5104
  %v5369 = vsel %vm2788, %v5305, %v5106
  %v5370 = vsel %vm2788, %v5306, %v5108
  %v5371 = vsel %vm2788, %v5307, %v5110
  %v5372 = vsel %vm2788, %v5308, %v5112
  %v5373 = vsel %vm2788, %v5309, %v5114
  %v5374 = vsel %vm2788, %v5310, %v5116
  %v5375 = vsel %vm2788, %v5311, %v5118
  %v5376 = vsel %vm2788, %v5312, %v5120
  %v5377 = vsel %vm2788, %v5313, %v5122
  %v5378 = vsel %vm2788, %v5314, %v5124
  %v5379 = vsel %vm2788, %v5315, %v5126
  %v5380 = vsel %vm2788, %v5316, %v5128
  %v5381 = vsel %vm2788, %v5317, %v5130
  %v5382 = vsel %vm2788, %v5318, %v5070
  %v5383 = vsel %vm2788, %v5319, %v5070
  %v5384 = vld [vmem:[%s2] sm:$0xff]
  %v5385 = vld [vmem:[%s2 + $0x8] sm:$0xff]
  %v5387 = vsel %vm2853, %v5320, 0
  %v5390 = vsel %vm2853, %v5321, 0
  %v5393 = vsel %vm2853, %v5322, 0
  %v5396 = vsel %vm2853, %v5323, 0
  %v5399 = vsel %vm2853, %v5324, 0
  %v5402 = vsel %vm2853, %v5325, 0
  %v5405 = vsel %vm2853, %v5326, 0
  %v5408 = vsel %vm2853, %v5327, 0
  %v5411 = vsel %vm2853, %v5328, 0
  %v5414 = vsel %vm2853, %v5329, 0
  %v5417 = vsel %vm2853, %v5330, 0
  %v5420 = vsel %vm2853, %v5331, 0
  %v5423 = vsel %vm2853, %v5332, 0
  %v5426 = vsel %vm2853, %v5333, 0
  %v5429 = vsel %vm2853, %v5334, 0
  %v5432 = vsel %vm2853, %v5335, 0
  %v5435 = vsel %vm2853, %v5336, 0
  %v5438 = vsel %vm2853, %v5337, 0
  %v5441 = vsel %vm2853, %v5338, 0
  %v5444 = vsel %vm2853, %v5339, 0
  %v5447 = vsel %vm2853, %v5340, 0
  %v5450 = vsel %vm2853, %v5341, 0
  %v5453 = vsel %vm2853, %v5342, 0
  %v5456 = vsel %vm2853, %v5343, 0
  %v5459 = vsel %vm2853, %v5344, 0
  %v5462 = vsel %vm2853, %v5345, 0
  %v5465 = vsel %vm2853, %v5346, 0
  %v5468 = vsel %vm2853, %v5347, 0
  %v5471 = vsel %vm2853, %v5348, 0
  %v5474 = vsel %vm2853, %v5349, 0
  %v5477 = vsel %vm2853, %v5350, 0
  %v5480 = vsel %vm2853, %v5351, 0
  %v5483 = vsel %vm2853, %v5352, 0
  %v5486 = vsel %vm2853, %v5353, 0
  %v5489 = vsel %vm2853, %v5354, 0
  %v5492 = vsel %vm2853, %v5355, 0
  %v5495 = vsel %vm2853, %v5356, 0
  %v5498 = vsel %vm2853, %v5357, 0
  %v5501 = vsel %vm2853, %v5358, 0
  %v5504 = vsel %vm2853, %v5359, 0
  %v5507 = vsel %vm2853, %v5360, 0
  %v5510 = vsel %vm2853, %v5361, 0
  %v5513 = vsel %vm2853, %v5362, 0
  %v5516 = vsel %vm2853, %v5363, 0
  %v5519 = vsel %vm2853, %v5364, 0
  %v5522 = vsel %vm2853, %v5365, 0
  %v5525 = vsel %vm2853, %v5366, 0
  %v5528 = vsel %vm2853, %v5367, 0
  %v5531 = vsel %vm2853, %v5368, 0
  %v5534 = vsel %vm2853, %v5369, 0
  %v5537 = vsel %vm2853, %v5370, 0
  %v5540 = vsel %vm2853, %v5371, 0
  %v5543 = vsel %vm2853, %v5372, 0
  %v5546 = vsel %vm2853, %v5373, 0
  %v5549 = vsel %vm2853, %v5374, 0
  %v5552 = vsel %vm2853, %v5375, 0
  %v5555 = vsel %vm2853, %v5376, 0
  %v5558 = vsel %vm2853, %v5377, 0
  %v5561 = vsel %vm2853, %v5378, 0
  %v5564 = vsel %vm2853, %v5379, 0
  %v5567 = vsel %vm2853, %v5380, 0
  %v5570 = vsel %vm2853, %v5381, 0
  %v5573 = vsel %vm2853, %v5382, 0
  %v5576 = vsel %vm2853, %v5383, 0
  %5578 = vmatprep.subr.mxu0 0.0
  %5579 = vmatpush1.msra.mxu0 0.0
  %5580 = vmatprep.subr.mxu0 0.0
  %5581 = vmatpush1.msra.mxu0 0.0
  %5582 = vmatprep.subr.mxu0 0.0
  %5583 = vmatpush1.msra.mxu0 0.0
  %5584 = vmatprep.subr.mxu0 0.0
  %5585 = vmatpush1.msra.mxu0 0.0
  %5586 = vmatprep.subr.mxu0 0.0
  %5587 = vmatpush1.msra.mxu0 0.0
  %5588 = vmatprep.subr.mxu0 0.0
  %5589 = vmatpush1.msra.mxu0 0.0
  %5590 = vmatprep.subr.mxu0 0.0
  %5591 = vmatpush1.msra.mxu0 0.0
  %5592 = vmatprep.subr.mxu0 0.0
  %5593 = vmatpush1.msra.mxu0 0.0
  %5594 = vmatprep.subr.mxu0 0.0
  %5595 = vmatpush1.msra.mxu0 0.0
  %5596 = vmatprep.subr.mxu0 0.0
  %5597 = vmatpush1.msra.mxu0 0.0
  %5598 = vmatprep.subr.mxu0 0.0
  %5599 = vmatpush1.msra.mxu0 0.0
  %5600 = vmatprep.subr.mxu0 0.0
  %5601 = vmatpush1.msra.mxu0 0.0
  %5602 = vmatprep.subr.mxu0 0.0
  %5603 = vmatpush1.msra.mxu0 0.0
  %5604 = vmatprep.subr.mxu0 0.0
  %5605 = vmatpush1.msra.mxu0 0.0
  %5606 = vmatprep.subr.mxu0 0.0
  %5607 = vmatpush1.msra.mxu0 %v5385
  %5608 = vmatprep.subr.mxu0 0.0
  %5609 = vmatpush1.msra.mxu0 %v5384
  %5610 = vmatprep.subr.mxu0 0.0
  %5611 = vmatpush2.msra.mxu0 0.0
  %5612 = vmatprep.subr.mxu0 0.0
  %5613 = vmatpush2.msra.mxu0 0.0
  %5614 = vmatprep.subr.mxu0 0.0
  %5615 = vmatpush2.msra.mxu0 0.0
  %5616 = vmatprep.subr.mxu0 0.0
  %5617 = vmatpush2.msra.mxu0 0.0
  %5618 = vmatprep.subr.mxu0 0.0
  %5619 = vmatpush2.msra.mxu0 0.0
  %5620 = vmatprep.subr.mxu0 0.0
  %5621 = vmatpush2.msra.mxu0 0.0
  %5622 = vmatprep.subr.mxu0 0.0
  %5623 = vmatpush2.msra.mxu0 0.0
  %5624 = vmatprep.subr.mxu0 0.0
  %5625 = vmatpush2.msra.mxu0 0.0
  %5626 = vmatprep.subr.mxu0 0.0
  %5627 = vmatpush2.msra.mxu0 0.0
  %5628 = vmatprep.subr.mxu0 0.0
  %5629 = vmatpush2.msra.mxu0 0.0
  %5630 = vmatprep.subr.mxu0 0.0
  %5631 = vmatpush2.msra.mxu0 0.0
  %5632 = vmatprep.subr.mxu0 0.0
  %5633 = vmatpush2.msra.mxu0 0.0
  %5634 = vmatprep.subr.mxu0 0.0
  %5635 = vmatpush2.msra.mxu0 0.0
  %5636 = vmatprep.subr.mxu0 0.0
  %5637 = vmatpush2.msra.mxu0 0.0
  %5638 = vmatprep.subr.mxu0 0.0
  %5639 = vmatpush2.msra.mxu0 0.0
  %5640 = vmatprep.subr.mxu0 0.0
  %5641 = vmatpush2.msra.mxu0 0.0
  %5642 = vmatprep.mubr.f32.mxu0 0.0
  %5643 = vmatmul.mubr.f32.gmra.mxu0 %v5387
  %v5644 = vpop.f32.mrf.mxu0
  %v5645 = vadd.f32 0.0, %v5644
  %v5646 = vpop.f32.mrf.mxu0
  %5647 = vmatprep.mubr.f32.mxu0 0.0
  %5648 = vmatmul.mubr.f32.gmra.mxu0 %v5390
  %v5649 = vpop.f32.mrf.mxu0
  %v5650 = vadd.f32 0.0, %v5649
  %v5651 = vpop.f32.mrf.mxu0
  %5652 = vmatprep.mubr.f32.mxu0 0.0
  %5653 = vmatmul.mubr.f32.gmra.mxu0 %v5393
  %v5654 = vpop.f32.mrf.mxu0
  %v5655 = vadd.f32 0.0, %v5654
  %v5656 = vpop.f32.mrf.mxu0
  %5657 = vmatprep.mubr.f32.mxu0 0.0
  %5658 = vmatmul.mubr.f32.gmra.mxu0 %v5396
  %v5659 = vpop.f32.mrf.mxu0
  %v5660 = vadd.f32 0.0, %v5659
  %v5661 = vpop.f32.mrf.mxu0
  %5662 = vmatprep.mubr.f32.mxu0 0.0
  %5663 = vmatmul.mubr.f32.gmra.mxu0 %v5399
  %v5664 = vpop.f32.mrf.mxu0
  %v5665 = vadd.f32 0.0, %v5664
  %v5666 = vpop.f32.mrf.mxu0
  %5667 = vmatprep.mubr.f32.mxu0 0.0
  %5668 = vmatmul.mubr.f32.gmra.mxu0 %v5402
  %v5669 = vpop.f32.mrf.mxu0
  %v5670 = vadd.f32 0.0, %v5669
  %v5671 = vpop.f32.mrf.mxu0
  %5672 = vmatprep.mubr.f32.mxu0 0.0
  %5673 = vmatmul.mubr.f32.gmra.mxu0 %v5405
  %v5674 = vpop.f32.mrf.mxu0
  %v5675 = vadd.f32 0.0, %v5674
  %v5676 = vpop.f32.mrf.mxu0
  %5677 = vmatprep.mubr.f32.mxu0 0.0
  %5678 = vmatmul.mubr.f32.gmra.mxu0 %v5408
  %v5679 = vpop.f32.mrf.mxu0
  %v5680 = vadd.f32 0.0, %v5679
  %v5681 = vpop.f32.mrf.mxu0
  %5682 = vmatprep.mubr.f32.mxu0 0.0
  %5683 = vmatmul.mubr.f32.gmra.mxu0 %v5411
  %v5684 = vpop.f32.mrf.mxu0
  %v5685 = vadd.f32 0.0, %v5684
  %v5686 = vpop.f32.mrf.mxu0
  %5687 = vmatprep.mubr.f32.mxu0 0.0
  %5688 = vmatmul.mubr.f32.gmra.mxu0 %v5414
  %v5689 = vpop.f32.mrf.mxu0
  %v5690 = vadd.f32 0.0, %v5689
  %v5691 = vpop.f32.mrf.mxu0
  %5692 = vmatprep.mubr.f32.mxu0 0.0
  %5693 = vmatmul.mubr.f32.gmra.mxu0 %v5417
  %v5694 = vpop.f32.mrf.mxu0
  %v5695 = vadd.f32 0.0, %v5694
  %v5696 = vpop.f32.mrf.mxu0
  %5697 = vmatprep.mubr.f32.mxu0 0.0
  %5698 = vmatmul.mubr.f32.gmra.mxu0 %v5420
  %v5699 = vpop.f32.mrf.mxu0
  %v5700 = vadd.f32 0.0, %v5699
  %v5701 = vpop.f32.mrf.mxu0
  %5702 = vmatprep.mubr.f32.mxu0 0.0
  %5703 = vmatmul.mubr.f32.gmra.mxu0 %v5423
  %v5704 = vpop.f32.mrf.mxu0
  %v5705 = vadd.f32 0.0, %v5704
  %v5706 = vpop.f32.mrf.mxu0
  %5707 = vmatprep.mubr.f32.mxu0 0.0
  %5708 = vmatmul.mubr.f32.gmra.mxu0 %v5426
  %v5709 = vpop.f32.mrf.mxu0
  %v5710 = vadd.f32 0.0, %v5709
  %v5711 = vpop.f32.mrf.mxu0
  %5712 = vmatprep.mubr.f32.mxu0 0.0
  %5713 = vmatmul.mubr.f32.gmra.mxu0 %v5429
  %v5714 = vpop.f32.mrf.mxu0
  %v5715 = vadd.f32 0.0, %v5714
  %v5716 = vpop.f32.mrf.mxu0
  %5717 = vmatprep.mubr.f32.mxu0 0.0
  %5718 = vmatmul.mubr.f32.gmra.mxu0 %v5432
  %v5719 = vpop.f32.mrf.mxu0
  %v5720 = vadd.f32 0.0, %v5719
  %v5721 = vpop.f32.mrf.mxu0
  %5722 = vmatprep.mubr.f32.mxu0 0.0
  %5723 = vmatmul.mubr.f32.gmra.mxu0 %v5435
  %v5724 = vpop.f32.mrf.mxu0
  %v5725 = vadd.f32 0.0, %v5724
  %v5726 = vpop.f32.mrf.mxu0
  %5727 = vmatprep.mubr.f32.mxu0 0.0
  %5728 = vmatmul.mubr.f32.gmra.mxu0 %v5438
  %v5729 = vpop.f32.mrf.mxu0
  %v5730 = vadd.f32 0.0, %v5729
  %v5731 = vpop.f32.mrf.mxu0
  %5732 = vmatprep.mubr.f32.mxu0 0.0
  %5733 = vmatmul.mubr.f32.gmra.mxu0 %v5441
  %v5734 = vpop.f32.mrf.mxu0
  %v5735 = vadd.f32 0.0, %v5734
  %v5736 = vpop.f32.mrf.mxu0
  %5737 = vmatprep.mubr.f32.mxu0 0.0
  %5738 = vmatmul.mubr.f32.gmra.mxu0 %v5444
  %v5739 = vpop.f32.mrf.mxu0
  %v5740 = vadd.f32 0.0, %v5739
  %v5741 = vpop.f32.mrf.mxu0
  %5742 = vmatprep.mubr.f32.mxu0 0.0
  %5743 = vmatmul.mubr.f32.gmra.mxu0 %v5447
  %v5744 = vpop.f32.mrf.mxu0
  %v5745 = vadd.f32 0.0, %v5744
  %v5746 = vpop.f32.mrf.mxu0
  %5747 = vmatprep.mubr.f32.mxu0 0.0
  %5748 = vmatmul.mubr.f32.gmra.mxu0 %v5450
  %v5749 = vpop.f32.mrf.mxu0
  %v5750 = vadd.f32 0.0, %v5749
  %v5751 = vpop.f32.mrf.mxu0
  %5752 = vmatprep.mubr.f32.mxu0 0.0
  %5753 = vmatmul.mubr.f32.gmra.mxu0 %v5453
  %v5754 = vpop.f32.mrf.mxu0
  %v5755 = vadd.f32 0.0, %v5754
  %v5756 = vpop.f32.mrf.mxu0
  %5757 = vmatprep.mubr.f32.mxu0 0.0
  %5758 = vmatmul.mubr.f32.gmra.mxu0 %v5456
  %v5759 = vpop.f32.mrf.mxu0
  %v5760 = vadd.f32 0.0, %v5759
  %v5761 = vpop.f32.mrf.mxu0
  %5762 = vmatprep.mubr.f32.mxu0 0.0
  %5763 = vmatmul.mubr.f32.gmra.mxu0 %v5459
  %v5764 = vpop.f32.mrf.mxu0
  %v5765 = vadd.f32 0.0, %v5764
  %v5766 = vpop.f32.mrf.mxu0
  %5767 = vmatprep.mubr.f32.mxu0 0.0
  %5768 = vmatmul.mubr.f32.gmra.mxu0 %v5462
  %v5769 = vpop.f32.mrf.mxu0
  %v5770 = vadd.f32 0.0, %v5769
  %v5771 = vpop.f32.mrf.mxu0
  %5772 = vmatprep.mubr.f32.mxu0 0.0
  %5773 = vmatmul.mubr.f32.gmra.mxu0 %v5465
  %v5774 = vpop.f32.mrf.mxu0
  %v5775 = vadd.f32 0.0, %v5774
  %v5776 = vpop.f32.mrf.mxu0
  %5777 = vmatprep.mubr.f32.mxu0 0.0
  %5778 = vmatmul.mubr.f32.gmra.mxu0 %v5468
  %v5779 = vpop.f32.mrf.mxu0
  %v5780 = vadd.f32 0.0, %v5779
  %v5781 = vpop.f32.mrf.mxu0
  %5782 = vmatprep.mubr.f32.mxu0 0.0
  %5783 = vmatmul.mubr.f32.gmra.mxu0 %v5471
  %v5784 = vpop.f32.mrf.mxu0
  %v5785 = vadd.f32 0.0, %v5784
  %v5786 = vpop.f32.mrf.mxu0
  %5787 = vmatprep.mubr.f32.mxu0 0.0
  %5788 = vmatmul.mubr.f32.gmra.mxu0 %v5474
  %v5789 = vpop.f32.mrf.mxu0
  %v5790 = vadd.f32 0.0, %v5789
  %v5791 = vpop.f32.mrf.mxu0
  %5792 = vmatprep.mubr.f32.mxu0 0.0
  %5793 = vmatmul.mubr.f32.gmra.mxu0 %v5477
  %v5794 = vpop.f32.mrf.mxu0
  %v5795 = vadd.f32 0.0, %v5794
  %v5796 = vpop.f32.mrf.mxu0
  %5797 = vmatprep.mubr.f32.mxu0 0.0
  %5798 = vmatmul.mubr.f32.gmra.mxu0 %v5480
  %v5799 = vpop.f32.mrf.mxu0
  %v5800 = vadd.f32 0.0, %v5799
  %v5801 = vpop.f32.mrf.mxu0
  %5802 = vmatprep.mubr.f32.mxu0 0.0
  %5803 = vmatmul.mubr.f32.gmra.mxu0 %v5483
  %v5804 = vpop.f32.mrf.mxu0
  %v5805 = vadd.f32 0.0, %v5804
  %v5806 = vpop.f32.mrf.mxu0
  %5807 = vmatprep.mubr.f32.mxu0 0.0
  %5808 = vmatmul.mubr.f32.gmra.mxu0 %v5486
  %v5809 = vpop.f32.mrf.mxu0
  %v5810 = vadd.f32 0.0, %v5809
  %v5811 = vpop.f32.mrf.mxu0
  %5812 = vmatprep.mubr.f32.mxu0 0.0
  %5813 = vmatmul.mubr.f32.gmra.mxu0 %v5489
  %v5814 = vpop.f32.mrf.mxu0
  %v5815 = vadd.f32 0.0, %v5814
  %v5816 = vpop.f32.mrf.mxu0
  %5817 = vmatprep.mubr.f32.mxu0 0.0
  %5818 = vmatmul.mubr.f32.gmra.mxu0 %v5492
  %v5819 = vpop.f32.mrf.mxu0
  %v5820 = vadd.f32 0.0, %v5819
  %v5821 = vpop.f32.mrf.mxu0
  %5822 = vmatprep.mubr.f32.mxu0 0.0
  %5823 = vmatmul.mubr.f32.gmra.mxu0 %v5495
  %v5824 = vpop.f32.mrf.mxu0
  %v5825 = vadd.f32 0.0, %v5824
  %v5826 = vpop.f32.mrf.mxu0
  %5827 = vmatprep.mubr.f32.mxu0 0.0
  %5828 = vmatmul.mubr.f32.gmra.mxu0 %v5498
  %v5829 = vpop.f32.mrf.mxu0
  %v5830 = vadd.f32 0.0, %v5829
  %v5831 = vpop.f32.mrf.mxu0
  %5832 = vmatprep.mubr.f32.mxu0 0.0
  %5833 = vmatmul.mubr.f32.gmra.mxu0 %v5501
  %v5834 = vpop.f32.mrf.mxu0
  %v5835 = vadd.f32 0.0, %v5834
  %v5836 = vpop.f32.mrf.mxu0
  %5837 = vmatprep.mubr.f32.mxu0 0.0
  %5838 = vmatmul.mubr.f32.gmra.mxu0 %v5504
  %v5839 = vpop.f32.mrf.mxu0
  %v5840 = vadd.f32 0.0, %v5839
  %v5841 = vpop.f32.mrf.mxu0
  %5842 = vmatprep.mubr.f32.mxu0 0.0
  %5843 = vmatmul.mubr.f32.gmra.mxu0 %v5507
  %v5844 = vpop.f32.mrf.mxu0
  %v5845 = vadd.f32 0.0, %v5844
  %v5846 = vpop.f32.mrf.mxu0
  %5847 = vmatprep.mubr.f32.mxu0 0.0
  %5848 = vmatmul.mubr.f32.gmra.mxu0 %v5510
  %v5849 = vpop.f32.mrf.mxu0
  %v5850 = vadd.f32 0.0, %v5849
  %v5851 = vpop.f32.mrf.mxu0
  %5852 = vmatprep.mubr.f32.mxu0 0.0
  %5853 = vmatmul.mubr.f32.gmra.mxu0 %v5513
  %v5854 = vpop.f32.mrf.mxu0
  %v5855 = vadd.f32 0.0, %v5854
  %v5856 = vpop.f32.mrf.mxu0
  %5857 = vmatprep.mubr.f32.mxu0 0.0
  %5858 = vmatmul.mubr.f32.gmra.mxu0 %v5516
  %v5859 = vpop.f32.mrf.mxu0
  %v5860 = vadd.f32 0.0, %v5859
  %v5861 = vpop.f32.mrf.mxu0
  %5862 = vmatprep.mubr.f32.mxu0 0.0
  %5863 = vmatmul.mubr.f32.gmra.mxu0 %v5519
  %v5864 = vpop.f32.mrf.mxu0
  %v5865 = vadd.f32 0.0, %v5864
  %v5866 = vpop.f32.mrf.mxu0
  %5867 = vmatprep.mubr.f32.mxu0 0.0
  %5868 = vmatmul.mubr.f32.gmra.mxu0 %v5522
  %v5869 = vpop.f32.mrf.mxu0
  %v5870 = vadd.f32 0.0, %v5869
  %v5871 = vpop.f32.mrf.mxu0
  %5872 = vmatprep.mubr.f32.mxu0 0.0
  %5873 = vmatmul.mubr.f32.gmra.mxu0 %v5525
  %v5874 = vpop.f32.mrf.mxu0
  %v5875 = vadd.f32 0.0, %v5874
  %v5876 = vpop.f32.mrf.mxu0
  %5877 = vmatprep.mubr.f32.mxu0 0.0
  %5878 = vmatmul.mubr.f32.gmra.mxu0 %v5528
  %v5879 = vpop.f32.mrf.mxu0
  %v5880 = vadd.f32 0.0, %v5879
  %v5881 = vpop.f32.mrf.mxu0
  %5882 = vmatprep.mubr.f32.mxu0 0.0
  %5883 = vmatmul.mubr.f32.gmra.mxu0 %v5531
  %v5884 = vpop.f32.mrf.mxu0
  %v5885 = vadd.f32 0.0, %v5884
  %v5886 = vpop.f32.mrf.mxu0
  %5887 = vmatprep.mubr.f32.mxu0 0.0
  %5888 = vmatmul.mubr.f32.gmra.mxu0 %v5534
  %v5889 = vpop.f32.mrf.mxu0
  %v5890 = vadd.f32 0.0, %v5889
  %v5891 = vpop.f32.mrf.mxu0
  %5892 = vmatprep.mubr.f32.mxu0 0.0
  %5893 = vmatmul.mubr.f32.gmra.mxu0 %v5537
  %v5894 = vpop.f32.mrf.mxu0
  %v5895 = vadd.f32 0.0, %v5894
  %v5896 = vpop.f32.mrf.mxu0
  %5897 = vmatprep.mubr.f32.mxu0 0.0
  %5898 = vmatmul.mubr.f32.gmra.mxu0 %v5540
  %v5899 = vpop.f32.mrf.mxu0
  %v5900 = vadd.f32 0.0, %v5899
  %v5901 = vpop.f32.mrf.mxu0
  %5902 = vmatprep.mubr.f32.mxu0 0.0
  %5903 = vmatmul.mubr.f32.gmra.mxu0 %v5543
  %v5904 = vpop.f32.mrf.mxu0
  %v5905 = vadd.f32 0.0, %v5904
  %v5906 = vpop.f32.mrf.mxu0
  %5907 = vmatprep.mubr.f32.mxu0 0.0
  %5908 = vmatmul.mubr.f32.gmra.mxu0 %v5546
  %v5909 = vpop.f32.mrf.mxu0
  %v5910 = vadd.f32 0.0, %v5909
  %v5911 = vpop.f32.mrf.mxu0
  %5912 = vmatprep.mubr.f32.mxu0 0.0
  %5913 = vmatmul.mubr.f32.gmra.mxu0 %v5549
  %v5914 = vpop.f32.mrf.mxu0
  %v5915 = vadd.f32 0.0, %v5914
  %v5916 = vpop.f32.mrf.mxu0
  %5917 = vmatprep.mubr.f32.mxu0 0.0
  %5918 = vmatmul.mubr.f32.gmra.mxu0 %v5552
  %v5919 = vpop.f32.mrf.mxu0
  %v5920 = vadd.f32 0.0, %v5919
  %v5921 = vpop.f32.mrf.mxu0
  %5922 = vmatprep.mubr.f32.mxu0 0.0
  %5923 = vmatmul.mubr.f32.gmra.mxu0 %v5555
  %v5924 = vpop.f32.mrf.mxu0
  %v5925 = vadd.f32 0.0, %v5924
  %v5926 = vpop.f32.mrf.mxu0
  %5927 = vmatprep.mubr.f32.mxu0 0.0
  %5928 = vmatmul.mubr.f32.gmra.mxu0 %v5558
  %v5929 = vpop.f32.mrf.mxu0
  %v5930 = vadd.f32 0.0, %v5929
  %v5931 = vpop.f32.mrf.mxu0
  %5932 = vmatprep.mubr.f32.mxu0 0.0
  %5933 = vmatmul.mubr.f32.gmra.mxu0 %v5561
  %v5934 = vpop.f32.mrf.mxu0
  %v5935 = vadd.f32 0.0, %v5934
  %v5936 = vpop.f32.mrf.mxu0
  %5937 = vmatprep.mubr.f32.mxu0 0.0
  %5938 = vmatmul.mubr.f32.gmra.mxu0 %v5564
  %v5939 = vpop.f32.mrf.mxu0
  %v5940 = vadd.f32 0.0, %v5939
  %v5941 = vpop.f32.mrf.mxu0
  %5942 = vmatprep.mubr.f32.mxu0 0.0
  %5943 = vmatmul.mubr.f32.gmra.mxu0 %v5567
  %v5944 = vpop.f32.mrf.mxu0
  %v5945 = vadd.f32 0.0, %v5944
  %v5946 = vpop.f32.mrf.mxu0
  %5947 = vmatprep.mubr.f32.mxu0 0.0
  %5948 = vmatmul.mubr.f32.gmra.mxu0 %v5570
  %v5949 = vpop.f32.mrf.mxu0
  %v5950 = vadd.f32 0.0, %v5949
  %v5951 = vpop.f32.mrf.mxu0
  %5952 = vmatprep.mubr.f32.mxu0 0.0
  %5953 = vmatmul.mubr.f32.gmra.mxu0 %v5573
  %v5954 = vpop.f32.mrf.mxu0
  %v5955 = vadd.f32 0.0, %v5954
  %v5956 = vpop.f32.mrf.mxu0
  %5957 = vmatprep.mubr.f32.mxu0 0.0
  %5958 = vmatmul.mubr.f32.gmra.mxu0 %v5576
  %v5959 = vpop.f32.mrf.mxu0
  %v5960 = vadd.f32 0.0, %v5959
  %v5961 = vpop.f32.mrf.mxu0
  %5962 = vdwg.mxu0
  %6027 = vrot.lane.b32.xlu0 %v3447, 28
  %v6028 = vpop.permute.xlu0 %6027
  %6029 = vrot.lane.b32.xlu0 %v3452, 28
  %v6030 = vpop.permute.xlu0 %6029
  %6031 = vrot.lane.b32.xlu0 %v3457, 28
  %v6032 = vpop.permute.xlu0 %6031
  %6033 = vrot.lane.b32.xlu0 %v3462, 28
  %v6034 = vpop.permute.xlu0 %6033
  %6035 = vrot.lane.b32.xlu0 %v3467, 28
  %v6036 = vpop.permute.xlu0 %6035
  %6037 = vrot.lane.b32.xlu0 %v3472, 28
  %v6038 = vpop.permute.xlu0 %6037
  %6039 = vrot.lane.b32.xlu0 %v3477, 28
  %v6040 = vpop.permute.xlu0 %6039
  %6041 = vrot.lane.b32.xlu0 %v3482, 28
  %v6042 = vpop.permute.xlu0 %6041
  %6043 = vrot.lane.b32.xlu0 %v3487, 28
  %v6044 = vpop.permute.xlu0 %6043
  %6045 = vrot.lane.b32.xlu0 %v3492, 28
  %v6046 = vpop.permute.xlu0 %6045
  %6047 = vrot.lane.b32.xlu0 %v3497, 28
  %v6048 = vpop.permute.xlu0 %6047
  %6049 = vrot.lane.b32.xlu0 %v3502, 28
  %v6050 = vpop.permute.xlu0 %6049
  %6051 = vrot.lane.b32.xlu0 %v3507, 28
  %v6052 = vpop.permute.xlu0 %6051
  %6053 = vrot.lane.b32.xlu0 %v3512, 28
  %v6054 = vpop.permute.xlu0 %6053
  %6055 = vrot.lane.b32.xlu0 %v3517, 28
  %v6056 = vpop.permute.xlu0 %6055
  %6057 = vrot.lane.b32.xlu0 %v3522, 28
  %v6058 = vpop.permute.xlu0 %6057
  %6059 = vrot.lane.b32.xlu0 %v3527, 28
  %v6060 = vpop.permute.xlu0 %6059
  %6061 = vrot.lane.b32.xlu0 %v3532, 28
  %v6062 = vpop.permute.xlu0 %6061
  %6063 = vrot.lane.b32.xlu0 %v3537, 28
  %v6064 = vpop.permute.xlu0 %6063
  %6065 = vrot.lane.b32.xlu0 %v3542, 28
  %v6066 = vpop.permute.xlu0 %6065
  %6067 = vrot.lane.b32.xlu0 %v3547, 28
  %v6068 = vpop.permute.xlu0 %6067
  %6069 = vrot.lane.b32.xlu0 %v3552, 28
  %v6070 = vpop.permute.xlu0 %6069
  %6071 = vrot.lane.b32.xlu0 %v3557, 28
  %v6072 = vpop.permute.xlu0 %6071
  %6073 = vrot.lane.b32.xlu0 %v3562, 28
  %v6074 = vpop.permute.xlu0 %6073
  %6075 = vrot.lane.b32.xlu0 %v3567, 28
  %v6076 = vpop.permute.xlu0 %6075
  %6077 = vrot.lane.b32.xlu0 %v3572, 28
  %v6078 = vpop.permute.xlu0 %6077
  %6079 = vrot.lane.b32.xlu0 %v3577, 28
  %v6080 = vpop.permute.xlu0 %6079
  %6081 = vrot.lane.b32.xlu0 %v3582, 28
  %v6082 = vpop.permute.xlu0 %6081
  %6083 = vrot.lane.b32.xlu0 %v3587, 28
  %v6084 = vpop.permute.xlu0 %6083
  %6085 = vrot.lane.b32.xlu0 %v3592, 28
  %v6086 = vpop.permute.xlu0 %6085
  %6087 = vrot.lane.b32.xlu0 %v3597, 28
  %v6088 = vpop.permute.xlu0 %6087
  %6089 = vrot.lane.b32.xlu0 %v3602, 28
  %v6090 = vpop.permute.xlu0 %6089
  %6091 = vrot.lane.b32.xlu0 %v3607, 28
  %v6092 = vpop.permute.xlu0 %6091
  %6093 = vrot.lane.b32.xlu0 %v3612, 28
  %v6094 = vpop.permute.xlu0 %6093
  %6095 = vrot.lane.b32.xlu0 %v3617, 28
  %v6096 = vpop.permute.xlu0 %6095
  %6097 = vrot.lane.b32.xlu0 %v3622, 28
  %v6098 = vpop.permute.xlu0 %6097
  %6099 = vrot.lane.b32.xlu0 %v3627, 28
  %v6100 = vpop.permute.xlu0 %6099
  %6101 = vrot.lane.b32.xlu0 %v3632, 28
  %v6102 = vpop.permute.xlu0 %6101
  %6103 = vrot.lane.b32.xlu0 %v3637, 28
  %v6104 = vpop.permute.xlu0 %6103
  %6105 = vrot.lane.b32.xlu0 %v3642, 28
  %v6106 = vpop.permute.xlu0 %6105
  %6107 = vrot.lane.b32.xlu0 %v3647, 28
  %v6108 = vpop.permute.xlu0 %6107
  %6109 = vrot.lane.b32.xlu0 %v3652, 28
  %v6110 = vpop.permute.xlu0 %6109
  %6111 = vrot.lane.b32.xlu0 %v3657, 28
  %v6112 = vpop.permute.xlu0 %6111
  %6113 = vrot.lane.b32.xlu0 %v3662, 28
  %v6114 = vpop.permute.xlu0 %6113
  %6115 = vrot.lane.b32.xlu0 %v3667, 28
  %v6116 = vpop.permute.xlu0 %6115
  %6117 = vrot.lane.b32.xlu0 %v3672, 28
  %v6118 = vpop.permute.xlu0 %6117
  %6119 = vrot.lane.b32.xlu0 %v3677, 28
  %v6120 = vpop.permute.xlu0 %6119
  %6121 = vrot.lane.b32.xlu0 %v3682, 28
  %v6122 = vpop.permute.xlu0 %6121
  %6123 = vrot.lane.b32.xlu0 %v3687, 28
  %v6124 = vpop.permute.xlu0 %6123
  %6125 = vrot.lane.b32.xlu0 %v3692, 28
  %v6126 = vpop.permute.xlu0 %6125
  %6127 = vrot.lane.b32.xlu0 %v3697, 28
  %v6128 = vpop.permute.xlu0 %6127
  %6129 = vrot.lane.b32.xlu0 %v3702, 28
  %v6130 = vpop.permute.xlu0 %6129
  %6131 = vrot.lane.b32.xlu0 %v3707, 28
  %v6132 = vpop.permute.xlu0 %6131
  %6133 = vrot.lane.b32.xlu0 %v3712, 28
  %v6134 = vpop.permute.xlu0 %6133
  %6135 = vrot.lane.b32.xlu0 %v3717, 28
  %v6136 = vpop.permute.xlu0 %6135
  %6137 = vrot.lane.b32.xlu0 %v3722, 28
  %v6138 = vpop.permute.xlu0 %6137
  %6139 = vrot.lane.b32.xlu0 %v3727, 28
  %v6140 = vpop.permute.xlu0 %6139
  %6141 = vrot.lane.b32.xlu0 %v3732, 28
  %v6142 = vpop.permute.xlu0 %6141
  %6143 = vrot.lane.b32.xlu0 %v3737, 28
  %v6144 = vpop.permute.xlu0 %6143
  %6145 = vrot.lane.b32.xlu0 %v3742, 28
  %v6146 = vpop.permute.xlu0 %6145
  %6147 = vrot.lane.b32.xlu0 %v3747, 28
  %v6148 = vpop.permute.xlu0 %6147
  %6149 = vrot.lane.b32.xlu0 %v3752, 28
  %v6150 = vpop.permute.xlu0 %6149
  %6151 = vrot.lane.b32.xlu0 %v3757, 28
  %v6152 = vpop.permute.xlu0 %6151
  %6153 = vrot.lane.b32.xlu0 %v3762, 28
  %v6154 = vpop.permute.xlu0 %6153
  %v6219 = vsel %vm3113, %v5645, %v6028
  %v6220 = vsel %vm3113, %v5650, %v6030
  %v6221 = vsel %vm3113, %v5655, %v6032
  %v6222 = vsel %vm3113, %v5660, %v6034
  %v6223 = vsel %vm3113, %v5665, %v6036
  %v6224 = vsel %vm3113, %v5670, %v6038
  %v6225 = vsel %vm3113, %v5675, %v6040
  %v6226 = vsel %vm3113, %v5680, %v6042
  %v6227 = vsel %vm3113, %v5685, %v6044
  %v6228 = vsel %vm3113, %v5690, %v6046
  %v6229 = vsel %vm3113, %v5695, %v6048
  %v6230 = vsel %vm3113, %v5700, %v6050
  %v6231 = vsel %vm3113, %v5705, %v6052
  %v6232 = vsel %vm3113, %v5710, %v6054
  %v6233 = vsel %vm3113, %v5715, %v6056
  %v6234 = vsel %vm3113, %v5720, %v6058
  %v6235 = vsel %vm3113, %v5725, %v6060
  %v6236 = vsel %vm3113, %v5730, %v6062
  %v6237 = vsel %vm3113, %v5735, %v6064
  %v6238 = vsel %vm3113, %v5740, %v6066
  %v6239 = vsel %vm3113, %v5745, %v6068
  %v6240 = vsel %vm3113, %v5750, %v6070
  %v6241 = vsel %vm3113, %v5755, %v6072
  %v6242 = vsel %vm3113, %v5760, %v6074
  %v6243 = vsel %vm3113, %v5765, %v6076
  %v6244 = vsel %vm3113, %v5770, %v6078
  %v6245 = vsel %vm3113, %v5775, %v6080
  %v6246 = vsel %vm3113, %v5780, %v6082
  %v6247 = vsel %vm3113, %v5785, %v6084
  %v6248 = vsel %vm3113, %v5790, %v6086
  %v6249 = vsel %vm3113, %v5795, %v6088
  %v6250 = vsel %vm3113, %v5800, %v6090
  %v6251 = vsel %vm3113, %v5805, %v6092
  %v6252 = vsel %vm3113, %v5810, %v6094
  %v6253 = vsel %vm3113, %v5815, %v6096
  %v6254 = vsel %vm3113, %v5820, %v6098
  %v6255 = vsel %vm3113, %v5825, %v6100
  %v6256 = vsel %vm3113, %v5830, %v6102
  %v6257 = vsel %vm3113, %v5835, %v6104
  %v6258 = vsel %vm3113, %v5840, %v6106
  %v6259 = vsel %vm3113, %v5845, %v6108
  %v6260 = vsel %vm3113, %v5850, %v6110
  %v6261 = vsel %vm3113, %v5855, %v6112
  %v6262 = vsel %vm3113, %v5860, %v6114
  %v6263 = vsel %vm3113, %v5865, %v6116
  %v6264 = vsel %vm3113, %v5870, %v6118
  %v6265 = vsel %vm3113, %v5875, %v6120
  %v6266 = vsel %vm3113, %v5880, %v6122
  %v6267 = vsel %vm3113, %v5885, %v6124
  %v6268 = vsel %vm3113, %v5890, %v6126
  %v6269 = vsel %vm3113, %v5895, %v6128
  %v6270 = vsel %vm3113, %v5900, %v6130
  %v6271 = vsel %vm3113, %v5905, %v6132
  %v6272 = vsel %vm3113, %v5910, %v6134
  %v6273 = vsel %vm3113, %v5915, %v6136
  %v6274 = vsel %vm3113, %v5920, %v6138
  %v6275 = vsel %vm3113, %v5925, %v6140
  %v6276 = vsel %vm3113, %v5930, %v6142
  %v6277 = vsel %vm3113, %v5935, %v6144
  %v6278 = vsel %vm3113, %v5940, %v6146
  %v6279 = vsel %vm3113, %v5945, %v6148
  %v6280 = vsel %vm3113, %v5950, %v6150
  %v6281 = vsel %vm3113, %v5955, %v6152
  %v6282 = vsel %vm3113, %v5960, %v6154
  %vm6283 = vcmask 523264
  %v6284 = vsel %vm6283, %v6219, 0.0
  %v6285 = vsel %vm6283, %v6220, 0.0
  %v6286 = vadd.f32 %v6284, %v6285
  %v6287 = vsel %vm6283, %v6221, 0.0
  %v6288 = vadd.f32 %v6286, %v6287
  %v6289 = vsel %vm6283, %v6222, 0.0
  %v6290 = vadd.f32 %v6288, %v6289
  %v6291 = vsel %vm6283, %v6223, 0.0
  %v6292 = vadd.f32 %v6290, %v6291
  %v6293 = vsel %vm6283, %v6224, 0.0
  %v6294 = vadd.f32 %v6292, %v6293
  %v6295 = vsel %vm6283, %v6225, 0.0
  %v6296 = vadd.f32 %v6294, %v6295
  %v6297 = vsel %vm6283, %v6226, 0.0
  %v6298 = vadd.f32 %v6296, %v6297
  %v6299 = vsel %vm6283, %v6227, 0.0
  %v6300 = vadd.f32 %v6298, %v6299
  %v6301 = vsel %vm6283, %v6228, 0.0
  %v6302 = vadd.f32 %v6300, %v6301
  %v6303 = vsel %vm6283, %v6229, 0.0
  %v6304 = vadd.f32 %v6302, %v6303
  %v6305 = vsel %vm6283, %v6230, 0.0
  %v6306 = vadd.f32 %v6304, %v6305
  %v6307 = vsel %vm6283, %v6231, 0.0
  %v6308 = vadd.f32 %v6306, %v6307
  %v6309 = vsel %vm6283, %v6232, 0.0
  %v6310 = vadd.f32 %v6308, %v6309
  %v6311 = vsel %vm6283, %v6233, 0.0
  %v6312 = vadd.f32 %v6310, %v6311
  %v6313 = vsel %vm6283, %v6234, 0.0
  %v6314 = vadd.f32 %v6312, %v6313
  %v6315 = vsel %vm6283, %v6235, 0.0
  %v6316 = vadd.f32 %v6314, %v6315
  %v6317 = vsel %vm6283, %v6236, 0.0
  %v6318 = vadd.f32 %v6316, %v6317
  %v6319 = vsel %vm6283, %v6237, 0.0
  %v6320 = vadd.f32 %v6318, %v6319
  %v6321 = vsel %vm6283, %v6238, 0.0
  %v6322 = vadd.f32 %v6320, %v6321
  %v6323 = vsel %vm6283, %v6239, 0.0
  %v6324 = vadd.f32 %v6322, %v6323
  %v6325 = vsel %vm6283, %v6240, 0.0
  %v6326 = vadd.f32 %v6324, %v6325
  %v6327 = vsel %vm6283, %v6241, 0.0
  %v6328 = vadd.f32 %v6326, %v6327
  %v6329 = vsel %vm6283, %v6242, 0.0
  %v6330 = vadd.f32 %v6328, %v6329
  %v6331 = vsel %vm6283, %v6243, 0.0
  %v6332 = vadd.f32 %v6330, %v6331
  %v6333 = vsel %vm6283, %v6244, 0.0
  %v6334 = vadd.f32 %v6332, %v6333
  %v6335 = vsel %vm6283, %v6245, 0.0
  %v6336 = vadd.f32 %v6334, %v6335
  %v6337 = vsel %vm6283, %v6246, 0.0
  %v6338 = vadd.f32 %v6336, %v6337
  %v6339 = vsel %vm6283, %v6247, 0.0
  %v6340 = vadd.f32 %v6338, %v6339
  %v6341 = vsel %vm6283, %v6248, 0.0
  %v6342 = vadd.f32 %v6340, %v6341
  %v6343 = vsel %vm6283, %v6249, 0.0
  %v6344 = vadd.f32 %v6342, %v6343
  %v6345 = vsel %vm6283, %v6250, 0.0
  %v6346 = vadd.f32 %v6344, %v6345
  %v6347 = vsel %vm6283, %v6251, 0.0
  %v6348 = vadd.f32 %v6346, %v6347
  %v6349 = vsel %vm6283, %v6252, 0.0
  %v6350 = vadd.f32 %v6348, %v6349
  %v6351 = vsel %vm6283, %v6253, 0.0
  %v6352 = vadd.f32 %v6350, %v6351
  %v6353 = vsel %vm6283, %v6254, 0.0
  %v6354 = vadd.f32 %v6352, %v6353
  %v6355 = vsel %vm6283, %v6255, 0.0
  %v6356 = vadd.f32 %v6354, %v6355
  %v6357 = vsel %vm6283, %v6256, 0.0
  %v6358 = vadd.f32 %v6356, %v6357
  %v6359 = vsel %vm6283, %v6257, 0.0
  %v6360 = vadd.f32 %v6358, %v6359
  %v6361 = vsel %vm6283, %v6258, 0.0
  %v6362 = vadd.f32 %v6360, %v6361
  %v6363 = vsel %vm6283, %v6259, 0.0
  %v6364 = vadd.f32 %v6362, %v6363
  %v6365 = vsel %vm6283, %v6260, 0.0
  %v6366 = vadd.f32 %v6364, %v6365
  %v6367 = vsel %vm6283, %v6261, 0.0
  %v6368 = vadd.f32 %v6366, %v6367
  %v6369 = vsel %vm6283, %v6262, 0.0
  %v6370 = vadd.f32 %v6368, %v6369
  %v6371 = vsel %vm6283, %v6263, 0.0
  %v6372 = vadd.f32 %v6370, %v6371
  %v6373 = vsel %vm6283, %v6264, 0.0
  %v6374 = vadd.f32 %v6372, %v6373
  %v6375 = vsel %vm6283, %v6265, 0.0
  %v6376 = vadd.f32 %v6374, %v6375
  %v6377 = vsel %vm6283, %v6266, 0.0
  %v6378 = vadd.f32 %v6376, %v6377
  %v6379 = vsel %vm6283, %v6267, 0.0
  %v6380 = vadd.f32 %v6378, %v6379
  %v6381 = vsel %vm6283, %v6268, 0.0
  %v6382 = vadd.f32 %v6380, %v6381
  %v6383 = vsel %vm6283, %v6269, 0.0
  %v6384 = vadd.f32 %v6382, %v6383
  %v6385 = vsel %vm6283, %v6270, 0.0
  %v6386 = vadd.f32 %v6384, %v6385
  %v6387 = vsel %vm6283, %v6271, 0.0
  %v6388 = vadd.f32 %v6386, %v6387
  %v6389 = vsel %vm6283, %v6272, 0.0
  %v6390 = vadd.f32 %v6388, %v6389
  %v6391 = vsel %vm6283, %v6273, 0.0
  %v6392 = vadd.f32 %v6390, %v6391
  %v6393 = vsel %vm6283, %v6274, 0.0
  %v6394 = vadd.f32 %v6392, %v6393
  %v6395 = vsel %vm6283, %v6275, 0.0
  %v6396 = vadd.f32 %v6394, %v6395
  %v6397 = vsel %vm6283, %v6276, 0.0
  %v6398 = vadd.f32 %v6396, %v6397
  %v6399 = vsel %vm6283, %v6277, 0.0
  %v6400 = vadd.f32 %v6398, %v6399
  %v6401 = vsel %vm6283, %v6278, 0.0
  %v6402 = vadd.f32 %v6400, %v6401
  %v6403 = vsel %vm6283, %v6279, 0.0
  %v6404 = vadd.f32 %v6402, %v6403
  %v6405 = vsel %vm6283, %v6280, 0.0
  %v6406 = vadd.f32 %v6404, %v6405
  %v6407 = vsel %vm6283, %v6281, 0.0
  %v6408 = vadd.f32 %v6406, %v6407
  %v6409 = vsel %vm6283, %v6282, 0.0
  %v6410 = vadd.f32 %v6408, %v6409
  %v6411 = vrot.slane %v6410, 4
  %v6412 = vadd.f32 %v6410, %v6411
  %v6413 = vrot.slane %v6412, 2
  %v6414 = vadd.f32 %v6412, %v6413
  %v6415 = vrot.slane %v6414, 1
  %v6416 = vadd.f32 %v6414, %v6415
  %v6417 = vmul.f32 %v6219, %v6219
  %v6418 = vmul.f32 %v6220, %v6220
  %v6419 = vmul.f32 %v6221, %v6221
  %v6420 = vmul.f32 %v6222, %v6222
  %v6421 = vmul.f32 %v6223, %v6223
  %v6422 = vmul.f32 %v6224, %v6224
  %v6423 = vmul.f32 %v6225, %v6225
  %v6424 = vmul.f32 %v6226, %v6226
  %v6425 = vmul.f32 %v6227, %v6227
  %v6426 = vmul.f32 %v6228, %v6228
  %v6427 = vmul.f32 %v6229, %v6229
  %v6428 = vmul.f32 %v6230, %v6230
  %v6429 = vmul.f32 %v6231, %v6231
  %v6430 = vmul.f32 %v6232, %v6232
  %v6431 = vmul.f32 %v6233, %v6233
  %v6432 = vmul.f32 %v6234, %v6234
  %v6433 = vmul.f32 %v6235, %v6235
  %v6434 = vmul.f32 %v6236, %v6236
  %v6435 = vmul.f32 %v6237, %v6237
  %v6436 = vmul.f32 %v6238, %v6238
  %v6437 = vmul.f32 %v6239, %v6239
  %v6438 = vmul.f32 %v6240, %v6240
  %v6439 = vmul.f32 %v6241, %v6241
  %v6440 = vmul.f32 %v6242, %v6242
  %v6441 = vmul.f32 %v6243, %v6243
  %v6442 = vmul.f32 %v6244, %v6244
  %v6443 = vmul.f32 %v6245, %v6245
  %v6444 = vmul.f32 %v6246, %v6246
  %v6445 = vmul.f32 %v6247, %v6247
  %v6446 = vmul.f32 %v6248, %v6248
  %v6447 = vmul.f32 %v6249, %v6249
  %v6448 = vmul.f32 %v6250, %v6250
  %v6449 = vmul.f32 %v6251, %v6251
  %v6450 = vmul.f32 %v6252, %v6252
  %v6451 = vmul.f32 %v6253, %v6253
  %v6452 = vmul.f32 %v6254, %v6254
  %v6453 = vmul.f32 %v6255, %v6255
  %v6454 = vmul.f32 %v6256, %v6256
  %v6455 = vmul.f32 %v6257, %v6257
  %v6456 = vmul.f32 %v6258, %v6258
  %v6457 = vmul.f32 %v6259, %v6259
  %v6458 = vmul.f32 %v6260, %v6260
  %v6459 = vmul.f32 %v6261, %v6261
  %v6460 = vmul.f32 %v6262, %v6262
  %v6461 = vmul.f32 %v6263, %v6263
  %v6462 = vmul.f32 %v6264, %v6264
  %v6463 = vmul.f32 %v6265, %v6265
  %v6464 = vmul.f32 %v6266, %v6266
  %v6465 = vmul.f32 %v6267, %v6267
  %v6466 = vmul.f32 %v6268, %v6268
  %v6467 = vmul.f32 %v6269, %v6269
  %v6468 = vmul.f32 %v6270, %v6270
  %v6469 = vmul.f32 %v6271, %v6271
  %v6470 = vmul.f32 %v6272, %v6272
  %v6471 = vmul.f32 %v6273, %v6273
  %v6472 = vmul.f32 %v6274, %v6274
  %v6473 = vmul.f32 %v6275, %v6275
  %v6474 = vmul.f32 %v6276, %v6276
  %v6475 = vmul.f32 %v6277, %v6277
  %v6476 = vmul.f32 %v6278, %v6278
  %v6477 = vmul.f32 %v6279, %v6279
  %v6478 = vmul.f32 %v6280, %v6280
  %v6479 = vmul.f32 %v6281, %v6281
  %v6480 = vmul.f32 %v6282, %v6282
  %v6481 = vsel %vm6283, %v6417, 0.0
  %v6482 = vsel %vm6283, %v6418, 0.0
  %v6483 = vadd.f32 %v6481, %v6482
  %v6484 = vsel %vm6283, %v6419, 0.0
  %v6485 = vadd.f32 %v6483, %v6484
  %v6486 = vsel %vm6283, %v6420, 0.0
  %v6487 = vadd.f32 %v6485, %v6486
  %v6488 = vsel %vm6283, %v6421, 0.0
  %v6489 = vadd.f32 %v6487, %v6488
  %v6490 = vsel %vm6283, %v6422, 0.0
  %v6491 = vadd.f32 %v6489, %v6490
  %v6492 = vsel %vm6283, %v6423, 0.0
  %v6493 = vadd.f32 %v6491, %v6492
  %v6494 = vsel %vm6283, %v6424, 0.0
  %v6495 = vadd.f32 %v6493, %v6494
  %v6496 = vsel %vm6283, %v6425, 0.0
  %v6497 = vadd.f32 %v6495, %v6496
  %v6498 = vsel %vm6283, %v6426, 0.0
  %v6499 = vadd.f32 %v6497, %v6498
  %v6500 = vsel %vm6283, %v6427, 0.0
  %v6501 = vadd.f32 %v6499, %v6500
  %v6502 = vsel %vm6283, %v6428, 0.0
  %v6503 = vadd.f32 %v6501, %v6502
  %v6504 = vsel %vm6283, %v6429, 0.0
  %v6505 = vadd.f32 %v6503, %v6504
  %v6506 = vsel %vm6283, %v6430, 0.0
  %v6507 = vadd.f32 %v6505, %v6506
  %v6508 = vsel %vm6283, %v6431, 0.0
  %v6509 = vadd.f32 %v6507, %v6508
  %v6510 = vsel %vm6283, %v6432, 0.0
  %v6511 = vadd.f32 %v6509, %v6510
  %v6512 = vsel %vm6283, %v6433, 0.0
  %v6513 = vadd.f32 %v6511, %v6512
  %v6514 = vsel %vm6283, %v6434, 0.0
  %v6515 = vadd.f32 %v6513, %v6514
  %v6516 = vsel %vm6283, %v6435, 0.0
  %v6517 = vadd.f32 %v6515, %v6516
  %v6518 = vsel %vm6283, %v6436, 0.0
  %v6519 = vadd.f32 %v6517, %v6518
  %v6520 = vsel %vm6283, %v6437, 0.0
  %v6521 = vadd.f32 %v6519, %v6520
  %v6522 = vsel %vm6283, %v6438, 0.0
  %v6523 = vadd.f32 %v6521, %v6522
  %v6524 = vsel %vm6283, %v6439, 0.0
  %v6525 = vadd.f32 %v6523, %v6524
  %v6526 = vsel %vm6283, %v6440, 0.0
  %v6527 = vadd.f32 %v6525, %v6526
  %v6528 = vsel %vm6283, %v6441, 0.0
  %v6529 = vadd.f32 %v6527, %v6528
  %v6530 = vsel %vm6283, %v6442, 0.0
  %v6531 = vadd.f32 %v6529, %v6530
  %v6532 = vsel %vm6283, %v6443, 0.0
  %v6533 = vadd.f32 %v6531, %v6532
  %v6534 = vsel %vm6283, %v6444, 0.0
  %v6535 = vadd.f32 %v6533, %v6534
  %v6536 = vsel %vm6283, %v6445, 0.0
  %v6537 = vadd.f32 %v6535, %v6536
  %v6538 = vsel %vm6283, %v6446, 0.0
  %v6539 = vadd.f32 %v6537, %v6538
  %v6540 = vsel %vm6283, %v6447, 0.0
  %v6541 = vadd.f32 %v6539, %v6540
  %v6542 = vsel %vm6283, %v6448, 0.0
  %v6543 = vadd.f32 %v6541, %v6542
  %v6544 = vsel %vm6283, %v6449, 0.0
  %v6545 = vadd.f32 %v6543, %v6544
  %v6546 = vsel %vm6283, %v6450, 0.0
  %v6547 = vadd.f32 %v6545, %v6546
  %v6548 = vsel %vm6283, %v6451, 0.0
  %v6549 = vadd.f32 %v6547, %v6548
  %v6550 = vsel %vm6283, %v6452, 0.0
  %v6551 = vadd.f32 %v6549, %v6550
  %v6552 = vsel %vm6283, %v6453, 0.0
  %v6553 = vadd.f32 %v6551, %v6552
  %v6554 = vsel %vm6283, %v6454, 0.0
  %v6555 = vadd.f32 %v6553, %v6554
  %v6556 = vsel %vm6283, %v6455, 0.0
  %v6557 = vadd.f32 %v6555, %v6556
  %v6558 = vsel %vm6283, %v6456, 0.0
  %v6559 = vadd.f32 %v6557, %v6558
  %v6560 = vsel %vm6283, %v6457, 0.0
  %v6561 = vadd.f32 %v6559, %v6560
  %v6562 = vsel %vm6283, %v6458, 0.0
  %v6563 = vadd.f32 %v6561, %v6562
  %v6564 = vsel %vm6283, %v6459, 0.0
  %v6565 = vadd.f32 %v6563, %v6564
  %v6566 = vsel %vm6283, %v6460, 0.0
  %v6567 = vadd.f32 %v6565, %v6566
  %v6568 = vsel %vm6283, %v6461, 0.0
  %v6569 = vadd.f32 %v6567, %v6568
  %v6570 = vsel %vm6283, %v6462, 0.0
  %v6571 = vadd.f32 %v6569, %v6570
  %v6572 = vsel %vm6283, %v6463, 0.0
  %v6573 = vadd.f32 %v6571, %v6572
  %v6574 = vsel %vm6283, %v6464, 0.0
  %v6575 = vadd.f32 %v6573, %v6574
  %v6576 = vsel %vm6283, %v6465, 0.0
  %v6577 = vadd.f32 %v6575, %v6576
  %v6578 = vsel %vm6283, %v6466, 0.0
  %v6579 = vadd.f32 %v6577, %v6578
  %v6580 = vsel %vm6283, %v6467, 0.0
  %v6581 = vadd.f32 %v6579, %v6580
  %v6582 = vsel %vm6283, %v6468, 0.0
  %v6583 = vadd.f32 %v6581, %v6582
  %v6584 = vsel %vm6283, %v6469, 0.0
  %v6585 = vadd.f32 %v6583, %v6584
  %v6586 = vsel %vm6283, %v6470, 0.0
  %v6587 = vadd.f32 %v6585, %v6586
  %v6588 = vsel %vm6283, %v6471, 0.0
  %v6589 = vadd.f32 %v6587, %v6588
  %v6590 = vsel %vm6283, %v6472, 0.0
  %v6591 = vadd.f32 %v6589, %v6590
  %v6592 = vsel %vm6283, %v6473, 0.0
  %v6593 = vadd.f32 %v6591, %v6592
  %v6594 = vsel %vm6283, %v6474, 0.0
  %v6595 = vadd.f32 %v6593, %v6594
  %v6596 = vsel %vm6283, %v6475, 0.0
  %v6597 = vadd.f32 %v6595, %v6596
  %v6598 = vsel %vm6283, %v6476, 0.0
  %v6599 = vadd.f32 %v6597, %v6598
  %v6600 = vsel %vm6283, %v6477, 0.0
  %v6601 = vadd.f32 %v6599, %v6600
  %v6602 = vsel %vm6283, %v6478, 0.0
  %v6603 = vadd.f32 %v6601, %v6602
  %v6604 = vsel %vm6283, %v6479, 0.0
  %v6605 = vadd.f32 %v6603, %v6604
  %v6606 = vsel %vm6283, %v6480, 0.0
  %v6607 = vadd.f32 %v6605, %v6606
  %v6608 = vrot.slane %v6607, 4
  %v6609 = vadd.f32 %v6607, %v6608
  %v6610 = vrot.slane %v6609, 2
  %v6611 = vadd.f32 %v6609, %v6610
  %v6612 = vrot.slane %v6611, 1
  %v6613 = vadd.f32 %v6611, %v6612
  %6615 = vrot.lane.b32.xlu0 %v6416, 120
  %v6616 = vpop.permute.xlu0 %6615
  %v6618 = vadd.f32 %v6416, %v6616
  %6619 = vrot.lane.b32.xlu0 %v6416, 112
  %v6620 = vpop.permute.xlu0 %6619
  %v6622 = vadd.f32 %v6618, %v6620
  %6623 = vrot.lane.b32.xlu0 %v6416, 104
  %v6624 = vpop.permute.xlu0 %6623
  %v6626 = vadd.f32 %v6622, %v6624
  %v6627 = vmul.f32 %v6626, 0.00048828125
  %6629 = vrot.lane.b32.xlu0 %v6613, 120
  %v6630 = vpop.permute.xlu0 %6629
  %v6632 = vadd.f32 %v6613, %v6630
  %6633 = vrot.lane.b32.xlu0 %v6613, 112
  %v6634 = vpop.permute.xlu0 %6633
  %v6636 = vadd.f32 %v6632, %v6634
  %6637 = vrot.lane.b32.xlu0 %v6613, 104
  %v6638 = vpop.permute.xlu0 %6637
  %v6640 = vadd.f32 %v6636, %v6638
  %v6641 = vmul.f32 %v6640, 0.00048828125
  %v6642 = vmul.f32 %v6627, %v6627
  %v6643 = vsub.f32 %v6641, %v6642
  %v6644 = vld [vmem:[%s5] sm:$0x1]
  %v6645 = vadd.f32 %v6643, 1e-05
  %v6646 = vrsqrt.pop %v6645
  %v6647 = vmul.f32 %v6644, %v6646
  %v6648 = vld [vmem:[%s7] sm:$0x1]
  %v6651 = vunpack.c.l.s4 1966171168
  %v6652 = vunpack.c.0.s8 %v6651
  %v6653 = vlaneseq
  %v6654 = vshrl.u32 %v6653, 7
  %v6655 = vsub.s32 %v6652, %v6654
  %v6656 = vrot.slane %v6646, %v6655
  %v6658 = vunpack.c.l.s4 1966171168
  %v6659 = vunpack.c.0.s8 %v6658
  %v6660 = vlaneseq
  %v6661 = vshrl.u32 %v6660, 7
  %v6662 = vsub.s32 %v6659, %v6661
  %v6663 = vrot.slane %v6656, %v6662
  %6664 = vrot.lane.b32.xlu0 %v6663, 96
  %v6665 = vpop.permute.xlu0 %6664
  %v6667 = vmul.f32 %v6648, %v6665
  %v6668 = vld [vmem:[%s6] sm:$0x1]
  %v6669 = vmul.f32 %v6627, %v6647
  %v6670 = vsub.f32 %v6668, %v6669
  %v6671 = vld [vmem:[%s8] sm:$0x1]
  %v6673 = vlaneseq
  %v6674 = vshrl.u32 %v6673, 7
  %v6675 = vsub.s32 0, %v6674
  %v6676 = vrot.slane %v6667, %v6675
  %6677 = vrot.lane.b32.xlu0 %v6676, 32
  %v6678 = vpop.permute.xlu0 %6677
  %v6680 = vmul.f32 %v6627, %v6678
  %v6683 = vunpack.c.l.s4 1966171168
  %v6684 = vunpack.c.0.s8 %v6683
  %v6685 = vlaneseq
  %v6686 = vshrl.u32 %v6685, 7
  %v6687 = vsub.s32 %v6684, %v6686
  %v6688 = vrot.slane %v6680, %v6687
  %v6690 = vunpack.c.l.s4 1966171168
  %v6691 = vunpack.c.0.s8 %v6690
  %v6692 = vlaneseq
  %v6693 = vshrl.u32 %v6692, 7
  %v6694 = vsub.s32 %v6691, %v6693
  %v6695 = vrot.slane %v6688, %v6694
  %6696 = vrot.lane.b32.xlu0 %v6695, 96
  %v6697 = vpop.permute.xlu0 %6696
  %v6699 = vsub.f32 %v6671, %v6697
  %v6701 = vlaneseq
  %v6702 = vshrl.u32 %v6701, 7
  %v6703 = vsub.s32 0, %v6702
  %v6704 = vrot.slane %v6647, %v6703
  %6705 = vrot.lane.b32.xlu0 %v6704, 8
  %v6706 = vpop.permute.xlu0 %6705
  %6708 = vrot.lane.b32.xlu0 %v6704, 16
  %v6709 = vpop.permute.xlu0 %6708
  %6711 = vrot.lane.b32.xlu0 %v6704, 24
  %v6712 = vpop.permute.xlu0 %6711
  %6714 = vrot.lane.b32.xlu0 %v6676, 40
  %v6715 = vpop.permute.xlu0 %6714
  %6717 = vrot.lane.b32.xlu0 %v6676, 48
  %v6718 = vpop.permute.xlu0 %6717
  %6720 = vrot.lane.b32.xlu0 %v6676, 56
  %v6721 = vpop.permute.xlu0 %6720
  %v6723 = vsel %vm2723, %v6647, %v6706
  %v6724 = vsel %vm2853, %v6723, %v6709
  %v6725 = vsel %vm2983, %v6724, %v6712
  %v6726 = vsel %vm3113, %v6725, %v6678
  %vm6727 = vcmask 326656
  %v6728 = vsel %vm6727, %v6726, %v6715
  %vm6729 = vcmask 392192
  %v6730 = vsel %vm6729, %v6728, %v6718
  %vm6731 = vcmask 457728
  %v6732 = vsel %vm6731, %v6730, %v6721
  %v6734 = vlaneseq
  %v6735 = vshrl.u32 %v6734, 7
  %v6736 = vsub.s32 0, %v6735
  %v6737 = vrot.slane %v6670, %v6736
  %6738 = vrot.lane.b32.xlu0 %v6737, 8
  %v6739 = vpop.permute.xlu0 %6738
  %6741 = vrot.lane.b32.xlu0 %v6737, 16
  %v6742 = vpop.permute.xlu0 %6741
  %6744 = vrot.lane.b32.xlu0 %v6737, 24
  %v6745 = vpop.permute.xlu0 %6744
  %v6748 = vlaneseq
  %v6749 = vshrl.u32 %v6748, 7
  %v6750 = vsub.s32 0, %v6749
  %v6751 = vrot.slane %v6699, %v6750
  %6752 = vrot.lane.b32.xlu0 %v6751, 32
  %v6753 = vpop.permute.xlu0 %6752
  %6755 = vrot.lane.b32.xlu0 %v6751, 40
  %v6756 = vpop.permute.xlu0 %6755
  %6758 = vrot.lane.b32.xlu0 %v6751, 48
  %v6759 = vpop.permute.xlu0 %6758
  %6761 = vrot.lane.b32.xlu0 %v6751, 56
  %v6762 = vpop.permute.xlu0 %6761
  %v6764 = vsel %vm2723, %v6670, %v6739
  %v6765 = vsel %vm2853, %v6764, %v6742
  %v6766 = vsel %vm2983, %v6765, %v6745
  %v6767 = vsel %vm3113, %v6766, %v6753
  %v6768 = vsel %vm6727, %v6767, %v6756
  %v6769 = vsel %vm6729, %v6768, %v6759
  %v6770 = vsel %vm6731, %v6769, %v6762
  %v6771 = vlaneseq
  %v6772 = vshrl.u32 %v6771, 7
  %v6773 = vsub.s32 0, %v6772
  %v6774 = vrot.slane %v6732, %v6773
  %v6775 = vmul.f32 %v6219, %v6774
  %v6776 = vmul.f32 %v6220, %v6774
  %v6777 = vmul.f32 %v6221, %v6774
  %v6778 = vmul.f32 %v6222, %v6774
  %v6779 = vmul.f32 %v6223, %v6774
  %v6780 = vmul.f32 %v6224, %v6774
  %v6781 = vmul.f32 %v6225, %v6774
  %v6782 = vmul.f32 %v6226, %v6774
  %v6783 = vmul.f32 %v6227, %v6774
  %v6784 = vmul.f32 %v6228, %v6774
  %v6785 = vmul.f32 %v6229, %v6774
  %v6786 = vmul.f32 %v6230, %v6774
  %v6787 = vmul.f32 %v6231, %v6774
  %v6788 = vmul.f32 %v6232, %v6774
  %v6789 = vmul.f32 %v6233, %v6774
  %v6790 = vmul.f32 %v6234, %v6774
  %v6791 = vmul.f32 %v6235, %v6774
  %v6792 = vmul.f32 %v6236, %v6774
  %v6793 = vmul.f32 %v6237, %v6774
  %v6794 = vmul.f32 %v6238, %v6774
  %v6795 = vmul.f32 %v6239, %v6774
  %v6796 = vmul.f32 %v6240, %v6774
  %v6797 = vmul.f32 %v6241, %v6774
  %v6798 = vmul.f32 %v6242, %v6774
  %v6799 = vmul.f32 %v6243, %v6774
  %v6800 = vmul.f32 %v6244, %v6774
  %v6801 = vmul.f32 %v6245, %v6774
  %v6802 = vmul.f32 %v6246, %v6774
  %v6803 = vmul.f32 %v6247, %v6774
  %v6804 = vmul.f32 %v6248, %v6774
  %v6805 = vmul.f32 %v6249, %v6774
  %v6806 = vmul.f32 %v6250, %v6774
  %v6807 = vmul.f32 %v6251, %v6774
  %v6808 = vmul.f32 %v6252, %v6774
  %v6809 = vmul.f32 %v6253, %v6774
  %v6810 = vmul.f32 %v6254, %v6774
  %v6811 = vmul.f32 %v6255, %v6774
  %v6812 = vmul.f32 %v6256, %v6774
  %v6813 = vmul.f32 %v6257, %v6774
  %v6814 = vmul.f32 %v6258, %v6774
  %v6815 = vmul.f32 %v6259, %v6774
  %v6816 = vmul.f32 %v6260, %v6774
  %v6817 = vmul.f32 %v6261, %v6774
  %v6818 = vmul.f32 %v6262, %v6774
  %v6819 = vmul.f32 %v6263, %v6774
  %v6820 = vmul.f32 %v6264, %v6774
  %v6821 = vmul.f32 %v6265, %v6774
  %v6822 = vmul.f32 %v6266, %v6774
  %v6823 = vmul.f32 %v6267, %v6774
  %v6824 = vmul.f32 %v6268, %v6774
  %v6825 = vmul.f32 %v6269, %v6774
  %v6826 = vmul.f32 %v6270, %v6774
  %v6827 = vmul.f32 %v6271, %v6774
  %v6828 = vmul.f32 %v6272, %v6774
  %v6829 = vmul.f32 %v6273, %v6774
  %v6830 = vmul.f32 %v6274, %v6774
  %v6831 = vmul.f32 %v6275, %v6774
  %v6832 = vmul.f32 %v6276, %v6774
  %v6833 = vmul.f32 %v6277, %v6774
  %v6834 = vmul.f32 %v6278, %v6774
  %v6835 = vmul.f32 %v6279, %v6774
  %v6836 = vmul.f32 %v6280, %v6774
  %v6837 = vmul.f32 %v6281, %v6774
  %v6838 = vmul.f32 %v6282, %v6774
  %v6839 = vlaneseq
  %v6840 = vshrl.u32 %v6839, 7
  %v6841 = vsub.s32 0, %v6840
  %v6842 = vrot.slane %v6770, %v6841
  %v6843 = vadd.f32 %v6775, %v6842
  %v6844 = vadd.f32 %v6776, %v6842
  %v6845 = vadd.f32 %v6777, %v6842
  %v6846 = vadd.f32 %v6778, %v6842
  %v6847 = vadd.f32 %v6779, %v6842
  %v6848 = vadd.f32 %v6780, %v6842
  %v6849 = vadd.f32 %v6781, %v6842
  %v6850 = vadd.f32 %v6782, %v6842
  %v6851 = vadd.f32 %v6783, %v6842
  %v6852 = vadd.f32 %v6784, %v6842
  %v6853 = vadd.f32 %v6785, %v6842
  %v6854 = vadd.f32 %v6786, %v6842
  %v6855 = vadd.f32 %v6787, %v6842
  %v6856 = vadd.f32 %v6788, %v6842
  %v6857 = vadd.f32 %v6789, %v6842
  %v6858 = vadd.f32 %v6790, %v6842
  %v6859 = vadd.f32 %v6791, %v6842
  %v6860 = vadd.f32 %v6792, %v6842
  %v6861 = vadd.f32 %v6793, %v6842
  %v6862 = vadd.f32 %v6794, %v6842
  %v6863 = vadd.f32 %v6795, %v6842
  %v6864 = vadd.f32 %v6796, %v6842
  %v6865 = vadd.f32 %v6797, %v6842
  %v6866 = vadd.f32 %v6798, %v6842
  %v6867 = vadd.f32 %v6799, %v6842
  %v6868 = vadd.f32 %v6800, %v6842
  %v6869 = vadd.f32 %v6801, %v6842
  %v6870 = vadd.f32 %v6802, %v6842
  %v6871 = vadd.f32 %v6803, %v6842
  %v6872 = vadd.f32 %v6804, %v6842
  %v6873 = vadd.f32 %v6805, %v6842
  %v6874 = vadd.f32 %v6806, %v6842
  %v6875 = vadd.f32 %v6807, %v6842
  %v6876 = vadd.f32 %v6808, %v6842
  %v6877 = vadd.f32 %v6809, %v6842
  %v6878 = vadd.f32 %v6810, %v6842
  %v6879 = vadd.f32 %v6811, %v6842
  %v6880 = vadd.f32 %v6812, %v6842
  %v6881 = vadd.f32 %v6813, %v6842
  %v6882 = vadd.f32 %v6814, %v6842
  %v6883 = vadd.f32 %v6815, %v6842
  %v6884 = vadd.f32 %v6816, %v6842
  %v6885 = vadd.f32 %v6817, %v6842
  %v6886 = vadd.f32 %v6818, %v6842
  %v6887 = vadd.f32 %v6819, %v6842
  %v6888 = vadd.f32 %v6820, %v6842
  %v6889 = vadd.f32 %v6821, %v6842
  %v6890 = vadd.f32 %v6822, %v6842
  %v6891 = vadd.f32 %v6823, %v6842
  %v6892 = vadd.f32 %v6824, %v6842
  %v6893 = vadd.f32 %v6825, %v6842
  %v6894 = vadd.f32 %v6826, %v6842
  %v6895 = vadd.f32 %v6827, %v6842
  %v6896 = vadd.f32 %v6828, %v6842
  %v6897 = vadd.f32 %v6829, %v6842
  %v6898 = vadd.f32 %v6830, %v6842
  %v6899 = vadd.f32 %v6831, %v6842
  %v6900 = vadd.f32 %v6832, %v6842
  %v6901 = vadd.f32 %v6833, %v6842
  %v6902 = vadd.f32 %v6834, %v6842
  %v6903 = vadd.f32 %v6835, %v6842
  %v6904 = vadd.f32 %v6836, %v6842
  %v6905 = vadd.f32 %v6837, %v6842
  %v6906 = vadd.f32 %v6838, %v6842
  %vm6907 = vcmp.ge.f32.partialorder %v6843, 0.0
  %vm6908 = vcmp.ge.f32.partialorder %v6844, 0.0
  %vm6909 = vcmp.ge.f32.partialorder %v6845, 0.0
  %vm6910 = vcmp.ge.f32.partialorder %v6846, 0.0
  %vm6911 = vcmp.ge.f32.partialorder %v6847, 0.0
  %vm6912 = vcmp.ge.f32.partialorder %v6848, 0.0
  %vm6913 = vcmp.ge.f32.partialorder %v6849, 0.0
  %vm6914 = vcmp.ge.f32.partialorder %v6850, 0.0
  %vm6915 = vcmp.ge.f32.partialorder %v6851, 0.0
  %vm6916 = vcmp.ge.f32.partialorder %v6852, 0.0
  %vm6917 = vcmp.ge.f32.partialorder %v6853, 0.0
  %vm6918 = vcmp.ge.f32.partialorder %v6854, 0.0
  %vm6919 = vcmp.ge.f32.partialorder %v6855, 0.0
  %vm6920 = vcmp.ge.f32.partialorder %v6856, 0.0
  %vm6921 = vcmp.ge.f32.partialorder %v6857, 0.0
  %vm6922 = vcmp.ge.f32.partialorder %v6858, 0.0
  %vm6923 = vcmp.ge.f32.partialorder %v6859, 0.0
  %vm6924 = vcmp.ge.f32.partialorder %v6860, 0.0
  %vm6925 = vcmp.ge.f32.partialorder %v6861, 0.0
  %vm6926 = vcmp.ge.f32.partialorder %v6862, 0.0
  %vm6927 = vcmp.ge.f32.partialorder %v6863, 0.0
  %vm6928 = vcmp.ge.f32.partialorder %v6864, 0.0
  %vm6929 = vcmp.ge.f32.partialorder %v6865, 0.0
  %vm6930 = vcmp.ge.f32.partialorder %v6866, 0.0
  %vm6931 = vcmp.ge.f32.partialorder %v6867, 0.0
  %vm6932 = vcmp.ge.f32.partialorder %v6868, 0.0
  %vm6933 = vcmp.ge.f32.partialorder %v6869, 0.0
  %vm6934 = vcmp.ge.f32.partialorder %v6870, 0.0
  %vm6935 = vcmp.ge.f32.partialorder %v6871, 0.0
  %vm6936 = vcmp.ge.f32.partialorder %v6872, 0.0
  %vm6937 = vcmp.ge.f32.partialorder %v6873, 0.0
  %vm6938 = vcmp.ge.f32.partialorder %v6874, 0.0
  %vm6939 = vcmp.ge.f32.partialorder %v6875, 0.0
  %vm6940 = vcmp.ge.f32.partialorder %v6876, 0.0
  %vm6941 = vcmp.ge.f32.partialorder %v6877, 0.0
  %vm6942 = vcmp.ge.f32.partialorder %v6878, 0.0
  %vm6943 = vcmp.ge.f32.partialorder %v6879, 0.0
  %vm6944 = vcmp.ge.f32.partialorder %v6880, 0.0
  %vm6945 = vcmp.ge.f32.partialorder %v6881, 0.0
  %vm6946 = vcmp.ge.f32.partialorder %v6882, 0.0
  %vm6947 = vcmp.ge.f32.partialorder %v6883, 0.0
  %vm6948 = vcmp.ge.f32.partialorder %v6884, 0.0
  %vm6949 = vcmp.ge.f32.partialorder %v6885, 0.0
  %vm6950 = vcmp.ge.f32.partialorder %v6886, 0.0
  %vm6951 = vcmp.ge.f32.partialorder %v6887, 0.0
  %vm6952 = vcmp.ge.f32.partialorder %v6888, 0.0
  %vm6953 = vcmp.ge.f32.partialorder %v6889, 0.0
  %vm6954 = vcmp.ge.f32.partialorder %v6890, 0.0
  %vm6955 = vcmp.ge.f32.partialorder %v6891, 0.0
  %vm6956 = vcmp.ge.f32.partialorder %v6892, 0.0
  %vm6957 = vcmp.ge.f32.partialorder %v6893, 0.0
  %vm6958 = vcmp.ge.f32.partialorder %v6894, 0.0
  %vm6959 = vcmp.ge.f32.partialorder %v6895, 0.0
  %vm6960 = vcmp.ge.f32.partialorder %v6896, 0.0
  %vm6961 = vcmp.ge.f32.partialorder %v6897, 0.0
  %vm6962 = vcmp.ge.f32.partialorder %v6898, 0.0
  %vm6963 = vcmp.ge.f32.partialorder %v6899, 0.0
  %vm6964 = vcmp.ge.f32.partialorder %v6900, 0.0
  %vm6965 = vcmp.ge.f32.partialorder %v6901, 0.0
  %vm6966 = vcmp.ge.f32.partialorder %v6902, 0.0
  %vm6967 = vcmp.ge.f32.partialorder %v6903, 0.0
  %vm6968 = vcmp.ge.f32.partialorder %v6904, 0.0
  %vm6969 = vcmp.ge.f32.partialorder %v6905, 0.0
  %vm6970 = vcmp.ge.f32.partialorder %v6906, 0.0
  %v6971 = vmul.f32 %v6843, 0.01
  %v6972 = vmul.f32 %v6844, 0.01
  %v6973 = vmul.f32 %v6845, 0.01
  %v6974 = vmul.f32 %v6846, 0.01
  %v6975 = vmul.f32 %v6847, 0.01
  %v6976 = vmul.f32 %v6848, 0.01
  %v6977 = vmul.f32 %v6849, 0.01
  %v6978 = vmul.f32 %v6850, 0.01
  %v6979 = vmul.f32 %v6851, 0.01
  %v6980 = vmul.f32 %v6852, 0.01
  %v6981 = vmul.f32 %v6853, 0.01
  %v6982 = vmul.f32 %v6854, 0.01
  %v6983 = vmul.f32 %v6855, 0.01
  %v6984 = vmul.f32 %v6856, 0.01
  %v6985 = vmul.f32 %v6857, 0.01
  %v6986 = vmul.f32 %v6858, 0.01
  %v6987 = vmul.f32 %v6859, 0.01
  %v6988 = vmul.f32 %v6860, 0.01
  %v6989 = vmul.f32 %v6861, 0.01
  %v6990 = vmul.f32 %v6862, 0.01
  %v6991 = vmul.f32 %v6863, 0.01
  %v6992 = vmul.f32 %v6864, 0.01
  %v6993 = vmul.f32 %v6865, 0.01
  %v6994 = vmul.f32 %v6866, 0.01
  %v6995 = vmul.f32 %v6867, 0.01
  %v6996 = vmul.f32 %v6868, 0.01
  %v6997 = vmul.f32 %v6869, 0.01
  %v6998 = vmul.f32 %v6870, 0.01
  %v6999 = vmul.f32 %v6871, 0.01
  %v7000 = vmul.f32 %v6872, 0.01
  %v7001 = vmul.f32 %v6873, 0.01
  %v7002 = vmul.f32 %v6874, 0.01
  %v7003 = vmul.f32 %v6875, 0.01
  %v7004 = vmul.f32 %v6876, 0.01
  %v7005 = vmul.f32 %v6877, 0.01
  %v7006 = vmul.f32 %v6878, 0.01
  %v7007 = vmul.f32 %v6879, 0.01
  %v7008 = vmul.f32 %v6880, 0.01
  %v7009 = vmul.f32 %v6881, 0.01
  %v7010 = vmul.f32 %v6882, 0.01
  %v7011 = vmul.f32 %v6883, 0.01
  %v7012 = vmul.f32 %v6884, 0.01
  %v7013 = vmul.f32 %v6885, 0.01
  %v7014 = vmul.f32 %v6886, 0.01
  %v7015 = vmul.f32 %v6887, 0.01
  %v7016 = vmul.f32 %v6888, 0.01
  %v7017 = vmul.f32 %v6889, 0.01
  %v7018 = vmul.f32 %v6890, 0.01
  %v7019 = vmul.f32 %v6891, 0.01
  %v7020 = vmul.f32 %v6892, 0.01
  %v7021 = vmul.f32 %v6893, 0.01
  %v7022 = vmul.f32 %v6894, 0.01
  %v7023 = vmul.f32 %v6895, 0.01
  %v7024 = vmul.f32 %v6896, 0.01
  %v7025 = vmul.f32 %v6897, 0.01
  %v7026 = vmul.f32 %v6898, 0.01
  %v7027 = vmul.f32 %v6899, 0.01
  %v7028 = vmul.f32 %v6900, 0.01
  %v7029 = vmul.f32 %v6901, 0.01
  %v7030 = vmul.f32 %v6902, 0.01
  %v7031 = vmul.f32 %v6903, 0.01
  %v7032 = vmul.f32 %v6904, 0.01
  %v7033 = vmul.f32 %v6905, 0.01
  %v7034 = vmul.f32 %v6906, 0.01
  %v7035 = vsel %vm6907, %v6843, %v6971
  %v7036 = vsel %vm6908, %v6844, %v6972
  %v7037 = vsel %vm6909, %v6845, %v6973
  %v7038 = vsel %vm6910, %v6846, %v6974
  %v7039 = vsel %vm6911, %v6847, %v6975
  %v7040 = vsel %vm6912, %v6848, %v6976
  %v7041 = vsel %vm6913, %v6849, %v6977
  %v7042 = vsel %vm6914, %v6850, %v6978
  %v7043 = vsel %vm6915, %v6851, %v6979
  %v7044 = vsel %vm6916, %v6852, %v6980
  %v7045 = vsel %vm6917, %v6853, %v6981
  %v7046 = vsel %vm6918, %v6854, %v6982
  %v7047 = vsel %vm6919, %v6855, %v6983
  %v7048 = vsel %vm6920, %v6856, %v6984
  %v7049 = vsel %vm6921, %v6857, %v6985
  %v7050 = vsel %vm6922, %v6858, %v6986
  %v7051 = vsel %vm6923, %v6859, %v6987
  %v7052 = vsel %vm6924, %v6860, %v6988
  %v7053 = vsel %vm6925, %v6861, %v6989
  %v7054 = vsel %vm6926, %v6862, %v6990
  %v7055 = vsel %vm6927, %v6863, %v6991
  %v7056 = vsel %vm6928, %v6864, %v6992
  %v7057 = vsel %vm6929, %v6865, %v6993
  %v7058 = vsel %vm6930, %v6866, %v6994
  %v7059 = vsel %vm6931, %v6867, %v6995
  %v7060 = vsel %vm6932, %v6868, %v6996
  %v7061 = vsel %vm6933, %v6869, %v6997
  %v7062 = vsel %vm6934, %v6870, %v6998
  %v7063 = vsel %vm6935, %v6871, %v6999
  %v7064 = vsel %vm6936, %v6872, %v7000
  %v7065 = vsel %vm6937, %v6873, %v7001
  %v7066 = vsel %vm6938, %v6874, %v7002
  %v7067 = vsel %vm6939, %v6875, %v7003
  %v7068 = vsel %vm6940, %v6876, %v7004
  %v7069 = vsel %vm6941, %v6877, %v7005
  %v7070 = vsel %vm6942, %v6878, %v7006
  %v7071 = vsel %vm6943, %v6879, %v7007
  %v7072 = vsel %vm6944, %v6880, %v7008
  %v7073 = vsel %vm6945, %v6881, %v7009
  %v7074 = vsel %vm6946, %v6882, %v7010
  %v7075 = vsel %vm6947, %v6883, %v7011
  %v7076 = vsel %vm6948, %v6884, %v7012
  %v7077 = vsel %vm6949, %v6885, %v7013
  %v7078 = vsel %vm6950, %v6886, %v7014
  %v7079 = vsel %vm6951, %v6887, %v7015
  %v7080 = vsel %vm6952, %v6888, %v7016
  %v7081 = vsel %vm6953, %v6889, %v7017
  %v7082 = vsel %vm6954, %v6890, %v7018
  %v7083 = vsel %vm6955, %v6891, %v7019
  %v7084 = vsel %vm6956, %v6892, %v7020
  %v7085 = vsel %vm6957, %v6893, %v7021
  %v7086 = vsel %vm6958, %v6894, %v7022
  %v7087 = vsel %vm6959, %v6895, %v7023
  %v7088 = vsel %vm6960, %v6896, %v7024
  %v7089 = vsel %vm6961, %v6897, %v7025
  %v7090 = vsel %vm6962, %v6898, %v7026
  %v7091 = vsel %vm6963, %v6899, %v7027
  %v7092 = vsel %vm6964, %v6900, %v7028
  %v7093 = vsel %vm6965, %v6901, %v7029
  %v7094 = vsel %vm6966, %v6902, %v7030
  %v7095 = vsel %vm6967, %v6903, %v7031
  %v7096 = vsel %vm6968, %v6904, %v7032
  %v7097 = vsel %vm6969, %v6905, %v7033
  %v7098 = vsel %vm6970, %v6906, %v7034
  %7163 = vrot.lane.b32.xlu0 %v7035, 96
  %v7164 = vpop.permute.xlu0 %7163
  %7165 = vrot.lane.b32.xlu0 %v7036, 96
  %v7166 = vpop.permute.xlu0 %7165
  %7167 = vrot.lane.b32.xlu0 %v7037, 96
  %v7168 = vpop.permute.xlu0 %7167
  %7169 = vrot.lane.b32.xlu0 %v7038, 96
  %v7170 = vpop.permute.xlu0 %7169
  %7171 = vrot.lane.b32.xlu0 %v7039, 96
  %v7172 = vpop.permute.xlu0 %7171
  %7173 = vrot.lane.b32.xlu0 %v7040, 96
  %v7174 = vpop.permute.xlu0 %7173
  %7175 = vrot.lane.b32.xlu0 %v7041, 96
  %v7176 = vpop.permute.xlu0 %7175
  %7177 = vrot.lane.b32.xlu0 %v7042, 96
  %v7178 = vpop.permute.xlu0 %7177
  %7179 = vrot.lane.b32.xlu0 %v7043, 96
  %v7180 = vpop.permute.xlu0 %7179
  %7181 = vrot.lane.b32.xlu0 %v7044, 96
  %v7182 = vpop.permute.xlu0 %7181
  %7183 = vrot.lane.b32.xlu0 %v7045, 96
  %v7184 = vpop.permute.xlu0 %7183
  %7185 = vrot.lane.b32.xlu0 %v7046, 96
  %v7186 = vpop.permute.xlu0 %7185
  %7187 = vrot.lane.b32.xlu0 %v7047, 96
  %v7188 = vpop.permute.xlu0 %7187
  %7189 = vrot.lane.b32.xlu0 %v7048, 96
  %v7190 = vpop.permute.xlu0 %7189
  %7191 = vrot.lane.b32.xlu0 %v7049, 96
  %v7192 = vpop.permute.xlu0 %7191
  %7193 = vrot.lane.b32.xlu0 %v7050, 96
  %v7194 = vpop.permute.xlu0 %7193
  %7195 = vrot.lane.b32.xlu0 %v7051, 96
  %v7196 = vpop.permute.xlu0 %7195
  %7197 = vrot.lane.b32.xlu0 %v7052, 96
  %v7198 = vpop.permute.xlu0 %7197
  %7199 = vrot.lane.b32.xlu0 %v7053, 96
  %v7200 = vpop.permute.xlu0 %7199
  %7201 = vrot.lane.b32.xlu0 %v7054, 96
  %v7202 = vpop.permute.xlu0 %7201
  %7203 = vrot.lane.b32.xlu0 %v7055, 96
  %v7204 = vpop.permute.xlu0 %7203
  %7205 = vrot.lane.b32.xlu0 %v7056, 96
  %v7206 = vpop.permute.xlu0 %7205
  %7207 = vrot.lane.b32.xlu0 %v7057, 96
  %v7208 = vpop.permute.xlu0 %7207
  %7209 = vrot.lane.b32.xlu0 %v7058, 96
  %v7210 = vpop.permute.xlu0 %7209
  %7211 = vrot.lane.b32.xlu0 %v7059, 96
  %v7212 = vpop.permute.xlu0 %7211
  %7213 = vrot.lane.b32.xlu0 %v7060, 96
  %v7214 = vpop.permute.xlu0 %7213
  %7215 = vrot.lane.b32.xlu0 %v7061, 96
  %v7216 = vpop.permute.xlu0 %7215
  %7217 = vrot.lane.b32.xlu0 %v7062, 96
  %v7218 = vpop.permute.xlu0 %7217
  %7219 = vrot.lane.b32.xlu0 %v7063, 96
  %v7220 = vpop.permute.xlu0 %7219
  %7221 = vrot.lane.b32.xlu0 %v7064, 96
  %v7222 = vpop.permute.xlu0 %7221
  %7223 = vrot.lane.b32.xlu0 %v7065, 96
  %v7224 = vpop.permute.xlu0 %7223
  %7225 = vrot.lane.b32.xlu0 %v7066, 96
  %v7226 = vpop.permute.xlu0 %7225
  %7227 = vrot.lane.b32.xlu0 %v7067, 96
  %v7228 = vpop.permute.xlu0 %7227
  %7229 = vrot.lane.b32.xlu0 %v7068, 96
  %v7230 = vpop.permute.xlu0 %7229
  %7231 = vrot.lane.b32.xlu0 %v7069, 96
  %v7232 = vpop.permute.xlu0 %7231
  %7233 = vrot.lane.b32.xlu0 %v7070, 96
  %v7234 = vpop.permute.xlu0 %7233
  %7235 = vrot.lane.b32.xlu0 %v7071, 96
  %v7236 = vpop.permute.xlu0 %7235
  %7237 = vrot.lane.b32.xlu0 %v7072, 96
  %v7238 = vpop.permute.xlu0 %7237
  %7239 = vrot.lane.b32.xlu0 %v7073, 96
  %v7240 = vpop.permute.xlu0 %7239
  %7241 = vrot.lane.b32.xlu0 %v7074, 96
  %v7242 = vpop.permute.xlu0 %7241
  %7243 = vrot.lane.b32.xlu0 %v7075, 96
  %v7244 = vpop.permute.xlu0 %7243
  %7245 = vrot.lane.b32.xlu0 %v7076, 96
  %v7246 = vpop.permute.xlu0 %7245
  %7247 = vrot.lane.b32.xlu0 %v7077, 96
  %v7248 = vpop.permute.xlu0 %7247
  %7249 = vrot.lane.b32.xlu0 %v7078, 96
  %v7250 = vpop.permute.xlu0 %7249
  %7251 = vrot.lane.b32.xlu0 %v7079, 96
  %v7252 = vpop.permute.xlu0 %7251
  %7253 = vrot.lane.b32.xlu0 %v7080, 96
  %v7254 = vpop.permute.xlu0 %7253
  %7255 = vrot.lane.b32.xlu0 %v7081, 96
  %v7256 = vpop.permute.xlu0 %7255
  %7257 = vrot.lane.b32.xlu0 %v7082, 96
  %v7258 = vpop.permute.xlu0 %7257
  %7259 = vrot.lane.b32.xlu0 %v7083, 96
  %v7260 = vpop.permute.xlu0 %7259
  %7261 = vrot.lane.b32.xlu0 %v7084, 96
  %v7262 = vpop.permute.xlu0 %7261
  %7263 = vrot.lane.b32.xlu0 %v7085, 96
  %v7264 = vpop.permute.xlu0 %7263
  %7265 = vrot.lane.b32.xlu0 %v7086, 96
  %v7266 = vpop.permute.xlu0 %7265
  %7267 = vrot.lane.b32.xlu0 %v7087, 96
  %v7268 = vpop.permute.xlu0 %7267
  %7269 = vrot.lane.b32.xlu0 %v7088, 96
  %v7270 = vpop.permute.xlu0 %7269
  %7271 = vrot.lane.b32.xlu0 %v7089, 96
  %v7272 = vpop.permute.xlu0 %7271
  %7273 = vrot.lane.b32.xlu0 %v7090, 96
  %v7274 = vpop.permute.xlu0 %7273
  %7275 = vrot.lane.b32.xlu0 %v7091, 96
  %v7276 = vpop.permute.xlu0 %7275
  %7277 = vrot.lane.b32.xlu0 %v7092, 96
  %v7278 = vpop.permute.xlu0 %7277
  %7279 = vrot.lane.b32.xlu0 %v7093, 96
  %v7280 = vpop.permute.xlu0 %7279
  %7281 = vrot.lane.b32.xlu0 %v7094, 96
  %v7282 = vpop.permute.xlu0 %7281
  %7283 = vrot.lane.b32.xlu0 %v7095, 96
  %v7284 = vpop.permute.xlu0 %7283
  %7285 = vrot.lane.b32.xlu0 %v7096, 96
  %v7286 = vpop.permute.xlu0 %7285
  %7287 = vrot.lane.b32.xlu0 %v7097, 96
  %v7288 = vpop.permute.xlu0 %7287
  %7289 = vrot.lane.b32.xlu0 %v7098, 96
  %v7290 = vpop.permute.xlu0 %7289
  %v7355 = vadd.f32 %v7035, %v7164
  %v7356 = vadd.f32 %v7036, %v7166
  %v7357 = vadd.f32 %v7037, %v7168
  %v7358 = vadd.f32 %v7038, %v7170
  %v7359 = vadd.f32 %v7039, %v7172
  %v7360 = vadd.f32 %v7040, %v7174
  %v7361 = vadd.f32 %v7041, %v7176
  %v7362 = vadd.f32 %v7042, %v7178
  %v7363 = vadd.f32 %v7043, %v7180
  %v7364 = vadd.f32 %v7044, %v7182
  %v7365 = vadd.f32 %v7045, %v7184
  %v7366 = vadd.f32 %v7046, %v7186
  %v7367 = vadd.f32 %v7047, %v7188
  %v7368 = vadd.f32 %v7048, %v7190
  %v7369 = vadd.f32 %v7049, %v7192
  %v7370 = vadd.f32 %v7050, %v7194
  %v7371 = vadd.f32 %v7051, %v7196
  %v7372 = vadd.f32 %v7052, %v7198
  %v7373 = vadd.f32 %v7053, %v7200
  %v7374 = vadd.f32 %v7054, %v7202
  %v7375 = vadd.f32 %v7055, %v7204
  %v7376 = vadd.f32 %v7056, %v7206
  %v7377 = vadd.f32 %v7057, %v7208
  %v7378 = vadd.f32 %v7058, %v7210
  %v7379 = vadd.f32 %v7059, %v7212
  %v7380 = vadd.f32 %v7060, %v7214
  %v7381 = vadd.f32 %v7061, %v7216
  %v7382 = vadd.f32 %v7062, %v7218
  %v7383 = vadd.f32 %v7063, %v7220
  %v7384 = vadd.f32 %v7064, %v7222
  %v7385 = vadd.f32 %v7065, %v7224
  %v7386 = vadd.f32 %v7066, %v7226
  %v7387 = vadd.f32 %v7067, %v7228
  %v7388 = vadd.f32 %v7068, %v7230
  %v7389 = vadd.f32 %v7069, %v7232
  %v7390 = vadd.f32 %v7070, %v7234
  %v7391 = vadd.f32 %v7071, %v7236
  %v7392 = vadd.f32 %v7072, %v7238
  %v7393 = vadd.f32 %v7073, %v7240
  %v7394 = vadd.f32 %v7074, %v7242
  %v7395 = vadd.f32 %v7075, %v7244
  %v7396 = vadd.f32 %v7076, %v7246
  %v7397 = vadd.f32 %v7077, %v7248
  %v7398 = vadd.f32 %v7078, %v7250
  %v7399 = vadd.f32 %v7079, %v7252
  %v7400 = vadd.f32 %v7080, %v7254
  %v7401 = vadd.f32 %v7081, %v7256
  %v7402 = vadd.f32 %v7082, %v7258
  %v7403 = vadd.f32 %v7083, %v7260
  %v7404 = vadd.f32 %v7084, %v7262
  %v7405 = vadd.f32 %v7085, %v7264
  %v7406 = vadd.f32 %v7086, %v7266
  %v7407 = vadd.f32 %v7087, %v7268
  %v7408 = vadd.f32 %v7088, %v7270
  %v7409 = vadd.f32 %v7089, %v7272
  %v7410 = vadd.f32 %v7090, %v7274
  %v7411 = vadd.f32 %v7091, %v7276
  %v7412 = vadd.f32 %v7092, %v7278
  %v7413 = vadd.f32 %v7093, %v7280
  %v7414 = vadd.f32 %v7094, %v7282
  %v7415 = vadd.f32 %v7095, %v7284
  %v7416 = vadd.f32 %v7096, %v7286
  %v7417 = vadd.f32 %v7097, %v7288
  %v7418 = vadd.f32 %v7098, %v7290
  %7435 = vrot.lane.b32.xlu0 %v7371, 32
  %v7436 = vpop.permute.xlu0 %7435
  %7437 = vrot.lane.b32.xlu0 %v7372, 32
  %v7438 = vpop.permute.xlu0 %7437
  %7439 = vrot.lane.b32.xlu0 %v7373, 32
  %v7440 = vpop.permute.xlu0 %7439
  %7441 = vrot.lane.b32.xlu0 %v7374, 32
  %v7442 = vpop.permute.xlu0 %7441
  %7443 = vrot.lane.b32.xlu0 %v7375, 32
  %v7444 = vpop.permute.xlu0 %7443
  %7445 = vrot.lane.b32.xlu0 %v7376, 32
  %v7446 = vpop.permute.xlu0 %7445
  %7447 = vrot.lane.b32.xlu0 %v7377, 32
  %v7448 = vpop.permute.xlu0 %7447
  %7449 = vrot.lane.b32.xlu0 %v7378, 32
  %v7450 = vpop.permute.xlu0 %7449
  %7451 = vrot.lane.b32.xlu0 %v7379, 32
  %v7452 = vpop.permute.xlu0 %7451
  %7453 = vrot.lane.b32.xlu0 %v7380, 32
  %v7454 = vpop.permute.xlu0 %7453
  %7455 = vrot.lane.b32.xlu0 %v7381, 32
  %v7456 = vpop.permute.xlu0 %7455
  %7457 = vrot.lane.b32.xlu0 %v7382, 32
  %v7458 = vpop.permute.xlu0 %7457
  %7459 = vrot.lane.b32.xlu0 %v7383, 32
  %v7460 = vpop.permute.xlu0 %7459
  %7461 = vrot.lane.b32.xlu0 %v7384, 32
  %v7462 = vpop.permute.xlu0 %7461
  %7463 = vrot.lane.b32.xlu0 %v7385, 32
  %v7464 = vpop.permute.xlu0 %7463
  %7465 = vrot.lane.b32.xlu0 %v7386, 32
  %v7466 = vpop.permute.xlu0 %7465
  %7499 = vrot.lane.b32.xlu0 %v7387, 64
  %v7500 = vpop.permute.xlu0 %7499
  %7501 = vrot.lane.b32.xlu0 %v7388, 64
  %v7502 = vpop.permute.xlu0 %7501
  %7503 = vrot.lane.b32.xlu0 %v7389, 64
  %v7504 = vpop.permute.xlu0 %7503
  %7505 = vrot.lane.b32.xlu0 %v7390, 64
  %v7506 = vpop.permute.xlu0 %7505
  %7507 = vrot.lane.b32.xlu0 %v7391, 64
  %v7508 = vpop.permute.xlu0 %7507
  %7509 = vrot.lane.b32.xlu0 %v7392, 64
  %v7510 = vpop.permute.xlu0 %7509
  %7511 = vrot.lane.b32.xlu0 %v7393, 64
  %v7512 = vpop.permute.xlu0 %7511
  %7513 = vrot.lane.b32.xlu0 %v7394, 64
  %v7514 = vpop.permute.xlu0 %7513
  %7515 = vrot.lane.b32.xlu0 %v7395, 64
  %v7516 = vpop.permute.xlu0 %7515
  %7517 = vrot.lane.b32.xlu0 %v7396, 64
  %v7518 = vpop.permute.xlu0 %7517
  %7519 = vrot.lane.b32.xlu0 %v7397, 64
  %v7520 = vpop.permute.xlu0 %7519
  %7521 = vrot.lane.b32.xlu0 %v7398, 64
  %v7522 = vpop.permute.xlu0 %7521
  %7523 = vrot.lane.b32.xlu0 %v7399, 64
  %v7524 = vpop.permute.xlu0 %7523
  %7525 = vrot.lane.b32.xlu0 %v7400, 64
  %v7526 = vpop.permute.xlu0 %7525
  %7527 = vrot.lane.b32.xlu0 %v7401, 64
  %v7528 = vpop.permute.xlu0 %7527
  %7529 = vrot.lane.b32.xlu0 %v7402, 64
  %v7530 = vpop.permute.xlu0 %7529
  %7563 = vrot.lane.b32.xlu0 %v7403, 96
  %v7564 = vpop.permute.xlu0 %7563
  %7565 = vrot.lane.b32.xlu0 %v7404, 96
  %v7566 = vpop.permute.xlu0 %7565
  %7567 = vrot.lane.b32.xlu0 %v7405, 96
  %v7568 = vpop.permute.xlu0 %7567
  %7569 = vrot.lane.b32.xlu0 %v7406, 96
  %v7570 = vpop.permute.xlu0 %7569
  %7571 = vrot.lane.b32.xlu0 %v7407, 96
  %v7572 = vpop.permute.xlu0 %7571
  %7573 = vrot.lane.b32.xlu0 %v7408, 96
  %v7574 = vpop.permute.xlu0 %7573
  %7575 = vrot.lane.b32.xlu0 %v7409, 96
  %v7576 = vpop.permute.xlu0 %7575
  %7577 = vrot.lane.b32.xlu0 %v7410, 96
  %v7578 = vpop.permute.xlu0 %7577
  %7579 = vrot.lane.b32.xlu0 %v7411, 96
  %v7580 = vpop.permute.xlu0 %7579
  %7581 = vrot.lane.b32.xlu0 %v7412, 96
  %v7582 = vpop.permute.xlu0 %7581
  %7583 = vrot.lane.b32.xlu0 %v7413, 96
  %v7584 = vpop.permute.xlu0 %7583
  %7585 = vrot.lane.b32.xlu0 %v7414, 96
  %v7586 = vpop.permute.xlu0 %7585
  %7587 = vrot.lane.b32.xlu0 %v7415, 96
  %v7588 = vpop.permute.xlu0 %7587
  %7589 = vrot.lane.b32.xlu0 %v7416, 96
  %v7590 = vpop.permute.xlu0 %7589
  %7591 = vrot.lane.b32.xlu0 %v7417, 96
  %v7592 = vpop.permute.xlu0 %7591
  %7593 = vrot.lane.b32.xlu0 %v7418, 96
  %v7594 = vpop.permute.xlu0 %7593
  %v7611 = vsel %vm3113, %v7355, %v7436
  %v7612 = vsel %vm3113, %v7356, %v7438
  %v7613 = vsel %vm3113, %v7357, %v7440
  %v7614 = vsel %vm3113, %v7358, %v7442
  %v7615 = vsel %vm3113, %v7359, %v7444
  %v7616 = vsel %vm3113, %v7360, %v7446
  %v7617 = vsel %vm3113, %v7361, %v7448
  %v7618 = vsel %vm3113, %v7362, %v7450
  %v7619 = vsel %vm3113, %v7363, %v7452
  %v7620 = vsel %vm3113, %v7364, %v7454
  %v7621 = vsel %vm3113, %v7365, %v7456
  %v7622 = vsel %vm3113, %v7366, %v7458
  %v7623 = vsel %vm3113, %v7367, %v7460
  %v7624 = vsel %vm3113, %v7368, %v7462
  %v7625 = vsel %vm3113, %v7369, %v7464
  %v7626 = vsel %vm3113, %v7370, %v7466
  %v7627 = vsel %vm6283, %v7611, %v7500
  %v7628 = vsel %vm6283, %v7612, %v7502
  %v7629 = vsel %vm6283, %v7613, %v7504
  %v7630 = vsel %vm6283, %v7614, %v7506
  %v7631 = vsel %vm6283, %v7615, %v7508
  %v7632 = vsel %vm6283, %v7616, %v7510
  %v7633 = vsel %vm6283, %v7617, %v7512
  %v7634 = vsel %vm6283, %v7618, %v7514
  %v7635 = vsel %vm6283, %v7619, %v7516
  %v7636 = vsel %vm6283, %v7620, %v7518
  %v7637 = vsel %vm6283, %v7621, %v7520
  %v7638 = vsel %vm6283, %v7622, %v7522
  %v7639 = vsel %vm6283, %v7623, %v7524
  %v7640 = vsel %vm6283, %v7624, %v7526
  %v7641 = vsel %vm6283, %v7625, %v7528
  %v7642 = vsel %vm6283, %v7626, %v7530
  %vm7643 = vcmask 785408
  %v7644 = vsel %vm7643, %v7627, %v7564
  %v7645 = vsel %vm7643, %v7628, %v7566
  %v7646 = vsel %vm7643, %v7629, %v7568
  %v7647 = vsel %vm7643, %v7630, %v7570
  %v7648 = vsel %vm7643, %v7631, %v7572
  %v7649 = vsel %vm7643, %v7632, %v7574
  %v7650 = vsel %vm7643, %v7633, %v7576
  %v7651 = vsel %vm7643, %v7634, %v7578
  %v7652 = vsel %vm7643, %v7635, %v7580
  %v7653 = vsel %vm7643, %v7636, %v7582
  %v7654 = vsel %vm7643, %v7637, %v7584
  %v7655 = vsel %vm7643, %v7638, %v7586
  %v7656 = vsel %vm7643, %v7639, %v7588
  %v7657 = vsel %vm7643, %v7640, %v7590
  %v7658 = vsel %vm7643, %v7641, %v7592
  %v7659 = vsel %vm7643, %v7642, %v7594
  %7660 = vst [vmem:[%s9] sm:$0xff] %v7644
  %7661 = vst [vmem:[%s9 + $0x8] sm:$0xff] %v7645
  %7662 = vst [vmem:[%s9 + $0x10] sm:$0xff] %v7646
  %7663 = vst [vmem:[%s9 + $0x18] sm:$0xff] %v7647
  %7664 = vst [vmem:[%s9 + $0x20] sm:$0xff] %v7648
  %7665 = vst [vmem:[%s9 + $0x28] sm:$0xff] %v7649
  %7666 = vst [vmem:[%s9 + $0x30] sm:$0xff] %v7650
  %7667 = vst [vmem:[%s9 + $0x38] sm:$0xff] %v7651
  %7668 = vst [vmem:[%s9 + $0x40] sm:$0xff] %v7652
  %7669 = vst [vmem:[%s9 + $0x48] sm:$0xff] %v7653
  %7670 = vst [vmem:[%s9 + $0x50] sm:$0xff] %v7654
  %7671 = vst [vmem:[%s9 + $0x58] sm:$0xff] %v7655
  %7672 = vst [vmem:[%s9 + $0x60] sm:$0xff] %v7656
  %7673 = vst [vmem:[%s9 + $0x68] sm:$0xff] %v7657
  %7674 = vst [vmem:[%s9 + $0x70] sm:$0xff] %v7658
  %7675 = vst [vmem:[%s9 + $0x78] sm:$0xff] %v7659
  // Predicated region
  $region38: #{dec_block_forward.1} parent=0 // pred_check
    _
  $region39: #{dec_block_forward.1} parent=0 // pred_check_branch
    %7677 = sbr.rel (0) target = $region41
  $region40: #{dec_block_forward.1} parent=0 // pred_region
    _
  $region41: #{dec_block_forward.1} parent=0 // pred_fallthru
    _
  // Predicated region
  $region42: #{dec_block_forward.1} parent=0 // pred_check
    _
  $region43: #{dec_block_forward.1} parent=0 // pred_check_branch
    %7679 = sbr.rel (0) target = $region45
  $region44: #{dec_block_forward.1} parent=0 // pred_region
    _
  $region45: #{dec_block_forward.1} parent=0 // pred_fallthru
    _

</llo_original>
